<compile_context>
chip_gen: v7x
topology: tpu7x:2x2x1
jax: 0.10.0
libtpu: 0.0.40
codegen_flags: <defaults>
</compile_context>

<pallas_src>
import jax
import jax.numpy as jnp
from jax import lax
from jax.experimental import pallas as pl
from jax.experimental.pallas import tpu as pltpu


def _resblock_kernel(x_ref, w1_ref, w2_ref, o_ref, slab_ref, acc_ref):
    """One batch element per grid step.

    x_ref:    (1, H, W, C) f32   input block (conv1 source + identity branch)
    w1_ref:   (9, C, C)    bf16  conv1 weights, tap-major (kh*3+kw, Cin, Cout)
    w2_ref:   (9, C, C)    bf16  conv2 weights
    o_ref:    (1, H, W, C) f32   output block
    slab_ref: (3, H+2, W, C) bf16 scratch: W-shifted activations + zero H halos
    acc_ref:  (H*W, C)     f32   matmul accumulator
    """
    H, W, C = o_ref.shape[1], o_ref.shape[2], o_ref.shape[3]

    # Zero only the H-halo rows (rows 0 and H+1 of each slab); interiors are
    # fully rewritten by every conv.  Six small aligned stores, no full-buffer
    # zero fill, and no cross-grid-step scratch dependence (safe under
    # "parallel" semantics on v7x megacore).
    zrow = jnp.zeros((W, C), jnp.bfloat16)
    for j in range(3):
        slab_ref[j, 0] = zrow
        slab_ref[j, H + 1] = zrow

    # Tiny (1, W, 1) column masks for the wrapped-around column after a W-roll
    # (broadcast inside jnp.where); replaces the old full (H, W, C) iota mask.
    col = lax.broadcasted_iota(jnp.int32, (1, W, 1), 1)
    keep_right = col < (W - 1)   # valid lanes for dw = +1 (b[h, w] = a[h, w+1])
    keep_left = col >= 1         # valid lanes for dw = -1 (b[h, w] = a[h, w-1])

    def shift_w(a, dw):
        # b[h, w, :] = a[h, w + dw, :], zeroed where w + dw is out of range.
        if dw == 0:
            return a
        b = pltpu.roll(a, shift=(-dw) % W, axis=1)   # XLU rotate, np.roll semantics
        return jnp.where(keep_right if dw > 0 else keep_left, b, 0.0)

    def conv3x3(src_hwc, w_ref):
        # Build three W-shifted slabs: full-width, aligned interior-row stores.
        # The bf16 cast for the MXU happens here, once per element.
        for j, dw in enumerate((-1, 0, 1)):
            slab_ref[j, 1:H + 1] = shift_w(src_hwc, dw).astype(jnp.bfloat16)
        # Nine taps: leading-axis slices of the slab give contiguous (H*W, C)
        # LHS views (W % 8 == 0 -> layout-preserving reshape).  Taps are summed
        # per kernel row in registers, so the VMEM accumulator sees only one
        # write + two read-modify-writes per conv.
        for kh in range(3):
            row = None
            for j in range(3):
                lhs = slab_ref[j, kh:kh + H].reshape(H * W, C)
                tap = jnp.dot(lhs, w_ref[kh * 3 + j],
                              preferred_element_type=jnp.float32)
                row = tap if row is None else row + tap
            if kh == 0:
                acc_ref[...] = row
            else:
                acc_ref[...] += row

    conv3x3(x_ref[0], w1_ref)                                  # conv1
    mid = jnp.maximum(acc_ref[...], 0.0).reshape(H, W, C)      # ReLU (f32)
    conv3x3(mid, w2_ref)                                       # conv2

    # Epilogue: scale, residual add (re-read the VMEM-resident input block
    # instead of keeping a duplicate live across both convs).
    o_ref[0] = (acc_ref[...].reshape(H, W, C) * 0.1 + x_ref[0]).astype(o_ref.dtype)


@jax.jit
def residual_block(x_nchw, w1_hwio, w2_hwio):
    """x_nchw: (N, C, H, W) float32 (PyTorch convention). Returns same shape."""
    N, C, H, W = x_nchw.shape

    # NCHW -> NHWC for the kernel (padding is handled inside the kernel).
    x = jnp.transpose(x_nchw, (0, 2, 3, 1))                    # (N, H, W, C)
    # Weights go to the MXU as bf16 operands (f32 accumulation in-kernel);
    # this also halves the weight HBM traffic.
    w1 = w1_hwio.reshape(9, C, C).astype(jnp.bfloat16)
    w2 = w2_hwio.reshape(9, C, C).astype(jnp.bfloat16)

    out_nhwc = pl.pallas_call(
        _resblock_kernel,
        out_shape=jax.ShapeDtypeStruct((N, H, W, C), x.dtype),
        grid_spec=pltpu.PrefetchScalarGridSpec(
            num_scalar_prefetch=0,
            grid=(N,),
            in_specs=[
                pl.BlockSpec((1, H, W, C), lambda n: (n, 0, 0, 0)),
                # Weights are constant across the grid: place the whole array
                # in VMEM once (single buffer, no per-step pipelining/DMA).
                pl.BlockSpec(memory_space=pltpu.MemorySpace.VMEM),
                pl.BlockSpec(memory_space=pltpu.MemorySpace.VMEM),
            ],
            out_specs=pl.BlockSpec((1, H, W, C), lambda n: (n, 0, 0, 0)),
            scratch_shapes=[
                pltpu.VMEM((3, H + 2, W, C), jnp.bfloat16),     # shifted slabs
                pltpu.VMEM((H * W, C), jnp.float32),            # f32 accumulator
            ],
        ),
        compiler_params=pltpu.CompilerParams(
            dimension_semantics=("parallel",),   # N splits across TCs on v7x
            vmem_limit_bytes=32 * 1024 * 1024,   # kernel uses ~4 MiB at 16x16
        ),
    )(x, w1, w2)

    # NHWC -> NCHW to match the PyTorch module's output convention.
    return jnp.transpose(out_nhwc, (0, 3, 1, 2))


def _reference(x_nchw, w1_hwio, w2_hwio):
    """Pure-JAX f32 reference (matches the PyTorch forward)."""
    x = jnp.transpose(x_nchw, (0, 2, 3, 1))
    dn = ("NHWC", "HWIO", "NHWC")
    y = jax.lax.conv_general_dilated(x, w1_hwio, (1, 1), "SAME", dimension_numbers=dn)
    y = jnp.maximum(y, 0.0)
    y = jax.lax.conv_general_dilated(y, w2_hwio, (1, 1), "SAME", dimension_numbers=dn)
    y = y * 0.1 + x
    return jnp.transpose(y, (0, 3, 1, 2))


if __name__ == "__main__":
    # The module hard-codes 256 channels; keep batch/spatial small.
    N, C, H, W = 2, 256, 16, 16

    key = jax.random.PRNGKey(0)
    kx, k1, k2 = jax.random.split(key, 3)

    x = jax.random.normal(kx, (N, C, H, W), dtype=jnp.float32)
    # Deterministic synthetic weights (HWIO), roughly kaiming-scaled.
    w_scale = 1.0 / jnp.sqrt(9.0 * C)
    w1 = jax.random.normal(k1, (3, 3, C, C), dtype=jnp.float32) * w_scale
    w2 = jax.random.normal(k2, (3, 3, C, C), dtype=jnp.float32) * w_scale

    out = residual_block(x, w1, w2)
    out = jax.block_until_ready(out)

    ref = _reference(x, w1, w2)
    assert out.shape == (N, C, H, W) and out.dtype == jnp.float32
    # Tolerance 2e-3 vs. the f32 reference: bf16 MXU operands (f32 accumulate)
    # introduce ~1e-3-level rounding over K_eff = 2304; the 0.1 output scale
    # and exact f32 identity path keep the final error well under this bound.
    assert jnp.allclose(out, ref, rtol=2e-3, atol=2e-3), (
        f"max abs err {jnp.max(jnp.abs(out - ref))}")

    print("KERNEL_OK")
</pallas_src>

<mosaic_0001>
module attributes {stable_mosaic.version = 11 : i64} {
  func.func @_resblock_kernel(%arg0: i32, %arg1: memref<1x16x16x256xf32, #tpu.memory_space<vmem>>, %arg2: memref<9x256x256xbf16, #tpu.memory_space<vmem>>, %arg3: memref<9x256x256xbf16, #tpu.memory_space<vmem>>, %arg4: memref<1x16x16x256xf32, #tpu.memory_space<vmem>>, %arg5: memref<3x18x16x256xbf16, #tpu.memory_space<vmem>>, %arg6: memref<256x256xf32, #tpu.memory_space<vmem>>) attributes {dimension_semantics = [#tpu.dimension_semantics<parallel>], iteration_bounds = array<i64: 2>, scalar_prefetch = 0 : i64, scratch_operands = 2 : i64, tpu.core_type = #tpu.core_type<tc>, window_params = [{transform_indices = @transform_0, window_bounds = array<i64: 1, 16, 16, 256>}, {pipeline_mode = #tpu.pipeline_mode<synchronous>, transform_indices = @transform_1, window_bounds = array<i64: 9, 256, 256>}, {pipeline_mode = #tpu.pipeline_mode<synchronous>, transform_indices = @transform_2, window_bounds = array<i64: 9, 256, 256>}, {transform_indices = @transform_3, window_bounds = array<i64: 1, 16, 16, 256>}]} {
    %cst = arith.constant 0.000000e+00 : bf16
    %0 = vector.broadcast %cst : bf16 to vector<16x256xbf16>
    %c0 = arith.constant 0 : index
    %c0_0 = arith.constant 0 : index
    %c0_1 = arith.constant 0 : index
    %c0_2 = arith.constant 0 : index
    %1 = vector.load %arg5[%c0, %c0_0, %c0_1, %c0_2] : memref<3x18x16x256xbf16, #tpu.memory_space<vmem>>, vector<1x1x16x256xbf16>
    %2 = vector.shape_cast %1 : vector<1x1x16x256xbf16> to vector<16x256xbf16>
    %3 = vector.shape_cast %0 : vector<16x256xbf16> to vector<1x1x16x256xbf16>
    tpu.vector_store %arg5[%c0, %c0_0, %c0_1, %c0_2], %3 {strides = array<i32>} : memref<3x18x16x256xbf16, #tpu.memory_space<vmem>>, vector<1x1x16x256xbf16>,
    %c0_3 = arith.constant 0 : index
    %c17 = arith.constant 17 : index
    %c0_4 = arith.constant 0 : index
    %c0_5 = arith.constant 0 : index
    %4 = vector.load %arg5[%c0_3, %c17, %c0_4, %c0_5] : memref<3x18x16x256xbf16, #tpu.memory_space<vmem>>, vector<1x1x16x256xbf16>
    %5 = vector.shape_cast %4 : vector<1x1x16x256xbf16> to vector<16x256xbf16>
    %6 = vector.shape_cast %0 : vector<16x256xbf16> to vector<1x1x16x256xbf16>
    tpu.vector_store %arg5[%c0_3, %c17, %c0_4, %c0_5], %6 {strides = array<i32>} : memref<3x18x16x256xbf16, #tpu.memory_space<vmem>>, vector<1x1x16x256xbf16>,
    %c1 = arith.constant 1 : index
    %c0_6 = arith.constant 0 : index
    %c0_7 = arith.constant 0 : index
    %c0_8 = arith.constant 0 : index
    %7 = vector.load %arg5[%c1, %c0_6, %c0_7, %c0_8] : memref<3x18x16x256xbf16, #tpu.memory_space<vmem>>, vector<1x1x16x256xbf16>
    %8 = vector.shape_cast %7 : vector<1x1x16x256xbf16> to vector<16x256xbf16>
    %9 = vector.shape_cast %0 : vector<16x256xbf16> to vector<1x1x16x256xbf16>
    tpu.vector_store %arg5[%c1, %c0_6, %c0_7, %c0_8], %9 {strides = array<i32>} : memref<3x18x16x256xbf16, #tpu.memory_space<vmem>>, vector<1x1x16x256xbf16>,
    %c1_9 = arith.constant 1 : index
    %c17_10 = arith.constant 17 : index
    %c0_11 = arith.constant 0 : index
    %c0_12 = arith.constant 0 : index
    %10 = vector.load %arg5[%c1_9, %c17_10, %c0_11, %c0_12] : memref<3x18x16x256xbf16, #tpu.memory_space<vmem>>, vector<1x1x16x256xbf16>
    %11 = vector.shape_cast %10 : vector<1x1x16x256xbf16> to vector<16x256xbf16>
    %12 = vector.shape_cast %0 : vector<16x256xbf16> to vector<1x1x16x256xbf16>
    tpu.vector_store %arg5[%c1_9, %c17_10, %c0_11, %c0_12], %12 {strides = array<i32>} : memref<3x18x16x256xbf16, #tpu.memory_space<vmem>>, vector<1x1x16x256xbf16>,
    %c2 = arith.constant 2 : index
    %c0_13 = arith.constant 0 : index
    %c0_14 = arith.constant 0 : index
    %c0_15 = arith.constant 0 : index
    %13 = vector.load %arg5[%c2, %c0_13, %c0_14, %c0_15] : memref<3x18x16x256xbf16, #tpu.memory_space<vmem>>, vector<1x1x16x256xbf16>
    %14 = vector.shape_cast %13 : vector<1x1x16x256xbf16> to vector<16x256xbf16>
    %15 = vector.shape_cast %0 : vector<16x256xbf16> to vector<1x1x16x256xbf16>
    tpu.vector_store %arg5[%c2, %c0_13, %c0_14, %c0_15], %15 {strides = array<i32>} : memref<3x18x16x256xbf16, #tpu.memory_space<vmem>>, vector<1x1x16x256xbf16>,
    %c2_16 = arith.constant 2 : index
    %c17_17 = arith.constant 17 : index
    %c0_18 = arith.constant 0 : index
    %c0_19 = arith.constant 0 : index
    %16 = vector.load %arg5[%c2_16, %c17_17, %c0_18, %c0_19] : memref<3x18x16x256xbf16, #tpu.memory_space<vmem>>, vector<1x1x16x256xbf16>
    %17 = vector.shape_cast %16 : vector<1x1x16x256xbf16> to vector<16x256xbf16>
    %18 = vector.shape_cast %0 : vector<16x256xbf16> to vector<1x1x16x256xbf16>
    tpu.vector_store %arg5[%c2_16, %c17_17, %c0_18, %c0_19], %18 {strides = array<i32>} : memref<3x18x16x256xbf16, #tpu.memory_space<vmem>>, vector<1x1x16x256xbf16>,
    %19 = tpu.iota {dimensions = array<i32: 1>} : vector<1x16x1xi32>
    %c15_i32 = arith.constant 15 : i32
    %20 = vector.broadcast %c15_i32 : i32 to vector<1x16x1xi32>
    %21 = arith.cmpi slt, %19, %20 : vector<1x16x1xi32>
    %c1_i32 = arith.constant 1 : i32
    %22 = vector.broadcast %c1_i32 : i32 to vector<1x16x1xi32>
    %23 = arith.cmpi sge, %19, %22 : vector<1x16x1xi32>
    %c0_20 = arith.constant 0 : index
    %c0_21 = arith.constant 0 : index
    %c0_22 = arith.constant 0 : index
    %c0_23 = arith.constant 0 : index
    %24 = vector.load %arg1[%c0_20, %c0_21, %c0_22, %c0_23] : memref<1x16x16x256xf32, #tpu.memory_space<vmem>>, vector<1x16x16x256xf32>
    %25 = vector.shape_cast %24 : vector<1x16x16x256xf32> to vector<16x16x256xf32>
    %c1_i32_24 = arith.constant 1 : i32
    %26 = tpu.dynamic_rotate %25 by %c1_i32_24 dim 1 : vector<16x16x256xf32>, i32 -> vector<16x16x256xf32>
    %cst_25 = arith.constant 0.000000e+00 : f32
    %27 = vector.shape_cast %23 : vector<1x16x1xi1> to vector<1x16x1xi1>
    %28 = vector.broadcast %27 : vector<1x16x1xi1> to vector<16x16x256xi1>
    %29 = vector.broadcast %cst_25 : f32 to vector<16x16x256xf32>
    %30 = arith.select %28, %26, %29 : vector<16x16x256xi1>, vector<16x16x256xf32>
    %31 = arith.truncf %30 : vector<16x16x256xf32> to vector<16x16x256xbf16>
    %c0_26 = arith.constant 0 : index
    %c1_27 = arith.constant 1 : index
    %c0_28 = arith.constant 0 : index
    %c0_29 = arith.constant 0 : index
    %32 = vector.load %arg5[%c0_26, %c1_27, %c0_28, %c0_29] : memref<3x18x16x256xbf16, #tpu.memory_space<vmem>>, vector<1x16x16x256xbf16>
    %33 = vector.shape_cast %32 : vector<1x16x16x256xbf16> to vector<16x16x256xbf16>
    %34 = vector.shape_cast %31 : vector<16x16x256xbf16> to vector<1x16x16x256xbf16>
    tpu.vector_store %arg5[%c0_26, %c1_27, %c0_28, %c0_29], %34 {strides = array<i32>} : memref<3x18x16x256xbf16, #tpu.memory_space<vmem>>, vector<1x16x16x256xbf16>,
    %35 = arith.truncf %25 : vector<16x16x256xf32> to vector<16x16x256xbf16>
    %c1_30 = arith.constant 1 : index
    %c1_31 = arith.constant 1 : index
    %c0_32 = arith.constant 0 : index
    %c0_33 = arith.constant 0 : index
    %36 = vector.load %arg5[%c1_30, %c1_31, %c0_32, %c0_33] : memref<3x18x16x256xbf16, #tpu.memory_space<vmem>>, vector<1x16x16x256xbf16>
    %37 = vector.shape_cast %36 : vector<1x16x16x256xbf16> to vector<16x16x256xbf16>
    %38 = vector.shape_cast %35 : vector<16x16x256xbf16> to vector<1x16x16x256xbf16>
    tpu.vector_store %arg5[%c1_30, %c1_31, %c0_32, %c0_33], %38 {strides = array<i32>} : memref<3x18x16x256xbf16, #tpu.memory_space<vmem>>, vector<1x16x16x256xbf16>,
    %c15_i32_34 = arith.constant 15 : i32
    %39 = tpu.dynamic_rotate %25 by %c15_i32_34 dim 1 : vector<16x16x256xf32>, i32 -> vector<16x16x256xf32>
    %cst_35 = arith.constant 0.000000e+00 : f32
    %40 = vector.shape_cast %21 : vector<1x16x1xi1> to vector<1x16x1xi1>
    %41 = vector.broadcast %40 : vector<1x16x1xi1> to vector<16x16x256xi1>
    %42 = vector.broadcast %cst_35 : f32 to vector<16x16x256xf32>
    %43 = arith.select %41, %39, %42 : vector<16x16x256xi1>, vector<16x16x256xf32>
    %44 = arith.truncf %43 : vector<16x16x256xf32> to vector<16x16x256xbf16>
    %c2_36 = arith.constant 2 : index
    %c1_37 = arith.constant 1 : index
    %c0_38 = arith.constant 0 : index
    %c0_39 = arith.constant 0 : index
    %45 = vector.load %arg5[%c2_36, %c1_37, %c0_38, %c0_39] : memref<3x18x16x256xbf16, #tpu.memory_space<vmem>>, vector<1x16x16x256xbf16>
    %46 = vector.shape_cast %45 : vector<1x16x16x256xbf16> to vector<16x16x256xbf16>
    %47 = vector.shape_cast %44 : vector<16x16x256xbf16> to vector<1x16x16x256xbf16>
    tpu.vector_store %arg5[%c2_36, %c1_37, %c0_38, %c0_39], %47 {strides = array<i32>} : memref<3x18x16x256xbf16, #tpu.memory_space<vmem>>, vector<1x16x16x256xbf16>,
    %c0_40 = arith.constant 0 : index
    %c0_41 = arith.constant 0 : index
    %c0_42 = arith.constant 0 : index
    %c0_43 = arith.constant 0 : index
    %48 = vector.load %arg5[%c0_40, %c0_41, %c0_42, %c0_43] : memref<3x18x16x256xbf16, #tpu.memory_space<vmem>>, vector<1x16x16x256xbf16>
    %49 = vector.shape_cast %48 : vector<1x16x16x256xbf16> to vector<16x16x256xbf16>
    %50 = vector.shape_cast %49 : vector<16x16x256xbf16> to vector<256x256xbf16>
    %c0_44 = arith.constant 0 : index
    %c0_45 = arith.constant 0 : index
    %c0_46 = arith.constant 0 : index
    %51 = vector.load %arg2[%c0_44, %c0_45, %c0_46] : memref<9x256x256xbf16, #tpu.memory_space<vmem>>, vector<1x256x256xbf16>
    %52 = vector.shape_cast %51 : vector<1x256x256xbf16> to vector<256x256xbf16>
    %cst_47 = arith.constant dense<0.000000e+00> : vector<256x256xf32>
    %53 = tpu.matmul %50, %52, %cst_47 {dimension_numbers = #tpu.dot_dimension_numbers<[1], [0], [0], [1], [0, 0, 1, 1], [], []>} : vector<256x256xbf16>, vector<256x256xbf16>, vector<256x256xf32> -> vector<256x256xf32>
    %c1_48 = arith.constant 1 : index
    %c0_49 = arith.constant 0 : index
    %c0_50 = arith.constant 0 : index
    %c0_51 = arith.constant 0 : index
    %54 = vector.load %arg5[%c1_48, %c0_49, %c0_50, %c0_51] : memref<3x18x16x256xbf16, #tpu.memory_space<vmem>>, vector<1x16x16x256xbf16>
    %55 = vector.shape_cast %54 : vector<1x16x16x256xbf16> to vector<16x16x256xbf16>
    %56 = vector.shape_cast %55 : vector<16x16x256xbf16> to vector<256x256xbf16>
    %c1_52 = arith.constant 1 : index
    %c0_53 = arith.constant 0 : index
    %c0_54 = arith.constant 0 : index
    %57 = vector.load %arg2[%c1_52, %c0_53, %c0_54] : memref<9x256x256xbf16, #tpu.memory_space<vmem>>, vector<1x256x256xbf16>
    %58 = vector.shape_cast %57 : vector<1x256x256xbf16> to vector<256x256xbf16>
    %cst_55 = arith.constant dense<0.000000e+00> : vector<256x256xf32>
    %59 = tpu.matmul %56, %58, %cst_55 {dimension_numbers = #tpu.dot_dimension_numbers<[1], [0], [0], [1], [0, 0, 1, 1], [], []>} : vector<256x256xbf16>, vector<256x256xbf16>, vector<256x256xf32> -> vector<256x256xf32>
    %60 = arith.addf %53, %59 : vector<256x256xf32>
    %c2_56 = arith.constant 2 : index
    %c0_57 = arith.constant 0 : index
    %c0_58 = arith.constant 0 : index
    %c0_59 = arith.constant 0 : index
    %61 = vector.load %arg5[%c2_56, %c0_57, %c0_58, %c0_59] : memref<3x18x16x256xbf16, #tpu.memory_space<vmem>>, vector<1x16x16x256xbf16>
    %62 = vector.shape_cast %61 : vector<1x16x16x256xbf16> to vector<16x16x256xbf16>
    %63 = vector.shape_cast %62 : vector<16x16x256xbf16> to vector<256x256xbf16>
    %c2_60 = arith.constant 2 : index
    %c0_61 = arith.constant 0 : index
    %c0_62 = arith.constant 0 : index
    %64 = vector.load %arg2[%c2_60, %c0_61, %c0_62] : memref<9x256x256xbf16, #tpu.memory_space<vmem>>, vector<1x256x256xbf16>
    %65 = vector.shape_cast %64 : vector<1x256x256xbf16> to vector<256x256xbf16>
    %cst_63 = arith.constant dense<0.000000e+00> : vector<256x256xf32>
    %66 = tpu.matmul %63, %65, %cst_63 {dimension_numbers = #tpu.dot_dimension_numbers<[1], [0], [0], [1], [0, 0, 1, 1], [], []>} : vector<256x256xbf16>, vector<256x256xbf16>, vector<256x256xf32> -> vector<256x256xf32>
    %67 = arith.addf %60, %66 : vector<256x256xf32>
    %c0_64 = arith.constant 0 : index
    %c0_65 = arith.constant 0 : index
    %68 = vector.load %arg6[%c0_64, %c0_65] : memref<256x256xf32, #tpu.memory_space<vmem>>, vector<256x256xf32>
    tpu.vector_store %arg6[%c0_64, %c0_65], %67 {strides = array<i32>} : memref<256x256xf32, #tpu.memory_space<vmem>>, vector<256x256xf32>,
    %c0_66 = arith.constant 0 : index
    %c1_67 = arith.constant 1 : index
    %c0_68 = arith.constant 0 : index
    %c0_69 = arith.constant 0 : index
    %69 = vector.load %arg5[%c0_66, %c1_67, %c0_68, %c0_69] : memref<3x18x16x256xbf16, #tpu.memory_space<vmem>>, vector<1x16x16x256xbf16>
    %70 = vector.shape_cast %69 : vector<1x16x16x256xbf16> to vector<16x16x256xbf16>
    %71 = vector.shape_cast %70 : vector<16x16x256xbf16> to vector<256x256xbf16>
    %c3 = arith.constant 3 : index
    %c0_70 = arith.constant 0 : index
    %c0_71 = arith.constant 0 : index
    %72 = vector.load %arg2[%c3, %c0_70, %c0_71] : memref<9x256x256xbf16, #tpu.memory_space<vmem>>, vector<1x256x256xbf16>
    %73 = vector.shape_cast %72 : vector<1x256x256xbf16> to vector<256x256xbf16>
    %cst_72 = arith.constant dense<0.000000e+00> : vector<256x256xf32>
    %74 = tpu.matmul %71, %73, %cst_72 {dimension_numbers = #tpu.dot_dimension_numbers<[1], [0], [0], [1], [0, 0, 1, 1], [], []>} : vector<256x256xbf16>, vector<256x256xbf16>, vector<256x256xf32> -> vector<256x256xf32>
    %c1_73 = arith.constant 1 : index
    %c1_74 = arith.constant 1 : index
    %c0_75 = arith.constant 0 : index
    %c0_76 = arith.constant 0 : index
    %75 = vector.load %arg5[%c1_73, %c1_74, %c0_75, %c0_76] : memref<3x18x16x256xbf16, #tpu.memory_space<vmem>>, vector<1x16x16x256xbf16>
    %76 = vector.shape_cast %75 : vector<1x16x16x256xbf16> to vector<16x16x256xbf16>
    %77 = vector.shape_cast %76 : vector<16x16x256xbf16> to vector<256x256xbf16>
    %c4 = arith.constant 4 : index
    %c0_77 = arith.constant 0 : index
    %c0_78 = arith.constant 0 : index
    %78 = vector.load %arg2[%c4, %c0_77, %c0_78] : memref<9x256x256xbf16, #tpu.memory_space<vmem>>, vector<1x256x256xbf16>
    %79 = vector.shape_cast %78 : vector<1x256x256xbf16> to vector<256x256xbf16>
    %cst_79 = arith.constant dense<0.000000e+00> : vector<256x256xf32>
    %80 = tpu.matmul %77, %79, %cst_79 {dimension_numbers = #tpu.dot_dimension_numbers<[1], [0], [0], [1], [0, 0, 1, 1], [], []>} : vector<256x256xbf16>, vector<256x256xbf16>, vector<256x256xf32> -> vector<256x256xf32>
    %81 = arith.addf %74, %80 : vector<256x256xf32>
    %c2_80 = arith.constant 2 : index
    %c1_81 = arith.constant 1 : index
    %c0_82 = arith.constant 0 : index
    %c0_83 = arith.constant 0 : index
    %82 = vector.load %arg5[%c2_80, %c1_81, %c0_82, %c0_83] : memref<3x18x16x256xbf16, #tpu.memory_space<vmem>>, vector<1x16x16x256xbf16>
    %83 = vector.shape_cast %82 : vector<1x16x16x256xbf16> to vector<16x16x256xbf16>
    %84 = vector.shape_cast %83 : vector<16x16x256xbf16> to vector<256x256xbf16>
    %c5 = arith.constant 5 : index
    %c0_84 = arith.constant 0 : index
    %c0_85 = arith.constant 0 : index
    %85 = vector.load %arg2[%c5, %c0_84, %c0_85] : memref<9x256x256xbf16, #tpu.memory_space<vmem>>, vector<1x256x256xbf16>
    %86 = vector.shape_cast %85 : vector<1x256x256xbf16> to vector<256x256xbf16>
    %cst_86 = arith.constant dense<0.000000e+00> : vector<256x256xf32>
    %87 = tpu.matmul %84, %86, %cst_86 {dimension_numbers = #tpu.dot_dimension_numbers<[1], [0], [0], [1], [0, 0, 1, 1], [], []>} : vector<256x256xbf16>, vector<256x256xbf16>, vector<256x256xf32> -> vector<256x256xf32>
    %88 = arith.addf %81, %87 : vector<256x256xf32>
    %c0_87 = arith.constant 0 : index
    %c0_88 = arith.constant 0 : index
    %89 = vector.load %arg6[%c0_87, %c0_88] : memref<256x256xf32, #tpu.memory_space<vmem>>, vector<256x256xf32>
    %90 = arith.addf %89, %88 : vector<256x256xf32>
    %c0_89 = arith.constant 0 : index
    %c0_90 = arith.constant 0 : index
    %91 = vector.load %arg6[%c0_89, %c0_90] : memref<256x256xf32, #tpu.memory_space<vmem>>, vector<256x256xf32>
    tpu.vector_store %arg6[%c0_89, %c0_90], %90 {strides = array<i32>} : memref<256x256xf32, #tpu.memory_space<vmem>>, vector<256x256xf32>,
    %c0_91 = arith.constant 0 : index
    %c2_92 = arith.constant 2 : index
    %c0_93 = arith.constant 0 : index
    %c0_94 = arith.constant 0 : index
    %92 = vector.load %arg5[%c0_91, %c2_92, %c0_93, %c0_94] : memref<3x18x16x256xbf16, #tpu.memory_space<vmem>>, vector<1x16x16x256xbf16>
    %93 = vector.shape_cast %92 : vector<1x16x16x256xbf16> to vector<16x16x256xbf16>
    %94 = vector.shape_cast %93 : vector<16x16x256xbf16> to vector<256x256xbf16>
    %c6 = arith.constant 6 : index
    %c0_95 = arith.constant 0 : index
    %c0_96 = arith.constant 0 : index
    %95 = vector.load %arg2[%c6, %c0_95, %c0_96] : memref<9x256x256xbf16, #tpu.memory_space<vmem>>, vector<1x256x256xbf16>
    %96 = vector.shape_cast %95 : vector<1x256x256xbf16> to vector<256x256xbf16>
    %cst_97 = arith.constant dense<0.000000e+00> : vector<256x256xf32>
    %97 = tpu.matmul %94, %96, %cst_97 {dimension_numbers = #tpu.dot_dimension_numbers<[1], [0], [0], [1], [0, 0, 1, 1], [], []>} : vector<256x256xbf16>, vector<256x256xbf16>, vector<256x256xf32> -> vector<256x256xf32>
    %c1_98 = arith.constant 1 : index
    %c2_99 = arith.constant 2 : index
    %c0_100 = arith.constant 0 : index
    %c0_101 = arith.constant 0 : index
    %98 = vector.load %arg5[%c1_98, %c2_99, %c0_100, %c0_101] : memref<3x18x16x256xbf16, #tpu.memory_space<vmem>>, vector<1x16x16x256xbf16>
    %99 = vector.shape_cast %98 : vector<1x16x16x256xbf16> to vector<16x16x256xbf16>
    %100 = vector.shape_cast %99 : vector<16x16x256xbf16> to vector<256x256xbf16>
    %c7 = arith.constant 7 : index
    %c0_102 = arith.constant 0 : index
    %c0_103 = arith.constant 0 : index
    %101 = vector.load %arg2[%c7, %c0_102, %c0_103] : memref<9x256x256xbf16, #tpu.memory_space<vmem>>, vector<1x256x256xbf16>
    %102 = vector.shape_cast %101 : vector<1x256x256xbf16> to vector<256x256xbf16>
    %cst_104 = arith.constant dense<0.000000e+00> : vector<256x256xf32>
    %103 = tpu.matmul %100, %102, %cst_104 {dimension_numbers = #tpu.dot_dimension_numbers<[1], [0], [0], [1], [0, 0, 1, 1], [], []>} : vector<256x256xbf16>, vector<256x256xbf16>, vector<256x256xf32> -> vector<256x256xf32>
    %104 = arith.addf %97, %103 : vector<256x256xf32>
    %c2_105 = arith.constant 2 : index
    %c2_106 = arith.constant 2 : index
    %c0_107 = arith.constant 0 : index
    %c0_108 = arith.constant 0 : index
    %105 = vector.load %arg5[%c2_105, %c2_106, %c0_107, %c0_108] : memref<3x18x16x256xbf16, #tpu.memory_space<vmem>>, vector<1x16x16x256xbf16>
    %106 = vector.shape_cast %105 : vector<1x16x16x256xbf16> to vector<16x16x256xbf16>
    %107 = vector.shape_cast %106 : vector<16x16x256xbf16> to vector<256x256xbf16>
    %c8 = arith.constant 8 : index
    %c0_109 = arith.constant 0 : index
    %c0_110 = arith.constant 0 : index
    %108 = vector.load %arg2[%c8, %c0_109, %c0_110] : memref<9x256x256xbf16, #tpu.memory_space<vmem>>, vector<1x256x256xbf16>
    %109 = vector.shape_cast %108 : vector<1x256x256xbf16> to vector<256x256xbf16>
    %cst_111 = arith.constant dense<0.000000e+00> : vector<256x256xf32>
    %110 = tpu.matmul %107, %109, %cst_111 {dimension_numbers = #tpu.dot_dimension_numbers<[1], [0], [0], [1], [0, 0, 1, 1], [], []>} : vector<256x256xbf16>, vector<256x256xbf16>, vector<256x256xf32> -> vector<256x256xf32>
    %111 = arith.addf %104, %110 : vector<256x256xf32>
    %c0_112 = arith.constant 0 : index
    %c0_113 = arith.constant 0 : index
    %112 = vector.load %arg6[%c0_112, %c0_113] : memref<256x256xf32, #tpu.memory_space<vmem>>, vector<256x256xf32>
    %113 = arith.addf %112, %111 : vector<256x256xf32>
    %c0_114 = arith.constant 0 : index
    %c0_115 = arith.constant 0 : index
    %114 = vector.load %arg6[%c0_114, %c0_115] : memref<256x256xf32, #tpu.memory_space<vmem>>, vector<256x256xf32>
    tpu.vector_store %arg6[%c0_114, %c0_115], %113 {strides = array<i32>} : memref<256x256xf32, #tpu.memory_space<vmem>>, vector<256x256xf32>,
    %c0_116 = arith.constant 0 : index
    %c0_117 = arith.constant 0 : index
    %115 = vector.load %arg6[%c0_116, %c0_117] : memref<256x256xf32, #tpu.memory_space<vmem>>, vector<256x256xf32>
    %cst_118 = arith.constant 0.000000e+00 : f32
    %116 = vector.broadcast %cst_118 : f32 to vector<256x256xf32>
    %117 = arith.maximumf %115, %116 : vector<256x256xf32>
    %118 = vector.shape_cast %117 : vector<256x256xf32> to vector<16x16x256xf32>
    %c1_i32_119 = arith.constant 1 : i32
    %119 = tpu.dynamic_rotate %118 by %c1_i32_119 dim 1 : vector<16x16x256xf32>, i32 -> vector<16x16x256xf32>
    %cst_120 = arith.constant 0.000000e+00 : f32
    %120 = vector.shape_cast %23 : vector<1x16x1xi1> to vector<1x16x1xi1>
    %121 = vector.broadcast %120 : vector<1x16x1xi1> to vector<16x16x256xi1>
    %122 = vector.broadcast %cst_120 : f32 to vector<16x16x256xf32>
    %123 = arith.select %121, %119, %122 : vector<16x16x256xi1>, vector<16x16x256xf32>
    %124 = arith.truncf %123 : vector<16x16x256xf32> to vector<16x16x256xbf16>
    %c0_121 = arith.constant 0 : index
    %c1_122 = arith.constant 1 : index
    %c0_123 = arith.constant 0 : index
    %c0_124 = arith.constant 0 : index
    %125 = vector.load %arg5[%c0_121, %c1_122, %c0_123, %c0_124] : memref<3x18x16x256xbf16, #tpu.memory_space<vmem>>, vector<1x16x16x256xbf16>
    %126 = vector.shape_cast %125 : vector<1x16x16x256xbf16> to vector<16x16x256xbf16>
    %127 = vector.shape_cast %124 : vector<16x16x256xbf16> to vector<1x16x16x256xbf16>
    tpu.vector_store %arg5[%c0_121, %c1_122, %c0_123, %c0_124], %127 {strides = array<i32>} : memref<3x18x16x256xbf16, #tpu.memory_space<vmem>>, vector<1x16x16x256xbf16>,
    %128 = arith.truncf %118 : vector<16x16x256xf32> to vector<16x16x256xbf16>
    %c1_125 = arith.constant 1 : index
    %c1_126 = arith.constant 1 : index
    %c0_127 = arith.constant 0 : index
    %c0_128 = arith.constant 0 : index
    %129 = vector.load %arg5[%c1_125, %c1_126, %c0_127, %c0_128] : memref<3x18x16x256xbf16, #tpu.memory_space<vmem>>, vector<1x16x16x256xbf16>
    %130 = vector.shape_cast %129 : vector<1x16x16x256xbf16> to vector<16x16x256xbf16>
    %131 = vector.shape_cast %128 : vector<16x16x256xbf16> to vector<1x16x16x256xbf16>
    tpu.vector_store %arg5[%c1_125, %c1_126, %c0_127, %c0_128], %131 {strides = array<i32>} : memref<3x18x16x256xbf16, #tpu.memory_space<vmem>>, vector<1x16x16x256xbf16>,
    %c15_i32_129 = arith.constant 15 : i32
    %132 = tpu.dynamic_rotate %118 by %c15_i32_129 dim 1 : vector<16x16x256xf32>, i32 -> vector<16x16x256xf32>
    %cst_130 = arith.constant 0.000000e+00 : f32
    %133 = vector.shape_cast %21 : vector<1x16x1xi1> to vector<1x16x1xi1>
    %134 = vector.broadcast %133 : vector<1x16x1xi1> to vector<16x16x256xi1>
    %135 = vector.broadcast %cst_130 : f32 to vector<16x16x256xf32>
    %136 = arith.select %134, %132, %135 : vector<16x16x256xi1>, vector<16x16x256xf32>
    %137 = arith.truncf %136 : vector<16x16x256xf32> to vector<16x16x256xbf16>
    %c2_131 = arith.constant 2 : index
    %c1_132 = arith.constant 1 : index
    %c0_133 = arith.constant 0 : index
    %c0_134 = arith.constant 0 : index
    %138 = vector.load %arg5[%c2_131, %c1_132, %c0_133, %c0_134] : memref<3x18x16x256xbf16, #tpu.memory_space<vmem>>, vector<1x16x16x256xbf16>
    %139 = vector.shape_cast %138 : vector<1x16x16x256xbf16> to vector<16x16x256xbf16>
    %140 = vector.shape_cast %137 : vector<16x16x256xbf16> to vector<1x16x16x256xbf16>
    tpu.vector_store %arg5[%c2_131, %c1_132, %c0_133, %c0_134], %140 {strides = array<i32>} : memref<3x18x16x256xbf16, #tpu.memory_space<vmem>>, vector<1x16x16x256xbf16>,
    %c0_135 = arith.constant 0 : index
    %c0_136 = arith.constant 0 : index
    %c0_137 = arith.constant 0 : index
    %c0_138 = arith.constant 0 : index
    %141 = vector.load %arg5[%c0_135, %c0_136, %c0_137, %c0_138] : memref<3x18x16x256xbf16, #tpu.memory_space<vmem>>, vector<1x16x16x256xbf16>
    %142 = vector.shape_cast %141 : vector<1x16x16x256xbf16> to vector<16x16x256xbf16>
    %143 = vector.shape_cast %142 : vector<16x16x256xbf16> to vector<256x256xbf16>
    %c0_139 = arith.constant 0 : index
    %c0_140 = arith.constant 0 : index
    %c0_141 = arith.constant 0 : index
    %144 = vector.load %arg3[%c0_139, %c0_140, %c0_141] : memref<9x256x256xbf16, #tpu.memory_space<vmem>>, vector<1x256x256xbf16>
    %145 = vector.shape_cast %144 : vector<1x256x256xbf16> to vector<256x256xbf16>
    %cst_142 = arith.constant dense<0.000000e+00> : vector<256x256xf32>
    %146 = tpu.matmul %143, %145, %cst_142 {dimension_numbers = #tpu.dot_dimension_numbers<[1], [0], [0], [1], [0, 0, 1, 1], [], []>} : vector<256x256xbf16>, vector<256x256xbf16>, vector<256x256xf32> -> vector<256x256xf32>
    %c1_143 = arith.constant 1 : index
    %c0_144 = arith.constant 0 : index
    %c0_145 = arith.constant 0 : index
    %c0_146 = arith.constant 0 : index
    %147 = vector.load %arg5[%c1_143, %c0_144, %c0_145, %c0_146] : memref<3x18x16x256xbf16, #tpu.memory_space<vmem>>, vector<1x16x16x256xbf16>
    %148 = vector.shape_cast %147 : vector<1x16x16x256xbf16> to vector<16x16x256xbf16>
    %149 = vector.shape_cast %148 : vector<16x16x256xbf16> to vector<256x256xbf16>
    %c1_147 = arith.constant 1 : index
    %c0_148 = arith.constant 0 : index
    %c0_149 = arith.constant 0 : index
    %150 = vector.load %arg3[%c1_147, %c0_148, %c0_149] : memref<9x256x256xbf16, #tpu.memory_space<vmem>>, vector<1x256x256xbf16>
    %151 = vector.shape_cast %150 : vector<1x256x256xbf16> to vector<256x256xbf16>
    %cst_150 = arith.constant dense<0.000000e+00> : vector<256x256xf32>
    %152 = tpu.matmul %149, %151, %cst_150 {dimension_numbers = #tpu.dot_dimension_numbers<[1], [0], [0], [1], [0, 0, 1, 1], [], []>} : vector<256x256xbf16>, vector<256x256xbf16>, vector<256x256xf32> -> vector<256x256xf32>
    %153 = arith.addf %146, %152 : vector<256x256xf32>
    %c2_151 = arith.constant 2 : index
    %c0_152 = arith.constant 0 : index
    %c0_153 = arith.constant 0 : index
    %c0_154 = arith.constant 0 : index
    %154 = vector.load %arg5[%c2_151, %c0_152, %c0_153, %c0_154] : memref<3x18x16x256xbf16, #tpu.memory_space<vmem>>, vector<1x16x16x256xbf16>
    %155 = vector.shape_cast %154 : vector<1x16x16x256xbf16> to vector<16x16x256xbf16>
    %156 = vector.shape_cast %155 : vector<16x16x256xbf16> to vector<256x256xbf16>
    %c2_155 = arith.constant 2 : index
    %c0_156 = arith.constant 0 : index
    %c0_157 = arith.constant 0 : index
    %157 = vector.load %arg3[%c2_155, %c0_156, %c0_157] : memref<9x256x256xbf16, #tpu.memory_space<vmem>>, vector<1x256x256xbf16>
    %158 = vector.shape_cast %157 : vector<1x256x256xbf16> to vector<256x256xbf16>
    %cst_158 = arith.constant dense<0.000000e+00> : vector<256x256xf32>
    %159 = tpu.matmul %156, %158, %cst_158 {dimension_numbers = #tpu.dot_dimension_numbers<[1], [0], [0], [1], [0, 0, 1, 1], [], []>} : vector<256x256xbf16>, vector<256x256xbf16>, vector<256x256xf32> -> vector<256x256xf32>
    %160 = arith.addf %153, %159 : vector<256x256xf32>
    %c0_159 = arith.constant 0 : index
    %c0_160 = arith.constant 0 : index
    %161 = vector.load %arg6[%c0_159, %c0_160] : memref<256x256xf32, #tpu.memory_space<vmem>>, vector<256x256xf32>
    tpu.vector_store %arg6[%c0_159, %c0_160], %160 {strides = array<i32>} : memref<256x256xf32, #tpu.memory_space<vmem>>, vector<256x256xf32>,
    %c0_161 = arith.constant 0 : index
    %c1_162 = arith.constant 1 : index
    %c0_163 = arith.constant 0 : index
    %c0_164 = arith.constant 0 : index
    %162 = vector.load %arg5[%c0_161, %c1_162, %c0_163, %c0_164] : memref<3x18x16x256xbf16, #tpu.memory_space<vmem>>, vector<1x16x16x256xbf16>
    %163 = vector.shape_cast %162 : vector<1x16x16x256xbf16> to vector<16x16x256xbf16>
    %164 = vector.shape_cast %163 : vector<16x16x256xbf16> to vector<256x256xbf16>
    %c3_165 = arith.constant 3 : index
    %c0_166 = arith.constant 0 : index
    %c0_167 = arith.constant 0 : index
    %165 = vector.load %arg3[%c3_165, %c0_166, %c0_167] : memref<9x256x256xbf16, #tpu.memory_space<vmem>>, vector<1x256x256xbf16>
    %166 = vector.shape_cast %165 : vector<1x256x256xbf16> to vector<256x256xbf16>
    %cst_168 = arith.constant dense<0.000000e+00> : vector<256x256xf32>
    %167 = tpu.matmul %164, %166, %cst_168 {dimension_numbers = #tpu.dot_dimension_numbers<[1], [0], [0], [1], [0, 0, 1, 1], [], []>} : vector<256x256xbf16>, vector<256x256xbf16>, vector<256x256xf32> -> vector<256x256xf32>
    %c1_169 = arith.constant 1 : index
    %c1_170 = arith.constant 1 : index
    %c0_171 = arith.constant 0 : index
    %c0_172 = arith.constant 0 : index
    %168 = vector.load %arg5[%c1_169, %c1_170, %c0_171, %c0_172] : memref<3x18x16x256xbf16, #tpu.memory_space<vmem>>, vector<1x16x16x256xbf16>
    %169 = vector.shape_cast %168 : vector<1x16x16x256xbf16> to vector<16x16x256xbf16>
    %170 = vector.shape_cast %169 : vector<16x16x256xbf16> to vector<256x256xbf16>
    %c4_173 = arith.constant 4 : index
    %c0_174 = arith.constant 0 : index
    %c0_175 = arith.constant 0 : index
    %171 = vector.load %arg3[%c4_173, %c0_174, %c0_175] : memref<9x256x256xbf16, #tpu.memory_space<vmem>>, vector<1x256x256xbf16>
    %172 = vector.shape_cast %171 : vector<1x256x256xbf16> to vector<256x256xbf16>
    %cst_176 = arith.constant dense<0.000000e+00> : vector<256x256xf32>
    %173 = tpu.matmul %170, %172, %cst_176 {dimension_numbers = #tpu.dot_dimension_numbers<[1], [0], [0], [1], [0, 0, 1, 1], [], []>} : vector<256x256xbf16>, vector<256x256xbf16>, vector<256x256xf32> -> vector<256x256xf32>
    %174 = arith.addf %167, %173 : vector<256x256xf32>
    %c2_177 = arith.constant 2 : index
    %c1_178 = arith.constant 1 : index
    %c0_179 = arith.constant 0 : index
    %c0_180 = arith.constant 0 : index
    %175 = vector.load %arg5[%c2_177, %c1_178, %c0_179, %c0_180] : memref<3x18x16x256xbf16, #tpu.memory_space<vmem>>, vector<1x16x16x256xbf16>
    %176 = vector.shape_cast %175 : vector<1x16x16x256xbf16> to vector<16x16x256xbf16>
    %177 = vector.shape_cast %176 : vector<16x16x256xbf16> to vector<256x256xbf16>
    %c5_181 = arith.constant 5 : index
    %c0_182 = arith.constant 0 : index
    %c0_183 = arith.constant 0 : index
    %178 = vector.load %arg3[%c5_181, %c0_182, %c0_183] : memref<9x256x256xbf16, #tpu.memory_space<vmem>>, vector<1x256x256xbf16>
    %179 = vector.shape_cast %178 : vector<1x256x256xbf16> to vector<256x256xbf16>
    %cst_184 = arith.constant dense<0.000000e+00> : vector<256x256xf32>
    %180 = tpu.matmul %177, %179, %cst_184 {dimension_numbers = #tpu.dot_dimension_numbers<[1], [0], [0], [1], [0, 0, 1, 1], [], []>} : vector<256x256xbf16>, vector<256x256xbf16>, vector<256x256xf32> -> vector<256x256xf32>
    %181 = arith.addf %174, %180 : vector<256x256xf32>
    %c0_185 = arith.constant 0 : index
    %c0_186 = arith.constant 0 : index
    %182 = vector.load %arg6[%c0_185, %c0_186] : memref<256x256xf32, #tpu.memory_space<vmem>>, vector<256x256xf32>
    %183 = arith.addf %182, %181 : vector<256x256xf32>
    %c0_187 = arith.constant 0 : index
    %c0_188 = arith.constant 0 : index
    %184 = vector.load %arg6[%c0_187, %c0_188] : memref<256x256xf32, #tpu.memory_space<vmem>>, vector<256x256xf32>
    tpu.vector_store %arg6[%c0_187, %c0_188], %183 {strides = array<i32>} : memref<256x256xf32, #tpu.memory_space<vmem>>, vector<256x256xf32>,
    %c0_189 = arith.constant 0 : index
    %c2_190 = arith.constant 2 : index
    %c0_191 = arith.constant 0 : index
    %c0_192 = arith.constant 0 : index
    %185 = vector.load %arg5[%c0_189, %c2_190, %c0_191, %c0_192] : memref<3x18x16x256xbf16, #tpu.memory_space<vmem>>, vector<1x16x16x256xbf16>
    %186 = vector.shape_cast %185 : vector<1x16x16x256xbf16> to vector<16x16x256xbf16>
    %187 = vector.shape_cast %186 : vector<16x16x256xbf16> to vector<256x256xbf16>
    %c6_193 = arith.constant 6 : index
    %c0_194 = arith.constant 0 : index
    %c0_195 = arith.constant 0 : index
    %188 = vector.load %arg3[%c6_193, %c0_194, %c0_195] : memref<9x256x256xbf16, #tpu.memory_space<vmem>>, vector<1x256x256xbf16>
    %189 = vector.shape_cast %188 : vector<1x256x256xbf16> to vector<256x256xbf16>
    %cst_196 = arith.constant dense<0.000000e+00> : vector<256x256xf32>
    %190 = tpu.matmul %187, %189, %cst_196 {dimension_numbers = #tpu.dot_dimension_numbers<[1], [0], [0], [1], [0, 0, 1, 1], [], []>} : vector<256x256xbf16>, vector<256x256xbf16>, vector<256x256xf32> -> vector<256x256xf32>
    %c1_197 = arith.constant 1 : index
    %c2_198 = arith.constant 2 : index
    %c0_199 = arith.constant 0 : index
    %c0_200 = arith.constant 0 : index
    %191 = vector.load %arg5[%c1_197, %c2_198, %c0_199, %c0_200] : memref<3x18x16x256xbf16, #tpu.memory_space<vmem>>, vector<1x16x16x256xbf16>
    %192 = vector.shape_cast %191 : vector<1x16x16x256xbf16> to vector<16x16x256xbf16>
    %193 = vector.shape_cast %192 : vector<16x16x256xbf16> to vector<256x256xbf16>
    %c7_201 = arith.constant 7 : index
    %c0_202 = arith.constant 0 : index
    %c0_203 = arith.constant 0 : index
    %194 = vector.load %arg3[%c7_201, %c0_202, %c0_203] : memref<9x256x256xbf16, #tpu.memory_space<vmem>>, vector<1x256x256xbf16>
    %195 = vector.shape_cast %194 : vector<1x256x256xbf16> to vector<256x256xbf16>
    %cst_204 = arith.constant dense<0.000000e+00> : vector<256x256xf32>
    %196 = tpu.matmul %193, %195, %cst_204 {dimension_numbers = #tpu.dot_dimension_numbers<[1], [0], [0], [1], [0, 0, 1, 1], [], []>} : vector<256x256xbf16>, vector<256x256xbf16>, vector<256x256xf32> -> vector<256x256xf32>
    %197 = arith.addf %190, %196 : vector<256x256xf32>
    %c2_205 = arith.constant 2 : index
    %c2_206 = arith.constant 2 : index
    %c0_207 = arith.constant 0 : index
    %c0_208 = arith.constant 0 : index
    %198 = vector.load %arg5[%c2_205, %c2_206, %c0_207, %c0_208] : memref<3x18x16x256xbf16, #tpu.memory_space<vmem>>, vector<1x16x16x256xbf16>
    %199 = vector.shape_cast %198 : vector<1x16x16x256xbf16> to vector<16x16x256xbf16>
    %200 = vector.shape_cast %199 : vector<16x16x256xbf16> to vector<256x256xbf16>
    %c8_209 = arith.constant 8 : index
    %c0_210 = arith.constant 0 : index
    %c0_211 = arith.constant 0 : index
    %201 = vector.load %arg3[%c8_209, %c0_210, %c0_211] : memref<9x256x256xbf16, #tpu.memory_space<vmem>>, vector<1x256x256xbf16>
    %202 = vector.shape_cast %201 : vector<1x256x256xbf16> to vector<256x256xbf16>
    %cst_212 = arith.constant dense<0.000000e+00> : vector<256x256xf32>
    %203 = tpu.matmul %200, %202, %cst_212 {dimension_numbers = #tpu.dot_dimension_numbers<[1], [0], [0], [1], [0, 0, 1, 1], [], []>} : vector<256x256xbf16>, vector<256x256xbf16>, vector<256x256xf32> -> vector<256x256xf32>
    %204 = arith.addf %197, %203 : vector<256x256xf32>
    %c0_213 = arith.constant 0 : index
    %c0_214 = arith.constant 0 : index
    %205 = vector.load %arg6[%c0_213, %c0_214] : memref<256x256xf32, #tpu.memory_space<vmem>>, vector<256x256xf32>
    %206 = arith.addf %205, %204 : vector<256x256xf32>
    %c0_215 = arith.constant 0 : index
    %c0_216 = arith.constant 0 : index
    %207 = vector.load %arg6[%c0_215, %c0_216] : memref<256x256xf32, #tpu.memory_space<vmem>>, vector<256x256xf32>
    tpu.vector_store %arg6[%c0_215, %c0_216], %206 {strides = array<i32>} : memref<256x256xf32, #tpu.memory_space<vmem>>, vector<256x256xf32>,
    %c0_217 = arith.constant 0 : index
    %c0_218 = arith.constant 0 : index
    %208 = vector.load %arg6[%c0_217, %c0_218] : memref<256x256xf32, #tpu.memory_space<vmem>>, vector<256x256xf32>
    %209 = vector.shape_cast %208 : vector<256x256xf32> to vector<16x16x256xf32>
    %cst_219 = arith.constant 1.000000e-01 : f32
    %210 = vector.broadcast %cst_219 : f32 to vector<16x16x256xf32>
    %211 = arith.mulf %209, %210 : vector<16x16x256xf32>
    %c0_220 = arith.constant 0 : index
    %c0_221 = arith.constant 0 : index
    %c0_222 = arith.constant 0 : index
    %c0_223 = arith.constant 0 : index
    %212 = vector.load %arg1[%c0_220, %c0_221, %c0_222, %c0_223] : memref<1x16x16x256xf32, #tpu.memory_space<vmem>>, vector<1x16x16x256xf32>
    %213 = vector.shape_cast %212 : vector<1x16x16x256xf32> to vector<16x16x256xf32>
    %214 = arith.addf %211, %213 : vector<16x16x256xf32>
    %c0_224 = arith.constant 0 : index
    %c0_225 = arith.constant 0 : index
    %c0_226 = arith.constant 0 : index
    %c0_227 = arith.constant 0 : index
    %215 = vector.load %arg4[%c0_224, %c0_225, %c0_226, %c0_227] : memref<1x16x16x256xf32, #tpu.memory_space<vmem>>, vector<1x16x16x256xf32>
    %216 = vector.shape_cast %215 : vector<1x16x16x256xf32> to vector<16x16x256xf32>
    %217 = vector.shape_cast %214 : vector<16x16x256xf32> to vector<1x16x16x256xf32>
    tpu.vector_store %arg4[%c0_224, %c0_225, %c0_226, %c0_227], %217 {strides = array<i32>} : memref<1x16x16x256xf32, #tpu.memory_space<vmem>>, vector<1x16x16x256xf32>,
    return
  }
  func.func @transform_0(%arg0: i32) -> (i32, i32, i32, i32) {
    %c0_i32 = arith.constant 0 : i32
    %c0_i32_0 = arith.constant 0 : i32
    %c0_i32_1 = arith.constant 0 : i32
    %c0_i32_2 = arith.constant 0 : i32
    return %arg0, %c0_i32, %c0_i32_0, %c0_i32_1 : i32, i32, i32, i32
  }
  func.func @transform_1(%arg0: i32) -> (i32, i32, i32) {
    %c0_i32 = arith.constant 0 : i32
    %c0_i32_0 = arith.constant 0 : i32
    %c0_i32_1 = arith.constant 0 : i32
    %c0_i32_2 = arith.constant 0 : i32
    return %c0_i32, %c0_i32_0, %c0_i32_1 : i32, i32, i32
  }
  func.func @transform_2(%arg0: i32) -> (i32, i32, i32) {
    %c0_i32 = arith.constant 0 : i32
    %c0_i32_0 = arith.constant 0 : i32
    %c0_i32_1 = arith.constant 0 : i32
    %c0_i32_2 = arith.constant 0 : i32
    return %c0_i32, %c0_i32_0, %c0_i32_1 : i32, i32, i32
  }
  func.func @transform_3(%arg0: i32) -> (i32, i32, i32, i32) {
    %c0_i32 = arith.constant 0 : i32
    %c0_i32_0 = arith.constant 0 : i32
    %c0_i32_1 = arith.constant 0 : i32
    %c0_i32_2 = arith.constant 0 : i32
    return %arg0, %c0_i32, %c0_i32_0, %c0_i32_1 : i32, i32, i32, i32
  }
}

</mosaic_0001>

<llo_original>
// kernel: residual_block.1
$region0: #{residual_block.1}
  #allocation0 [shape = 'u32[]', space=smem, size = 0x4, offset = 0x4, fixed_abs, tag = 'smem constant byte address 0x4 - core index']
  #allocation1 [shape = 'u32[144,128]{1,0:T(1,128)}', space=vmem, size = 0x12000, scoped, tag = 'internal scratch']
  #allocation2 [shape = 'bf16[3,18,16,256]{3,2,1,0:T(16,128)(2,1)}', space=vmem, size = 0x6c000, scoped, tag = 'scratch operand']
  #allocation3 [shape = 'f32[256,256]{1,0:T(8,128)}', space=vmem, size = 0x40000, scoped, tag = 'scratch operand']
  %s0 = inlined_call_operand.vmem [shape: f32[2,16,16,256], index: 0, kind: input, shape index: {}]
  %s1 = inlined_call_operand.vmem [shape: bf16[9,256,256], index: 1, kind: input, shape index: {}]
  %s2 = inlined_call_operand.vmem [shape: bf16[9,256,256], index: 2, kind: input, shape index: {}]
  %s3 = inlined_call_operand.hbm [shape: f32[2,16,16,256], index: 3, kind: output, shape index: {}]
  %s4 = sld [smem:[#allocation0]]
  $region45: #{residual_block.1} parent=0
    _
  %s6 = ssub.s32 1, %s4
  %s7 = scalar_select 0, %s6, %s4
  $region1: #{residual_block.1} parent=0
    #allocation4 [shape = 'u8[524288]{0}', space=vmem, size = 0x80000, scoped, tag = 'output window, operand 0']
    #allocation5 [shape = 's32[2]{0}', space=sflag, size = 0x8, scoped, tag = 'scoped memory for residual_block.1']
    %8 = vsyncpa [#allocation5], 0
    %s9 = scalar_lea.sflag [#allocation5], 1
    %10 = vsyncpa %s9, 0
    loop: start=0, step=1, limit=4
    $region2: #{residual_block.1} parent=1 // loop_pre_header
      _
    $region3: #{residual_block.1} parent=1 // loop_header
      %s12 = sphi 0, %s16
      %p13 = scmp.ge.s32.totalorder %s12, 4
      %s22 = sphi 0, %s24
      %s25 = sphi 0, %s22
      %s26 = sphi 0, %s25
      %s42 = sphi 0, %s26
      %s46 = sphi 0, %s46
      %s48 = sphi 0, %s46
      %s49 = sphi 0, %s48
      %s63 = sphi 0, %s49
      %s67 = sphi 0, %s67
      %s69 = sphi 0, %s67
      %s70 = sphi 0, %s69
      %s84 = sphi 0, %s70
      %s90 = sphi 0, %s92
      %s93 = sphi 0, %s90
      %s94 = sphi 0, %s93
      %s110 = sphi 0, %s94
    $region4: #{residual_block.1} parent=1 // loop_header_branch
      %15 = sbr.rel (%p13) target = $region8
    $region5: #{residual_block.1} parent=1 // loop_body
      %s17 = ssub.s32 %s12, 1
      %s18 = ssub.s32 %s12, 2
      %s19 = sadd.s32 %s12, 1
      %s20 = ssub.s32 %s12, %s19
      %p21 = scmp.eq.s32.totalorder %s20, 0
      %s23 = sadd.s32 %s22, 1
      %s24 = scalar_select %p21, %s22, %s23
      %p27 = pneg %p21
      %p28 = scmp.eq.s32.totalorder %s12, 1
      %p29 = por %p27, %p28
      %p30 = scmp.ne.s32.totalorder %s22, %s25
      %p31 = scmp.eq.s32.totalorder %s12, 0
      %p32 = por %p30, %p31
      %p33 = scmp.ne.s32.totalorder %s22, %s25
      %p34 = scmp.eq.s32.totalorder %s17, 1
      %p35 = por %p33, %p34
      %p36 = scmp.ne.s32.totalorder %s25, %s26
      %p37 = scmp.eq.s32.totalorder %s17, 0
      %p38 = por %p36, %p37
      %p39 = scmp.ne.s32.totalorder %s25, %s26
      %p40 = scmp.eq.s32.totalorder %s18, 1
      %p41 = por %p39, %p40
      %p43 = scmp.ne.s32.totalorder %s26, %s42
      %p44 = scmp.eq.s32.totalorder %s18, 0
      %p45 = por %p43, %p44
      %s47 = sadd.s32 %s46, 1
      %p50 = scmp.eq.s32.totalorder %s12, 1
      %p51 = scmp.ne.s32.totalorder %s46, %s48
      %p52 = scmp.eq.s32.totalorder %s12, 0
      %p53 = por %p51, %p52
      %p54 = scmp.ne.s32.totalorder %s46, %s48
      %p55 = scmp.eq.s32.totalorder %s17, 1
      %p56 = por %p54, %p55
      %p57 = scmp.ne.s32.totalorder %s48, %s49
      %p58 = scmp.eq.s32.totalorder %s17, 0
      %p59 = por %p57, %p58
      %p60 = scmp.ne.s32.totalorder %s48, %s49
      %p61 = scmp.eq.s32.totalorder %s18, 1
      %p62 = por %p60, %p61
      %p64 = scmp.ne.s32.totalorder %s49, %s63
      %p65 = scmp.eq.s32.totalorder %s18, 0
      %p66 = por %p64, %p65
      %s68 = sadd.s32 %s67, 1
      %p71 = scmp.eq.s32.totalorder %s12, 1
      %p72 = scmp.ne.s32.totalorder %s67, %s69
      %p73 = scmp.eq.s32.totalorder %s12, 0
      %p74 = por %p72, %p73
      %p75 = scmp.ne.s32.totalorder %s67, %s69
      %p76 = scmp.eq.s32.totalorder %s17, 1
      %p77 = por %p75, %p76
      %p78 = scmp.ne.s32.totalorder %s69, %s70
      %p79 = scmp.eq.s32.totalorder %s17, 0
      %p80 = por %p78, %p79
      %p81 = scmp.ne.s32.totalorder %s69, %s70
      %p82 = scmp.eq.s32.totalorder %s18, 1
      %p83 = por %p81, %p82
      %p85 = scmp.ne.s32.totalorder %s70, %s84
      %p86 = scmp.eq.s32.totalorder %s18, 0
      %p87 = por %p85, %p86
      %s88 = ssub.s32 %s12, %s19
      %p89 = scmp.eq.s32.totalorder %s88, 0
      %s91 = sadd.s32 %s90, 1
      %s92 = scalar_select %p89, %s90, %s91
      %p95 = pneg %p89
      %p96 = scmp.eq.s32.totalorder %s12, 1
      %p97 = por %p95, %p96
      %p98 = scmp.ne.s32.totalorder %s90, %s93
      %p99 = scmp.eq.s32.totalorder %s12, 0
      %p100 = por %p98, %p99
      %p101 = scmp.ne.s32.totalorder %s90, %s93
      %p102 = scmp.eq.s32.totalorder %s17, 1
      %p103 = por %p101, %p102
      %p104 = scmp.ne.s32.totalorder %s93, %s94
      %p105 = scmp.eq.s32.totalorder %s17, 0
      %p106 = por %p104, %p105
      %p107 = scmp.ne.s32.totalorder %s93, %s94
      %p108 = scmp.eq.s32.totalorder %s18, 1
      %p109 = por %p107, %p108
      %p111 = scmp.ne.s32.totalorder %s94, %s110
      %p112 = scmp.eq.s32.totalorder %s18, 0
      %p113 = por %p111, %p112
      %p114 = scmp.le.s32.totalorder 1, %s12
      %p115 = scmp.lt.s32.totalorder %s12, 3
      %p116 = pnand %p114, %p115
      %p117 = pneg %p116
      // Predicated region
      $region9: #{residual_block.1} parent=5 // pred_check
        _
      $region10: #{residual_block.1} parent=5 // pred_check_branch
        %119 = sbr.rel (%p116) target = $region12
      $region11: #{residual_block.1} parent=5 // pred_region
        %s120 = ssub.s32 %s12, 1
        // Predicated region
        $region13: #{residual_block.1} parent=11 // pred_check
          %p121 = pneg %p59
        $region14: #{residual_block.1} parent=11 // pred_check_branch
          %123 = sbr.rel (%p121) target = $region16
        $region15: #{residual_block.1} parent=11 // pred_region
          _
        $region16: #{residual_block.1} parent=11 // pred_fallthru
          _
        // Predicated region
        $region17: #{residual_block.1} parent=11 // pred_check
          %p124 = pneg %p80
        $region18: #{residual_block.1} parent=11 // pred_check_branch
          %126 = sbr.rel (%p124) target = $region20
        $region19: #{residual_block.1} parent=11 // pred_region
          _
        $region20: #{residual_block.1} parent=11 // pred_fallthru
          _
      $region12: #{residual_block.1} parent=5 // pred_fallthru
        _
      %p127 = scmp.lt.s32.totalorder %s12, 2
      // Predicated region
      $region21: #{residual_block.1} parent=5 // pred_check
        %p128 = pneg %p127
      $region22: #{residual_block.1} parent=5 // pred_check_branch
        %130 = sbr.rel (%p128) target = $region24
      $region23: #{residual_block.1} parent=5 // pred_region
        // Predicated region
        $region25: #{residual_block.1} parent=23 // pred_check
          %p131 = pneg %p32
        $region26: #{residual_block.1} parent=23 // pred_check_branch
          %133 = sbr.rel (%p131) target = $region28
        $region27: #{residual_block.1} parent=23 // pred_region
          %p134 = scmp.lt.s32.totalorder %s12, 1
          %s135 = scalar_select %p134, %s12, 1
          %s136 = smul.addr %s135, 64
          %s137 = smul.addr %s136, 8
          %s138 = scalar_lea.vmem %s0, %s137
        $region28: #{residual_block.1} parent=23 // pred_fallthru
          _
      $region24: #{residual_block.1} parent=5 // pred_fallthru
        _
      %p139 = scmp.le.s32.totalorder 1, %s12
      %p140 = scmp.lt.s32.totalorder %s12, 3
      %p141 = pnand %p139, %p140
      %p142 = pneg %p141
      // Predicated region
      $region29: #{residual_block.1} parent=5 // pred_check
        _
      $region30: #{residual_block.1} parent=5 // pred_check_branch
        %144 = sbr.rel (%p141) target = $region32
      $region31: #{residual_block.1} parent=5 // pred_region
        %s145 = ssub.s32 %s12, 1
        %p146 = scmp.lt.s32.totalorder %s17, 1
        %s147 = scalar_select %p146, %s17, 1
        %s148 = smul.addr %s147, 64
        %s149 = smul.addr %s148, 8
        %s150 = scalar_lea.vmem %s0, %s149
        %p151 = pneg %p38
        %p152 = pneg %p35
        %p153 = pneg %p59
        %p154 = pneg %p56
        %p155 = pneg %p80
        %p156 = pneg %p77
        %p157 = pneg %p106
        %p158 = pneg %p103
        %s159 = sand.u32 %s93, 1
        %s160 = scalar_lea.sflag [#allocation5], %s159
        %s161 = sand.u32 %s93, 1
        %s162 = smul.addr %s161, 512
        %s163 = scalar_lea.vmem [#allocation4], %s162
        %p164 = scmp.lt.s32.totalorder %s17, 1
        %s165 = scalar_select %p164, %s17, 1
        %s166 = smul.addr %s165, 64
        %s167 = smul.addr %s166, 8
        %s168 = scalar_lea.vmem %s0, %s167
        %170 = vst [vmem:[#allocation2] sm:$0xff] 0
        %171 = vst [vmem:[#allocation2 + $0x8] sm:$0xff] 0
        %s172 = scalar_lea.vmem [#allocation2], 272
        %173 = vst [vmem:[%s172] sm:$0xff] 0
        %174 = vst [vmem:[%s172 + $0x8] sm:$0xff] 0
        %s175 = scalar_lea.vmem [#allocation2], 288
        %176 = vst [vmem:[%s175] sm:$0xff] 0
        %177 = vst [vmem:[%s175 + $0x8] sm:$0xff] 0
        %s178 = scalar_lea.vmem [#allocation2], 560
        %179 = vst [vmem:[%s178] sm:$0xff] 0
        %180 = vst [vmem:[%s178 + $0x8] sm:$0xff] 0
        %s181 = scalar_lea.vmem [#allocation2], 576
        %182 = vst [vmem:[%s181] sm:$0xff] 0
        %183 = vst [vmem:[%s181 + $0x8] sm:$0xff] 0
        %s184 = scalar_lea.vmem [#allocation2], 848
        %185 = vst [vmem:[%s184] sm:$0xff] 0
        %186 = vst [vmem:[%s184 + $0x8] sm:$0xff] 0
        %v187 = vlaneseq
        %v188 = vshrl.u32 %v187, 7
        %v189 = vadd.s32 %v188, 8
        %vm190 = vcmp.lt.s32.totalorder %v188, 15
        %vm191 = vcmp.lt.s32.totalorder %v189, 15
        %vm192 = vcmp.ge.s32.totalorder %v188, 1
        %vm193 = vcmp.ge.s32.totalorder %v189, 1
        %v194 = vld [vmem:[%s168] sm:$0xff]
        %v195 = vld [vmem:[%s168 + $0x8] sm:$0xff]
        %v196 = vld [vmem:[%s168 + $0x10] sm:$0xff]
        %v197 = vld [vmem:[%s168 + $0x18] sm:$0xff]
        %v198 = vld [vmem:[%s168 + $0x20] sm:$0xff]
        %v199 = vld [vmem:[%s168 + $0x28] sm:$0xff]
        %v200 = vld [vmem:[%s168 + $0x30] sm:$0xff]
        %v201 = vld [vmem:[%s168 + $0x38] sm:$0xff]
        %v202 = vld [vmem:[%s168 + $0x40] sm:$0xff]
        %v203 = vld [vmem:[%s168 + $0x48] sm:$0xff]
        %v204 = vld [vmem:[%s168 + $0x50] sm:$0xff]
        %v205 = vld [vmem:[%s168 + $0x58] sm:$0xff]
        %v206 = vld [vmem:[%s168 + $0x60] sm:$0xff]
        %v207 = vld [vmem:[%s168 + $0x68] sm:$0xff]
        %v208 = vld [vmem:[%s168 + $0x70] sm:$0xff]
        %v209 = vld [vmem:[%s168 + $0x78] sm:$0xff]
        %v210 = vld [vmem:[%s168 + $0x80] sm:$0xff]
        %v211 = vld [vmem:[%s168 + $0x88] sm:$0xff]
        %v212 = vld [vmem:[%s168 + $0x90] sm:$0xff]
        %v213 = vld [vmem:[%s168 + $0x98] sm:$0xff]
        %v214 = vld [vmem:[%s168 + $0xa0] sm:$0xff]
        %v215 = vld [vmem:[%s168 + $0xa8] sm:$0xff]
        %v216 = vld [vmem:[%s168 + $0xb0] sm:$0xff]
        %v217 = vld [vmem:[%s168 + $0xb8] sm:$0xff]
        %v218 = vld [vmem:[%s168 + $0xc0] sm:$0xff]
        %v219 = vld [vmem:[%s168 + $0xc8] sm:$0xff]
        %v220 = vld [vmem:[%s168 + $0xd0] sm:$0xff]
        %v221 = vld [vmem:[%s168 + $0xd8] sm:$0xff]
        %v222 = vld [vmem:[%s168 + $0xe0] sm:$0xff]
        %v223 = vld [vmem:[%s168 + $0xe8] sm:$0xff]
        %v224 = vld [vmem:[%s168 + $0xf0] sm:$0xff]
        %v225 = vld [vmem:[%s168 + $0xf8] sm:$0xff]
        %v226 = vld [vmem:[%s168 + $0x100] sm:$0xff]
        %v227 = vld [vmem:[%s168 + $0x108] sm:$0xff]
        %v228 = vld [vmem:[%s168 + $0x110] sm:$0xff]
        %v229 = vld [vmem:[%s168 + $0x118] sm:$0xff]
        %v230 = vld [vmem:[%s168 + $0x120] sm:$0xff]
        %v231 = vld [vmem:[%s168 + $0x128] sm:$0xff]
        %v232 = vld [vmem:[%s168 + $0x130] sm:$0xff]
        %v233 = vld [vmem:[%s168 + $0x138] sm:$0xff]
        %v234 = vld [vmem:[%s168 + $0x140] sm:$0xff]
        %v235 = vld [vmem:[%s168 + $0x148] sm:$0xff]
        %v236 = vld [vmem:[%s168 + $0x150] sm:$0xff]
        %v237 = vld [vmem:[%s168 + $0x158] sm:$0xff]
        %v238 = vld [vmem:[%s168 + $0x160] sm:$0xff]
        %v239 = vld [vmem:[%s168 + $0x168] sm:$0xff]
        %v240 = vld [vmem:[%s168 + $0x170] sm:$0xff]
        %v241 = vld [vmem:[%s168 + $0x178] sm:$0xff]
        %v242 = vld [vmem:[%s168 + $0x180] sm:$0xff]
        %v243 = vld [vmem:[%s168 + $0x188] sm:$0xff]
        %v244 = vld [vmem:[%s168 + $0x190] sm:$0xff]
        %v245 = vld [vmem:[%s168 + $0x198] sm:$0xff]
        %v246 = vld [vmem:[%s168 + $0x1a0] sm:$0xff]
        %v247 = vld [vmem:[%s168 + $0x1a8] sm:$0xff]
        %v248 = vld [vmem:[%s168 + $0x1b0] sm:$0xff]
        %v249 = vld [vmem:[%s168 + $0x1b8] sm:$0xff]
        %v250 = vld [vmem:[%s168 + $0x1c0] sm:$0xff]
        %v251 = vld [vmem:[%s168 + $0x1c8] sm:$0xff]
        %v252 = vld [vmem:[%s168 + $0x1d0] sm:$0xff]
        %v253 = vld [vmem:[%s168 + $0x1d8] sm:$0xff]
        %v254 = vld [vmem:[%s168 + $0x1e0] sm:$0xff]
        %v255 = vld [vmem:[%s168 + $0x1e8] sm:$0xff]
        %v256 = vld [vmem:[%s168 + $0x1f0] sm:$0xff]
        %v257 = vld [vmem:[%s168 + $0x1f8] sm:$0xff]
        %v258 = vrot.slane %v194, 7
        %v259 = vrot.slane %v195, 7
        %v260 = vrot.slane %v198, 7
        %v261 = vrot.slane %v199, 7
        %v262 = vrot.slane %v202, 7
        %v263 = vrot.slane %v203, 7
        %v264 = vrot.slane %v206, 7
        %v265 = vrot.slane %v207, 7
        %v266 = vrot.slane %v210, 7
        %v267 = vrot.slane %v211, 7
        %v268 = vrot.slane %v214, 7
        %v269 = vrot.slane %v215, 7
        %v270 = vrot.slane %v218, 7
        %v271 = vrot.slane %v219, 7
        %v272 = vrot.slane %v222, 7
        %v273 = vrot.slane %v223, 7
        %v274 = vrot.slane %v226, 7
        %v275 = vrot.slane %v227, 7
        %v276 = vrot.slane %v230, 7
        %v277 = vrot.slane %v231, 7
        %v278 = vrot.slane %v234, 7
        %v279 = vrot.slane %v235, 7
        %v280 = vrot.slane %v238, 7
        %v281 = vrot.slane %v239, 7
        %v282 = vrot.slane %v242, 7
        %v283 = vrot.slane %v243, 7
        %v284 = vrot.slane %v246, 7
        %v285 = vrot.slane %v247, 7
        %v286 = vrot.slane %v250, 7
        %v287 = vrot.slane %v251, 7
        %v288 = vrot.slane %v254, 7
        %v289 = vrot.slane %v255, 7
        %v290 = vrot.slane %v196, 7
        %v291 = vrot.slane %v197, 7
        %v292 = vrot.slane %v200, 7
        %v293 = vrot.slane %v201, 7
        %v294 = vrot.slane %v204, 7
        %v295 = vrot.slane %v205, 7
        %v296 = vrot.slane %v208, 7
        %v297 = vrot.slane %v209, 7
        %v298 = vrot.slane %v212, 7
        %v299 = vrot.slane %v213, 7
        %v300 = vrot.slane %v216, 7
        %v301 = vrot.slane %v217, 7
        %v302 = vrot.slane %v220, 7
        %v303 = vrot.slane %v221, 7
        %v304 = vrot.slane %v224, 7
        %v305 = vrot.slane %v225, 7
        %v306 = vrot.slane %v228, 7
        %v307 = vrot.slane %v229, 7
        %v308 = vrot.slane %v232, 7
        %v309 = vrot.slane %v233, 7
        %v310 = vrot.slane %v236, 7
        %v311 = vrot.slane %v237, 7
        %v312 = vrot.slane %v240, 7
        %v313 = vrot.slane %v241, 7
        %v314 = vrot.slane %v244, 7
        %v315 = vrot.slane %v245, 7
        %v316 = vrot.slane %v248, 7
        %v317 = vrot.slane %v249, 7
        %v318 = vrot.slane %v252, 7
        %v319 = vrot.slane %v253, 7
        %v320 = vrot.slane %v256, 7
        %v321 = vrot.slane %v257, 7
        %vm322 = vcmp.lt.s32.totalorder %v188, 1
        %v323 = vsel %vm322, %v258, %v290
        %v324 = vsel %vm322, %v259, %v291
        %v325 = vsel %vm322, %v260, %v292
        %v326 = vsel %vm322, %v261, %v293
        %v327 = vsel %vm322, %v262, %v294
        %v328 = vsel %vm322, %v263, %v295
        %v329 = vsel %vm322, %v264, %v296
        %v330 = vsel %vm322, %v265, %v297
        %v331 = vsel %vm322, %v266, %v298
        %v332 = vsel %vm322, %v267, %v299
        %v333 = vsel %vm322, %v268, %v300
        %v334 = vsel %vm322, %v269, %v301
        %v335 = vsel %vm322, %v270, %v302
        %v336 = vsel %vm322, %v271, %v303
        %v337 = vsel %vm322, %v272, %v304
        %v338 = vsel %vm322, %v273, %v305
        %v339 = vsel %vm322, %v274, %v306
        %v340 = vsel %vm322, %v275, %v307
        %v341 = vsel %vm322, %v276, %v308
        %v342 = vsel %vm322, %v277, %v309
        %v343 = vsel %vm322, %v278, %v310
        %v344 = vsel %vm322, %v279, %v311
        %v345 = vsel %vm322, %v280, %v312
        %v346 = vsel %vm322, %v281, %v313
        %v347 = vsel %vm322, %v282, %v314
        %v348 = vsel %vm322, %v283, %v315
        %v349 = vsel %vm322, %v284, %v316
        %v350 = vsel %vm322, %v285, %v317
        %v351 = vsel %vm322, %v286, %v318
        %v352 = vsel %vm322, %v287, %v319
        %v353 = vsel %vm322, %v288, %v320
        %v354 = vsel %vm322, %v289, %v321
        %v355 = vsel %vm322, %v290, %v258
        %v356 = vsel %vm322, %v291, %v259
        %v357 = vsel %vm322, %v292, %v260
        %v358 = vsel %vm322, %v293, %v261
        %v359 = vsel %vm322, %v294, %v262
        %v360 = vsel %vm322, %v295, %v263
        %v361 = vsel %vm322, %v296, %v264
        %v362 = vsel %vm322, %v297, %v265
        %v363 = vsel %vm322, %v298, %v266
        %v364 = vsel %vm322, %v299, %v267
        %v365 = vsel %vm322, %v300, %v268
        %v366 = vsel %vm322, %v301, %v269
        %v367 = vsel %vm322, %v302, %v270
        %v368 = vsel %vm322, %v303, %v271
        %v369 = vsel %vm322, %v304, %v272
        %v370 = vsel %vm322, %v305, %v273
        %v371 = vsel %vm322, %v306, %v274
        %v372 = vsel %vm322, %v307, %v275
        %v373 = vsel %vm322, %v308, %v276
        %v374 = vsel %vm322, %v309, %v277
        %v375 = vsel %vm322, %v310, %v278
        %v376 = vsel %vm322, %v311, %v279
        %v377 = vsel %vm322, %v312, %v280
        %v378 = vsel %vm322, %v313, %v281
        %v379 = vsel %vm322, %v314, %v282
        %v380 = vsel %vm322, %v315, %v283
        %v381 = vsel %vm322, %v316, %v284
        %v382 = vsel %vm322, %v317, %v285
        %v383 = vsel %vm322, %v318, %v286
        %v384 = vsel %vm322, %v319, %v287
        %v385 = vsel %vm322, %v320, %v288
        %v386 = vsel %vm322, %v321, %v289
        %v387 = vsel %vm192, 1, 0
        %v388 = vsel %vm193, 1, 0
        %vm389 = vcmp.eq.s32.totalorder %v387, 1
        %vm390 = vcmp.eq.s32.totalorder %v388, 1
        %v391 = vsel %vm389, %v355, 0.0
        %v392 = vsel %vm389, %v356, 0.0
        %v393 = vsel %vm390, %v323, 0.0
        %v394 = vsel %vm390, %v324, 0.0
        %v395 = vsel %vm389, %v357, 0.0
        %v396 = vsel %vm389, %v358, 0.0
        %v397 = vsel %vm390, %v325, 0.0
        %v398 = vsel %vm390, %v326, 0.0
        %v399 = vsel %vm389, %v359, 0.0
        %v400 = vsel %vm389, %v360, 0.0
        %v401 = vsel %vm390, %v327, 0.0
        %v402 = vsel %vm390, %v328, 0.0
        %v403 = vsel %vm389, %v361, 0.0
        %v404 = vsel %vm389, %v362, 0.0
        %v405 = vsel %vm390, %v329, 0.0
        %v406 = vsel %vm390, %v330, 0.0
        %v407 = vsel %vm389, %v363, 0.0
        %v408 = vsel %vm389, %v364, 0.0
        %v409 = vsel %vm390, %v331, 0.0
        %v410 = vsel %vm390, %v332, 0.0
        %v411 = vsel %vm389, %v365, 0.0
        %v412 = vsel %vm389, %v366, 0.0
        %v413 = vsel %vm390, %v333, 0.0
        %v414 = vsel %vm390, %v334, 0.0
        %v415 = vsel %vm389, %v367, 0.0
        %v416 = vsel %vm389, %v368, 0.0
        %v417 = vsel %vm390, %v335, 0.0
        %v418 = vsel %vm390, %v336, 0.0
        %v419 = vsel %vm389, %v369, 0.0
        %v420 = vsel %vm389, %v370, 0.0
        %v421 = vsel %vm390, %v337, 0.0
        %v422 = vsel %vm390, %v338, 0.0
        %v423 = vsel %vm389, %v371, 0.0
        %v424 = vsel %vm389, %v372, 0.0
        %v425 = vsel %vm390, %v339, 0.0
        %v426 = vsel %vm390, %v340, 0.0
        %v427 = vsel %vm389, %v373, 0.0
        %v428 = vsel %vm389, %v374, 0.0
        %v429 = vsel %vm390, %v341, 0.0
        %v430 = vsel %vm390, %v342, 0.0
        %v431 = vsel %vm389, %v375, 0.0
        %v432 = vsel %vm389, %v376, 0.0
        %v433 = vsel %vm390, %v343, 0.0
        %v434 = vsel %vm390, %v344, 0.0
        %v435 = vsel %vm389, %v377, 0.0
        %v436 = vsel %vm389, %v378, 0.0
        %v437 = vsel %vm390, %v345, 0.0
        %v438 = vsel %vm390, %v346, 0.0
        %v439 = vsel %vm389, %v379, 0.0
        %v440 = vsel %vm389, %v380, 0.0
        %v441 = vsel %vm390, %v347, 0.0
        %v442 = vsel %vm390, %v348, 0.0
        %v443 = vsel %vm389, %v381, 0.0
        %v444 = vsel %vm389, %v382, 0.0
        %v445 = vsel %vm390, %v349, 0.0
        %v446 = vsel %vm390, %v350, 0.0
        %v447 = vsel %vm389, %v383, 0.0
        %v448 = vsel %vm389, %v384, 0.0
        %v449 = vsel %vm390, %v351, 0.0
        %v450 = vsel %vm390, %v352, 0.0
        %v451 = vsel %vm389, %v385, 0.0
        %v452 = vsel %vm389, %v386, 0.0
        %v453 = vsel %vm390, %v353, 0.0
        %v454 = vsel %vm390, %v354, 0.0
        %v455 = vpack.c.bf16 %v393, %v391
        %v456 = vpack.c.bf16 %v394, %v392
        %v457 = vpack.c.bf16 %v397, %v395
        %v458 = vpack.c.bf16 %v398, %v396
        %v459 = vpack.c.bf16 %v401, %v399
        %v460 = vpack.c.bf16 %v402, %v400
        %v461 = vpack.c.bf16 %v405, %v403
        %v462 = vpack.c.bf16 %v406, %v404
        %v463 = vpack.c.bf16 %v409, %v407
        %v464 = vpack.c.bf16 %v410, %v408
        %v465 = vpack.c.bf16 %v413, %v411
        %v466 = vpack.c.bf16 %v414, %v412
        %v467 = vpack.c.bf16 %v417, %v415
        %v468 = vpack.c.bf16 %v418, %v416
        %v469 = vpack.c.bf16 %v421, %v419
        %v470 = vpack.c.bf16 %v422, %v420
        %v471 = vpack.c.bf16 %v425, %v423
        %v472 = vpack.c.bf16 %v426, %v424
        %v473 = vpack.c.bf16 %v429, %v427
        %v474 = vpack.c.bf16 %v430, %v428
        %v475 = vpack.c.bf16 %v433, %v431
        %v476 = vpack.c.bf16 %v434, %v432
        %v477 = vpack.c.bf16 %v437, %v435
        %v478 = vpack.c.bf16 %v438, %v436
        %v479 = vpack.c.bf16 %v441, %v439
        %v480 = vpack.c.bf16 %v442, %v440
        %v481 = vpack.c.bf16 %v445, %v443
        %v482 = vpack.c.bf16 %v446, %v444
        %v483 = vpack.c.bf16 %v449, %v447
        %v484 = vpack.c.bf16 %v450, %v448
        %v485 = vpack.c.bf16 %v453, %v451
        %v486 = vpack.c.bf16 %v454, %v452
        %s487 = scalar_lea.vmem [#allocation2], 16
        %488 = vst [vmem:[%s487] sm:$0xff] %v455
        %489 = vst [vmem:[%s487 + $0x8] sm:$0xff] %v456
        %490 = vst [vmem:[%s487 + $0x10] sm:$0xff] %v457
        %491 = vst [vmem:[%s487 + $0x18] sm:$0xff] %v458
        %492 = vst [vmem:[%s487 + $0x20] sm:$0xff] %v459
        %493 = vst [vmem:[%s487 + $0x28] sm:$0xff] %v460
        %494 = vst [vmem:[%s487 + $0x30] sm:$0xff] %v461
        %495 = vst [vmem:[%s487 + $0x38] sm:$0xff] %v462
        %496 = vst [vmem:[%s487 + $0x40] sm:$0xff] %v463
        %497 = vst [vmem:[%s487 + $0x48] sm:$0xff] %v464
        %498 = vst [vmem:[%s487 + $0x50] sm:$0xff] %v465
        %499 = vst [vmem:[%s487 + $0x58] sm:$0xff] %v466
        %500 = vst [vmem:[%s487 + $0x60] sm:$0xff] %v467
        %501 = vst [vmem:[%s487 + $0x68] sm:$0xff] %v468
        %502 = vst [vmem:[%s487 + $0x70] sm:$0xff] %v469
        %503 = vst [vmem:[%s487 + $0x78] sm:$0xff] %v470
        %504 = vst [vmem:[%s487 + $0x80] sm:$0xff] %v471
        %505 = vst [vmem:[%s487 + $0x88] sm:$0xff] %v472
        %506 = vst [vmem:[%s487 + $0x90] sm:$0xff] %v473
        %507 = vst [vmem:[%s487 + $0x98] sm:$0xff] %v474
        %508 = vst [vmem:[%s487 + $0xa0] sm:$0xff] %v475
        %509 = vst [vmem:[%s487 + $0xa8] sm:$0xff] %v476
        %510 = vst [vmem:[%s487 + $0xb0] sm:$0xff] %v477
        %511 = vst [vmem:[%s487 + $0xb8] sm:$0xff] %v478
        %512 = vst [vmem:[%s487 + $0xc0] sm:$0xff] %v479
        %513 = vst [vmem:[%s487 + $0xc8] sm:$0xff] %v480
        %514 = vst [vmem:[%s487 + $0xd0] sm:$0xff] %v481
        %515 = vst [vmem:[%s487 + $0xd8] sm:$0xff] %v482
        %516 = vst [vmem:[%s487 + $0xe0] sm:$0xff] %v483
        %517 = vst [vmem:[%s487 + $0xe8] sm:$0xff] %v484
        %518 = vst [vmem:[%s487 + $0xf0] sm:$0xff] %v485
        %519 = vst [vmem:[%s487 + $0xf8] sm:$0xff] %v486
        %v520 = vpack.c.bf16 %v196, %v194
        %v521 = vpack.c.bf16 %v197, %v195
        %v522 = vpack.c.bf16 %v200, %v198
        %v523 = vpack.c.bf16 %v201, %v199
        %v524 = vpack.c.bf16 %v204, %v202
        %v525 = vpack.c.bf16 %v205, %v203
        %v526 = vpack.c.bf16 %v208, %v206
        %v527 = vpack.c.bf16 %v209, %v207
        %v528 = vpack.c.bf16 %v212, %v210
        %v529 = vpack.c.bf16 %v213, %v211
        %v530 = vpack.c.bf16 %v216, %v214
        %v531 = vpack.c.bf16 %v217, %v215
        %v532 = vpack.c.bf16 %v220, %v218
        %v533 = vpack.c.bf16 %v221, %v219
        %v534 = vpack.c.bf16 %v224, %v222
        %v535 = vpack.c.bf16 %v225, %v223
        %v536 = vpack.c.bf16 %v228, %v226
        %v537 = vpack.c.bf16 %v229, %v227
        %v538 = vpack.c.bf16 %v232, %v230
        %v539 = vpack.c.bf16 %v233, %v231
        %v540 = vpack.c.bf16 %v236, %v234
        %v541 = vpack.c.bf16 %v237, %v235
        %v542 = vpack.c.bf16 %v240, %v238
        %v543 = vpack.c.bf16 %v241, %v239
        %v544 = vpack.c.bf16 %v244, %v242
        %v545 = vpack.c.bf16 %v245, %v243
        %v546 = vpack.c.bf16 %v248, %v246
        %v547 = vpack.c.bf16 %v249, %v247
        %v548 = vpack.c.bf16 %v252, %v250
        %v549 = vpack.c.bf16 %v253, %v251
        %v550 = vpack.c.bf16 %v256, %v254
        %v551 = vpack.c.bf16 %v257, %v255
        %s552 = scalar_lea.vmem [#allocation2], 304
        %553 = vst [vmem:[%s552] sm:$0xff] %v520
        %554 = vst [vmem:[%s552 + $0x8] sm:$0xff] %v521
        %555 = vst [vmem:[%s552 + $0x10] sm:$0xff] %v522
        %556 = vst [vmem:[%s552 + $0x18] sm:$0xff] %v523
        %557 = vst [vmem:[%s552 + $0x20] sm:$0xff] %v524
        %558 = vst [vmem:[%s552 + $0x28] sm:$0xff] %v525
        %559 = vst [vmem:[%s552 + $0x30] sm:$0xff] %v526
        %560 = vst [vmem:[%s552 + $0x38] sm:$0xff] %v527
        %561 = vst [vmem:[%s552 + $0x40] sm:$0xff] %v528
        %562 = vst [vmem:[%s552 + $0x48] sm:$0xff] %v529
        %563 = vst [vmem:[%s552 + $0x50] sm:$0xff] %v530
        %564 = vst [vmem:[%s552 + $0x58] sm:$0xff] %v531
        %565 = vst [vmem:[%s552 + $0x60] sm:$0xff] %v532
        %566 = vst [vmem:[%s552 + $0x68] sm:$0xff] %v533
        %567 = vst [vmem:[%s552 + $0x70] sm:$0xff] %v534
        %568 = vst [vmem:[%s552 + $0x78] sm:$0xff] %v535
        %569 = vst [vmem:[%s552 + $0x80] sm:$0xff] %v536
        %570 = vst [vmem:[%s552 + $0x88] sm:$0xff] %v537
        %571 = vst [vmem:[%s552 + $0x90] sm:$0xff] %v538
        %572 = vst [vmem:[%s552 + $0x98] sm:$0xff] %v539
        %573 = vst [vmem:[%s552 + $0xa0] sm:$0xff] %v540
        %574 = vst [vmem:[%s552 + $0xa8] sm:$0xff] %v541
        %575 = vst [vmem:[%s552 + $0xb0] sm:$0xff] %v542
        %576 = vst [vmem:[%s552 + $0xb8] sm:$0xff] %v543
        %577 = vst [vmem:[%s552 + $0xc0] sm:$0xff] %v544
        %578 = vst [vmem:[%s552 + $0xc8] sm:$0xff] %v545
        %579 = vst [vmem:[%s552 + $0xd0] sm:$0xff] %v546
        %580 = vst [vmem:[%s552 + $0xd8] sm:$0xff] %v547
        %581 = vst [vmem:[%s552 + $0xe0] sm:$0xff] %v548
        %582 = vst [vmem:[%s552 + $0xe8] sm:$0xff] %v549
        %583 = vst [vmem:[%s552 + $0xf0] sm:$0xff] %v550
        %584 = vst [vmem:[%s552 + $0xf8] sm:$0xff] %v551
        %v585 = vrot.slane %v194, 1
        %v586 = vrot.slane %v195, 1
        %v587 = vrot.slane %v198, 1
        %v588 = vrot.slane %v199, 1
        %v589 = vrot.slane %v202, 1
        %v590 = vrot.slane %v203, 1
        %v591 = vrot.slane %v206, 1
        %v592 = vrot.slane %v207, 1
        %v593 = vrot.slane %v210, 1
        %v594 = vrot.slane %v211, 1
        %v595 = vrot.slane %v214, 1
        %v596 = vrot.slane %v215, 1
        %v597 = vrot.slane %v218, 1
        %v598 = vrot.slane %v219, 1
        %v599 = vrot.slane %v222, 1
        %v600 = vrot.slane %v223, 1
        %v601 = vrot.slane %v226, 1
        %v602 = vrot.slane %v227, 1
        %v603 = vrot.slane %v230, 1
        %v604 = vrot.slane %v231, 1
        %v605 = vrot.slane %v234, 1
        %v606 = vrot.slane %v235, 1
        %v607 = vrot.slane %v238, 1
        %v608 = vrot.slane %v239, 1
        %v609 = vrot.slane %v242, 1
        %v610 = vrot.slane %v243, 1
        %v611 = vrot.slane %v246, 1
        %v612 = vrot.slane %v247, 1
        %v613 = vrot.slane %v250, 1
        %v614 = vrot.slane %v251, 1
        %v615 = vrot.slane %v254, 1
        %v616 = vrot.slane %v255, 1
        %v617 = vrot.slane %v196, 1
        %v618 = vrot.slane %v197, 1
        %v619 = vrot.slane %v200, 1
        %v620 = vrot.slane %v201, 1
        %v621 = vrot.slane %v204, 1
        %v622 = vrot.slane %v205, 1
        %v623 = vrot.slane %v208, 1
        %v624 = vrot.slane %v209, 1
        %v625 = vrot.slane %v212, 1
        %v626 = vrot.slane %v213, 1
        %v627 = vrot.slane %v216, 1
        %v628 = vrot.slane %v217, 1
        %v629 = vrot.slane %v220, 1
        %v630 = vrot.slane %v221, 1
        %v631 = vrot.slane %v224, 1
        %v632 = vrot.slane %v225, 1
        %v633 = vrot.slane %v228, 1
        %v634 = vrot.slane %v229, 1
        %v635 = vrot.slane %v232, 1
        %v636 = vrot.slane %v233, 1
        %v637 = vrot.slane %v236, 1
        %v638 = vrot.slane %v237, 1
        %v639 = vrot.slane %v240, 1
        %v640 = vrot.slane %v241, 1
        %v641 = vrot.slane %v244, 1
        %v642 = vrot.slane %v245, 1
        %v643 = vrot.slane %v248, 1
        %v644 = vrot.slane %v249, 1
        %v645 = vrot.slane %v252, 1
        %v646 = vrot.slane %v253, 1
        %v647 = vrot.slane %v256, 1
        %v648 = vrot.slane %v257, 1
        %vm649 = vcmp.lt.s32.totalorder %v188, 7
        %v650 = vsel %vm649, %v585, %v617
        %v651 = vsel %vm649, %v586, %v618
        %v652 = vsel %vm649, %v587, %v619
        %v653 = vsel %vm649, %v588, %v620
        %v654 = vsel %vm649, %v589, %v621
        %v655 = vsel %vm649, %v590, %v622
        %v656 = vsel %vm649, %v591, %v623
        %v657 = vsel %vm649, %v592, %v624
        %v658 = vsel %vm649, %v593, %v625
        %v659 = vsel %vm649, %v594, %v626
        %v660 = vsel %vm649, %v595, %v627
        %v661 = vsel %vm649, %v596, %v628
        %v662 = vsel %vm649, %v597, %v629
        %v663 = vsel %vm649, %v598, %v630
        %v664 = vsel %vm649, %v599, %v631
        %v665 = vsel %vm649, %v600, %v632
        %v666 = vsel %vm649, %v601, %v633
        %v667 = vsel %vm649, %v602, %v634
        %v668 = vsel %vm649, %v603, %v635
        %v669 = vsel %vm649, %v604, %v636
        %v670 = vsel %vm649, %v605, %v637
        %v671 = vsel %vm649, %v606, %v638
        %v672 = vsel %vm649, %v607, %v639
        %v673 = vsel %vm649, %v608, %v640
        %v674 = vsel %vm649, %v609, %v641
        %v675 = vsel %vm649, %v610, %v642
        %v676 = vsel %vm649, %v611, %v643
        %v677 = vsel %vm649, %v612, %v644
        %v678 = vsel %vm649, %v613, %v645
        %v679 = vsel %vm649, %v614, %v646
        %v680 = vsel %vm649, %v615, %v647
        %v681 = vsel %vm649, %v616, %v648
        %v682 = vsel %vm649, %v617, %v585
        %v683 = vsel %vm649, %v618, %v586
        %v684 = vsel %vm649, %v619, %v587
        %v685 = vsel %vm649, %v620, %v588
        %v686 = vsel %vm649, %v621, %v589
        %v687 = vsel %vm649, %v622, %v590
        %v688 = vsel %vm649, %v623, %v591
        %v689 = vsel %vm649, %v624, %v592
        %v690 = vsel %vm649, %v625, %v593
        %v691 = vsel %vm649, %v626, %v594
        %v692 = vsel %vm649, %v627, %v595
        %v693 = vsel %vm649, %v628, %v596
        %v694 = vsel %vm649, %v629, %v597
        %v695 = vsel %vm649, %v630, %v598
        %v696 = vsel %vm649, %v631, %v599
        %v697 = vsel %vm649, %v632, %v600
        %v698 = vsel %vm649, %v633, %v601
        %v699 = vsel %vm649, %v634, %v602
        %v700 = vsel %vm649, %v635, %v603
        %v701 = vsel %vm649, %v636, %v604
        %v702 = vsel %vm649, %v637, %v605
        %v703 = vsel %vm649, %v638, %v606
        %v704 = vsel %vm649, %v639, %v607
        %v705 = vsel %vm649, %v640, %v608
        %v706 = vsel %vm649, %v641, %v609
        %v707 = vsel %vm649, %v642, %v610
        %v708 = vsel %vm649, %v643, %v611
        %v709 = vsel %vm649, %v644, %v612
        %v710 = vsel %vm649, %v645, %v613
        %v711 = vsel %vm649, %v646, %v614
        %v712 = vsel %vm649, %v647, %v615
        %v713 = vsel %vm649, %v648, %v616
        %v714 = vsel %vm190, 1, 0
        %v715 = vsel %vm191, 1, 0
        %vm716 = vcmp.eq.s32.totalorder %v714, 1
        %vm717 = vcmp.eq.s32.totalorder %v715, 1
        %v718 = vsel %vm716, %v650, 0.0
        %v719 = vsel %vm716, %v651, 0.0
        %v720 = vsel %vm717, %v682, 0.0
        %v721 = vsel %vm717, %v683, 0.0
        %v722 = vsel %vm716, %v652, 0.0
        %v723 = vsel %vm716, %v653, 0.0
        %v724 = vsel %vm717, %v684, 0.0
        %v725 = vsel %vm717, %v685, 0.0
        %v726 = vsel %vm716, %v654, 0.0
        %v727 = vsel %vm716, %v655, 0.0
        %v728 = vsel %vm717, %v686, 0.0
        %v729 = vsel %vm717, %v687, 0.0
        %v730 = vsel %vm716, %v656, 0.0
        %v731 = vsel %vm716, %v657, 0.0
        %v732 = vsel %vm717, %v688, 0.0
        %v733 = vsel %vm717, %v689, 0.0
        %v734 = vsel %vm716, %v658, 0.0
        %v735 = vsel %vm716, %v659, 0.0
        %v736 = vsel %vm717, %v690, 0.0
        %v737 = vsel %vm717, %v691, 0.0
        %v738 = vsel %vm716, %v660, 0.0
        %v739 = vsel %vm716, %v661, 0.0
        %v740 = vsel %vm717, %v692, 0.0
        %v741 = vsel %vm717, %v693, 0.0
        %v742 = vsel %vm716, %v662, 0.0
        %v743 = vsel %vm716, %v663, 0.0
        %v744 = vsel %vm717, %v694, 0.0
        %v745 = vsel %vm717, %v695, 0.0
        %v746 = vsel %vm716, %v664, 0.0
        %v747 = vsel %vm716, %v665, 0.0
        %v748 = vsel %vm717, %v696, 0.0
        %v749 = vsel %vm717, %v697, 0.0
        %v750 = vsel %vm716, %v666, 0.0
        %v751 = vsel %vm716, %v667, 0.0
        %v752 = vsel %vm717, %v698, 0.0
        %v753 = vsel %vm717, %v699, 0.0
        %v754 = vsel %vm716, %v668, 0.0
        %v755 = vsel %vm716, %v669, 0.0
        %v756 = vsel %vm717, %v700, 0.0
        %v757 = vsel %vm717, %v701, 0.0
        %v758 = vsel %vm716, %v670, 0.0
        %v759 = vsel %vm716, %v671, 0.0
        %v760 = vsel %vm717, %v702, 0.0
        %v761 = vsel %vm717, %v703, 0.0
        %v762 = vsel %vm716, %v672, 0.0
        %v763 = vsel %vm716, %v673, 0.0
        %v764 = vsel %vm717, %v704, 0.0
        %v765 = vsel %vm717, %v705, 0.0
        %v766 = vsel %vm716, %v674, 0.0
        %v767 = vsel %vm716, %v675, 0.0
        %v768 = vsel %vm717, %v706, 0.0
        %v769 = vsel %vm717, %v707, 0.0
        %v770 = vsel %vm716, %v676, 0.0
        %v771 = vsel %vm716, %v677, 0.0
        %v772 = vsel %vm717, %v708, 0.0
        %v773 = vsel %vm717, %v709, 0.0
        %v774 = vsel %vm716, %v678, 0.0
        %v775 = vsel %vm716, %v679, 0.0
        %v776 = vsel %vm717, %v710, 0.0
        %v777 = vsel %vm717, %v711, 0.0
        %v778 = vsel %vm716, %v680, 0.0
        %v779 = vsel %vm716, %v681, 0.0
        %v780 = vsel %vm717, %v712, 0.0
        %v781 = vsel %vm717, %v713, 0.0
        %v782 = vpack.c.bf16 %v720, %v718
        %v783 = vpack.c.bf16 %v721, %v719
        %v784 = vpack.c.bf16 %v724, %v722
        %v785 = vpack.c.bf16 %v725, %v723
        %v786 = vpack.c.bf16 %v728, %v726
        %v787 = vpack.c.bf16 %v729, %v727
        %v788 = vpack.c.bf16 %v732, %v730
        %v789 = vpack.c.bf16 %v733, %v731
        %v790 = vpack.c.bf16 %v736, %v734
        %v791 = vpack.c.bf16 %v737, %v735
        %v792 = vpack.c.bf16 %v740, %v738
        %v793 = vpack.c.bf16 %v741, %v739
        %v794 = vpack.c.bf16 %v744, %v742
        %v795 = vpack.c.bf16 %v745, %v743
        %v796 = vpack.c.bf16 %v748, %v746
        %v797 = vpack.c.bf16 %v749, %v747
        %v798 = vpack.c.bf16 %v752, %v750
        %v799 = vpack.c.bf16 %v753, %v751
        %v800 = vpack.c.bf16 %v756, %v754
        %v801 = vpack.c.bf16 %v757, %v755
        %v802 = vpack.c.bf16 %v760, %v758
        %v803 = vpack.c.bf16 %v761, %v759
        %v804 = vpack.c.bf16 %v764, %v762
        %v805 = vpack.c.bf16 %v765, %v763
        %v806 = vpack.c.bf16 %v768, %v766
        %v807 = vpack.c.bf16 %v769, %v767
        %v808 = vpack.c.bf16 %v772, %v770
        %v809 = vpack.c.bf16 %v773, %v771
        %v810 = vpack.c.bf16 %v776, %v774
        %v811 = vpack.c.bf16 %v777, %v775
        %v812 = vpack.c.bf16 %v780, %v778
        %v813 = vpack.c.bf16 %v781, %v779
        %s814 = scalar_lea.vmem [#allocation2], 592
        %815 = vst [vmem:[%s814] sm:$0xff] %v782
        %816 = vst [vmem:[%s814 + $0x8] sm:$0xff] %v783
        %817 = vst [vmem:[%s814 + $0x10] sm:$0xff] %v784
        %818 = vst [vmem:[%s814 + $0x18] sm:$0xff] %v785
        %819 = vst [vmem:[%s814 + $0x20] sm:$0xff] %v786
        %820 = vst [vmem:[%s814 + $0x28] sm:$0xff] %v787
        %821 = vst [vmem:[%s814 + $0x30] sm:$0xff] %v788
        %822 = vst [vmem:[%s814 + $0x38] sm:$0xff] %v789
        %823 = vst [vmem:[%s814 + $0x40] sm:$0xff] %v790
        %824 = vst [vmem:[%s814 + $0x48] sm:$0xff] %v791
        %825 = vst [vmem:[%s814 + $0x50] sm:$0xff] %v792
        %826 = vst [vmem:[%s814 + $0x58] sm:$0xff] %v793
        %827 = vst [vmem:[%s814 + $0x60] sm:$0xff] %v794
        %828 = vst [vmem:[%s814 + $0x68] sm:$0xff] %v795
        %829 = vst [vmem:[%s814 + $0x70] sm:$0xff] %v796
        %830 = vst [vmem:[%s814 + $0x78] sm:$0xff] %v797
        %831 = vst [vmem:[%s814 + $0x80] sm:$0xff] %v798
        %832 = vst [vmem:[%s814 + $0x88] sm:$0xff] %v799
        %833 = vst [vmem:[%s814 + $0x90] sm:$0xff] %v800
        %834 = vst [vmem:[%s814 + $0x98] sm:$0xff] %v801
        %835 = vst [vmem:[%s814 + $0xa0] sm:$0xff] %v802
        %836 = vst [vmem:[%s814 + $0xa8] sm:$0xff] %v803
        %837 = vst [vmem:[%s814 + $0xb0] sm:$0xff] %v804
        %838 = vst [vmem:[%s814 + $0xb8] sm:$0xff] %v805
        %839 = vst [vmem:[%s814 + $0xc0] sm:$0xff] %v806
        %840 = vst [vmem:[%s814 + $0xc8] sm:$0xff] %v807
        %841 = vst [vmem:[%s814 + $0xd0] sm:$0xff] %v808
        %842 = vst [vmem:[%s814 + $0xd8] sm:$0xff] %v809
        %843 = vst [vmem:[%s814 + $0xe0] sm:$0xff] %v810
        %844 = vst [vmem:[%s814 + $0xe8] sm:$0xff] %v811
        %845 = vst [vmem:[%s814 + $0xf0] sm:$0xff] %v812
        %846 = vst [vmem:[%s814 + $0xf8] sm:$0xff] %v813
        %v847 = vld [vmem:[#allocation2] sm:$0xff]
        %v848 = vld [vmem:[#allocation2 + $0x8] sm:$0xff]
        %v849 = vld [vmem:[#allocation2 + $0x10] sm:$0xff]
        %v850 = vld [vmem:[#allocation2 + $0x18] sm:$0xff]
        %v851 = vld [vmem:[#allocation2 + $0x20] sm:$0xff]
        %v852 = vld [vmem:[#allocation2 + $0x28] sm:$0xff]
        %v853 = vld [vmem:[#allocation2 + $0x30] sm:$0xff]
        %v854 = vld [vmem:[#allocation2 + $0x38] sm:$0xff]
        %v855 = vld [vmem:[#allocation2 + $0x40] sm:$0xff]
        %v856 = vld [vmem:[#allocation2 + $0x48] sm:$0xff]
        %v857 = vld [vmem:[#allocation2 + $0x50] sm:$0xff]
        %v858 = vld [vmem:[#allocation2 + $0x58] sm:$0xff]
        %v859 = vld [vmem:[#allocation2 + $0x60] sm:$0xff]
        %v860 = vld [vmem:[#allocation2 + $0x68] sm:$0xff]
        %v861 = vld [vmem:[#allocation2 + $0x70] sm:$0xff]
        %v862 = vld [vmem:[#allocation2 + $0x78] sm:$0xff]
        %v863 = vld [vmem:[#allocation2 + $0x80] sm:$0xff]
        %v864 = vld [vmem:[#allocation2 + $0x88] sm:$0xff]
        %v865 = vld [vmem:[#allocation2 + $0x90] sm:$0xff]
        %v866 = vld [vmem:[#allocation2 + $0x98] sm:$0xff]
        %v867 = vld [vmem:[#allocation2 + $0xa0] sm:$0xff]
        %v868 = vld [vmem:[#allocation2 + $0xa8] sm:$0xff]
        %v869 = vld [vmem:[#allocation2 + $0xb0] sm:$0xff]
        %v870 = vld [vmem:[#allocation2 + $0xb8] sm:$0xff]
        %v871 = vld [vmem:[#allocation2 + $0xc0] sm:$0xff]
        %v872 = vld [vmem:[#allocation2 + $0xc8] sm:$0xff]
        %v873 = vld [vmem:[#allocation2 + $0xd0] sm:$0xff]
        %v874 = vld [vmem:[#allocation2 + $0xd8] sm:$0xff]
        %v875 = vld [vmem:[#allocation2 + $0xe0] sm:$0xff]
        %v876 = vld [vmem:[#allocation2 + $0xe8] sm:$0xff]
        %v877 = vld [vmem:[#allocation2 + $0xf0] sm:$0xff]
        %v878 = vld [vmem:[#allocation2 + $0xf8] sm:$0xff]
        %v879 = vld [vmem:[%s1] sm:$0xff]
        %v880 = vld [vmem:[%s1 + $0x8] sm:$0xff]
        %v881 = vld [vmem:[%s1 + $0x10] sm:$0xff]
        %v882 = vld [vmem:[%s1 + $0x18] sm:$0xff]
        %v883 = vld [vmem:[%s1 + $0x20] sm:$0xff]
        %v884 = vld [vmem:[%s1 + $0x28] sm:$0xff]
        %v885 = vld [vmem:[%s1 + $0x30] sm:$0xff]
        %v886 = vld [vmem:[%s1 + $0x38] sm:$0xff]
        %v887 = vld [vmem:[%s1 + $0x40] sm:$0xff]
        %v888 = vld [vmem:[%s1 + $0x48] sm:$0xff]
        %v889 = vld [vmem:[%s1 + $0x50] sm:$0xff]
        %v890 = vld [vmem:[%s1 + $0x58] sm:$0xff]
        %v891 = vld [vmem:[%s1 + $0x60] sm:$0xff]
        %v892 = vld [vmem:[%s1 + $0x68] sm:$0xff]
        %v893 = vld [vmem:[%s1 + $0x70] sm:$0xff]
        %v894 = vld [vmem:[%s1 + $0x78] sm:$0xff]
        %v895 = vld [vmem:[%s1 + $0x80] sm:$0xff]
        %v896 = vld [vmem:[%s1 + $0x88] sm:$0xff]
        %v897 = vld [vmem:[%s1 + $0x90] sm:$0xff]
        %v898 = vld [vmem:[%s1 + $0x98] sm:$0xff]
        %v899 = vld [vmem:[%s1 + $0xa0] sm:$0xff]
        %v900 = vld [vmem:[%s1 + $0xa8] sm:$0xff]
        %v901 = vld [vmem:[%s1 + $0xb0] sm:$0xff]
        %v902 = vld [vmem:[%s1 + $0xb8] sm:$0xff]
        %v903 = vld [vmem:[%s1 + $0xc0] sm:$0xff]
        %v904 = vld [vmem:[%s1 + $0xc8] sm:$0xff]
        %v905 = vld [vmem:[%s1 + $0xd0] sm:$0xff]
        %v906 = vld [vmem:[%s1 + $0xd8] sm:$0xff]
        %v907 = vld [vmem:[%s1 + $0xe0] sm:$0xff]
        %v908 = vld [vmem:[%s1 + $0xe8] sm:$0xff]
        %v909 = vld [vmem:[%s1 + $0xf0] sm:$0xff]
        %v910 = vld [vmem:[%s1 + $0xf8] sm:$0xff]
        %v911 = vld [vmem:[%s175] sm:$0xff]
        %v912 = vld [vmem:[%s175 + $0x8] sm:$0xff]
        %v913 = vld [vmem:[%s175 + $0x10] sm:$0xff]
        %v914 = vld [vmem:[%s175 + $0x18] sm:$0xff]
        %v915 = vld [vmem:[%s175 + $0x20] sm:$0xff]
        %v916 = vld [vmem:[%s175 + $0x28] sm:$0xff]
        %v917 = vld [vmem:[%s175 + $0x30] sm:$0xff]
        %v918 = vld [vmem:[%s175 + $0x38] sm:$0xff]
        %v919 = vld [vmem:[%s175 + $0x40] sm:$0xff]
        %v920 = vld [vmem:[%s175 + $0x48] sm:$0xff]
        %v921 = vld [vmem:[%s175 + $0x50] sm:$0xff]
        %v922 = vld [vmem:[%s175 + $0x58] sm:$0xff]
        %v923 = vld [vmem:[%s175 + $0x60] sm:$0xff]
        %v924 = vld [vmem:[%s175 + $0x68] sm:$0xff]
        %v925 = vld [vmem:[%s175 + $0x70] sm:$0xff]
        %v926 = vld [vmem:[%s175 + $0x78] sm:$0xff]
        %v927 = vld [vmem:[%s175 + $0x80] sm:$0xff]
        %v928 = vld [vmem:[%s175 + $0x88] sm:$0xff]
        %v929 = vld [vmem:[%s175 + $0x90] sm:$0xff]
        %v930 = vld [vmem:[%s175 + $0x98] sm:$0xff]
        %v931 = vld [vmem:[%s175 + $0xa0] sm:$0xff]
        %v932 = vld [vmem:[%s175 + $0xa8] sm:$0xff]
        %v933 = vld [vmem:[%s175 + $0xb0] sm:$0xff]
        %v934 = vld [vmem:[%s175 + $0xb8] sm:$0xff]
        %v935 = vld [vmem:[%s175 + $0xc0] sm:$0xff]
        %v936 = vld [vmem:[%s175 + $0xc8] sm:$0xff]
        %v937 = vld [vmem:[%s175 + $0xd0] sm:$0xff]
        %v938 = vld [vmem:[%s175 + $0xd8] sm:$0xff]
        %v939 = vld [vmem:[%s175 + $0xe0] sm:$0xff]
        %v940 = vld [vmem:[%s175 + $0xe8] sm:$0xff]
        %v941 = vld [vmem:[%s175 + $0xf0] sm:$0xff]
        %v942 = vld [vmem:[%s175 + $0xf8] sm:$0xff]
        %s943 = scalar_lea.vmem %s1, 256
        %v944 = vld [vmem:[%s943] sm:$0xff]
        %v945 = vld [vmem:[%s943 + $0x8] sm:$0xff]
        %v946 = vld [vmem:[%s943 + $0x10] sm:$0xff]
        %v947 = vld [vmem:[%s943 + $0x18] sm:$0xff]
        %v948 = vld [vmem:[%s943 + $0x20] sm:$0xff]
        %v949 = vld [vmem:[%s943 + $0x28] sm:$0xff]
        %v950 = vld [vmem:[%s943 + $0x30] sm:$0xff]
        %v951 = vld [vmem:[%s943 + $0x38] sm:$0xff]
        %v952 = vld [vmem:[%s943 + $0x40] sm:$0xff]
        %v953 = vld [vmem:[%s943 + $0x48] sm:$0xff]
        %v954 = vld [vmem:[%s943 + $0x50] sm:$0xff]
        %v955 = vld [vmem:[%s943 + $0x58] sm:$0xff]
        %v956 = vld [vmem:[%s943 + $0x60] sm:$0xff]
        %v957 = vld [vmem:[%s943 + $0x68] sm:$0xff]
        %v958 = vld [vmem:[%s943 + $0x70] sm:$0xff]
        %v959 = vld [vmem:[%s943 + $0x78] sm:$0xff]
        %v960 = vld [vmem:[%s943 + $0x80] sm:$0xff]
        %v961 = vld [vmem:[%s943 + $0x88] sm:$0xff]
        %v962 = vld [vmem:[%s943 + $0x90] sm:$0xff]
        %v963 = vld [vmem:[%s943 + $0x98] sm:$0xff]
        %v964 = vld [vmem:[%s943 + $0xa0] sm:$0xff]
        %v965 = vld [vmem:[%s943 + $0xa8] sm:$0xff]
        %v966 = vld [vmem:[%s943 + $0xb0] sm:$0xff]
        %v967 = vld [vmem:[%s943 + $0xb8] sm:$0xff]
        %v968 = vld [vmem:[%s943 + $0xc0] sm:$0xff]
        %v969 = vld [vmem:[%s943 + $0xc8] sm:$0xff]
        %v970 = vld [vmem:[%s943 + $0xd0] sm:$0xff]
        %v971 = vld [vmem:[%s943 + $0xd8] sm:$0xff]
        %v972 = vld [vmem:[%s943 + $0xe0] sm:$0xff]
        %v973 = vld [vmem:[%s943 + $0xe8] sm:$0xff]
        %v974 = vld [vmem:[%s943 + $0xf0] sm:$0xff]
        %v975 = vld [vmem:[%s943 + $0xf8] sm:$0xff]
        %v1008 = vunpack.c.l.b16 %v944
        %v1009 = vunpack.c.h.b16 %v944
        %v1010 = vunpack.c.l.b16 %v945
        %v1011 = vunpack.c.h.b16 %v945
        %v1012 = vunpack.c.l.b16 %v946
        %v1013 = vunpack.c.h.b16 %v946
        %v1014 = vunpack.c.l.b16 %v947
        %v1015 = vunpack.c.h.b16 %v947
        %v1016 = vunpack.c.l.b16 %v948
        %v1017 = vunpack.c.h.b16 %v948
        %v1018 = vunpack.c.l.b16 %v949
        %v1019 = vunpack.c.h.b16 %v949
        %v1020 = vunpack.c.l.b16 %v950
        %v1021 = vunpack.c.h.b16 %v950
        %v1022 = vunpack.c.l.b16 %v951
        %v1023 = vunpack.c.h.b16 %v951
        %v1024 = vunpack.c.l.b16 %v952
        %v1025 = vunpack.c.h.b16 %v952
        %v1026 = vunpack.c.l.b16 %v953
        %v1027 = vunpack.c.h.b16 %v953
        %v1028 = vunpack.c.l.b16 %v954
        %v1029 = vunpack.c.h.b16 %v954
        %v1030 = vunpack.c.l.b16 %v955
        %v1031 = vunpack.c.h.b16 %v955
        %v1032 = vunpack.c.l.b16 %v956
        %v1033 = vunpack.c.h.b16 %v956
        %v1034 = vunpack.c.l.b16 %v957
        %v1035 = vunpack.c.h.b16 %v957
        %v1036 = vunpack.c.l.b16 %v958
        %v1037 = vunpack.c.h.b16 %v958
        %v1038 = vunpack.c.l.b16 %v959
        %v1039 = vunpack.c.h.b16 %v959
        %v1040 = vunpack.c.l.b16 %v960
        %v1041 = vunpack.c.h.b16 %v960
        %v1042 = vunpack.c.l.b16 %v961
        %v1043 = vunpack.c.h.b16 %v961
        %v1044 = vunpack.c.l.b16 %v962
        %v1045 = vunpack.c.h.b16 %v962
        %v1046 = vunpack.c.l.b16 %v963
        %v1047 = vunpack.c.h.b16 %v963
        %v1048 = vunpack.c.l.b16 %v964
        %v1049 = vunpack.c.h.b16 %v964
        %v1050 = vunpack.c.l.b16 %v965
        %v1051 = vunpack.c.h.b16 %v965
        %v1052 = vunpack.c.l.b16 %v966
        %v1053 = vunpack.c.h.b16 %v966
        %v1054 = vunpack.c.l.b16 %v967
        %v1055 = vunpack.c.h.b16 %v967
        %v1056 = vunpack.c.l.b16 %v968
        %v1057 = vunpack.c.h.b16 %v968
        %v1058 = vunpack.c.l.b16 %v969
        %v1059 = vunpack.c.h.b16 %v969
        %v1060 = vunpack.c.l.b16 %v970
        %v1061 = vunpack.c.h.b16 %v970
        %v1062 = vunpack.c.l.b16 %v971
        %v1063 = vunpack.c.h.b16 %v971
        %v1064 = vunpack.c.l.b16 %v972
        %v1065 = vunpack.c.h.b16 %v972
        %v1066 = vunpack.c.l.b16 %v973
        %v1067 = vunpack.c.h.b16 %v973
        %v1068 = vunpack.c.l.b16 %v974
        %v1069 = vunpack.c.h.b16 %v974
        %v1070 = vunpack.c.l.b16 %v975
        %v1071 = vunpack.c.h.b16 %v975
        %v1072 = vpack.c.b16 %v1010, %v1008
        %v1073 = vpack.c.b16 %v1011, %v1009
        %v1074 = vpack.c.b16 %v1014, %v1012
        %v1075 = vpack.c.b16 %v1015, %v1013
        %v1076 = vpack.c.b16 %v1018, %v1016
        %v1077 = vpack.c.b16 %v1019, %v1017
        %v1078 = vpack.c.b16 %v1022, %v1020
        %v1079 = vpack.c.b16 %v1023, %v1021
        %v1080 = vpack.c.b16 %v1026, %v1024
        %v1081 = vpack.c.b16 %v1027, %v1025
        %v1082 = vpack.c.b16 %v1030, %v1028
        %v1083 = vpack.c.b16 %v1031, %v1029
        %v1084 = vpack.c.b16 %v1034, %v1032
        %v1085 = vpack.c.b16 %v1035, %v1033
        %v1086 = vpack.c.b16 %v1038, %v1036
        %v1087 = vpack.c.b16 %v1039, %v1037
        %v1088 = vpack.c.b16 %v1042, %v1040
        %v1089 = vpack.c.b16 %v1043, %v1041
        %v1090 = vpack.c.b16 %v1046, %v1044
        %v1091 = vpack.c.b16 %v1047, %v1045
        %v1092 = vpack.c.b16 %v1050, %v1048
        %v1093 = vpack.c.b16 %v1051, %v1049
        %v1094 = vpack.c.b16 %v1054, %v1052
        %v1095 = vpack.c.b16 %v1055, %v1053
        %v1096 = vpack.c.b16 %v1058, %v1056
        %v1097 = vpack.c.b16 %v1059, %v1057
        %v1098 = vpack.c.b16 %v1062, %v1060
        %v1099 = vpack.c.b16 %v1063, %v1061
        %v1100 = vpack.c.b16 %v1066, %v1064
        %v1101 = vpack.c.b16 %v1067, %v1065
        %v1102 = vpack.c.b16 %v1070, %v1068
        %v1103 = vpack.c.b16 %v1071, %v1069
        %1136 = vmatprep.subr.bf16.mxu0 %v1073
        %1137 = vmatpush1.bf16.msra.mxu0 %v1072
        %1138 = vmatprep.subr.bf16.mxu0 %v1075
        %1139 = vmatpush1.bf16.msra.mxu0 %v1074
        %1140 = vmatprep.subr.bf16.mxu0 %v1077
        %1141 = vmatpush1.bf16.msra.mxu0 %v1076
        %1142 = vmatprep.subr.bf16.mxu0 %v1079
        %1143 = vmatpush1.bf16.msra.mxu0 %v1078
        %1144 = vmatprep.subr.bf16.mxu0 %v1081
        %1145 = vmatpush1.bf16.msra.mxu0 %v1080
        %1146 = vmatprep.subr.bf16.mxu0 %v1083
        %1147 = vmatpush1.bf16.msra.mxu0 %v1082
        %1148 = vmatprep.subr.bf16.mxu0 %v1085
        %1149 = vmatpush1.bf16.msra.mxu0 %v1084
        %1150 = vmatprep.subr.bf16.mxu0 %v1087
        %1151 = vmatpush1.bf16.msra.mxu0 %v1086
        %1152 = vmatprep.subr.bf16.mxu0 %v1089
        %1153 = vmatpush1.bf16.msra.mxu0 %v1088
        %1154 = vmatprep.subr.bf16.mxu0 %v1091
        %1155 = vmatpush1.bf16.msra.mxu0 %v1090
        %1156 = vmatprep.subr.bf16.mxu0 %v1093
        %1157 = vmatpush1.bf16.msra.mxu0 %v1092
        %1158 = vmatprep.subr.bf16.mxu0 %v1095
        %1159 = vmatpush1.bf16.msra.mxu0 %v1094
        %1160 = vmatprep.subr.bf16.mxu0 %v1097
        %1161 = vmatpush1.bf16.msra.mxu0 %v1096
        %1162 = vmatprep.subr.bf16.mxu0 %v1099
        %1163 = vmatpush1.bf16.msra.mxu0 %v1098
        %1164 = vmatprep.subr.bf16.mxu0 %v1101
        %1165 = vmatpush1.bf16.msra.mxu0 %v1100
        %1166 = vmatprep.subr.bf16.mxu0 %v1103
        %1167 = vmatpush1.bf16.msra.mxu0 %v1102
        %1168 = vmatprep.mubr.bf16.mxu0 %v912
        %1169 = vmatmul.mubr.bf16.gmra.mrb[0].mxu0 %v911
        %v1170 = vpop.f32.mrb[0].mxu0
        %v1171 = vadd.f32 0.0, %v1170
        %v1172 = vpop.f32.mrb[0].mxu0
        %v1173 = vadd.f32 0.0, %v1172
        %v1174 = vpop.f32.mrb[0].mxu0
        %v1175 = vadd.f32 0.0, %v1174
        %v1176 = vpop.f32.mrb[0].mxu0
        %v1177 = vadd.f32 0.0, %v1176
        %1178 = vmatprep.mubr.bf16.mxu0 %v914
        %1179 = vmatmul.mubr.bf16.gmra.mrb[0].mxu0 %v913
        %v1180 = vpop.f32.mrb[0].mxu0
        %v1181 = vadd.f32 0.0, %v1180
        %v1182 = vpop.f32.mrb[0].mxu0
        %v1183 = vadd.f32 0.0, %v1182
        %v1184 = vpop.f32.mrb[0].mxu0
        %v1185 = vadd.f32 0.0, %v1184
        %v1186 = vpop.f32.mrb[0].mxu0
        %v1187 = vadd.f32 0.0, %v1186
        %1188 = vmatprep.mubr.bf16.mxu0 %v916
        %1189 = vmatmul.mubr.bf16.gmra.mrb[0].mxu0 %v915
        %v1190 = vpop.f32.mrb[0].mxu0
        %v1191 = vadd.f32 0.0, %v1190
        %v1192 = vpop.f32.mrb[0].mxu0
        %v1193 = vadd.f32 0.0, %v1192
        %v1194 = vpop.f32.mrb[0].mxu0
        %v1195 = vadd.f32 0.0, %v1194
        %v1196 = vpop.f32.mrb[0].mxu0
        %v1197 = vadd.f32 0.0, %v1196
        %1198 = vmatprep.mubr.bf16.mxu0 %v918
        %1199 = vmatmul.mubr.bf16.gmra.mrb[0].mxu0 %v917
        %v1200 = vpop.f32.mrb[0].mxu0
        %v1201 = vadd.f32 0.0, %v1200
        %v1202 = vpop.f32.mrb[0].mxu0
        %v1203 = vadd.f32 0.0, %v1202
        %v1204 = vpop.f32.mrb[0].mxu0
        %v1205 = vadd.f32 0.0, %v1204
        %v1206 = vpop.f32.mrb[0].mxu0
        %v1207 = vadd.f32 0.0, %v1206
        %1208 = vmatprep.mubr.bf16.mxu0 %v920
        %1209 = vmatmul.mubr.bf16.gmra.mrb[0].mxu0 %v919
        %v1210 = vpop.f32.mrb[0].mxu0
        %v1211 = vadd.f32 0.0, %v1210
        %v1212 = vpop.f32.mrb[0].mxu0
        %v1213 = vadd.f32 0.0, %v1212
        %v1214 = vpop.f32.mrb[0].mxu0
        %v1215 = vadd.f32 0.0, %v1214
        %v1216 = vpop.f32.mrb[0].mxu0
        %v1217 = vadd.f32 0.0, %v1216
        %1218 = vmatprep.mubr.bf16.mxu0 %v922
        %1219 = vmatmul.mubr.bf16.gmra.mrb[0].mxu0 %v921
        %v1220 = vpop.f32.mrb[0].mxu0
        %v1221 = vadd.f32 0.0, %v1220
        %v1222 = vpop.f32.mrb[0].mxu0
        %v1223 = vadd.f32 0.0, %v1222
        %v1224 = vpop.f32.mrb[0].mxu0
        %v1225 = vadd.f32 0.0, %v1224
        %v1226 = vpop.f32.mrb[0].mxu0
        %v1227 = vadd.f32 0.0, %v1226
        %1228 = vmatprep.mubr.bf16.mxu0 %v924
        %1229 = vmatmul.mubr.bf16.gmra.mrb[0].mxu0 %v923
        %v1230 = vpop.f32.mrb[0].mxu0
        %v1231 = vadd.f32 0.0, %v1230
        %v1232 = vpop.f32.mrb[0].mxu0
        %v1233 = vadd.f32 0.0, %v1232
        %v1234 = vpop.f32.mrb[0].mxu0
        %v1235 = vadd.f32 0.0, %v1234
        %v1236 = vpop.f32.mrb[0].mxu0
        %v1237 = vadd.f32 0.0, %v1236
        %1238 = vmatprep.mubr.bf16.mxu0 %v926
        %1239 = vmatmul.mubr.bf16.gmra.mrb[0].mxu0 %v925
        %v1240 = vpop.f32.mrb[0].mxu0
        %v1241 = vadd.f32 0.0, %v1240
        %v1242 = vpop.f32.mrb[0].mxu0
        %v1243 = vadd.f32 0.0, %v1242
        %v1244 = vpop.f32.mrb[0].mxu0
        %v1245 = vadd.f32 0.0, %v1244
        %v1246 = vpop.f32.mrb[0].mxu0
        %v1247 = vadd.f32 0.0, %v1246
        %1248 = vmatprep.mubr.bf16.mxu0 %v928
        %1249 = vmatmul.mubr.bf16.gmra.mrb[0].mxu0 %v927
        %v1250 = vpop.f32.mrb[0].mxu0
        %v1251 = vadd.f32 0.0, %v1250
        %v1252 = vpop.f32.mrb[0].mxu0
        %v1253 = vadd.f32 0.0, %v1252
        %v1254 = vpop.f32.mrb[0].mxu0
        %v1255 = vadd.f32 0.0, %v1254
        %v1256 = vpop.f32.mrb[0].mxu0
        %v1257 = vadd.f32 0.0, %v1256
        %1258 = vmatprep.mubr.bf16.mxu0 %v930
        %1259 = vmatmul.mubr.bf16.gmra.mrb[0].mxu0 %v929
        %v1260 = vpop.f32.mrb[0].mxu0
        %v1261 = vadd.f32 0.0, %v1260
        %v1262 = vpop.f32.mrb[0].mxu0
        %v1263 = vadd.f32 0.0, %v1262
        %v1264 = vpop.f32.mrb[0].mxu0
        %v1265 = vadd.f32 0.0, %v1264
        %v1266 = vpop.f32.mrb[0].mxu0
        %v1267 = vadd.f32 0.0, %v1266
        %1268 = vmatprep.mubr.bf16.mxu0 %v932
        %1269 = vmatmul.mubr.bf16.gmra.mrb[0].mxu0 %v931
        %v1270 = vpop.f32.mrb[0].mxu0
        %v1271 = vadd.f32 0.0, %v1270
        %v1272 = vpop.f32.mrb[0].mxu0
        %v1273 = vadd.f32 0.0, %v1272
        %v1274 = vpop.f32.mrb[0].mxu0
        %v1275 = vadd.f32 0.0, %v1274
        %v1276 = vpop.f32.mrb[0].mxu0
        %v1277 = vadd.f32 0.0, %v1276
        %1278 = vmatprep.mubr.bf16.mxu0 %v934
        %1279 = vmatmul.mubr.bf16.gmra.mrb[0].mxu0 %v933
        %v1280 = vpop.f32.mrb[0].mxu0
        %v1281 = vadd.f32 0.0, %v1280
        %v1282 = vpop.f32.mrb[0].mxu0
        %v1283 = vadd.f32 0.0, %v1282
        %v1284 = vpop.f32.mrb[0].mxu0
        %v1285 = vadd.f32 0.0, %v1284
        %v1286 = vpop.f32.mrb[0].mxu0
        %v1287 = vadd.f32 0.0, %v1286
        %1288 = vmatprep.mubr.bf16.mxu0 %v936
        %1289 = vmatmul.mubr.bf16.gmra.mrb[0].mxu0 %v935
        %v1290 = vpop.f32.mrb[0].mxu0
        %v1291 = vadd.f32 0.0, %v1290
        %v1292 = vpop.f32.mrb[0].mxu0
        %v1293 = vadd.f32 0.0, %v1292
        %v1294 = vpop.f32.mrb[0].mxu0
        %v1295 = vadd.f32 0.0, %v1294
        %v1296 = vpop.f32.mrb[0].mxu0
        %v1297 = vadd.f32 0.0, %v1296
        %1298 = vmatprep.mubr.bf16.mxu0 %v938
        %1299 = vmatmul.mubr.bf16.gmra.mrb[0].mxu0 %v937
        %v1300 = vpop.f32.mrb[0].mxu0
        %v1301 = vadd.f32 0.0, %v1300
        %v1302 = vpop.f32.mrb[0].mxu0
        %v1303 = vadd.f32 0.0, %v1302
        %v1304 = vpop.f32.mrb[0].mxu0
        %v1305 = vadd.f32 0.0, %v1304
        %v1306 = vpop.f32.mrb[0].mxu0
        %v1307 = vadd.f32 0.0, %v1306
        %1308 = vmatprep.mubr.bf16.mxu0 %v940
        %1309 = vmatmul.mubr.bf16.gmra.mrb[0].mxu0 %v939
        %v1310 = vpop.f32.mrb[0].mxu0
        %v1311 = vadd.f32 0.0, %v1310
        %v1312 = vpop.f32.mrb[0].mxu0
        %v1313 = vadd.f32 0.0, %v1312
        %v1314 = vpop.f32.mrb[0].mxu0
        %v1315 = vadd.f32 0.0, %v1314
        %v1316 = vpop.f32.mrb[0].mxu0
        %v1317 = vadd.f32 0.0, %v1316
        %1318 = vmatprep.mubr.bf16.mxu0 %v942
        %1319 = vmatmul.mubr.bf16.gmra.mrb[0].mxu0 %v941
        %v1320 = vpop.f32.mrb[0].mxu0
        %v1321 = vadd.f32 0.0, %v1320
        %v1322 = vpop.f32.mrb[0].mxu0
        %v1323 = vadd.f32 0.0, %v1322
        %v1324 = vpop.f32.mrb[0].mxu0
        %v1325 = vadd.f32 0.0, %v1324
        %v1326 = vpop.f32.mrb[0].mxu0
        %v1327 = vadd.f32 0.0, %v1326
        %1328 = vdwg.mxu0
        %v1361 = vunpack.c.l.b16 %v879
        %v1362 = vunpack.c.h.b16 %v879
        %v1363 = vunpack.c.l.b16 %v880
        %v1364 = vunpack.c.h.b16 %v880
        %v1365 = vunpack.c.l.b16 %v881
        %v1366 = vunpack.c.h.b16 %v881
        %v1367 = vunpack.c.l.b16 %v882
        %v1368 = vunpack.c.h.b16 %v882
        %v1369 = vunpack.c.l.b16 %v883
        %v1370 = vunpack.c.h.b16 %v883
        %v1371 = vunpack.c.l.b16 %v884
        %v1372 = vunpack.c.h.b16 %v884
        %v1373 = vunpack.c.l.b16 %v885
        %v1374 = vunpack.c.h.b16 %v885
        %v1375 = vunpack.c.l.b16 %v886
        %v1376 = vunpack.c.h.b16 %v886
        %v1377 = vunpack.c.l.b16 %v887
        %v1378 = vunpack.c.h.b16 %v887
        %v1379 = vunpack.c.l.b16 %v888
        %v1380 = vunpack.c.h.b16 %v888
        %v1381 = vunpack.c.l.b16 %v889
        %v1382 = vunpack.c.h.b16 %v889
        %v1383 = vunpack.c.l.b16 %v890
        %v1384 = vunpack.c.h.b16 %v890
        %v1385 = vunpack.c.l.b16 %v891
        %v1386 = vunpack.c.h.b16 %v891
        %v1387 = vunpack.c.l.b16 %v892
        %v1388 = vunpack.c.h.b16 %v892
        %v1389 = vunpack.c.l.b16 %v893
        %v1390 = vunpack.c.h.b16 %v893
        %v1391 = vunpack.c.l.b16 %v894
        %v1392 = vunpack.c.h.b16 %v894
        %v1393 = vunpack.c.l.b16 %v895
        %v1394 = vunpack.c.h.b16 %v895
        %v1395 = vunpack.c.l.b16 %v896
        %v1396 = vunpack.c.h.b16 %v896
        %v1397 = vunpack.c.l.b16 %v897
        %v1398 = vunpack.c.h.b16 %v897
        %v1399 = vunpack.c.l.b16 %v898
        %v1400 = vunpack.c.h.b16 %v898
        %v1401 = vunpack.c.l.b16 %v899
        %v1402 = vunpack.c.h.b16 %v899
        %v1403 = vunpack.c.l.b16 %v900
        %v1404 = vunpack.c.h.b16 %v900
        %v1405 = vunpack.c.l.b16 %v901
        %v1406 = vunpack.c.h.b16 %v901
        %v1407 = vunpack.c.l.b16 %v902
        %v1408 = vunpack.c.h.b16 %v902
        %v1409 = vunpack.c.l.b16 %v903
        %v1410 = vunpack.c.h.b16 %v903
        %v1411 = vunpack.c.l.b16 %v904
        %v1412 = vunpack.c.h.b16 %v904
        %v1413 = vunpack.c.l.b16 %v905
        %v1414 = vunpack.c.h.b16 %v905
        %v1415 = vunpack.c.l.b16 %v906
        %v1416 = vunpack.c.h.b16 %v906
        %v1417 = vunpack.c.l.b16 %v907
        %v1418 = vunpack.c.h.b16 %v907
        %v1419 = vunpack.c.l.b16 %v908
        %v1420 = vunpack.c.h.b16 %v908
        %v1421 = vunpack.c.l.b16 %v909
        %v1422 = vunpack.c.h.b16 %v909
        %v1423 = vunpack.c.l.b16 %v910
        %v1424 = vunpack.c.h.b16 %v910
        %v1425 = vpack.c.b16 %v1363, %v1361
        %v1426 = vpack.c.b16 %v1364, %v1362
        %v1427 = vpack.c.b16 %v1367, %v1365
        %v1428 = vpack.c.b16 %v1368, %v1366
        %v1429 = vpack.c.b16 %v1371, %v1369
        %v1430 = vpack.c.b16 %v1372, %v1370
        %v1431 = vpack.c.b16 %v1375, %v1373
        %v1432 = vpack.c.b16 %v1376, %v1374
        %v1433 = vpack.c.b16 %v1379, %v1377
        %v1434 = vpack.c.b16 %v1380, %v1378
        %v1435 = vpack.c.b16 %v1383, %v1381
        %v1436 = vpack.c.b16 %v1384, %v1382
        %v1437 = vpack.c.b16 %v1387, %v1385
        %v1438 = vpack.c.b16 %v1388, %v1386
        %v1439 = vpack.c.b16 %v1391, %v1389
        %v1440 = vpack.c.b16 %v1392, %v1390
        %v1441 = vpack.c.b16 %v1395, %v1393
        %v1442 = vpack.c.b16 %v1396, %v1394
        %v1443 = vpack.c.b16 %v1399, %v1397
        %v1444 = vpack.c.b16 %v1400, %v1398
        %v1445 = vpack.c.b16 %v1403, %v1401
        %v1446 = vpack.c.b16 %v1404, %v1402
        %v1447 = vpack.c.b16 %v1407, %v1405
        %v1448 = vpack.c.b16 %v1408, %v1406
        %v1449 = vpack.c.b16 %v1411, %v1409
        %v1450 = vpack.c.b16 %v1412, %v1410
        %v1451 = vpack.c.b16 %v1415, %v1413
        %v1452 = vpack.c.b16 %v1416, %v1414
        %v1453 = vpack.c.b16 %v1419, %v1417
        %v1454 = vpack.c.b16 %v1420, %v1418
        %v1455 = vpack.c.b16 %v1423, %v1421
        %v1456 = vpack.c.b16 %v1424, %v1422
        %1489 = vmatprep.subr.bf16.mxu0 %v1426
        %1490 = vmatpush1.bf16.msra.mxu0 %v1425
        %1491 = vmatprep.subr.bf16.mxu0 %v1428
        %1492 = vmatpush1.bf16.msra.mxu0 %v1427
        %1493 = vmatprep.subr.bf16.mxu0 %v1430
        %1494 = vmatpush1.bf16.msra.mxu0 %v1429
        %1495 = vmatprep.subr.bf16.mxu0 %v1432
        %1496 = vmatpush1.bf16.msra.mxu0 %v1431
        %1497 = vmatprep.subr.bf16.mxu0 %v1434
        %1498 = vmatpush1.bf16.msra.mxu0 %v1433
        %1499 = vmatprep.subr.bf16.mxu0 %v1436
        %1500 = vmatpush1.bf16.msra.mxu0 %v1435
        %1501 = vmatprep.subr.bf16.mxu0 %v1438
        %1502 = vmatpush1.bf16.msra.mxu0 %v1437
        %1503 = vmatprep.subr.bf16.mxu0 %v1440
        %1504 = vmatpush1.bf16.msra.mxu0 %v1439
        %1505 = vmatprep.subr.bf16.mxu0 %v1442
        %1506 = vmatpush1.bf16.msra.mxu0 %v1441
        %1507 = vmatprep.subr.bf16.mxu0 %v1444
        %1508 = vmatpush1.bf16.msra.mxu0 %v1443
        %1509 = vmatprep.subr.bf16.mxu0 %v1446
        %1510 = vmatpush1.bf16.msra.mxu0 %v1445
        %1511 = vmatprep.subr.bf16.mxu0 %v1448
        %1512 = vmatpush1.bf16.msra.mxu0 %v1447
        %1513 = vmatprep.subr.bf16.mxu0 %v1450
        %1514 = vmatpush1.bf16.msra.mxu0 %v1449
        %1515 = vmatprep.subr.bf16.mxu0 %v1452
        %1516 = vmatpush1.bf16.msra.mxu0 %v1451
        %1517 = vmatprep.subr.bf16.mxu0 %v1454
        %1518 = vmatpush1.bf16.msra.mxu0 %v1453
        %1519 = vmatprep.subr.bf16.mxu0 %v1456
        %1520 = vmatpush1.bf16.msra.mxu0 %v1455
        %1521 = vmatprep.mubr.bf16.mxu0 %v848
        %1522 = vmatmul.mubr.bf16.gmra.mrb[0].mxu0 %v847
        %v1523 = vpop.f32.mrb[0].mxu0
        %v1524 = vadd.f32 %v1171, %v1523
        %v1525 = vpop.f32.mrb[0].mxu0
        %v1526 = vadd.f32 %v1173, %v1525
        %v1527 = vpop.f32.mrb[0].mxu0
        %v1528 = vadd.f32 %v1175, %v1527
        %v1529 = vpop.f32.mrb[0].mxu0
        %v1530 = vadd.f32 %v1177, %v1529
        %1531 = vmatprep.mubr.bf16.mxu0 %v850
        %1532 = vmatmul.mubr.bf16.gmra.mrb[0].mxu0 %v849
        %v1533 = vpop.f32.mrb[0].mxu0
        %v1534 = vadd.f32 %v1181, %v1533
        %v1535 = vpop.f32.mrb[0].mxu0
        %v1536 = vadd.f32 %v1183, %v1535
        %v1537 = vpop.f32.mrb[0].mxu0
        %v1538 = vadd.f32 %v1185, %v1537
        %v1539 = vpop.f32.mrb[0].mxu0
        %v1540 = vadd.f32 %v1187, %v1539
        %1541 = vmatprep.mubr.bf16.mxu0 %v852
        %1542 = vmatmul.mubr.bf16.gmra.mrb[0].mxu0 %v851
        %v1543 = vpop.f32.mrb[0].mxu0
        %v1544 = vadd.f32 %v1191, %v1543
        %v1545 = vpop.f32.mrb[0].mxu0
        %v1546 = vadd.f32 %v1193, %v1545
        %v1547 = vpop.f32.mrb[0].mxu0
        %v1548 = vadd.f32 %v1195, %v1547
        %v1549 = vpop.f32.mrb[0].mxu0
        %v1550 = vadd.f32 %v1197, %v1549
        %1551 = vmatprep.mubr.bf16.mxu0 %v854
        %1552 = vmatmul.mubr.bf16.gmra.mrb[0].mxu0 %v853
        %v1553 = vpop.f32.mrb[0].mxu0
        %v1554 = vadd.f32 %v1201, %v1553
        %v1555 = vpop.f32.mrb[0].mxu0
        %v1556 = vadd.f32 %v1203, %v1555
        %v1557 = vpop.f32.mrb[0].mxu0
        %v1558 = vadd.f32 %v1205, %v1557
        %v1559 = vpop.f32.mrb[0].mxu0
        %v1560 = vadd.f32 %v1207, %v1559
        %1561 = vmatprep.mubr.bf16.mxu0 %v856
        %1562 = vmatmul.mubr.bf16.gmra.mrb[0].mxu0 %v855
        %v1563 = vpop.f32.mrb[0].mxu0
        %v1564 = vadd.f32 %v1211, %v1563
        %v1565 = vpop.f32.mrb[0].mxu0
        %v1566 = vadd.f32 %v1213, %v1565
        %v1567 = vpop.f32.mrb[0].mxu0
        %v1568 = vadd.f32 %v1215, %v1567
        %v1569 = vpop.f32.mrb[0].mxu0
        %v1570 = vadd.f32 %v1217, %v1569
        %1571 = vmatprep.mubr.bf16.mxu0 %v858
        %1572 = vmatmul.mubr.bf16.gmra.mrb[0].mxu0 %v857
        %v1573 = vpop.f32.mrb[0].mxu0
        %v1574 = vadd.f32 %v1221, %v1573
        %v1575 = vpop.f32.mrb[0].mxu0
        %v1576 = vadd.f32 %v1223, %v1575
        %v1577 = vpop.f32.mrb[0].mxu0
        %v1578 = vadd.f32 %v1225, %v1577
        %v1579 = vpop.f32.mrb[0].mxu0
        %v1580 = vadd.f32 %v1227, %v1579
        %1581 = vmatprep.mubr.bf16.mxu0 %v860
        %1582 = vmatmul.mubr.bf16.gmra.mrb[0].mxu0 %v859
        %v1583 = vpop.f32.mrb[0].mxu0
        %v1584 = vadd.f32 %v1231, %v1583
        %v1585 = vpop.f32.mrb[0].mxu0
        %v1586 = vadd.f32 %v1233, %v1585
        %v1587 = vpop.f32.mrb[0].mxu0
        %v1588 = vadd.f32 %v1235, %v1587
        %v1589 = vpop.f32.mrb[0].mxu0
        %v1590 = vadd.f32 %v1237, %v1589
        %1591 = vmatprep.mubr.bf16.mxu0 %v862
        %1592 = vmatmul.mubr.bf16.gmra.mrb[0].mxu0 %v861
        %v1593 = vpop.f32.mrb[0].mxu0
        %v1594 = vadd.f32 %v1241, %v1593
        %v1595 = vpop.f32.mrb[0].mxu0
        %v1596 = vadd.f32 %v1243, %v1595
        %v1597 = vpop.f32.mrb[0].mxu0
        %v1598 = vadd.f32 %v1245, %v1597
        %v1599 = vpop.f32.mrb[0].mxu0
        %v1600 = vadd.f32 %v1247, %v1599
        %1601 = vmatprep.mubr.bf16.mxu0 %v864
        %1602 = vmatmul.mubr.bf16.gmra.mrb[0].mxu0 %v863
        %v1603 = vpop.f32.mrb[0].mxu0
        %v1604 = vadd.f32 %v1251, %v1603
        %v1605 = vpop.f32.mrb[0].mxu0
        %v1606 = vadd.f32 %v1253, %v1605
        %v1607 = vpop.f32.mrb[0].mxu0
        %v1608 = vadd.f32 %v1255, %v1607
        %v1609 = vpop.f32.mrb[0].mxu0
        %v1610 = vadd.f32 %v1257, %v1609
        %1611 = vmatprep.mubr.bf16.mxu0 %v866
        %1612 = vmatmul.mubr.bf16.gmra.mrb[0].mxu0 %v865
        %v1613 = vpop.f32.mrb[0].mxu0
        %v1614 = vadd.f32 %v1261, %v1613
        %v1615 = vpop.f32.mrb[0].mxu0
        %v1616 = vadd.f32 %v1263, %v1615
        %v1617 = vpop.f32.mrb[0].mxu0
        %v1618 = vadd.f32 %v1265, %v1617
        %v1619 = vpop.f32.mrb[0].mxu0
        %v1620 = vadd.f32 %v1267, %v1619
        %1621 = vmatprep.mubr.bf16.mxu0 %v868
        %1622 = vmatmul.mubr.bf16.gmra.mrb[0].mxu0 %v867
        %v1623 = vpop.f32.mrb[0].mxu0
        %v1624 = vadd.f32 %v1271, %v1623
        %v1625 = vpop.f32.mrb[0].mxu0
        %v1626 = vadd.f32 %v1273, %v1625
        %v1627 = vpop.f32.mrb[0].mxu0
        %v1628 = vadd.f32 %v1275, %v1627
        %v1629 = vpop.f32.mrb[0].mxu0
        %v1630 = vadd.f32 %v1277, %v1629
        %1631 = vmatprep.mubr.bf16.mxu0 %v870
        %1632 = vmatmul.mubr.bf16.gmra.mrb[0].mxu0 %v869
        %v1633 = vpop.f32.mrb[0].mxu0
        %v1634 = vadd.f32 %v1281, %v1633
        %v1635 = vpop.f32.mrb[0].mxu0
        %v1636 = vadd.f32 %v1283, %v1635
        %v1637 = vpop.f32.mrb[0].mxu0
        %v1638 = vadd.f32 %v1285, %v1637
        %v1639 = vpop.f32.mrb[0].mxu0
        %v1640 = vadd.f32 %v1287, %v1639
        %1641 = vmatprep.mubr.bf16.mxu0 %v872
        %1642 = vmatmul.mubr.bf16.gmra.mrb[0].mxu0 %v871
        %v1643 = vpop.f32.mrb[0].mxu0
        %v1644 = vadd.f32 %v1291, %v1643
        %v1645 = vpop.f32.mrb[0].mxu0
        %v1646 = vadd.f32 %v1293, %v1645
        %v1647 = vpop.f32.mrb[0].mxu0
        %v1648 = vadd.f32 %v1295, %v1647
        %v1649 = vpop.f32.mrb[0].mxu0
        %v1650 = vadd.f32 %v1297, %v1649
        %1651 = vmatprep.mubr.bf16.mxu0 %v874
        %1652 = vmatmul.mubr.bf16.gmra.mrb[0].mxu0 %v873
        %v1653 = vpop.f32.mrb[0].mxu0
        %v1654 = vadd.f32 %v1301, %v1653
        %v1655 = vpop.f32.mrb[0].mxu0
        %v1656 = vadd.f32 %v1303, %v1655
        %v1657 = vpop.f32.mrb[0].mxu0
        %v1658 = vadd.f32 %v1305, %v1657
        %v1659 = vpop.f32.mrb[0].mxu0
        %v1660 = vadd.f32 %v1307, %v1659
        %1661 = vmatprep.mubr.bf16.mxu0 %v876
        %1662 = vmatmul.mubr.bf16.gmra.mrb[0].mxu0 %v875
        %v1663 = vpop.f32.mrb[0].mxu0
        %v1664 = vadd.f32 %v1311, %v1663
        %v1665 = vpop.f32.mrb[0].mxu0
        %v1666 = vadd.f32 %v1313, %v1665
        %v1667 = vpop.f32.mrb[0].mxu0
        %v1668 = vadd.f32 %v1315, %v1667
        %v1669 = vpop.f32.mrb[0].mxu0
        %v1670 = vadd.f32 %v1317, %v1669
        %1671 = vmatprep.mubr.bf16.mxu0 %v878
        %1672 = vmatmul.mubr.bf16.gmra.mrb[0].mxu0 %v877
        %v1673 = vpop.f32.mrb[0].mxu0
        %v1674 = vadd.f32 %v1321, %v1673
        %v1675 = vpop.f32.mrb[0].mxu0
        %v1676 = vadd.f32 %v1323, %v1675
        %v1677 = vpop.f32.mrb[0].mxu0
        %v1678 = vadd.f32 %v1325, %v1677
        %v1679 = vpop.f32.mrb[0].mxu0
        %v1680 = vadd.f32 %v1327, %v1679
        %1681 = vdwg.mxu0
        %v1682 = vld [vmem:[%s181] sm:$0xff]
        %v1683 = vld [vmem:[%s181 + $0x8] sm:$0xff]
        %v1684 = vld [vmem:[%s181 + $0x10] sm:$0xff]
        %v1685 = vld [vmem:[%s181 + $0x18] sm:$0xff]
        %v1686 = vld [vmem:[%s181 + $0x20] sm:$0xff]
        %v1687 = vld [vmem:[%s181 + $0x28] sm:$0xff]
        %v1688 = vld [vmem:[%s181 + $0x30] sm:$0xff]
        %v1689 = vld [vmem:[%s181 + $0x38] sm:$0xff]
        %v1690 = vld [vmem:[%s181 + $0x40] sm:$0xff]
        %v1691 = vld [vmem:[%s181 + $0x48] sm:$0xff]
        %v1692 = vld [vmem:[%s181 + $0x50] sm:$0xff]
        %v1693 = vld [vmem:[%s181 + $0x58] sm:$0xff]
        %v1694 = vld [vmem:[%s181 + $0x60] sm:$0xff]
        %v1695 = vld [vmem:[%s181 + $0x68] sm:$0xff]
        %v1696 = vld [vmem:[%s181 + $0x70] sm:$0xff]
        %v1697 = vld [vmem:[%s181 + $0x78] sm:$0xff]
        %v1698 = vld [vmem:[%s181 + $0x80] sm:$0xff]
        %v1699 = vld [vmem:[%s181 + $0x88] sm:$0xff]
        %v1700 = vld [vmem:[%s181 + $0x90] sm:$0xff]
        %v1701 = vld [vmem:[%s181 + $0x98] sm:$0xff]
        %v1702 = vld [vmem:[%s181 + $0xa0] sm:$0xff]
        %v1703 = vld [vmem:[%s181 + $0xa8] sm:$0xff]
        %v1704 = vld [vmem:[%s181 + $0xb0] sm:$0xff]
        %v1705 = vld [vmem:[%s181 + $0xb8] sm:$0xff]
        %v1706 = vld [vmem:[%s181 + $0xc0] sm:$0xff]
        %v1707 = vld [vmem:[%s181 + $0xc8] sm:$0xff]
        %v1708 = vld [vmem:[%s181 + $0xd0] sm:$0xff]
        %v1709 = vld [vmem:[%s181 + $0xd8] sm:$0xff]
        %v1710 = vld [vmem:[%s181 + $0xe0] sm:$0xff]
        %v1711 = vld [vmem:[%s181 + $0xe8] sm:$0xff]
        %v1712 = vld [vmem:[%s181 + $0xf0] sm:$0xff]
        %v1713 = vld [vmem:[%s181 + $0xf8] sm:$0xff]
        %s1714 = scalar_lea.vmem %s1, 512
        %v1715 = vld [vmem:[%s1714] sm:$0xff]
        %v1716 = vld [vmem:[%s1714 + $0x8] sm:$0xff]
        %v1717 = vld [vmem:[%s1714 + $0x10] sm:$0xff]
        %v1718 = vld [vmem:[%s1714 + $0x18] sm:$0xff]
        %v1719 = vld [vmem:[%s1714 + $0x20] sm:$0xff]
        %v1720 = vld [vmem:[%s1714 + $0x28] sm:$0xff]
        %v1721 = vld [vmem:[%s1714 + $0x30] sm:$0xff]
        %v1722 = vld [vmem:[%s1714 + $0x38] sm:$0xff]
        %v1723 = vld [vmem:[%s1714 + $0x40] sm:$0xff]
        %v1724 = vld [vmem:[%s1714 + $0x48] sm:$0xff]
        %v1725 = vld [vmem:[%s1714 + $0x50] sm:$0xff]
        %v1726 = vld [vmem:[%s1714 + $0x58] sm:$0xff]
        %v1727 = vld [vmem:[%s1714 + $0x60] sm:$0xff]
        %v1728 = vld [vmem:[%s1714 + $0x68] sm:$0xff]
        %v1729 = vld [vmem:[%s1714 + $0x70] sm:$0xff]
        %v1730 = vld [vmem:[%s1714 + $0x78] sm:$0xff]
        %v1731 = vld [vmem:[%s1714 + $0x80] sm:$0xff]
        %v1732 = vld [vmem:[%s1714 + $0x88] sm:$0xff]
        %v1733 = vld [vmem:[%s1714 + $0x90] sm:$0xff]
        %v1734 = vld [vmem:[%s1714 + $0x98] sm:$0xff]
        %v1735 = vld [vmem:[%s1714 + $0xa0] sm:$0xff]
        %v1736 = vld [vmem:[%s1714 + $0xa8] sm:$0xff]
        %v1737 = vld [vmem:[%s1714 + $0xb0] sm:$0xff]
        %v1738 = vld [vmem:[%s1714 + $0xb8] sm:$0xff]
        %v1739 = vld [vmem:[%s1714 + $0xc0] sm:$0xff]
        %v1740 = vld [vmem:[%s1714 + $0xc8] sm:$0xff]
        %v1741 = vld [vmem:[%s1714 + $0xd0] sm:$0xff]
        %v1742 = vld [vmem:[%s1714 + $0xd8] sm:$0xff]
        %v1743 = vld [vmem:[%s1714 + $0xe0] sm:$0xff]
        %v1744 = vld [vmem:[%s1714 + $0xe8] sm:$0xff]
        %v1745 = vld [vmem:[%s1714 + $0xf0] sm:$0xff]
        %v1746 = vld [vmem:[%s1714 + $0xf8] sm:$0xff]
        %v1779 = vunpack.c.l.b16 %v1715
        %v1780 = vunpack.c.h.b16 %v1715
        %v1781 = vunpack.c.l.b16 %v1716
        %v1782 = vunpack.c.h.b16 %v1716
        %v1783 = vunpack.c.l.b16 %v1717
        %v1784 = vunpack.c.h.b16 %v1717
        %v1785 = vunpack.c.l.b16 %v1718
        %v1786 = vunpack.c.h.b16 %v1718
        %v1787 = vunpack.c.l.b16 %v1719
        %v1788 = vunpack.c.h.b16 %v1719
        %v1789 = vunpack.c.l.b16 %v1720
        %v1790 = vunpack.c.h.b16 %v1720
        %v1791 = vunpack.c.l.b16 %v1721
        %v1792 = vunpack.c.h.b16 %v1721
        %v1793 = vunpack.c.l.b16 %v1722
        %v1794 = vunpack.c.h.b16 %v1722
        %v1795 = vunpack.c.l.b16 %v1723
        %v1796 = vunpack.c.h.b16 %v1723
        %v1797 = vunpack.c.l.b16 %v1724
        %v1798 = vunpack.c.h.b16 %v1724
        %v1799 = vunpack.c.l.b16 %v1725
        %v1800 = vunpack.c.h.b16 %v1725
        %v1801 = vunpack.c.l.b16 %v1726
        %v1802 = vunpack.c.h.b16 %v1726
        %v1803 = vunpack.c.l.b16 %v1727
        %v1804 = vunpack.c.h.b16 %v1727
        %v1805 = vunpack.c.l.b16 %v1728
        %v1806 = vunpack.c.h.b16 %v1728
        %v1807 = vunpack.c.l.b16 %v1729
        %v1808 = vunpack.c.h.b16 %v1729
        %v1809 = vunpack.c.l.b16 %v1730
        %v1810 = vunpack.c.h.b16 %v1730
        %v1811 = vunpack.c.l.b16 %v1731
        %v1812 = vunpack.c.h.b16 %v1731
        %v1813 = vunpack.c.l.b16 %v1732
        %v1814 = vunpack.c.h.b16 %v1732
        %v1815 = vunpack.c.l.b16 %v1733
        %v1816 = vunpack.c.h.b16 %v1733
        %v1817 = vunpack.c.l.b16 %v1734
        %v1818 = vunpack.c.h.b16 %v1734
        %v1819 = vunpack.c.l.b16 %v1735
        %v1820 = vunpack.c.h.b16 %v1735
        %v1821 = vunpack.c.l.b16 %v1736
        %v1822 = vunpack.c.h.b16 %v1736
        %v1823 = vunpack.c.l.b16 %v1737
        %v1824 = vunpack.c.h.b16 %v1737
        %v1825 = vunpack.c.l.b16 %v1738
        %v1826 = vunpack.c.h.b16 %v1738
        %v1827 = vunpack.c.l.b16 %v1739
        %v1828 = vunpack.c.h.b16 %v1739
        %v1829 = vunpack.c.l.b16 %v1740
        %v1830 = vunpack.c.h.b16 %v1740
        %v1831 = vunpack.c.l.b16 %v1741
        %v1832 = vunpack.c.h.b16 %v1741
        %v1833 = vunpack.c.l.b16 %v1742
        %v1834 = vunpack.c.h.b16 %v1742
        %v1835 = vunpack.c.l.b16 %v1743
        %v1836 = vunpack.c.h.b16 %v1743
        %v1837 = vunpack.c.l.b16 %v1744
        %v1838 = vunpack.c.h.b16 %v1744
        %v1839 = vunpack.c.l.b16 %v1745
        %v1840 = vunpack.c.h.b16 %v1745
        %v1841 = vunpack.c.l.b16 %v1746
        %v1842 = vunpack.c.h.b16 %v1746
        %v1843 = vpack.c.b16 %v1781, %v1779
        %v1844 = vpack.c.b16 %v1782, %v1780
        %v1845 = vpack.c.b16 %v1785, %v1783
        %v1846 = vpack.c.b16 %v1786, %v1784
        %v1847 = vpack.c.b16 %v1789, %v1787
        %v1848 = vpack.c.b16 %v1790, %v1788
        %v1849 = vpack.c.b16 %v1793, %v1791
        %v1850 = vpack.c.b16 %v1794, %v1792
        %v1851 = vpack.c.b16 %v1797, %v1795
        %v1852 = vpack.c.b16 %v1798, %v1796
        %v1853 = vpack.c.b16 %v1801, %v1799
        %v1854 = vpack.c.b16 %v1802, %v1800
        %v1855 = vpack.c.b16 %v1805, %v1803
        %v1856 = vpack.c.b16 %v1806, %v1804
        %v1857 = vpack.c.b16 %v1809, %v1807
        %v1858 = vpack.c.b16 %v1810, %v1808
        %v1859 = vpack.c.b16 %v1813, %v1811
        %v1860 = vpack.c.b16 %v1814, %v1812
        %v1861 = vpack.c.b16 %v1817, %v1815
        %v1862 = vpack.c.b16 %v1818, %v1816
        %v1863 = vpack.c.b16 %v1821, %v1819
        %v1864 = vpack.c.b16 %v1822, %v1820
        %v1865 = vpack.c.b16 %v1825, %v1823
        %v1866 = vpack.c.b16 %v1826, %v1824
        %v1867 = vpack.c.b16 %v1829, %v1827
        %v1868 = vpack.c.b16 %v1830, %v1828
        %v1869 = vpack.c.b16 %v1833, %v1831
        %v1870 = vpack.c.b16 %v1834, %v1832
        %v1871 = vpack.c.b16 %v1837, %v1835
        %v1872 = vpack.c.b16 %v1838, %v1836
        %v1873 = vpack.c.b16 %v1841, %v1839
        %v1874 = vpack.c.b16 %v1842, %v1840
        %1907 = vmatprep.subr.bf16.mxu0 %v1844
        %1908 = vmatpush1.bf16.msra.mxu0 %v1843
        %1909 = vmatprep.subr.bf16.mxu0 %v1846
        %1910 = vmatpush1.bf16.msra.mxu0 %v1845
        %1911 = vmatprep.subr.bf16.mxu0 %v1848
        %1912 = vmatpush1.bf16.msra.mxu0 %v1847
        %1913 = vmatprep.subr.bf16.mxu0 %v1850
        %1914 = vmatpush1.bf16.msra.mxu0 %v1849
        %1915 = vmatprep.subr.bf16.mxu0 %v1852
        %1916 = vmatpush1.bf16.msra.mxu0 %v1851
        %1917 = vmatprep.subr.bf16.mxu0 %v1854
        %1918 = vmatpush1.bf16.msra.mxu0 %v1853
        %1919 = vmatprep.subr.bf16.mxu0 %v1856
        %1920 = vmatpush1.bf16.msra.mxu0 %v1855
        %1921 = vmatprep.subr.bf16.mxu0 %v1858
        %1922 = vmatpush1.bf16.msra.mxu0 %v1857
        %1923 = vmatprep.subr.bf16.mxu0 %v1860
        %1924 = vmatpush1.bf16.msra.mxu0 %v1859
        %1925 = vmatprep.subr.bf16.mxu0 %v1862
        %1926 = vmatpush1.bf16.msra.mxu0 %v1861
        %1927 = vmatprep.subr.bf16.mxu0 %v1864
        %1928 = vmatpush1.bf16.msra.mxu0 %v1863
        %1929 = vmatprep.subr.bf16.mxu0 %v1866
        %1930 = vmatpush1.bf16.msra.mxu0 %v1865
        %1931 = vmatprep.subr.bf16.mxu0 %v1868
        %1932 = vmatpush1.bf16.msra.mxu0 %v1867
        %1933 = vmatprep.subr.bf16.mxu0 %v1870
        %1934 = vmatpush1.bf16.msra.mxu0 %v1869
        %1935 = vmatprep.subr.bf16.mxu0 %v1872
        %1936 = vmatpush1.bf16.msra.mxu0 %v1871
        %1937 = vmatprep.subr.bf16.mxu0 %v1874
        %1938 = vmatpush1.bf16.msra.mxu0 %v1873
        %1939 = vmatprep.mubr.bf16.mxu0 %v1683
        %1940 = vmatmul.mubr.bf16.gmra.mrb[0].mxu0 %v1682
        %v1941 = vpop.f32.mrb[0].mxu0
        %v1942 = vadd.f32 0.0, %v1941
        %v1943 = vpop.f32.mrb[0].mxu0
        %v1944 = vadd.f32 0.0, %v1943
        %v1945 = vpop.f32.mrb[0].mxu0
        %v1946 = vadd.f32 0.0, %v1945
        %v1947 = vpop.f32.mrb[0].mxu0
        %v1948 = vadd.f32 0.0, %v1947
        %1949 = vmatprep.mubr.bf16.mxu0 %v1685
        %1950 = vmatmul.mubr.bf16.gmra.mrb[0].mxu0 %v1684
        %v1951 = vpop.f32.mrb[0].mxu0
        %v1952 = vadd.f32 0.0, %v1951
        %v1953 = vpop.f32.mrb[0].mxu0
        %v1954 = vadd.f32 0.0, %v1953
        %v1955 = vpop.f32.mrb[0].mxu0
        %v1956 = vadd.f32 0.0, %v1955
        %v1957 = vpop.f32.mrb[0].mxu0
        %v1958 = vadd.f32 0.0, %v1957
        %1959 = vmatprep.mubr.bf16.mxu0 %v1687
        %1960 = vmatmul.mubr.bf16.gmra.mrb[0].mxu0 %v1686
        %v1961 = vpop.f32.mrb[0].mxu0
        %v1962 = vadd.f32 0.0, %v1961
        %v1963 = vpop.f32.mrb[0].mxu0
        %v1964 = vadd.f32 0.0, %v1963
        %v1965 = vpop.f32.mrb[0].mxu0
        %v1966 = vadd.f32 0.0, %v1965
        %v1967 = vpop.f32.mrb[0].mxu0
        %v1968 = vadd.f32 0.0, %v1967
        %1969 = vmatprep.mubr.bf16.mxu0 %v1689
        %1970 = vmatmul.mubr.bf16.gmra.mrb[0].mxu0 %v1688
        %v1971 = vpop.f32.mrb[0].mxu0
        %v1972 = vadd.f32 0.0, %v1971
        %v1973 = vpop.f32.mrb[0].mxu0
        %v1974 = vadd.f32 0.0, %v1973
        %v1975 = vpop.f32.mrb[0].mxu0
        %v1976 = vadd.f32 0.0, %v1975
        %v1977 = vpop.f32.mrb[0].mxu0
        %v1978 = vadd.f32 0.0, %v1977
        %1979 = vmatprep.mubr.bf16.mxu0 %v1691
        %1980 = vmatmul.mubr.bf16.gmra.mrb[0].mxu0 %v1690
        %v1981 = vpop.f32.mrb[0].mxu0
        %v1982 = vadd.f32 0.0, %v1981
        %v1983 = vpop.f32.mrb[0].mxu0
        %v1984 = vadd.f32 0.0, %v1983
        %v1985 = vpop.f32.mrb[0].mxu0
        %v1986 = vadd.f32 0.0, %v1985
        %v1987 = vpop.f32.mrb[0].mxu0
        %v1988 = vadd.f32 0.0, %v1987
        %1989 = vmatprep.mubr.bf16.mxu0 %v1693
        %1990 = vmatmul.mubr.bf16.gmra.mrb[0].mxu0 %v1692
        %v1991 = vpop.f32.mrb[0].mxu0
        %v1992 = vadd.f32 0.0, %v1991
        %v1993 = vpop.f32.mrb[0].mxu0
        %v1994 = vadd.f32 0.0, %v1993
        %v1995 = vpop.f32.mrb[0].mxu0
        %v1996 = vadd.f32 0.0, %v1995
        %v1997 = vpop.f32.mrb[0].mxu0
        %v1998 = vadd.f32 0.0, %v1997
        %1999 = vmatprep.mubr.bf16.mxu0 %v1695
        %2000 = vmatmul.mubr.bf16.gmra.mrb[0].mxu0 %v1694
        %v2001 = vpop.f32.mrb[0].mxu0
        %v2002 = vadd.f32 0.0, %v2001
        %v2003 = vpop.f32.mrb[0].mxu0
        %v2004 = vadd.f32 0.0, %v2003
        %v2005 = vpop.f32.mrb[0].mxu0
        %v2006 = vadd.f32 0.0, %v2005
        %v2007 = vpop.f32.mrb[0].mxu0
        %v2008 = vadd.f32 0.0, %v2007
        %2009 = vmatprep.mubr.bf16.mxu0 %v1697
        %2010 = vmatmul.mubr.bf16.gmra.mrb[0].mxu0 %v1696
        %v2011 = vpop.f32.mrb[0].mxu0
        %v2012 = vadd.f32 0.0, %v2011
        %v2013 = vpop.f32.mrb[0].mxu0
        %v2014 = vadd.f32 0.0, %v2013
        %v2015 = vpop.f32.mrb[0].mxu0
        %v2016 = vadd.f32 0.0, %v2015
        %v2017 = vpop.f32.mrb[0].mxu0
        %v2018 = vadd.f32 0.0, %v2017
        %2019 = vmatprep.mubr.bf16.mxu0 %v1699
        %2020 = vmatmul.mubr.bf16.gmra.mrb[0].mxu0 %v1698
        %v2021 = vpop.f32.mrb[0].mxu0
        %v2022 = vadd.f32 0.0, %v2021
        %v2023 = vpop.f32.mrb[0].mxu0
        %v2024 = vadd.f32 0.0, %v2023
        %v2025 = vpop.f32.mrb[0].mxu0
        %v2026 = vadd.f32 0.0, %v2025
        %v2027 = vpop.f32.mrb[0].mxu0
        %v2028 = vadd.f32 0.0, %v2027
        %2029 = vmatprep.mubr.bf16.mxu0 %v1701
        %2030 = vmatmul.mubr.bf16.gmra.mrb[0].mxu0 %v1700
        %v2031 = vpop.f32.mrb[0].mxu0
        %v2032 = vadd.f32 0.0, %v2031
        %v2033 = vpop.f32.mrb[0].mxu0
        %v2034 = vadd.f32 0.0, %v2033
        %v2035 = vpop.f32.mrb[0].mxu0
        %v2036 = vadd.f32 0.0, %v2035
        %v2037 = vpop.f32.mrb[0].mxu0
        %v2038 = vadd.f32 0.0, %v2037
        %2039 = vmatprep.mubr.bf16.mxu0 %v1703
        %2040 = vmatmul.mubr.bf16.gmra.mrb[0].mxu0 %v1702
        %v2041 = vpop.f32.mrb[0].mxu0
        %v2042 = vadd.f32 0.0, %v2041
        %v2043 = vpop.f32.mrb[0].mxu0
        %v2044 = vadd.f32 0.0, %v2043
        %v2045 = vpop.f32.mrb[0].mxu0
        %v2046 = vadd.f32 0.0, %v2045
        %v2047 = vpop.f32.mrb[0].mxu0
        %v2048 = vadd.f32 0.0, %v2047
        %2049 = vmatprep.mubr.bf16.mxu0 %v1705
        %2050 = vmatmul.mubr.bf16.gmra.mrb[0].mxu0 %v1704
        %v2051 = vpop.f32.mrb[0].mxu0
        %v2052 = vadd.f32 0.0, %v2051
        %v2053 = vpop.f32.mrb[0].mxu0
        %v2054 = vadd.f32 0.0, %v2053
        %v2055 = vpop.f32.mrb[0].mxu0
        %v2056 = vadd.f32 0.0, %v2055
        %v2057 = vpop.f32.mrb[0].mxu0
        %v2058 = vadd.f32 0.0, %v2057
        %2059 = vmatprep.mubr.bf16.mxu0 %v1707
        %2060 = vmatmul.mubr.bf16.gmra.mrb[0].mxu0 %v1706
        %v2061 = vpop.f32.mrb[0].mxu0
        %v2062 = vadd.f32 0.0, %v2061
        %v2063 = vpop.f32.mrb[0].mxu0
        %v2064 = vadd.f32 0.0, %v2063
        %v2065 = vpop.f32.mrb[0].mxu0
        %v2066 = vadd.f32 0.0, %v2065
        %v2067 = vpop.f32.mrb[0].mxu0
        %v2068 = vadd.f32 0.0, %v2067
        %2069 = vmatprep.mubr.bf16.mxu0 %v1709
        %2070 = vmatmul.mubr.bf16.gmra.mrb[0].mxu0 %v1708
        %v2071 = vpop.f32.mrb[0].mxu0
        %v2072 = vadd.f32 0.0, %v2071
        %v2073 = vpop.f32.mrb[0].mxu0
        %v2074 = vadd.f32 0.0, %v2073
        %v2075 = vpop.f32.mrb[0].mxu0
        %v2076 = vadd.f32 0.0, %v2075
        %v2077 = vpop.f32.mrb[0].mxu0
        %v2078 = vadd.f32 0.0, %v2077
        %2079 = vmatprep.mubr.bf16.mxu0 %v1711
        %2080 = vmatmul.mubr.bf16.gmra.mrb[0].mxu0 %v1710
        %v2081 = vpop.f32.mrb[0].mxu0
        %v2082 = vadd.f32 0.0, %v2081
        %v2083 = vpop.f32.mrb[0].mxu0
        %v2084 = vadd.f32 0.0, %v2083
        %v2085 = vpop.f32.mrb[0].mxu0
        %v2086 = vadd.f32 0.0, %v2085
        %v2087 = vpop.f32.mrb[0].mxu0
        %v2088 = vadd.f32 0.0, %v2087
        %2089 = vmatprep.mubr.bf16.mxu0 %v1713
        %2090 = vmatmul.mubr.bf16.gmra.mrb[0].mxu0 %v1712
        %v2091 = vpop.f32.mrb[0].mxu0
        %v2092 = vadd.f32 0.0, %v2091
        %v2093 = vpop.f32.mrb[0].mxu0
        %v2094 = vadd.f32 0.0, %v2093
        %v2095 = vpop.f32.mrb[0].mxu0
        %v2096 = vadd.f32 0.0, %v2095
        %v2097 = vpop.f32.mrb[0].mxu0
        %v2098 = vadd.f32 0.0, %v2097
        %2099 = vdwg.mxu0
        %v2100 = vadd.f32 %v1524, %v1942
        %v2101 = vadd.f32 %v1526, %v1944
        %v2102 = vadd.f32 %v1528, %v1946
        %v2103 = vadd.f32 %v1530, %v1948
        %v2104 = vadd.f32 %v1534, %v1952
        %v2105 = vadd.f32 %v1536, %v1954
        %v2106 = vadd.f32 %v1538, %v1956
        %v2107 = vadd.f32 %v1540, %v1958
        %v2108 = vadd.f32 %v1544, %v1962
        %v2109 = vadd.f32 %v1546, %v1964
        %v2110 = vadd.f32 %v1548, %v1966
        %v2111 = vadd.f32 %v1550, %v1968
        %v2112 = vadd.f32 %v1554, %v1972
        %v2113 = vadd.f32 %v1556, %v1974
        %v2114 = vadd.f32 %v1558, %v1976
        %v2115 = vadd.f32 %v1560, %v1978
        %v2116 = vadd.f32 %v1564, %v1982
        %v2117 = vadd.f32 %v1566, %v1984
        %v2118 = vadd.f32 %v1568, %v1986
        %v2119 = vadd.f32 %v1570, %v1988
        %v2120 = vadd.f32 %v1574, %v1992
        %v2121 = vadd.f32 %v1576, %v1994
        %v2122 = vadd.f32 %v1578, %v1996
        %v2123 = vadd.f32 %v1580, %v1998
        %v2124 = vadd.f32 %v1584, %v2002
        %v2125 = vadd.f32 %v1586, %v2004
        %v2126 = vadd.f32 %v1588, %v2006
        %v2127 = vadd.f32 %v1590, %v2008
        %v2128 = vadd.f32 %v1594, %v2012
        %v2129 = vadd.f32 %v1596, %v2014
        %v2130 = vadd.f32 %v1598, %v2016
        %v2131 = vadd.f32 %v1600, %v2018
        %v2132 = vadd.f32 %v1604, %v2022
        %v2133 = vadd.f32 %v1606, %v2024
        %v2134 = vadd.f32 %v1608, %v2026
        %v2135 = vadd.f32 %v1610, %v2028
        %v2136 = vadd.f32 %v1614, %v2032
        %v2137 = vadd.f32 %v1616, %v2034
        %v2138 = vadd.f32 %v1618, %v2036
        %v2139 = vadd.f32 %v1620, %v2038
        %v2140 = vadd.f32 %v1624, %v2042
        %v2141 = vadd.f32 %v1626, %v2044
        %v2142 = vadd.f32 %v1628, %v2046
        %v2143 = vadd.f32 %v1630, %v2048
        %v2144 = vadd.f32 %v1634, %v2052
        %v2145 = vadd.f32 %v1636, %v2054
        %v2146 = vadd.f32 %v1638, %v2056
        %v2147 = vadd.f32 %v1640, %v2058
        %v2148 = vadd.f32 %v1644, %v2062
        %v2149 = vadd.f32 %v1646, %v2064
        %v2150 = vadd.f32 %v1648, %v2066
        %v2151 = vadd.f32 %v1650, %v2068
        %v2152 = vadd.f32 %v1654, %v2072
        %v2153 = vadd.f32 %v1656, %v2074
        %v2154 = vadd.f32 %v1658, %v2076
        %v2155 = vadd.f32 %v1660, %v2078
        %v2156 = vadd.f32 %v1664, %v2082
        %v2157 = vadd.f32 %v1666, %v2084
        %v2158 = vadd.f32 %v1668, %v2086
        %v2159 = vadd.f32 %v1670, %v2088
        %v2160 = vadd.f32 %v1674, %v2092
        %v2161 = vadd.f32 %v1676, %v2094
        %v2162 = vadd.f32 %v1678, %v2096
        %v2163 = vadd.f32 %v1680, %v2098
        %2164 = vst [vmem:[#allocation3] sm:$0xff] %v2100
        %2165 = vst [vmem:[#allocation3 + $0x8] sm:$0xff] %v2101
        %2166 = vst [vmem:[#allocation3 + $0x10] sm:$0xff] %v2102
        %2167 = vst [vmem:[#allocation3 + $0x18] sm:$0xff] %v2103
        %2168 = vst [vmem:[#allocation3 + $0x20] sm:$0xff] %v2104
        %2169 = vst [vmem:[#allocation3 + $0x28] sm:$0xff] %v2105
        %2170 = vst [vmem:[#allocation3 + $0x30] sm:$0xff] %v2106
        %2171 = vst [vmem:[#allocation3 + $0x38] sm:$0xff] %v2107
        %2172 = vst [vmem:[#allocation3 + $0x40] sm:$0xff] %v2108
        %2173 = vst [vmem:[#allocation3 + $0x48] sm:$0xff] %v2109
        %2174 = vst [vmem:[#allocation3 + $0x50] sm:$0xff] %v2110
        %2175 = vst [vmem:[#allocation3 + $0x58] sm:$0xff] %v2111
        %2176 = vst [vmem:[#allocation3 + $0x60] sm:$0xff] %v2112
        %2177 = vst [vmem:[#allocation3 + $0x68] sm:$0xff] %v2113
        %2178 = vst [vmem:[#allocation3 + $0x70] sm:$0xff] %v2114
        %2179 = vst [vmem:[#allocation3 + $0x78] sm:$0xff] %v2115
        %2180 = vst [vmem:[#allocation3 + $0x80] sm:$0xff] %v2116
        %2181 = vst [vmem:[#allocation3 + $0x88] sm:$0xff] %v2117
        %2182 = vst [vmem:[#allocation3 + $0x90] sm:$0xff] %v2118
        %2183 = vst [vmem:[#allocation3 + $0x98] sm:$0xff] %v2119
        %2184 = vst [vmem:[#allocation3 + $0xa0] sm:$0xff] %v2120
        %2185 = vst [vmem:[#allocation3 + $0xa8] sm:$0xff] %v2121
        %2186 = vst [vmem:[#allocation3 + $0xb0] sm:$0xff] %v2122
        %2187 = vst [vmem:[#allocation3 + $0xb8] sm:$0xff] %v2123
        %2188 = vst [vmem:[#allocation3 + $0xc0] sm:$0xff] %v2124
        %2189 = vst [vmem:[#allocation3 + $0xc8] sm:$0xff] %v2125
        %2190 = vst [vmem:[#allocation3 + $0xd0] sm:$0xff] %v2126
        %2191 = vst [vmem:[#allocation3 + $0xd8] sm:$0xff] %v2127
        %2192 = vst [vmem:[#allocation3 + $0xe0] sm:$0xff] %v2128
        %2193 = vst [vmem:[#allocation3 + $0xe8] sm:$0xff] %v2129
        %2194 = vst [vmem:[#allocation3 + $0xf0] sm:$0xff] %v2130
        %2195 = vst [vmem:[#allocation3 + $0xf8] sm:$0xff] %v2131
        %2196 = vst [vmem:[#allocation3 + $0x100] sm:$0xff] %v2132
        %2197 = vst [vmem:[#allocation3 + $0x108] sm:$0xff] %v2133
        %2198 = vst [vmem:[#allocation3 + $0x110] sm:$0xff] %v2134
        %2199 = vst [vmem:[#allocation3 + $0x118] sm:$0xff] %v2135
        %2200 = vst [vmem:[#allocation3 + $0x120] sm:$0xff] %v2136
        %2201 = vst [vmem:[#allocation3 + $0x128] sm:$0xff] %v2137
        %2202 = vst [vmem:[#allocation3 + $0x130] sm:$0xff] %v2138
        %2203 = vst [vmem:[#allocation3 + $0x138] sm:$0xff] %v2139
        %2204 = vst [vmem:[#allocation3 + $0x140] sm:$0xff] %v2140
        %2205 = vst [vmem:[#allocation3 + $0x148] sm:$0xff] %v2141
        %2206 = vst [vmem:[#allocation3 + $0x150] sm:$0xff] %v2142
        %2207 = vst [vmem:[#allocation3 + $0x158] sm:$0xff] %v2143
        %2208 = vst [vmem:[#allocation3 + $0x160] sm:$0xff] %v2144
        %2209 = vst [vmem:[#allocation3 + $0x168] sm:$0xff] %v2145
        %2210 = vst [vmem:[#allocation3 + $0x170] sm:$0xff] %v2146
        %2211 = vst [vmem:[#allocation3 + $0x178] sm:$0xff] %v2147
        %2212 = vst [vmem:[#allocation3 + $0x180] sm:$0xff] %v2148
        %2213 = vst [vmem:[#allocation3 + $0x188] sm:$0xff] %v2149
        %2214 = vst [vmem:[#allocation3 + $0x190] sm:$0xff] %v2150
        %2215 = vst [vmem:[#allocation3 + $0x198] sm:$0xff] %v2151
        %2216 = vst [vmem:[#allocation3 + $0x1a0] sm:$0xff] %v2152
        %2217 = vst [vmem:[#allocation3 + $0x1a8] sm:$0xff] %v2153
        %2218 = vst [vmem:[#allocation3 + $0x1b0] sm:$0xff] %v2154
        %2219 = vst [vmem:[#allocation3 + $0x1b8] sm:$0xff] %v2155
        %2220 = vst [vmem:[#allocation3 + $0x1c0] sm:$0xff] %v2156
        %2221 = vst [vmem:[#allocation3 + $0x1c8] sm:$0xff] %v2157
        %2222 = vst [vmem:[#allocation3 + $0x1d0] sm:$0xff] %v2158
        %2223 = vst [vmem:[#allocation3 + $0x1d8] sm:$0xff] %v2159
        %2224 = vst [vmem:[#allocation3 + $0x1e0] sm:$0xff] %v2160
        %2225 = vst [vmem:[#allocation3 + $0x1e8] sm:$0xff] %v2161
        %2226 = vst [vmem:[#allocation3 + $0x1f0] sm:$0xff] %v2162
        %2227 = vst [vmem:[#allocation3 + $0x1f8] sm:$0xff] %v2163
        %v2228 = vld [vmem:[%s487] sm:$0xff]
        %v2229 = vld [vmem:[%s487 + $0x8] sm:$0xff]
        %v2230 = vld [vmem:[%s487 + $0x10] sm:$0xff]
        %v2231 = vld [vmem:[%s487 + $0x18] sm:$0xff]
        %v2232 = vld [vmem:[%s487 + $0x20] sm:$0xff]
        %v2233 = vld [vmem:[%s487 + $0x28] sm:$0xff]
        %v2234 = vld [vmem:[%s487 + $0x30] sm:$0xff]
        %v2235 = vld [vmem:[%s487 + $0x38] sm:$0xff]
        %v2236 = vld [vmem:[%s487 + $0x40] sm:$0xff]
        %v2237 = vld [vmem:[%s487 + $0x48] sm:$0xff]
        %v2238 = vld [vmem:[%s487 + $0x50] sm:$0xff]
        %v2239 = vld [vmem:[%s487 + $0x58] sm:$0xff]
        %v2240 = vld [vmem:[%s487 + $0x60] sm:$0xff]
        %v2241 = vld [vmem:[%s487 + $0x68] sm:$0xff]
        %v2242 = vld [vmem:[%s487 + $0x70] sm:$0xff]
        %v2243 = vld [vmem:[%s487 + $0x78] sm:$0xff]
        %v2244 = vld [vmem:[%s487 + $0x80] sm:$0xff]
        %v2245 = vld [vmem:[%s487 + $0x88] sm:$0xff]
        %v2246 = vld [vmem:[%s487 + $0x90] sm:$0xff]
        %v2247 = vld [vmem:[%s487 + $0x98] sm:$0xff]
        %v2248 = vld [vmem:[%s487 + $0xa0] sm:$0xff]
        %v2249 = vld [vmem:[%s487 + $0xa8] sm:$0xff]
        %v2250 = vld [vmem:[%s487 + $0xb0] sm:$0xff]
        %v2251 = vld [vmem:[%s487 + $0xb8] sm:$0xff]
        %v2252 = vld [vmem:[%s487 + $0xc0] sm:$0xff]
        %v2253 = vld [vmem:[%s487 + $0xc8] sm:$0xff]
        %v2254 = vld [vmem:[%s487 + $0xd0] sm:$0xff]
        %v2255 = vld [vmem:[%s487 + $0xd8] sm:$0xff]
        %v2256 = vld [vmem:[%s487 + $0xe0] sm:$0xff]
        %v2257 = vld [vmem:[%s487 + $0xe8] sm:$0xff]
        %v2258 = vld [vmem:[%s487 + $0xf0] sm:$0xff]
        %v2259 = vld [vmem:[%s487 + $0xf8] sm:$0xff]
        %s2260 = scalar_lea.vmem %s1, 768
        %v2261 = vld [vmem:[%s2260] sm:$0xff]
        %v2262 = vld [vmem:[%s2260 + $0x8] sm:$0xff]
        %v2263 = vld [vmem:[%s2260 + $0x10] sm:$0xff]
        %v2264 = vld [vmem:[%s2260 + $0x18] sm:$0xff]
        %v2265 = vld [vmem:[%s2260 + $0x20] sm:$0xff]
        %v2266 = vld [vmem:[%s2260 + $0x28] sm:$0xff]
        %v2267 = vld [vmem:[%s2260 + $0x30] sm:$0xff]
        %v2268 = vld [vmem:[%s2260 + $0x38] sm:$0xff]
        %v2269 = vld [vmem:[%s2260 + $0x40] sm:$0xff]
        %v2270 = vld [vmem:[%s2260 + $0x48] sm:$0xff]
        %v2271 = vld [vmem:[%s2260 + $0x50] sm:$0xff]
        %v2272 = vld [vmem:[%s2260 + $0x58] sm:$0xff]
        %v2273 = vld [vmem:[%s2260 + $0x60] sm:$0xff]
        %v2274 = vld [vmem:[%s2260 + $0x68] sm:$0xff]
        %v2275 = vld [vmem:[%s2260 + $0x70] sm:$0xff]
        %v2276 = vld [vmem:[%s2260 + $0x78] sm:$0xff]
        %v2277 = vld [vmem:[%s2260 + $0x80] sm:$0xff]
        %v2278 = vld [vmem:[%s2260 + $0x88] sm:$0xff]
        %v2279 = vld [vmem:[%s2260 + $0x90] sm:$0xff]
        %v2280 = vld [vmem:[%s2260 + $0x98] sm:$0xff]
        %v2281 = vld [vmem:[%s2260 + $0xa0] sm:$0xff]
        %v2282 = vld [vmem:[%s2260 + $0xa8] sm:$0xff]
        %v2283 = vld [vmem:[%s2260 + $0xb0] sm:$0xff]
        %v2284 = vld [vmem:[%s2260 + $0xb8] sm:$0xff]
        %v2285 = vld [vmem:[%s2260 + $0xc0] sm:$0xff]
        %v2286 = vld [vmem:[%s2260 + $0xc8] sm:$0xff]
        %v2287 = vld [vmem:[%s2260 + $0xd0] sm:$0xff]
        %v2288 = vld [vmem:[%s2260 + $0xd8] sm:$0xff]
        %v2289 = vld [vmem:[%s2260 + $0xe0] sm:$0xff]
        %v2290 = vld [vmem:[%s2260 + $0xe8] sm:$0xff]
        %v2291 = vld [vmem:[%s2260 + $0xf0] sm:$0xff]
        %v2292 = vld [vmem:[%s2260 + $0xf8] sm:$0xff]
        %v2293 = vld [vmem:[%s552] sm:$0xff]
        %v2294 = vld [vmem:[%s552 + $0x8] sm:$0xff]
        %v2295 = vld [vmem:[%s552 + $0x10] sm:$0xff]
        %v2296 = vld [vmem:[%s552 + $0x18] sm:$0xff]
        %v2297 = vld [vmem:[%s552 + $0x20] sm:$0xff]
        %v2298 = vld [vmem:[%s552 + $0x28] sm:$0xff]
        %v2299 = vld [vmem:[%s552 + $0x30] sm:$0xff]
        %v2300 = vld [vmem:[%s552 + $0x38] sm:$0xff]
        %v2301 = vld [vmem:[%s552 + $0x40] sm:$0xff]
        %v2302 = vld [vmem:[%s552 + $0x48] sm:$0xff]
        %v2303 = vld [vmem:[%s552 + $0x50] sm:$0xff]
        %v2304 = vld [vmem:[%s552 + $0x58] sm:$0xff]
        %v2305 = vld [vmem:[%s552 + $0x60] sm:$0xff]
        %v2306 = vld [vmem:[%s552 + $0x68] sm:$0xff]
        %v2307 = vld [vmem:[%s552 + $0x70] sm:$0xff]
        %v2308 = vld [vmem:[%s552 + $0x78] sm:$0xff]
        %v2309 = vld [vmem:[%s552 + $0x80] sm:$0xff]
        %v2310 = vld [vmem:[%s552 + $0x88] sm:$0xff]
        %v2311 = vld [vmem:[%s552 + $0x90] sm:$0xff]
        %v2312 = vld [vmem:[%s552 + $0x98] sm:$0xff]
        %v2313 = vld [vmem:[%s552 + $0xa0] sm:$0xff]
        %v2314 = vld [vmem:[%s552 + $0xa8] sm:$0xff]
        %v2315 = vld [vmem:[%s552 + $0xb0] sm:$0xff]
        %v2316 = vld [vmem:[%s552 + $0xb8] sm:$0xff]
        %v2317 = vld [vmem:[%s552 + $0xc0] sm:$0xff]
        %v2318 = vld [vmem:[%s552 + $0xc8] sm:$0xff]
        %v2319 = vld [vmem:[%s552 + $0xd0] sm:$0xff]
        %v2320 = vld [vmem:[%s552 + $0xd8] sm:$0xff]
        %v2321 = vld [vmem:[%s552 + $0xe0] sm:$0xff]
        %v2322 = vld [vmem:[%s552 + $0xe8] sm:$0xff]
        %v2323 = vld [vmem:[%s552 + $0xf0] sm:$0xff]
        %v2324 = vld [vmem:[%s552 + $0xf8] sm:$0xff]
        %s2325 = scalar_lea.vmem %s1, 1024
        %v2326 = vld [vmem:[%s2325] sm:$0xff]
        %v2327 = vld [vmem:[%s2325 + $0x8] sm:$0xff]
        %v2328 = vld [vmem:[%s2325 + $0x10] sm:$0xff]
        %v2329 = vld [vmem:[%s2325 + $0x18] sm:$0xff]
        %v2330 = vld [vmem:[%s2325 + $0x20] sm:$0xff]
        %v2331 = vld [vmem:[%s2325 + $0x28] sm:$0xff]
        %v2332 = vld [vmem:[%s2325 + $0x30] sm:$0xff]
        %v2333 = vld [vmem:[%s2325 + $0x38] sm:$0xff]
        %v2334 = vld [vmem:[%s2325 + $0x40] sm:$0xff]
        %v2335 = vld [vmem:[%s2325 + $0x48] sm:$0xff]
        %v2336 = vld [vmem:[%s2325 + $0x50] sm:$0xff]
        %v2337 = vld [vmem:[%s2325 + $0x58] sm:$0xff]
        %v2338 = vld [vmem:[%s2325 + $0x60] sm:$0xff]
        %v2339 = vld [vmem:[%s2325 + $0x68] sm:$0xff]
        %v2340 = vld [vmem:[%s2325 + $0x70] sm:$0xff]
        %v2341 = vld [vmem:[%s2325 + $0x78] sm:$0xff]
        %v2342 = vld [vmem:[%s2325 + $0x80] sm:$0xff]
        %v2343 = vld [vmem:[%s2325 + $0x88] sm:$0xff]
        %v2344 = vld [vmem:[%s2325 + $0x90] sm:$0xff]
        %v2345 = vld [vmem:[%s2325 + $0x98] sm:$0xff]
        %v2346 = vld [vmem:[%s2325 + $0xa0] sm:$0xff]
        %v2347 = vld [vmem:[%s2325 + $0xa8] sm:$0xff]
        %v2348 = vld [vmem:[%s2325 + $0xb0] sm:$0xff]
        %v2349 = vld [vmem:[%s2325 + $0xb8] sm:$0xff]
        %v2350 = vld [vmem:[%s2325 + $0xc0] sm:$0xff]
        %v2351 = vld [vmem:[%s2325 + $0xc8] sm:$0xff]
        %v2352 = vld [vmem:[%s2325 + $0xd0] sm:$0xff]
        %v2353 = vld [vmem:[%s2325 + $0xd8] sm:$0xff]
        %v2354 = vld [vmem:[%s2325 + $0xe0] sm:$0xff]
        %v2355 = vld [vmem:[%s2325 + $0xe8] sm:$0xff]
        %v2356 = vld [vmem:[%s2325 + $0xf0] sm:$0xff]
        %v2357 = vld [vmem:[%s2325 + $0xf8] sm:$0xff]
        %v2390 = vunpack.c.l.b16 %v2326
        %v2391 = vunpack.c.h.b16 %v2326
        %v2392 = vunpack.c.l.b16 %v2327
        %v2393 = vunpack.c.h.b16 %v2327
        %v2394 = vunpack.c.l.b16 %v2328
        %v2395 = vunpack.c.h.b16 %v2328
        %v2396 = vunpack.c.l.b16 %v2329
        %v2397 = vunpack.c.h.b16 %v2329
        %v2398 = vunpack.c.l.b16 %v2330
        %v2399 = vunpack.c.h.b16 %v2330
        %v2400 = vunpack.c.l.b16 %v2331
        %v2401 = vunpack.c.h.b16 %v2331
        %v2402 = vunpack.c.l.b16 %v2332
        %v2403 = vunpack.c.h.b16 %v2332
        %v2404 = vunpack.c.l.b16 %v2333
        %v2405 = vunpack.c.h.b16 %v2333
        %v2406 = vunpack.c.l.b16 %v2334
        %v2407 = vunpack.c.h.b16 %v2334
        %v2408 = vunpack.c.l.b16 %v2335
        %v2409 = vunpack.c.h.b16 %v2335
        %v2410 = vunpack.c.l.b16 %v2336
        %v2411 = vunpack.c.h.b16 %v2336
        %v2412 = vunpack.c.l.b16 %v2337
        %v2413 = vunpack.c.h.b16 %v2337
        %v2414 = vunpack.c.l.b16 %v2338
        %v2415 = vunpack.c.h.b16 %v2338
        %v2416 = vunpack.c.l.b16 %v2339
        %v2417 = vunpack.c.h.b16 %v2339
        %v2418 = vunpack.c.l.b16 %v2340
        %v2419 = vunpack.c.h.b16 %v2340
        %v2420 = vunpack.c.l.b16 %v2341
        %v2421 = vunpack.c.h.b16 %v2341
        %v2422 = vunpack.c.l.b16 %v2342
        %v2423 = vunpack.c.h.b16 %v2342
        %v2424 = vunpack.c.l.b16 %v2343
        %v2425 = vunpack.c.h.b16 %v2343
        %v2426 = vunpack.c.l.b16 %v2344
        %v2427 = vunpack.c.h.b16 %v2344
        %v2428 = vunpack.c.l.b16 %v2345
        %v2429 = vunpack.c.h.b16 %v2345
        %v2430 = vunpack.c.l.b16 %v2346
        %v2431 = vunpack.c.h.b16 %v2346
        %v2432 = vunpack.c.l.b16 %v2347
        %v2433 = vunpack.c.h.b16 %v2347
        %v2434 = vunpack.c.l.b16 %v2348
        %v2435 = vunpack.c.h.b16 %v2348
        %v2436 = vunpack.c.l.b16 %v2349
        %v2437 = vunpack.c.h.b16 %v2349
        %v2438 = vunpack.c.l.b16 %v2350
        %v2439 = vunpack.c.h.b16 %v2350
        %v2440 = vunpack.c.l.b16 %v2351
        %v2441 = vunpack.c.h.b16 %v2351
        %v2442 = vunpack.c.l.b16 %v2352
        %v2443 = vunpack.c.h.b16 %v2352
        %v2444 = vunpack.c.l.b16 %v2353
        %v2445 = vunpack.c.h.b16 %v2353
        %v2446 = vunpack.c.l.b16 %v2354
        %v2447 = vunpack.c.h.b16 %v2354
        %v2448 = vunpack.c.l.b16 %v2355
        %v2449 = vunpack.c.h.b16 %v2355
        %v2450 = vunpack.c.l.b16 %v2356
        %v2451 = vunpack.c.h.b16 %v2356
        %v2452 = vunpack.c.l.b16 %v2357
        %v2453 = vunpack.c.h.b16 %v2357
        %v2454 = vpack.c.b16 %v2392, %v2390
        %v2455 = vpack.c.b16 %v2393, %v2391
        %v2456 = vpack.c.b16 %v2396, %v2394
        %v2457 = vpack.c.b16 %v2397, %v2395
        %v2458 = vpack.c.b16 %v2400, %v2398
        %v2459 = vpack.c.b16 %v2401, %v2399
        %v2460 = vpack.c.b16 %v2404, %v2402
        %v2461 = vpack.c.b16 %v2405, %v2403
        %v2462 = vpack.c.b16 %v2408, %v2406
        %v2463 = vpack.c.b16 %v2409, %v2407
        %v2464 = vpack.c.b16 %v2412, %v2410
        %v2465 = vpack.c.b16 %v2413, %v2411
        %v2466 = vpack.c.b16 %v2416, %v2414
        %v2467 = vpack.c.b16 %v2417, %v2415
        %v2468 = vpack.c.b16 %v2420, %v2418
        %v2469 = vpack.c.b16 %v2421, %v2419
        %v2470 = vpack.c.b16 %v2424, %v2422
        %v2471 = vpack.c.b16 %v2425, %v2423
        %v2472 = vpack.c.b16 %v2428, %v2426
        %v2473 = vpack.c.b16 %v2429, %v2427
        %v2474 = vpack.c.b16 %v2432, %v2430
        %v2475 = vpack.c.b16 %v2433, %v2431
        %v2476 = vpack.c.b16 %v2436, %v2434
        %v2477 = vpack.c.b16 %v2437, %v2435
        %v2478 = vpack.c.b16 %v2440, %v2438
        %v2479 = vpack.c.b16 %v2441, %v2439
        %v2480 = vpack.c.b16 %v2444, %v2442
        %v2481 = vpack.c.b16 %v2445, %v2443
        %v2482 = vpack.c.b16 %v2448, %v2446
        %v2483 = vpack.c.b16 %v2449, %v2447
        %v2484 = vpack.c.b16 %v2452, %v2450
        %v2485 = vpack.c.b16 %v2453, %v2451
        %2518 = vmatprep.subr.bf16.mxu0 %v2455
        %2519 = vmatpush1.bf16.msra.mxu0 %v2454
        %2520 = vmatprep.subr.bf16.mxu0 %v2457
        %2521 = vmatpush1.bf16.msra.mxu0 %v2456
        %2522 = vmatprep.subr.bf16.mxu0 %v2459
        %2523 = vmatpush1.bf16.msra.mxu0 %v2458
        %2524 = vmatprep.subr.bf16.mxu0 %v2461
        %2525 = vmatpush1.bf16.msra.mxu0 %v2460
        %2526 = vmatprep.subr.bf16.mxu0 %v2463
        %2527 = vmatpush1.bf16.msra.mxu0 %v2462
        %2528 = vmatprep.subr.bf16.mxu0 %v2465
        %2529 = vmatpush1.bf16.msra.mxu0 %v2464
        %2530 = vmatprep.subr.bf16.mxu0 %v2467
        %2531 = vmatpush1.bf16.msra.mxu0 %v2466
        %2532 = vmatprep.subr.bf16.mxu0 %v2469
        %2533 = vmatpush1.bf16.msra.mxu0 %v2468
        %2534 = vmatprep.subr.bf16.mxu0 %v2471
        %2535 = vmatpush1.bf16.msra.mxu0 %v2470
        %2536 = vmatprep.subr.bf16.mxu0 %v2473
        %2537 = vmatpush1.bf16.msra.mxu0 %v2472
        %2538 = vmatprep.subr.bf16.mxu0 %v2475
        %2539 = vmatpush1.bf16.msra.mxu0 %v2474
        %2540 = vmatprep.subr.bf16.mxu0 %v2477
        %2541 = vmatpush1.bf16.msra.mxu0 %v2476
        %2542 = vmatprep.subr.bf16.mxu0 %v2479
        %2543 = vmatpush1.bf16.msra.mxu0 %v2478
        %2544 = vmatprep.subr.bf16.mxu0 %v2481
        %2545 = vmatpush1.bf16.msra.mxu0 %v2480
        %2546 = vmatprep.subr.bf16.mxu0 %v2483
        %2547 = vmatpush1.bf16.msra.mxu0 %v2482
        %2548 = vmatprep.subr.bf16.mxu0 %v2485
        %2549 = vmatpush1.bf16.msra.mxu0 %v2484
        %2550 = vmatprep.mubr.bf16.mxu0 %v2294
        %2551 = vmatmul.mubr.bf16.gmra.mrb[0].mxu0 %v2293
        %v2552 = vpop.f32.mrb[0].mxu0
        %v2553 = vadd.f32 0.0, %v2552
        %v2554 = vpop.f32.mrb[0].mxu0
        %v2555 = vadd.f32 0.0, %v2554
        %v2556 = vpop.f32.mrb[0].mxu0
        %v2557 = vadd.f32 0.0, %v2556
        %v2558 = vpop.f32.mrb[0].mxu0
        %v2559 = vadd.f32 0.0, %v2558
        %2560 = vmatprep.mubr.bf16.mxu0 %v2296
        %2561 = vmatmul.mubr.bf16.gmra.mrb[0].mxu0 %v2295
        %v2562 = vpop.f32.mrb[0].mxu0
        %v2563 = vadd.f32 0.0, %v2562
        %v2564 = vpop.f32.mrb[0].mxu0
        %v2565 = vadd.f32 0.0, %v2564
        %v2566 = vpop.f32.mrb[0].mxu0
        %v2567 = vadd.f32 0.0, %v2566
        %v2568 = vpop.f32.mrb[0].mxu0
        %v2569 = vadd.f32 0.0, %v2568
        %2570 = vmatprep.mubr.bf16.mxu0 %v2298
        %2571 = vmatmul.mubr.bf16.gmra.mrb[0].mxu0 %v2297
        %v2572 = vpop.f32.mrb[0].mxu0
        %v2573 = vadd.f32 0.0, %v2572
        %v2574 = vpop.f32.mrb[0].mxu0
        %v2575 = vadd.f32 0.0, %v2574
        %v2576 = vpop.f32.mrb[0].mxu0
        %v2577 = vadd.f32 0.0, %v2576
        %v2578 = vpop.f32.mrb[0].mxu0
        %v2579 = vadd.f32 0.0, %v2578
        %2580 = vmatprep.mubr.bf16.mxu0 %v2300
        %2581 = vmatmul.mubr.bf16.gmra.mrb[0].mxu0 %v2299
        %v2582 = vpop.f32.mrb[0].mxu0
        %v2583 = vadd.f32 0.0, %v2582
        %v2584 = vpop.f32.mrb[0].mxu0
        %v2585 = vadd.f32 0.0, %v2584
        %v2586 = vpop.f32.mrb[0].mxu0
        %v2587 = vadd.f32 0.0, %v2586
        %v2588 = vpop.f32.mrb[0].mxu0
        %v2589 = vadd.f32 0.0, %v2588
        %2590 = vmatprep.mubr.bf16.mxu0 %v2302
        %2591 = vmatmul.mubr.bf16.gmra.mrb[0].mxu0 %v2301
        %v2592 = vpop.f32.mrb[0].mxu0
        %v2593 = vadd.f32 0.0, %v2592
        %v2594 = vpop.f32.mrb[0].mxu0
        %v2595 = vadd.f32 0.0, %v2594
        %v2596 = vpop.f32.mrb[0].mxu0
        %v2597 = vadd.f32 0.0, %v2596
        %v2598 = vpop.f32.mrb[0].mxu0
        %v2599 = vadd.f32 0.0, %v2598
        %2600 = vmatprep.mubr.bf16.mxu0 %v2304
        %2601 = vmatmul.mubr.bf16.gmra.mrb[0].mxu0 %v2303
        %v2602 = vpop.f32.mrb[0].mxu0
        %v2603 = vadd.f32 0.0, %v2602
        %v2604 = vpop.f32.mrb[0].mxu0
        %v2605 = vadd.f32 0.0, %v2604
        %v2606 = vpop.f32.mrb[0].mxu0
        %v2607 = vadd.f32 0.0, %v2606
        %v2608 = vpop.f32.mrb[0].mxu0
        %v2609 = vadd.f32 0.0, %v2608
        %2610 = vmatprep.mubr.bf16.mxu0 %v2306
        %2611 = vmatmul.mubr.bf16.gmra.mrb[0].mxu0 %v2305
        %v2612 = vpop.f32.mrb[0].mxu0
        %v2613 = vadd.f32 0.0, %v2612
        %v2614 = vpop.f32.mrb[0].mxu0
        %v2615 = vadd.f32 0.0, %v2614
        %v2616 = vpop.f32.mrb[0].mxu0
        %v2617 = vadd.f32 0.0, %v2616
        %v2618 = vpop.f32.mrb[0].mxu0
        %v2619 = vadd.f32 0.0, %v2618
        %2620 = vmatprep.mubr.bf16.mxu0 %v2308
        %2621 = vmatmul.mubr.bf16.gmra.mrb[0].mxu0 %v2307
        %v2622 = vpop.f32.mrb[0].mxu0
        %v2623 = vadd.f32 0.0, %v2622
        %v2624 = vpop.f32.mrb[0].mxu0
        %v2625 = vadd.f32 0.0, %v2624
        %v2626 = vpop.f32.mrb[0].mxu0
        %v2627 = vadd.f32 0.0, %v2626
        %v2628 = vpop.f32.mrb[0].mxu0
        %v2629 = vadd.f32 0.0, %v2628
        %2630 = vmatprep.mubr.bf16.mxu0 %v2310
        %2631 = vmatmul.mubr.bf16.gmra.mrb[0].mxu0 %v2309
        %v2632 = vpop.f32.mrb[0].mxu0
        %v2633 = vadd.f32 0.0, %v2632
        %v2634 = vpop.f32.mrb[0].mxu0
        %v2635 = vadd.f32 0.0, %v2634
        %v2636 = vpop.f32.mrb[0].mxu0
        %v2637 = vadd.f32 0.0, %v2636
        %v2638 = vpop.f32.mrb[0].mxu0
        %v2639 = vadd.f32 0.0, %v2638
        %2640 = vmatprep.mubr.bf16.mxu0 %v2312
        %2641 = vmatmul.mubr.bf16.gmra.mrb[0].mxu0 %v2311
        %v2642 = vpop.f32.mrb[0].mxu0
        %v2643 = vadd.f32 0.0, %v2642
        %v2644 = vpop.f32.mrb[0].mxu0
        %v2645 = vadd.f32 0.0, %v2644
        %v2646 = vpop.f32.mrb[0].mxu0
        %v2647 = vadd.f32 0.0, %v2646
        %v2648 = vpop.f32.mrb[0].mxu0
        %v2649 = vadd.f32 0.0, %v2648
        %2650 = vmatprep.mubr.bf16.mxu0 %v2314
        %2651 = vmatmul.mubr.bf16.gmra.mrb[0].mxu0 %v2313
        %v2652 = vpop.f32.mrb[0].mxu0
        %v2653 = vadd.f32 0.0, %v2652
        %v2654 = vpop.f32.mrb[0].mxu0
        %v2655 = vadd.f32 0.0, %v2654
        %v2656 = vpop.f32.mrb[0].mxu0
        %v2657 = vadd.f32 0.0, %v2656
        %v2658 = vpop.f32.mrb[0].mxu0
        %v2659 = vadd.f32 0.0, %v2658
        %2660 = vmatprep.mubr.bf16.mxu0 %v2316
        %2661 = vmatmul.mubr.bf16.gmra.mrb[0].mxu0 %v2315
        %v2662 = vpop.f32.mrb[0].mxu0
        %v2663 = vadd.f32 0.0, %v2662
        %v2664 = vpop.f32.mrb[0].mxu0
        %v2665 = vadd.f32 0.0, %v2664
        %v2666 = vpop.f32.mrb[0].mxu0
        %v2667 = vadd.f32 0.0, %v2666
        %v2668 = vpop.f32.mrb[0].mxu0
        %v2669 = vadd.f32 0.0, %v2668
        %2670 = vmatprep.mubr.bf16.mxu0 %v2318
        %2671 = vmatmul.mubr.bf16.gmra.mrb[0].mxu0 %v2317
        %v2672 = vpop.f32.mrb[0].mxu0
        %v2673 = vadd.f32 0.0, %v2672
        %v2674 = vpop.f32.mrb[0].mxu0
        %v2675 = vadd.f32 0.0, %v2674
        %v2676 = vpop.f32.mrb[0].mxu0
        %v2677 = vadd.f32 0.0, %v2676
        %v2678 = vpop.f32.mrb[0].mxu0
        %v2679 = vadd.f32 0.0, %v2678
        %2680 = vmatprep.mubr.bf16.mxu0 %v2320
        %2681 = vmatmul.mubr.bf16.gmra.mrb[0].mxu0 %v2319
        %v2682 = vpop.f32.mrb[0].mxu0
        %v2683 = vadd.f32 0.0, %v2682
        %v2684 = vpop.f32.mrb[0].mxu0
        %v2685 = vadd.f32 0.0, %v2684
        %v2686 = vpop.f32.mrb[0].mxu0
        %v2687 = vadd.f32 0.0, %v2686
        %v2688 = vpop.f32.mrb[0].mxu0
        %v2689 = vadd.f32 0.0, %v2688
        %2690 = vmatprep.mubr.bf16.mxu0 %v2322
        %2691 = vmatmul.mubr.bf16.gmra.mrb[0].mxu0 %v2321
        %v2692 = vpop.f32.mrb[0].mxu0
        %v2693 = vadd.f32 0.0, %v2692
        %v2694 = vpop.f32.mrb[0].mxu0
        %v2695 = vadd.f32 0.0, %v2694
        %v2696 = vpop.f32.mrb[0].mxu0
        %v2697 = vadd.f32 0.0, %v2696
        %v2698 = vpop.f32.mrb[0].mxu0
        %v2699 = vadd.f32 0.0, %v2698
        %2700 = vmatprep.mubr.bf16.mxu0 %v2324
        %2701 = vmatmul.mubr.bf16.gmra.mrb[0].mxu0 %v2323
        %v2702 = vpop.f32.mrb[0].mxu0
        %v2703 = vadd.f32 0.0, %v2702
        %v2704 = vpop.f32.mrb[0].mxu0
        %v2705 = vadd.f32 0.0, %v2704
        %v2706 = vpop.f32.mrb[0].mxu0
        %v2707 = vadd.f32 0.0, %v2706
        %v2708 = vpop.f32.mrb[0].mxu0
        %v2709 = vadd.f32 0.0, %v2708
        %2710 = vdwg.mxu0
        %v2743 = vunpack.c.l.b16 %v2261
        %v2744 = vunpack.c.h.b16 %v2261
        %v2745 = vunpack.c.l.b16 %v2262
        %v2746 = vunpack.c.h.b16 %v2262
        %v2747 = vunpack.c.l.b16 %v2263
        %v2748 = vunpack.c.h.b16 %v2263
        %v2749 = vunpack.c.l.b16 %v2264
        %v2750 = vunpack.c.h.b16 %v2264
        %v2751 = vunpack.c.l.b16 %v2265
        %v2752 = vunpack.c.h.b16 %v2265
        %v2753 = vunpack.c.l.b16 %v2266
        %v2754 = vunpack.c.h.b16 %v2266
        %v2755 = vunpack.c.l.b16 %v2267
        %v2756 = vunpack.c.h.b16 %v2267
        %v2757 = vunpack.c.l.b16 %v2268
        %v2758 = vunpack.c.h.b16 %v2268
        %v2759 = vunpack.c.l.b16 %v2269
        %v2760 = vunpack.c.h.b16 %v2269
        %v2761 = vunpack.c.l.b16 %v2270
        %v2762 = vunpack.c.h.b16 %v2270
        %v2763 = vunpack.c.l.b16 %v2271
        %v2764 = vunpack.c.h.b16 %v2271
        %v2765 = vunpack.c.l.b16 %v2272
        %v2766 = vunpack.c.h.b16 %v2272
        %v2767 = vunpack.c.l.b16 %v2273
        %v2768 = vunpack.c.h.b16 %v2273
        %v2769 = vunpack.c.l.b16 %v2274
        %v2770 = vunpack.c.h.b16 %v2274
        %v2771 = vunpack.c.l.b16 %v2275
        %v2772 = vunpack.c.h.b16 %v2275
        %v2773 = vunpack.c.l.b16 %v2276
        %v2774 = vunpack.c.h.b16 %v2276
        %v2775 = vunpack.c.l.b16 %v2277
        %v2776 = vunpack.c.h.b16 %v2277
        %v2777 = vunpack.c.l.b16 %v2278
        %v2778 = vunpack.c.h.b16 %v2278
        %v2779 = vunpack.c.l.b16 %v2279
        %v2780 = vunpack.c.h.b16 %v2279
        %v2781 = vunpack.c.l.b16 %v2280
        %v2782 = vunpack.c.h.b16 %v2280
        %v2783 = vunpack.c.l.b16 %v2281
        %v2784 = vunpack.c.h.b16 %v2281
        %v2785 = vunpack.c.l.b16 %v2282
        %v2786 = vunpack.c.h.b16 %v2282
        %v2787 = vunpack.c.l.b16 %v2283
        %v2788 = vunpack.c.h.b16 %v2283
        %v2789 = vunpack.c.l.b16 %v2284
        %v2790 = vunpack.c.h.b16 %v2284
        %v2791 = vunpack.c.l.b16 %v2285
        %v2792 = vunpack.c.h.b16 %v2285
        %v2793 = vunpack.c.l.b16 %v2286
        %v2794 = vunpack.c.h.b16 %v2286
        %v2795 = vunpack.c.l.b16 %v2287
        %v2796 = vunpack.c.h.b16 %v2287
        %v2797 = vunpack.c.l.b16 %v2288
        %v2798 = vunpack.c.h.b16 %v2288
        %v2799 = vunpack.c.l.b16 %v2289
        %v2800 = vunpack.c.h.b16 %v2289
        %v2801 = vunpack.c.l.b16 %v2290
        %v2802 = vunpack.c.h.b16 %v2290
        %v2803 = vunpack.c.l.b16 %v2291
        %v2804 = vunpack.c.h.b16 %v2291
        %v2805 = vunpack.c.l.b16 %v2292
        %v2806 = vunpack.c.h.b16 %v2292
        %v2807 = vpack.c.b16 %v2745, %v2743
        %v2808 = vpack.c.b16 %v2746, %v2744
        %v2809 = vpack.c.b16 %v2749, %v2747
        %v2810 = vpack.c.b16 %v2750, %v2748
        %v2811 = vpack.c.b16 %v2753, %v2751
        %v2812 = vpack.c.b16 %v2754, %v2752
        %v2813 = vpack.c.b16 %v2757, %v2755
        %v2814 = vpack.c.b16 %v2758, %v2756
        %v2815 = vpack.c.b16 %v2761, %v2759
        %v2816 = vpack.c.b16 %v2762, %v2760
        %v2817 = vpack.c.b16 %v2765, %v2763
        %v2818 = vpack.c.b16 %v2766, %v2764
        %v2819 = vpack.c.b16 %v2769, %v2767
        %v2820 = vpack.c.b16 %v2770, %v2768
        %v2821 = vpack.c.b16 %v2773, %v2771
        %v2822 = vpack.c.b16 %v2774, %v2772
        %v2823 = vpack.c.b16 %v2777, %v2775
        %v2824 = vpack.c.b16 %v2778, %v2776
        %v2825 = vpack.c.b16 %v2781, %v2779
        %v2826 = vpack.c.b16 %v2782, %v2780
        %v2827 = vpack.c.b16 %v2785, %v2783
        %v2828 = vpack.c.b16 %v2786, %v2784
        %v2829 = vpack.c.b16 %v2789, %v2787
        %v2830 = vpack.c.b16 %v2790, %v2788
        %v2831 = vpack.c.b16 %v2793, %v2791
        %v2832 = vpack.c.b16 %v2794, %v2792
        %v2833 = vpack.c.b16 %v2797, %v2795
        %v2834 = vpack.c.b16 %v2798, %v2796
        %v2835 = vpack.c.b16 %v2801, %v2799
        %v2836 = vpack.c.b16 %v2802, %v2800
        %v2837 = vpack.c.b16 %v2805, %v2803
        %v2838 = vpack.c.b16 %v2806, %v2804
        %2871 = vmatprep.subr.bf16.mxu0 %v2808
        %2872 = vmatpush1.bf16.msra.mxu0 %v2807
        %2873 = vmatprep.subr.bf16.mxu0 %v2810
        %2874 = vmatpush1.bf16.msra.mxu0 %v2809
        %2875 = vmatprep.subr.bf16.mxu0 %v2812
        %2876 = vmatpush1.bf16.msra.mxu0 %v2811
        %2877 = vmatprep.subr.bf16.mxu0 %v2814
        %2878 = vmatpush1.bf16.msra.mxu0 %v2813
        %2879 = vmatprep.subr.bf16.mxu0 %v2816
        %2880 = vmatpush1.bf16.msra.mxu0 %v2815
        %2881 = vmatprep.subr.bf16.mxu0 %v2818
        %2882 = vmatpush1.bf16.msra.mxu0 %v2817
        %2883 = vmatprep.subr.bf16.mxu0 %v2820
        %2884 = vmatpush1.bf16.msra.mxu0 %v2819
        %2885 = vmatprep.subr.bf16.mxu0 %v2822
        %2886 = vmatpush1.bf16.msra.mxu0 %v2821
        %2887 = vmatprep.subr.bf16.mxu0 %v2824
        %2888 = vmatpush1.bf16.msra.mxu0 %v2823
        %2889 = vmatprep.subr.bf16.mxu0 %v2826
        %2890 = vmatpush1.bf16.msra.mxu0 %v2825
        %2891 = vmatprep.subr.bf16.mxu0 %v2828
        %2892 = vmatpush1.bf16.msra.mxu0 %v2827
        %2893 = vmatprep.subr.bf16.mxu0 %v2830
        %2894 = vmatpush1.bf16.msra.mxu0 %v2829
        %2895 = vmatprep.subr.bf16.mxu0 %v2832
        %2896 = vmatpush1.bf16.msra.mxu0 %v2831
        %2897 = vmatprep.subr.bf16.mxu0 %v2834
        %2898 = vmatpush1.bf16.msra.mxu0 %v2833
        %2899 = vmatprep.subr.bf16.mxu0 %v2836
        %2900 = vmatpush1.bf16.msra.mxu0 %v2835
        %2901 = vmatprep.subr.bf16.mxu0 %v2838
        %2902 = vmatpush1.bf16.msra.mxu0 %v2837
        %2903 = vmatprep.mubr.bf16.mxu0 %v2229
        %2904 = vmatmul.mubr.bf16.gmra.mrb[0].mxu0 %v2228
        %v2905 = vpop.f32.mrb[0].mxu0
        %v2906 = vadd.f32 %v2553, %v2905
        %v2907 = vpop.f32.mrb[0].mxu0
        %v2908 = vadd.f32 %v2555, %v2907
        %v2909 = vpop.f32.mrb[0].mxu0
        %v2910 = vadd.f32 %v2557, %v2909
        %v2911 = vpop.f32.mrb[0].mxu0
        %v2912 = vadd.f32 %v2559, %v2911
        %2913 = vmatprep.mubr.bf16.mxu0 %v2231
        %2914 = vmatmul.mubr.bf16.gmra.mrb[0].mxu0 %v2230
        %v2915 = vpop.f32.mrb[0].mxu0
        %v2916 = vadd.f32 %v2563, %v2915
        %v2917 = vpop.f32.mrb[0].mxu0
        %v2918 = vadd.f32 %v2565, %v2917
        %v2919 = vpop.f32.mrb[0].mxu0
        %v2920 = vadd.f32 %v2567, %v2919
        %v2921 = vpop.f32.mrb[0].mxu0
        %v2922 = vadd.f32 %v2569, %v2921
        %2923 = vmatprep.mubr.bf16.mxu0 %v2233
        %2924 = vmatmul.mubr.bf16.gmra.mrb[0].mxu0 %v2232
        %v2925 = vpop.f32.mrb[0].mxu0
        %v2926 = vadd.f32 %v2573, %v2925
        %v2927 = vpop.f32.mrb[0].mxu0
        %v2928 = vadd.f32 %v2575, %v2927
        %v2929 = vpop.f32.mrb[0].mxu0
        %v2930 = vadd.f32 %v2577, %v2929
        %v2931 = vpop.f32.mrb[0].mxu0
        %v2932 = vadd.f32 %v2579, %v2931
        %2933 = vmatprep.mubr.bf16.mxu0 %v2235
        %2934 = vmatmul.mubr.bf16.gmra.mrb[0].mxu0 %v2234
        %v2935 = vpop.f32.mrb[0].mxu0
        %v2936 = vadd.f32 %v2583, %v2935
        %v2937 = vpop.f32.mrb[0].mxu0
        %v2938 = vadd.f32 %v2585, %v2937
        %v2939 = vpop.f32.mrb[0].mxu0
        %v2940 = vadd.f32 %v2587, %v2939
        %v2941 = vpop.f32.mrb[0].mxu0
        %v2942 = vadd.f32 %v2589, %v2941
        %2943 = vmatprep.mubr.bf16.mxu0 %v2237
        %2944 = vmatmul.mubr.bf16.gmra.mrb[0].mxu0 %v2236
        %v2945 = vpop.f32.mrb[0].mxu0
        %v2946 = vadd.f32 %v2593, %v2945
        %v2947 = vpop.f32.mrb[0].mxu0
        %v2948 = vadd.f32 %v2595, %v2947
        %v2949 = vpop.f32.mrb[0].mxu0
        %v2950 = vadd.f32 %v2597, %v2949
        %v2951 = vpop.f32.mrb[0].mxu0
        %v2952 = vadd.f32 %v2599, %v2951
        %2953 = vmatprep.mubr.bf16.mxu0 %v2239
        %2954 = vmatmul.mubr.bf16.gmra.mrb[0].mxu0 %v2238
        %v2955 = vpop.f32.mrb[0].mxu0
        %v2956 = vadd.f32 %v2603, %v2955
        %v2957 = vpop.f32.mrb[0].mxu0
        %v2958 = vadd.f32 %v2605, %v2957
        %v2959 = vpop.f32.mrb[0].mxu0
        %v2960 = vadd.f32 %v2607, %v2959
        %v2961 = vpop.f32.mrb[0].mxu0
        %v2962 = vadd.f32 %v2609, %v2961
        %2963 = vmatprep.mubr.bf16.mxu0 %v2241
        %2964 = vmatmul.mubr.bf16.gmra.mrb[0].mxu0 %v2240
        %v2965 = vpop.f32.mrb[0].mxu0
        %v2966 = vadd.f32 %v2613, %v2965
        %v2967 = vpop.f32.mrb[0].mxu0
        %v2968 = vadd.f32 %v2615, %v2967
        %v2969 = vpop.f32.mrb[0].mxu0
        %v2970 = vadd.f32 %v2617, %v2969
        %v2971 = vpop.f32.mrb[0].mxu0
        %v2972 = vadd.f32 %v2619, %v2971
        %2973 = vmatprep.mubr.bf16.mxu0 %v2243
        %2974 = vmatmul.mubr.bf16.gmra.mrb[0].mxu0 %v2242
        %v2975 = vpop.f32.mrb[0].mxu0
        %v2976 = vadd.f32 %v2623, %v2975
        %v2977 = vpop.f32.mrb[0].mxu0
        %v2978 = vadd.f32 %v2625, %v2977
        %v2979 = vpop.f32.mrb[0].mxu0
        %v2980 = vadd.f32 %v2627, %v2979
        %v2981 = vpop.f32.mrb[0].mxu0
        %v2982 = vadd.f32 %v2629, %v2981
        %2983 = vmatprep.mubr.bf16.mxu0 %v2245
        %2984 = vmatmul.mubr.bf16.gmra.mrb[0].mxu0 %v2244
        %v2985 = vpop.f32.mrb[0].mxu0
        %v2986 = vadd.f32 %v2633, %v2985
        %v2987 = vpop.f32.mrb[0].mxu0
        %v2988 = vadd.f32 %v2635, %v2987
        %v2989 = vpop.f32.mrb[0].mxu0
        %v2990 = vadd.f32 %v2637, %v2989
        %v2991 = vpop.f32.mrb[0].mxu0
        %v2992 = vadd.f32 %v2639, %v2991
        %2993 = vmatprep.mubr.bf16.mxu0 %v2247
        %2994 = vmatmul.mubr.bf16.gmra.mrb[0].mxu0 %v2246
        %v2995 = vpop.f32.mrb[0].mxu0
        %v2996 = vadd.f32 %v2643, %v2995
        %v2997 = vpop.f32.mrb[0].mxu0
        %v2998 = vadd.f32 %v2645, %v2997
        %v2999 = vpop.f32.mrb[0].mxu0
        %v3000 = vadd.f32 %v2647, %v2999
        %v3001 = vpop.f32.mrb[0].mxu0
        %v3002 = vadd.f32 %v2649, %v3001
        %3003 = vmatprep.mubr.bf16.mxu0 %v2249
        %3004 = vmatmul.mubr.bf16.gmra.mrb[0].mxu0 %v2248
        %v3005 = vpop.f32.mrb[0].mxu0
        %v3006 = vadd.f32 %v2653, %v3005
        %v3007 = vpop.f32.mrb[0].mxu0
        %v3008 = vadd.f32 %v2655, %v3007
        %v3009 = vpop.f32.mrb[0].mxu0
        %v3010 = vadd.f32 %v2657, %v3009
        %v3011 = vpop.f32.mrb[0].mxu0
        %v3012 = vadd.f32 %v2659, %v3011
        %3013 = vmatprep.mubr.bf16.mxu0 %v2251
        %3014 = vmatmul.mubr.bf16.gmra.mrb[0].mxu0 %v2250
        %v3015 = vpop.f32.mrb[0].mxu0
        %v3016 = vadd.f32 %v2663, %v3015
        %v3017 = vpop.f32.mrb[0].mxu0
        %v3018 = vadd.f32 %v2665, %v3017
        %v3019 = vpop.f32.mrb[0].mxu0
        %v3020 = vadd.f32 %v2667, %v3019
        %v3021 = vpop.f32.mrb[0].mxu0
        %v3022 = vadd.f32 %v2669, %v3021
        %3023 = vmatprep.mubr.bf16.mxu0 %v2253
        %3024 = vmatmul.mubr.bf16.gmra.mrb[0].mxu0 %v2252
        %v3025 = vpop.f32.mrb[0].mxu0
        %v3026 = vadd.f32 %v2673, %v3025
        %v3027 = vpop.f32.mrb[0].mxu0
        %v3028 = vadd.f32 %v2675, %v3027
        %v3029 = vpop.f32.mrb[0].mxu0
        %v3030 = vadd.f32 %v2677, %v3029
        %v3031 = vpop.f32.mrb[0].mxu0
        %v3032 = vadd.f32 %v2679, %v3031
        %3033 = vmatprep.mubr.bf16.mxu0 %v2255
        %3034 = vmatmul.mubr.bf16.gmra.mrb[0].mxu0 %v2254
        %v3035 = vpop.f32.mrb[0].mxu0
        %v3036 = vadd.f32 %v2683, %v3035
        %v3037 = vpop.f32.mrb[0].mxu0
        %v3038 = vadd.f32 %v2685, %v3037
        %v3039 = vpop.f32.mrb[0].mxu0
        %v3040 = vadd.f32 %v2687, %v3039
        %v3041 = vpop.f32.mrb[0].mxu0
        %v3042 = vadd.f32 %v2689, %v3041
        %3043 = vmatprep.mubr.bf16.mxu0 %v2257
        %3044 = vmatmul.mubr.bf16.gmra.mrb[0].mxu0 %v2256
        %v3045 = vpop.f32.mrb[0].mxu0
        %v3046 = vadd.f32 %v2693, %v3045
        %v3047 = vpop.f32.mrb[0].mxu0
        %v3048 = vadd.f32 %v2695, %v3047
        %v3049 = vpop.f32.mrb[0].mxu0
        %v3050 = vadd.f32 %v2697, %v3049
        %v3051 = vpop.f32.mrb[0].mxu0
        %v3052 = vadd.f32 %v2699, %v3051
        %3053 = vmatprep.mubr.bf16.mxu0 %v2259
        %3054 = vmatmul.mubr.bf16.gmra.mrb[0].mxu0 %v2258
        %v3055 = vpop.f32.mrb[0].mxu0
        %v3056 = vadd.f32 %v2703, %v3055
        %v3057 = vpop.f32.mrb[0].mxu0
        %v3058 = vadd.f32 %v2705, %v3057
        %v3059 = vpop.f32.mrb[0].mxu0
        %v3060 = vadd.f32 %v2707, %v3059
        %v3061 = vpop.f32.mrb[0].mxu0
        %v3062 = vadd.f32 %v2709, %v3061
        %3063 = vdwg.mxu0
        %v3064 = vld [vmem:[%s814] sm:$0xff]
        %v3065 = vld [vmem:[%s814 + $0x8] sm:$0xff]
        %v3066 = vld [vmem:[%s814 + $0x10] sm:$0xff]
        %v3067 = vld [vmem:[%s814 + $0x18] sm:$0xff]
        %v3068 = vld [vmem:[%s814 + $0x20] sm:$0xff]
        %v3069 = vld [vmem:[%s814 + $0x28] sm:$0xff]
        %v3070 = vld [vmem:[%s814 + $0x30] sm:$0xff]
        %v3071 = vld [vmem:[%s814 + $0x38] sm:$0xff]
        %v3072 = vld [vmem:[%s814 + $0x40] sm:$0xff]
        %v3073 = vld [vmem:[%s814 + $0x48] sm:$0xff]
        %v3074 = vld [vmem:[%s814 + $0x50] sm:$0xff]
        %v3075 = vld [vmem:[%s814 + $0x58] sm:$0xff]
        %v3076 = vld [vmem:[%s814 + $0x60] sm:$0xff]
        %v3077 = vld [vmem:[%s814 + $0x68] sm:$0xff]
        %v3078 = vld [vmem:[%s814 + $0x70] sm:$0xff]
        %v3079 = vld [vmem:[%s814 + $0x78] sm:$0xff]
        %v3080 = vld [vmem:[%s814 + $0x80] sm:$0xff]
        %v3081 = vld [vmem:[%s814 + $0x88] sm:$0xff]
        %v3082 = vld [vmem:[%s814 + $0x90] sm:$0xff]
        %v3083 = vld [vmem:[%s814 + $0x98] sm:$0xff]
        %v3084 = vld [vmem:[%s814 + $0xa0] sm:$0xff]
        %v3085 = vld [vmem:[%s814 + $0xa8] sm:$0xff]
        %v3086 = vld [vmem:[%s814 + $0xb0] sm:$0xff]
        %v3087 = vld [vmem:[%s814 + $0xb8] sm:$0xff]
        %v3088 = vld [vmem:[%s814 + $0xc0] sm:$0xff]
        %v3089 = vld [vmem:[%s814 + $0xc8] sm:$0xff]
        %v3090 = vld [vmem:[%s814 + $0xd0] sm:$0xff]
        %v3091 = vld [vmem:[%s814 + $0xd8] sm:$0xff]
        %v3092 = vld [vmem:[%s814 + $0xe0] sm:$0xff]
        %v3093 = vld [vmem:[%s814 + $0xe8] sm:$0xff]
        %v3094 = vld [vmem:[%s814 + $0xf0] sm:$0xff]
        %v3095 = vld [vmem:[%s814 + $0xf8] sm:$0xff]
        %s3096 = scalar_lea.vmem %s1, 1280
        %v3097 = vld [vmem:[%s3096] sm:$0xff]
        %v3098 = vld [vmem:[%s3096 + $0x8] sm:$0xff]
        %v3099 = vld [vmem:[%s3096 + $0x10] sm:$0xff]
        %v3100 = vld [vmem:[%s3096 + $0x18] sm:$0xff]
        %v3101 = vld [vmem:[%s3096 + $0x20] sm:$0xff]
        %v3102 = vld [vmem:[%s3096 + $0x28] sm:$0xff]
        %v3103 = vld [vmem:[%s3096 + $0x30] sm:$0xff]
        %v3104 = vld [vmem:[%s3096 + $0x38] sm:$0xff]
        %v3105 = vld [vmem:[%s3096 + $0x40] sm:$0xff]
        %v3106 = vld [vmem:[%s3096 + $0x48] sm:$0xff]
        %v3107 = vld [vmem:[%s3096 + $0x50] sm:$0xff]
        %v3108 = vld [vmem:[%s3096 + $0x58] sm:$0xff]
        %v3109 = vld [vmem:[%s3096 + $0x60] sm:$0xff]
        %v3110 = vld [vmem:[%s3096 + $0x68] sm:$0xff]
        %v3111 = vld [vmem:[%s3096 + $0x70] sm:$0xff]
        %v3112 = vld [vmem:[%s3096 + $0x78] sm:$0xff]
        %v3113 = vld [vmem:[%s3096 + $0x80] sm:$0xff]
        %v3114 = vld [vmem:[%s3096 + $0x88] sm:$0xff]
        %v3115 = vld [vmem:[%s3096 + $0x90] sm:$0xff]
        %v3116 = vld [vmem:[%s3096 + $0x98] sm:$0xff]
        %v3117 = vld [vmem:[%s3096 + $0xa0] sm:$0xff]
        %v3118 = vld [vmem:[%s3096 + $0xa8] sm:$0xff]
        %v3119 = vld [vmem:[%s3096 + $0xb0] sm:$0xff]
        %v3120 = vld [vmem:[%s3096 + $0xb8] sm:$0xff]
        %v3121 = vld [vmem:[%s3096 + $0xc0] sm:$0xff]
        %v3122 = vld [vmem:[%s3096 + $0xc8] sm:$0xff]
        %v3123 = vld [vmem:[%s3096 + $0xd0] sm:$0xff]
        %v3124 = vld [vmem:[%s3096 + $0xd8] sm:$0xff]
        %v3125 = vld [vmem:[%s3096 + $0xe0] sm:$0xff]
        %v3126 = vld [vmem:[%s3096 + $0xe8] sm:$0xff]
        %v3127 = vld [vmem:[%s3096 + $0xf0] sm:$0xff]
        %v3128 = vld [vmem:[%s3096 + $0xf8] sm:$0xff]
        %v3161 = vunpack.c.l.b16 %v3097
        %v3162 = vunpack.c.h.b16 %v3097
        %v3163 = vunpack.c.l.b16 %v3098
        %v3164 = vunpack.c.h.b16 %v3098
        %v3165 = vunpack.c.l.b16 %v3099
        %v3166 = vunpack.c.h.b16 %v3099
        %v3167 = vunpack.c.l.b16 %v3100
        %v3168 = vunpack.c.h.b16 %v3100
        %v3169 = vunpack.c.l.b16 %v3101
        %v3170 = vunpack.c.h.b16 %v3101
        %v3171 = vunpack.c.l.b16 %v3102
        %v3172 = vunpack.c.h.b16 %v3102
        %v3173 = vunpack.c.l.b16 %v3103
        %v3174 = vunpack.c.h.b16 %v3103
        %v3175 = vunpack.c.l.b16 %v3104
        %v3176 = vunpack.c.h.b16 %v3104
        %v3177 = vunpack.c.l.b16 %v3105
        %v3178 = vunpack.c.h.b16 %v3105
        %v3179 = vunpack.c.l.b16 %v3106
        %v3180 = vunpack.c.h.b16 %v3106
        %v3181 = vunpack.c.l.b16 %v3107
        %v3182 = vunpack.c.h.b16 %v3107
        %v3183 = vunpack.c.l.b16 %v3108
        %v3184 = vunpack.c.h.b16 %v3108
        %v3185 = vunpack.c.l.b16 %v3109
        %v3186 = vunpack.c.h.b16 %v3109
        %v3187 = vunpack.c.l.b16 %v3110
        %v3188 = vunpack.c.h.b16 %v3110
        %v3189 = vunpack.c.l.b16 %v3111
        %v3190 = vunpack.c.h.b16 %v3111
        %v3191 = vunpack.c.l.b16 %v3112
        %v3192 = vunpack.c.h.b16 %v3112
        %v3193 = vunpack.c.l.b16 %v3113
        %v3194 = vunpack.c.h.b16 %v3113
        %v3195 = vunpack.c.l.b16 %v3114
        %v3196 = vunpack.c.h.b16 %v3114
        %v3197 = vunpack.c.l.b16 %v3115
        %v3198 = vunpack.c.h.b16 %v3115
        %v3199 = vunpack.c.l.b16 %v3116
        %v3200 = vunpack.c.h.b16 %v3116
        %v3201 = vunpack.c.l.b16 %v3117
        %v3202 = vunpack.c.h.b16 %v3117
        %v3203 = vunpack.c.l.b16 %v3118
        %v3204 = vunpack.c.h.b16 %v3118
        %v3205 = vunpack.c.l.b16 %v3119
        %v3206 = vunpack.c.h.b16 %v3119
        %v3207 = vunpack.c.l.b16 %v3120
        %v3208 = vunpack.c.h.b16 %v3120
        %v3209 = vunpack.c.l.b16 %v3121
        %v3210 = vunpack.c.h.b16 %v3121
        %v3211 = vunpack.c.l.b16 %v3122
        %v3212 = vunpack.c.h.b16 %v3122
        %v3213 = vunpack.c.l.b16 %v3123
        %v3214 = vunpack.c.h.b16 %v3123
        %v3215 = vunpack.c.l.b16 %v3124
        %v3216 = vunpack.c.h.b16 %v3124
        %v3217 = vunpack.c.l.b16 %v3125
        %v3218 = vunpack.c.h.b16 %v3125
        %v3219 = vunpack.c.l.b16 %v3126
        %v3220 = vunpack.c.h.b16 %v3126
        %v3221 = vunpack.c.l.b16 %v3127
        %v3222 = vunpack.c.h.b16 %v3127
        %v3223 = vunpack.c.l.b16 %v3128
        %v3224 = vunpack.c.h.b16 %v3128
        %v3225 = vpack.c.b16 %v3163, %v3161
        %v3226 = vpack.c.b16 %v3164, %v3162
        %v3227 = vpack.c.b16 %v3167, %v3165
        %v3228 = vpack.c.b16 %v3168, %v3166
        %v3229 = vpack.c.b16 %v3171, %v3169
        %v3230 = vpack.c.b16 %v3172, %v3170
        %v3231 = vpack.c.b16 %v3175, %v3173
        %v3232 = vpack.c.b16 %v3176, %v3174
        %v3233 = vpack.c.b16 %v3179, %v3177
        %v3234 = vpack.c.b16 %v3180, %v3178
        %v3235 = vpack.c.b16 %v3183, %v3181
        %v3236 = vpack.c.b16 %v3184, %v3182
        %v3237 = vpack.c.b16 %v3187, %v3185
        %v3238 = vpack.c.b16 %v3188, %v3186
        %v3239 = vpack.c.b16 %v3191, %v3189
        %v3240 = vpack.c.b16 %v3192, %v3190
        %v3241 = vpack.c.b16 %v3195, %v3193
        %v3242 = vpack.c.b16 %v3196, %v3194
        %v3243 = vpack.c.b16 %v3199, %v3197
        %v3244 = vpack.c.b16 %v3200, %v3198
        %v3245 = vpack.c.b16 %v3203, %v3201
        %v3246 = vpack.c.b16 %v3204, %v3202
        %v3247 = vpack.c.b16 %v3207, %v3205
        %v3248 = vpack.c.b16 %v3208, %v3206
        %v3249 = vpack.c.b16 %v3211, %v3209
        %v3250 = vpack.c.b16 %v3212, %v3210
        %v3251 = vpack.c.b16 %v3215, %v3213
        %v3252 = vpack.c.b16 %v3216, %v3214
        %v3253 = vpack.c.b16 %v3219, %v3217
        %v3254 = vpack.c.b16 %v3220, %v3218
        %v3255 = vpack.c.b16 %v3223, %v3221
        %v3256 = vpack.c.b16 %v3224, %v3222
        %3289 = vmatprep.subr.bf16.mxu0 %v3226
        %3290 = vmatpush1.bf16.msra.mxu0 %v3225
        %3291 = vmatprep.subr.bf16.mxu0 %v3228
        %3292 = vmatpush1.bf16.msra.mxu0 %v3227
        %3293 = vmatprep.subr.bf16.mxu0 %v3230
        %3294 = vmatpush1.bf16.msra.mxu0 %v3229
        %3295 = vmatprep.subr.bf16.mxu0 %v3232
        %3296 = vmatpush1.bf16.msra.mxu0 %v3231
        %3297 = vmatprep.subr.bf16.mxu0 %v3234
        %3298 = vmatpush1.bf16.msra.mxu0 %v3233
        %3299 = vmatprep.subr.bf16.mxu0 %v3236
        %3300 = vmatpush1.bf16.msra.mxu0 %v3235
        %3301 = vmatprep.subr.bf16.mxu0 %v3238
        %3302 = vmatpush1.bf16.msra.mxu0 %v3237
        %3303 = vmatprep.subr.bf16.mxu0 %v3240
        %3304 = vmatpush1.bf16.msra.mxu0 %v3239
        %3305 = vmatprep.subr.bf16.mxu0 %v3242
        %3306 = vmatpush1.bf16.msra.mxu0 %v3241
        %3307 = vmatprep.subr.bf16.mxu0 %v3244
        %3308 = vmatpush1.bf16.msra.mxu0 %v3243
        %3309 = vmatprep.subr.bf16.mxu0 %v3246
        %3310 = vmatpush1.bf16.msra.mxu0 %v3245
        %3311 = vmatprep.subr.bf16.mxu0 %v3248
        %3312 = vmatpush1.bf16.msra.mxu0 %v3247
        %3313 = vmatprep.subr.bf16.mxu0 %v3250
        %3314 = vmatpush1.bf16.msra.mxu0 %v3249
        %3315 = vmatprep.subr.bf16.mxu0 %v3252
        %3316 = vmatpush1.bf16.msra.mxu0 %v3251
        %3317 = vmatprep.subr.bf16.mxu0 %v3254
        %3318 = vmatpush1.bf16.msra.mxu0 %v3253
        %3319 = vmatprep.subr.bf16.mxu0 %v3256
        %3320 = vmatpush1.bf16.msra.mxu0 %v3255
        %3321 = vmatprep.mubr.bf16.mxu0 %v3065
        %3322 = vmatmul.mubr.bf16.gmra.mrb[0].mxu0 %v3064
        %v3323 = vpop.f32.mrb[0].mxu0
        %v3324 = vadd.f32 0.0, %v3323
        %v3325 = vpop.f32.mrb[0].mxu0
        %v3326 = vadd.f32 0.0, %v3325
        %v3327 = vpop.f32.mrb[0].mxu0
        %v3328 = vadd.f32 0.0, %v3327
        %v3329 = vpop.f32.mrb[0].mxu0
        %v3330 = vadd.f32 0.0, %v3329
        %3331 = vmatprep.mubr.bf16.mxu0 %v3067
        %3332 = vmatmul.mubr.bf16.gmra.mrb[0].mxu0 %v3066
        %v3333 = vpop.f32.mrb[0].mxu0
        %v3334 = vadd.f32 0.0, %v3333
        %v3335 = vpop.f32.mrb[0].mxu0
        %v3336 = vadd.f32 0.0, %v3335
        %v3337 = vpop.f32.mrb[0].mxu0
        %v3338 = vadd.f32 0.0, %v3337
        %v3339 = vpop.f32.mrb[0].mxu0
        %v3340 = vadd.f32 0.0, %v3339
        %3341 = vmatprep.mubr.bf16.mxu0 %v3069
        %3342 = vmatmul.mubr.bf16.gmra.mrb[0].mxu0 %v3068
        %v3343 = vpop.f32.mrb[0].mxu0
        %v3344 = vadd.f32 0.0, %v3343
        %v3345 = vpop.f32.mrb[0].mxu0
        %v3346 = vadd.f32 0.0, %v3345
        %v3347 = vpop.f32.mrb[0].mxu0
        %v3348 = vadd.f32 0.0, %v3347
        %v3349 = vpop.f32.mrb[0].mxu0
        %v3350 = vadd.f32 0.0, %v3349
        %3351 = vmatprep.mubr.bf16.mxu0 %v3071
        %3352 = vmatmul.mubr.bf16.gmra.mrb[0].mxu0 %v3070
        %v3353 = vpop.f32.mrb[0].mxu0
        %v3354 = vadd.f32 0.0, %v3353
        %v3355 = vpop.f32.mrb[0].mxu0
        %v3356 = vadd.f32 0.0, %v3355
        %v3357 = vpop.f32.mrb[0].mxu0
        %v3358 = vadd.f32 0.0, %v3357
        %v3359 = vpop.f32.mrb[0].mxu0
        %v3360 = vadd.f32 0.0, %v3359
        %3361 = vmatprep.mubr.bf16.mxu0 %v3073
        %3362 = vmatmul.mubr.bf16.gmra.mrb[0].mxu0 %v3072
        %v3363 = vpop.f32.mrb[0].mxu0
        %v3364 = vadd.f32 0.0, %v3363
        %v3365 = vpop.f32.mrb[0].mxu0
        %v3366 = vadd.f32 0.0, %v3365
        %v3367 = vpop.f32.mrb[0].mxu0
        %v3368 = vadd.f32 0.0, %v3367
        %v3369 = vpop.f32.mrb[0].mxu0
        %v3370 = vadd.f32 0.0, %v3369
        %3371 = vmatprep.mubr.bf16.mxu0 %v3075
        %3372 = vmatmul.mubr.bf16.gmra.mrb[0].mxu0 %v3074
        %v3373 = vpop.f32.mrb[0].mxu0
        %v3374 = vadd.f32 0.0, %v3373
        %v3375 = vpop.f32.mrb[0].mxu0
        %v3376 = vadd.f32 0.0, %v3375
        %v3377 = vpop.f32.mrb[0].mxu0
        %v3378 = vadd.f32 0.0, %v3377
        %v3379 = vpop.f32.mrb[0].mxu0
        %v3380 = vadd.f32 0.0, %v3379
        %3381 = vmatprep.mubr.bf16.mxu0 %v3077
        %3382 = vmatmul.mubr.bf16.gmra.mrb[0].mxu0 %v3076
        %v3383 = vpop.f32.mrb[0].mxu0
        %v3384 = vadd.f32 0.0, %v3383
        %v3385 = vpop.f32.mrb[0].mxu0
        %v3386 = vadd.f32 0.0, %v3385
        %v3387 = vpop.f32.mrb[0].mxu0
        %v3388 = vadd.f32 0.0, %v3387
        %v3389 = vpop.f32.mrb[0].mxu0
        %v3390 = vadd.f32 0.0, %v3389
        %3391 = vmatprep.mubr.bf16.mxu0 %v3079
        %3392 = vmatmul.mubr.bf16.gmra.mrb[0].mxu0 %v3078
        %v3393 = vpop.f32.mrb[0].mxu0
        %v3394 = vadd.f32 0.0, %v3393
        %v3395 = vpop.f32.mrb[0].mxu0
        %v3396 = vadd.f32 0.0, %v3395
        %v3397 = vpop.f32.mrb[0].mxu0
        %v3398 = vadd.f32 0.0, %v3397
        %v3399 = vpop.f32.mrb[0].mxu0
        %v3400 = vadd.f32 0.0, %v3399
        %3401 = vmatprep.mubr.bf16.mxu0 %v3081
        %3402 = vmatmul.mubr.bf16.gmra.mrb[0].mxu0 %v3080
        %v3403 = vpop.f32.mrb[0].mxu0
        %v3404 = vadd.f32 0.0, %v3403
        %v3405 = vpop.f32.mrb[0].mxu0
        %v3406 = vadd.f32 0.0, %v3405
        %v3407 = vpop.f32.mrb[0].mxu0
        %v3408 = vadd.f32 0.0, %v3407
        %v3409 = vpop.f32.mrb[0].mxu0
        %v3410 = vadd.f32 0.0, %v3409
        %3411 = vmatprep.mubr.bf16.mxu0 %v3083
        %3412 = vmatmul.mubr.bf16.gmra.mrb[0].mxu0 %v3082
        %v3413 = vpop.f32.mrb[0].mxu0
        %v3414 = vadd.f32 0.0, %v3413
        %v3415 = vpop.f32.mrb[0].mxu0
        %v3416 = vadd.f32 0.0, %v3415
        %v3417 = vpop.f32.mrb[0].mxu0
        %v3418 = vadd.f32 0.0, %v3417
        %v3419 = vpop.f32.mrb[0].mxu0
        %v3420 = vadd.f32 0.0, %v3419
        %3421 = vmatprep.mubr.bf16.mxu0 %v3085
        %3422 = vmatmul.mubr.bf16.gmra.mrb[0].mxu0 %v3084
        %v3423 = vpop.f32.mrb[0].mxu0
        %v3424 = vadd.f32 0.0, %v3423
        %v3425 = vpop.f32.mrb[0].mxu0
        %v3426 = vadd.f32 0.0, %v3425
        %v3427 = vpop.f32.mrb[0].mxu0
        %v3428 = vadd.f32 0.0, %v3427
        %v3429 = vpop.f32.mrb[0].mxu0
        %v3430 = vadd.f32 0.0, %v3429
        %3431 = vmatprep.mubr.bf16.mxu0 %v3087
        %3432 = vmatmul.mubr.bf16.gmra.mrb[0].mxu0 %v3086
        %v3433 = vpop.f32.mrb[0].mxu0
        %v3434 = vadd.f32 0.0, %v3433
        %v3435 = vpop.f32.mrb[0].mxu0
        %v3436 = vadd.f32 0.0, %v3435
        %v3437 = vpop.f32.mrb[0].mxu0
        %v3438 = vadd.f32 0.0, %v3437
        %v3439 = vpop.f32.mrb[0].mxu0
        %v3440 = vadd.f32 0.0, %v3439
        %3441 = vmatprep.mubr.bf16.mxu0 %v3089
        %3442 = vmatmul.mubr.bf16.gmra.mrb[0].mxu0 %v3088
        %v3443 = vpop.f32.mrb[0].mxu0
        %v3444 = vadd.f32 0.0, %v3443
        %v3445 = vpop.f32.mrb[0].mxu0
        %v3446 = vadd.f32 0.0, %v3445
        %v3447 = vpop.f32.mrb[0].mxu0
        %v3448 = vadd.f32 0.0, %v3447
        %v3449 = vpop.f32.mrb[0].mxu0
        %v3450 = vadd.f32 0.0, %v3449
        %3451 = vmatprep.mubr.bf16.mxu0 %v3091
        %3452 = vmatmul.mubr.bf16.gmra.mrb[0].mxu0 %v3090
        %v3453 = vpop.f32.mrb[0].mxu0
        %v3454 = vadd.f32 0.0, %v3453
        %v3455 = vpop.f32.mrb[0].mxu0
        %v3456 = vadd.f32 0.0, %v3455
        %v3457 = vpop.f32.mrb[0].mxu0
        %v3458 = vadd.f32 0.0, %v3457
        %v3459 = vpop.f32.mrb[0].mxu0
        %v3460 = vadd.f32 0.0, %v3459
        %3461 = vmatprep.mubr.bf16.mxu0 %v3093
        %3462 = vmatmul.mubr.bf16.gmra.mrb[0].mxu0 %v3092
        %v3463 = vpop.f32.mrb[0].mxu0
        %v3464 = vadd.f32 0.0, %v3463
        %v3465 = vpop.f32.mrb[0].mxu0
        %v3466 = vadd.f32 0.0, %v3465
        %v3467 = vpop.f32.mrb[0].mxu0
        %v3468 = vadd.f32 0.0, %v3467
        %v3469 = vpop.f32.mrb[0].mxu0
        %v3470 = vadd.f32 0.0, %v3469
        %3471 = vmatprep.mubr.bf16.mxu0 %v3095
        %3472 = vmatmul.mubr.bf16.gmra.mrb[0].mxu0 %v3094
        %v3473 = vpop.f32.mrb[0].mxu0
        %v3474 = vadd.f32 0.0, %v3473
        %v3475 = vpop.f32.mrb[0].mxu0
        %v3476 = vadd.f32 0.0, %v3475
        %v3477 = vpop.f32.mrb[0].mxu0
        %v3478 = vadd.f32 0.0, %v3477
        %v3479 = vpop.f32.mrb[0].mxu0
        %v3480 = vadd.f32 0.0, %v3479
        %3481 = vdwg.mxu0
        %v3482 = vadd.f32 %v2906, %v3324
        %v3483 = vadd.f32 %v2908, %v3326
        %v3484 = vadd.f32 %v2910, %v3328
        %v3485 = vadd.f32 %v2912, %v3330
        %v3486 = vadd.f32 %v2916, %v3334
        %v3487 = vadd.f32 %v2918, %v3336
        %v3488 = vadd.f32 %v2920, %v3338
        %v3489 = vadd.f32 %v2922, %v3340
        %v3490 = vadd.f32 %v2926, %v3344
        %v3491 = vadd.f32 %v2928, %v3346
        %v3492 = vadd.f32 %v2930, %v3348
        %v3493 = vadd.f32 %v2932, %v3350
        %v3494 = vadd.f32 %v2936, %v3354
        %v3495 = vadd.f32 %v2938, %v3356
        %v3496 = vadd.f32 %v2940, %v3358
        %v3497 = vadd.f32 %v2942, %v3360
        %v3498 = vadd.f32 %v2946, %v3364
        %v3499 = vadd.f32 %v2948, %v3366
        %v3500 = vadd.f32 %v2950, %v3368
        %v3501 = vadd.f32 %v2952, %v3370
        %v3502 = vadd.f32 %v2956, %v3374
        %v3503 = vadd.f32 %v2958, %v3376
        %v3504 = vadd.f32 %v2960, %v3378
        %v3505 = vadd.f32 %v2962, %v3380
        %v3506 = vadd.f32 %v2966, %v3384
        %v3507 = vadd.f32 %v2968, %v3386
        %v3508 = vadd.f32 %v2970, %v3388
        %v3509 = vadd.f32 %v2972, %v3390
        %v3510 = vadd.f32 %v2976, %v3394
        %v3511 = vadd.f32 %v2978, %v3396
        %v3512 = vadd.f32 %v2980, %v3398
        %v3513 = vadd.f32 %v2982, %v3400
        %v3514 = vadd.f32 %v2986, %v3404
        %v3515 = vadd.f32 %v2988, %v3406
        %v3516 = vadd.f32 %v2990, %v3408
        %v3517 = vadd.f32 %v2992, %v3410
        %v3518 = vadd.f32 %v2996, %v3414
        %v3519 = vadd.f32 %v2998, %v3416
        %v3520 = vadd.f32 %v3000, %v3418
        %v3521 = vadd.f32 %v3002, %v3420
        %v3522 = vadd.f32 %v3006, %v3424
        %v3523 = vadd.f32 %v3008, %v3426
        %v3524 = vadd.f32 %v3010, %v3428
        %v3525 = vadd.f32 %v3012, %v3430
        %v3526 = vadd.f32 %v3016, %v3434
        %v3527 = vadd.f32 %v3018, %v3436
        %v3528 = vadd.f32 %v3020, %v3438
        %v3529 = vadd.f32 %v3022, %v3440
        %v3530 = vadd.f32 %v3026, %v3444
        %v3531 = vadd.f32 %v3028, %v3446
        %v3532 = vadd.f32 %v3030, %v3448
        %v3533 = vadd.f32 %v3032, %v3450
        %v3534 = vadd.f32 %v3036, %v3454
        %v3535 = vadd.f32 %v3038, %v3456
        %v3536 = vadd.f32 %v3040, %v3458
        %v3537 = vadd.f32 %v3042, %v3460
        %v3538 = vadd.f32 %v3046, %v3464
        %v3539 = vadd.f32 %v3048, %v3466
        %v3540 = vadd.f32 %v3050, %v3468
        %v3541 = vadd.f32 %v3052, %v3470
        %v3542 = vadd.f32 %v3056, %v3474
        %v3543 = vadd.f32 %v3058, %v3476
        %v3544 = vadd.f32 %v3060, %v3478
        %v3545 = vadd.f32 %v3062, %v3480
        %v3546 = vld [vmem:[#allocation3] sm:$0xff]
        %v3547 = vld [vmem:[#allocation3 + $0x8] sm:$0xff]
        %v3548 = vld [vmem:[#allocation3 + $0x10] sm:$0xff]
        %v3549 = vld [vmem:[#allocation3 + $0x18] sm:$0xff]
        %v3550 = vld [vmem:[#allocation3 + $0x20] sm:$0xff]
        %v3551 = vld [vmem:[#allocation3 + $0x28] sm:$0xff]
        %v3552 = vld [vmem:[#allocation3 + $0x30] sm:$0xff]
        %v3553 = vld [vmem:[#allocation3 + $0x38] sm:$0xff]
        %v3554 = vld [vmem:[#allocation3 + $0x40] sm:$0xff]
        %v3555 = vld [vmem:[#allocation3 + $0x48] sm:$0xff]
        %v3556 = vld [vmem:[#allocation3 + $0x50] sm:$0xff]
        %v3557 = vld [vmem:[#allocation3 + $0x58] sm:$0xff]
        %v3558 = vld [vmem:[#allocation3 + $0x60] sm:$0xff]
        %v3559 = vld [vmem:[#allocation3 + $0x68] sm:$0xff]
        %v3560 = vld [vmem:[#allocation3 + $0x70] sm:$0xff]
        %v3561 = vld [vmem:[#allocation3 + $0x78] sm:$0xff]
        %v3562 = vld [vmem:[#allocation3 + $0x80] sm:$0xff]
        %v3563 = vld [vmem:[#allocation3 + $0x88] sm:$0xff]
        %v3564 = vld [vmem:[#allocation3 + $0x90] sm:$0xff]
        %v3565 = vld [vmem:[#allocation3 + $0x98] sm:$0xff]
        %v3566 = vld [vmem:[#allocation3 + $0xa0] sm:$0xff]
        %v3567 = vld [vmem:[#allocation3 + $0xa8] sm:$0xff]
        %v3568 = vld [vmem:[#allocation3 + $0xb0] sm:$0xff]
        %v3569 = vld [vmem:[#allocation3 + $0xb8] sm:$0xff]
        %v3570 = vld [vmem:[#allocation3 + $0xc0] sm:$0xff]
        %v3571 = vld [vmem:[#allocation3 + $0xc8] sm:$0xff]
        %v3572 = vld [vmem:[#allocation3 + $0xd0] sm:$0xff]
        %v3573 = vld [vmem:[#allocation3 + $0xd8] sm:$0xff]
        %v3574 = vld [vmem:[#allocation3 + $0xe0] sm:$0xff]
        %v3575 = vld [vmem:[#allocation3 + $0xe8] sm:$0xff]
        %v3576 = vld [vmem:[#allocation3 + $0xf0] sm:$0xff]
        %v3577 = vld [vmem:[#allocation3 + $0xf8] sm:$0xff]
        %v3578 = vld [vmem:[#allocation3 + $0x100] sm:$0xff]
        %v3579 = vld [vmem:[#allocation3 + $0x108] sm:$0xff]
        %v3580 = vld [vmem:[#allocation3 + $0x110] sm:$0xff]
        %v3581 = vld [vmem:[#allocation3 + $0x118] sm:$0xff]
        %v3582 = vld [vmem:[#allocation3 + $0x120] sm:$0xff]
        %v3583 = vld [vmem:[#allocation3 + $0x128] sm:$0xff]
        %v3584 = vld [vmem:[#allocation3 + $0x130] sm:$0xff]
        %v3585 = vld [vmem:[#allocation3 + $0x138] sm:$0xff]
        %v3586 = vld [vmem:[#allocation3 + $0x140] sm:$0xff]
        %v3587 = vld [vmem:[#allocation3 + $0x148] sm:$0xff]
        %v3588 = vld [vmem:[#allocation3 + $0x150] sm:$0xff]
        %v3589 = vld [vmem:[#allocation3 + $0x158] sm:$0xff]
        %v3590 = vld [vmem:[#allocation3 + $0x160] sm:$0xff]
        %v3591 = vld [vmem:[#allocation3 + $0x168] sm:$0xff]
        %v3592 = vld [vmem:[#allocation3 + $0x170] sm:$0xff]
        %v3593 = vld [vmem:[#allocation3 + $0x178] sm:$0xff]
        %v3594 = vld [vmem:[#allocation3 + $0x180] sm:$0xff]
        %v3595 = vld [vmem:[#allocation3 + $0x188] sm:$0xff]
        %v3596 = vld [vmem:[#allocation3 + $0x190] sm:$0xff]
        %v3597 = vld [vmem:[#allocation3 + $0x198] sm:$0xff]
        %v3598 = vld [vmem:[#allocation3 + $0x1a0] sm:$0xff]
        %v3599 = vld [vmem:[#allocation3 + $0x1a8] sm:$0xff]
        %v3600 = vld [vmem:[#allocation3 + $0x1b0] sm:$0xff]
        %v3601 = vld [vmem:[#allocation3 + $0x1b8] sm:$0xff]
        %v3602 = vld [vmem:[#allocation3 + $0x1c0] sm:$0xff]
        %v3603 = vld [vmem:[#allocation3 + $0x1c8] sm:$0xff]
        %v3604 = vld [vmem:[#allocation3 + $0x1d0] sm:$0xff]
        %v3605 = vld [vmem:[#allocation3 + $0x1d8] sm:$0xff]
        %v3606 = vld [vmem:[#allocation3 + $0x1e0] sm:$0xff]
        %v3607 = vld [vmem:[#allocation3 + $0x1e8] sm:$0xff]
        %v3608 = vld [vmem:[#allocation3 + $0x1f0] sm:$0xff]
        %v3609 = vld [vmem:[#allocation3 + $0x1f8] sm:$0xff]
        %v3610 = vadd.f32 %v3546, %v3482
        %v3611 = vadd.f32 %v3547, %v3483
        %v3612 = vadd.f32 %v3548, %v3484
        %v3613 = vadd.f32 %v3549, %v3485
        %v3614 = vadd.f32 %v3550, %v3486
        %v3615 = vadd.f32 %v3551, %v3487
        %v3616 = vadd.f32 %v3552, %v3488
        %v3617 = vadd.f32 %v3553, %v3489
        %v3618 = vadd.f32 %v3554, %v3490
        %v3619 = vadd.f32 %v3555, %v3491
        %v3620 = vadd.f32 %v3556, %v3492
        %v3621 = vadd.f32 %v3557, %v3493
        %v3622 = vadd.f32 %v3558, %v3494
        %v3623 = vadd.f32 %v3559, %v3495
        %v3624 = vadd.f32 %v3560, %v3496
        %v3625 = vadd.f32 %v3561, %v3497
        %v3626 = vadd.f32 %v3562, %v3498
        %v3627 = vadd.f32 %v3563, %v3499
        %v3628 = vadd.f32 %v3564, %v3500
        %v3629 = vadd.f32 %v3565, %v3501
        %v3630 = vadd.f32 %v3566, %v3502
        %v3631 = vadd.f32 %v3567, %v3503
        %v3632 = vadd.f32 %v3568, %v3504
        %v3633 = vadd.f32 %v3569, %v3505
        %v3634 = vadd.f32 %v3570, %v3506
        %v3635 = vadd.f32 %v3571, %v3507
        %v3636 = vadd.f32 %v3572, %v3508
        %v3637 = vadd.f32 %v3573, %v3509
        %v3638 = vadd.f32 %v3574, %v3510
        %v3639 = vadd.f32 %v3575, %v3511
        %v3640 = vadd.f32 %v3576, %v3512
        %v3641 = vadd.f32 %v3577, %v3513
        %v3642 = vadd.f32 %v3578, %v3514
        %v3643 = vadd.f32 %v3579, %v3515
        %v3644 = vadd.f32 %v3580, %v3516
        %v3645 = vadd.f32 %v3581, %v3517
        %v3646 = vadd.f32 %v3582, %v3518
        %v3647 = vadd.f32 %v3583, %v3519
        %v3648 = vadd.f32 %v3584, %v3520
        %v3649 = vadd.f32 %v3585, %v3521
        %v3650 = vadd.f32 %v3586, %v3522
        %v3651 = vadd.f32 %v3587, %v3523
        %v3652 = vadd.f32 %v3588, %v3524
        %v3653 = vadd.f32 %v3589, %v3525
        %v3654 = vadd.f32 %v3590, %v3526
        %v3655 = vadd.f32 %v3591, %v3527
        %v3656 = vadd.f32 %v3592, %v3528
        %v3657 = vadd.f32 %v3593, %v3529
        %v3658 = vadd.f32 %v3594, %v3530
        %v3659 = vadd.f32 %v3595, %v3531
        %v3660 = vadd.f32 %v3596, %v3532
        %v3661 = vadd.f32 %v3597, %v3533
        %v3662 = vadd.f32 %v3598, %v3534
        %v3663 = vadd.f32 %v3599, %v3535
        %v3664 = vadd.f32 %v3600, %v3536
        %v3665 = vadd.f32 %v3601, %v3537
        %v3666 = vadd.f32 %v3602, %v3538
        %v3667 = vadd.f32 %v3603, %v3539
        %v3668 = vadd.f32 %v3604, %v3540
        %v3669 = vadd.f32 %v3605, %v3541
        %v3670 = vadd.f32 %v3606, %v3542
        %v3671 = vadd.f32 %v3607, %v3543
        %v3672 = vadd.f32 %v3608, %v3544
        %v3673 = vadd.f32 %v3609, %v3545
        %3674 = vst [vmem:[#allocation3] sm:$0xff] %v3610
        %3675 = vst [vmem:[#allocation3 + $0x8] sm:$0xff] %v3611
        %3676 = vst [vmem:[#allocation3 + $0x10] sm:$0xff] %v3612
        %3677 = vst [vmem:[#allocation3 + $0x18] sm:$0xff] %v3613
        %3678 = vst [vmem:[#allocation3 + $0x20] sm:$0xff] %v3614
        %3679 = vst [vmem:[#allocation3 + $0x28] sm:$0xff] %v3615
        %3680 = vst [vmem:[#allocation3 + $0x30] sm:$0xff] %v3616
        %3681 = vst [vmem:[#allocation3 + $0x38] sm:$0xff] %v3617
        %3682 = vst [vmem:[#allocation3 + $0x40] sm:$0xff] %v3618
        %3683 = vst [vmem:[#allocation3 + $0x48] sm:$0xff] %v3619
        %3684 = vst [vmem:[#allocation3 + $0x50] sm:$0xff] %v3620
        %3685 = vst [vmem:[#allocation3 + $0x58] sm:$0xff] %v3621
        %3686 = vst [vmem:[#allocation3 + $0x60] sm:$0xff] %v3622
        %3687 = vst [vmem:[#allocation3 + $0x68] sm:$0xff] %v3623
        %3688 = vst [vmem:[#allocation3 + $0x70] sm:$0xff] %v3624
        %3689 = vst [vmem:[#allocation3 + $0x78] sm:$0xff] %v3625
        %3690 = vst [vmem:[#allocation3 + $0x80] sm:$0xff] %v3626
        %3691 = vst [vmem:[#allocation3 + $0x88] sm:$0xff] %v3627
        %3692 = vst [vmem:[#allocation3 + $0x90] sm:$0xff] %v3628
        %3693 = vst [vmem:[#allocation3 + $0x98] sm:$0xff] %v3629
        %3694 = vst [vmem:[#allocation3 + $0xa0] sm:$0xff] %v3630
        %3695 = vst [vmem:[#allocation3 + $0xa8] sm:$0xff] %v3631
        %3696 = vst [vmem:[#allocation3 + $0xb0] sm:$0xff] %v3632
        %3697 = vst [vmem:[#allocation3 + $0xb8] sm:$0xff] %v3633
        %3698 = vst [vmem:[#allocation3 + $0xc0] sm:$0xff] %v3634
        %3699 = vst [vmem:[#allocation3 + $0xc8] sm:$0xff] %v3635
        %3700 = vst [vmem:[#allocation3 + $0xd0] sm:$0xff] %v3636
        %3701 = vst [vmem:[#allocation3 + $0xd8] sm:$0xff] %v3637
        %3702 = vst [vmem:[#allocation3 + $0xe0] sm:$0xff] %v3638
        %3703 = vst [vmem:[#allocation3 + $0xe8] sm:$0xff] %v3639
        %3704 = vst [vmem:[#allocation3 + $0xf0] sm:$0xff] %v3640
        %3705 = vst [vmem:[#allocation3 + $0xf8] sm:$0xff] %v3641
        %3706 = vst [vmem:[#allocation3 + $0x100] sm:$0xff] %v3642
        %3707 = vst [vmem:[#allocation3 + $0x108] sm:$0xff] %v3643
        %3708 = vst [vmem:[#allocation3 + $0x110] sm:$0xff] %v3644
        %3709 = vst [vmem:[#allocation3 + $0x118] sm:$0xff] %v3645
        %3710 = vst [vmem:[#allocation3 + $0x120] sm:$0xff] %v3646
        %3711 = vst [vmem:[#allocation3 + $0x128] sm:$0xff] %v3647
        %3712 = vst [vmem:[#allocation3 + $0x130] sm:$0xff] %v3648
        %3713 = vst [vmem:[#allocation3 + $0x138] sm:$0xff] %v3649
        %3714 = vst [vmem:[#allocation3 + $0x140] sm:$0xff] %v3650
        %3715 = vst [vmem:[#allocation3 + $0x148] sm:$0xff] %v3651
        %3716 = vst [vmem:[#allocation3 + $0x150] sm:$0xff] %v3652
        %3717 = vst [vmem:[#allocation3 + $0x158] sm:$0xff] %v3653
        %3718 = vst [vmem:[#allocation3 + $0x160] sm:$0xff] %v3654
        %3719 = vst [vmem:[#allocation3 + $0x168] sm:$0xff] %v3655
        %3720 = vst [vmem:[#allocation3 + $0x170] sm:$0xff] %v3656
        %3721 = vst [vmem:[#allocation3 + $0x178] sm:$0xff] %v3657
        %3722 = vst [vmem:[#allocation3 + $0x180] sm:$0xff] %v3658
        %3723 = vst [vmem:[#allocation3 + $0x188] sm:$0xff] %v3659
        %3724 = vst [vmem:[#allocation3 + $0x190] sm:$0xff] %v3660
        %3725 = vst [vmem:[#allocation3 + $0x198] sm:$0xff] %v3661
        %3726 = vst [vmem:[#allocation3 + $0x1a0] sm:$0xff] %v3662
        %3727 = vst [vmem:[#allocation3 + $0x1a8] sm:$0xff] %v3663
        %3728 = vst [vmem:[#allocation3 + $0x1b0] sm:$0xff] %v3664
        %3729 = vst [vmem:[#allocation3 + $0x1b8] sm:$0xff] %v3665
        %3730 = vst [vmem:[#allocation3 + $0x1c0] sm:$0xff] %v3666
        %3731 = vst [vmem:[#allocation3 + $0x1c8] sm:$0xff] %v3667
        %3732 = vst [vmem:[#allocation3 + $0x1d0] sm:$0xff] %v3668
        %3733 = vst [vmem:[#allocation3 + $0x1d8] sm:$0xff] %v3669
        %3734 = vst [vmem:[#allocation3 + $0x1e0] sm:$0xff] %v3670
        %3735 = vst [vmem:[#allocation3 + $0x1e8] sm:$0xff] %v3671
        %3736 = vst [vmem:[#allocation3 + $0x1f0] sm:$0xff] %v3672
        %3737 = vst [vmem:[#allocation3 + $0x1f8] sm:$0xff] %v3673
        %s3738 = scalar_lea.vmem [#allocation2], 32
        %v3739 = vld [vmem:[%s3738] sm:$0xff]
        %v3740 = vld [vmem:[%s3738 + $0x8] sm:$0xff]
        %v3741 = vld [vmem:[%s3738 + $0x10] sm:$0xff]
        %v3742 = vld [vmem:[%s3738 + $0x18] sm:$0xff]
        %v3743 = vld [vmem:[%s3738 + $0x20] sm:$0xff]
        %v3744 = vld [vmem:[%s3738 + $0x28] sm:$0xff]
        %v3745 = vld [vmem:[%s3738 + $0x30] sm:$0xff]
        %v3746 = vld [vmem:[%s3738 + $0x38] sm:$0xff]
        %v3747 = vld [vmem:[%s3738 + $0x40] sm:$0xff]
        %v3748 = vld [vmem:[%s3738 + $0x48] sm:$0xff]
        %v3749 = vld [vmem:[%s3738 + $0x50] sm:$0xff]
        %v3750 = vld [vmem:[%s3738 + $0x58] sm:$0xff]
        %v3751 = vld [vmem:[%s3738 + $0x60] sm:$0xff]
        %v3752 = vld [vmem:[%s3738 + $0x68] sm:$0xff]
        %v3753 = vld [vmem:[%s3738 + $0x70] sm:$0xff]
        %v3754 = vld [vmem:[%s3738 + $0x78] sm:$0xff]
        %v3755 = vld [vmem:[%s3738 + $0x80] sm:$0xff]
        %v3756 = vld [vmem:[%s3738 + $0x88] sm:$0xff]
        %v3757 = vld [vmem:[%s3738 + $0x90] sm:$0xff]
        %v3758 = vld [vmem:[%s3738 + $0x98] sm:$0xff]
        %v3759 = vld [vmem:[%s3738 + $0xa0] sm:$0xff]
        %v3760 = vld [vmem:[%s3738 + $0xa8] sm:$0xff]
        %v3761 = vld [vmem:[%s3738 + $0xb0] sm:$0xff]
        %v3762 = vld [vmem:[%s3738 + $0xb8] sm:$0xff]
        %v3763 = vld [vmem:[%s3738 + $0xc0] sm:$0xff]
        %v3764 = vld [vmem:[%s3738 + $0xc8] sm:$0xff]
        %v3765 = vld [vmem:[%s3738 + $0xd0] sm:$0xff]
        %v3766 = vld [vmem:[%s3738 + $0xd8] sm:$0xff]
        %v3767 = vld [vmem:[%s3738 + $0xe0] sm:$0xff]
        %v3768 = vld [vmem:[%s3738 + $0xe8] sm:$0xff]
        %v3769 = vld [vmem:[%s3738 + $0xf0] sm:$0xff]
        %v3770 = vld [vmem:[%s3738 + $0xf8] sm:$0xff]
        %s3771 = scalar_lea.vmem %s1, 1536
        %v3772 = vld [vmem:[%s3771] sm:$0xff]
        %v3773 = vld [vmem:[%s3771 + $0x8] sm:$0xff]
        %v3774 = vld [vmem:[%s3771 + $0x10] sm:$0xff]
        %v3775 = vld [vmem:[%s3771 + $0x18] sm:$0xff]
        %v3776 = vld [vmem:[%s3771 + $0x20] sm:$0xff]
        %v3777 = vld [vmem:[%s3771 + $0x28] sm:$0xff]
        %v3778 = vld [vmem:[%s3771 + $0x30] sm:$0xff]
        %v3779 = vld [vmem:[%s3771 + $0x38] sm:$0xff]
        %v3780 = vld [vmem:[%s3771 + $0x40] sm:$0xff]
        %v3781 = vld [vmem:[%s3771 + $0x48] sm:$0xff]
        %v3782 = vld [vmem:[%s3771 + $0x50] sm:$0xff]
        %v3783 = vld [vmem:[%s3771 + $0x58] sm:$0xff]
        %v3784 = vld [vmem:[%s3771 + $0x60] sm:$0xff]
        %v3785 = vld [vmem:[%s3771 + $0x68] sm:$0xff]
        %v3786 = vld [vmem:[%s3771 + $0x70] sm:$0xff]
        %v3787 = vld [vmem:[%s3771 + $0x78] sm:$0xff]
        %v3788 = vld [vmem:[%s3771 + $0x80] sm:$0xff]
        %v3789 = vld [vmem:[%s3771 + $0x88] sm:$0xff]
        %v3790 = vld [vmem:[%s3771 + $0x90] sm:$0xff]
        %v3791 = vld [vmem:[%s3771 + $0x98] sm:$0xff]
        %v3792 = vld [vmem:[%s3771 + $0xa0] sm:$0xff]
        %v3793 = vld [vmem:[%s3771 + $0xa8] sm:$0xff]
        %v3794 = vld [vmem:[%s3771 + $0xb0] sm:$0xff]
        %v3795 = vld [vmem:[%s3771 + $0xb8] sm:$0xff]
        %v3796 = vld [vmem:[%s3771 + $0xc0] sm:$0xff]
        %v3797 = vld [vmem:[%s3771 + $0xc8] sm:$0xff]
        %v3798 = vld [vmem:[%s3771 + $0xd0] sm:$0xff]
        %v3799 = vld [vmem:[%s3771 + $0xd8] sm:$0xff]
        %v3800 = vld [vmem:[%s3771 + $0xe0] sm:$0xff]
        %v3801 = vld [vmem:[%s3771 + $0xe8] sm:$0xff]
        %v3802 = vld [vmem:[%s3771 + $0xf0] sm:$0xff]
        %v3803 = vld [vmem:[%s3771 + $0xf8] sm:$0xff]
        %s3804 = scalar_lea.vmem [#allocation2], 320
        %v3805 = vld [vmem:[%s3804] sm:$0xff]
        %v3806 = vld [vmem:[%s3804 + $0x8] sm:$0xff]
        %v3807 = vld [vmem:[%s3804 + $0x10] sm:$0xff]
        %v3808 = vld [vmem:[%s3804 + $0x18] sm:$0xff]
        %v3809 = vld [vmem:[%s3804 + $0x20] sm:$0xff]
        %v3810 = vld [vmem:[%s3804 + $0x28] sm:$0xff]
        %v3811 = vld [vmem:[%s3804 + $0x30] sm:$0xff]
        %v3812 = vld [vmem:[%s3804 + $0x38] sm:$0xff]
        %v3813 = vld [vmem:[%s3804 + $0x40] sm:$0xff]
        %v3814 = vld [vmem:[%s3804 + $0x48] sm:$0xff]
        %v3815 = vld [vmem:[%s3804 + $0x50] sm:$0xff]
        %v3816 = vld [vmem:[%s3804 + $0x58] sm:$0xff]
        %v3817 = vld [vmem:[%s3804 + $0x60] sm:$0xff]
        %v3818 = vld [vmem:[%s3804 + $0x68] sm:$0xff]
        %v3819 = vld [vmem:[%s3804 + $0x70] sm:$0xff]
        %v3820 = vld [vmem:[%s3804 + $0x78] sm:$0xff]
        %v3821 = vld [vmem:[%s3804 + $0x80] sm:$0xff]
        %v3822 = vld [vmem:[%s3804 + $0x88] sm:$0xff]
        %v3823 = vld [vmem:[%s3804 + $0x90] sm:$0xff]
        %v3824 = vld [vmem:[%s3804 + $0x98] sm:$0xff]
        %v3825 = vld [vmem:[%s3804 + $0xa0] sm:$0xff]
        %v3826 = vld [vmem:[%s3804 + $0xa8] sm:$0xff]
        %v3827 = vld [vmem:[%s3804 + $0xb0] sm:$0xff]
        %v3828 = vld [vmem:[%s3804 + $0xb8] sm:$0xff]
        %v3829 = vld [vmem:[%s3804 + $0xc0] sm:$0xff]
        %v3830 = vld [vmem:[%s3804 + $0xc8] sm:$0xff]
        %v3831 = vld [vmem:[%s3804 + $0xd0] sm:$0xff]
        %v3832 = vld [vmem:[%s3804 + $0xd8] sm:$0xff]
        %v3833 = vld [vmem:[%s3804 + $0xe0] sm:$0xff]
        %v3834 = vld [vmem:[%s3804 + $0xe8] sm:$0xff]
        %v3835 = vld [vmem:[%s3804 + $0xf0] sm:$0xff]
        %v3836 = vld [vmem:[%s3804 + $0xf8] sm:$0xff]
        %s3837 = scalar_lea.vmem %s1, 1792
        %v3838 = vld [vmem:[%s3837] sm:$0xff]
        %v3839 = vld [vmem:[%s3837 + $0x8] sm:$0xff]
        %v3840 = vld [vmem:[%s3837 + $0x10] sm:$0xff]
        %v3841 = vld [vmem:[%s3837 + $0x18] sm:$0xff]
        %v3842 = vld [vmem:[%s3837 + $0x20] sm:$0xff]
        %v3843 = vld [vmem:[%s3837 + $0x28] sm:$0xff]
        %v3844 = vld [vmem:[%s3837 + $0x30] sm:$0xff]
        %v3845 = vld [vmem:[%s3837 + $0x38] sm:$0xff]
        %v3846 = vld [vmem:[%s3837 + $0x40] sm:$0xff]
        %v3847 = vld [vmem:[%s3837 + $0x48] sm:$0xff]
        %v3848 = vld [vmem:[%s3837 + $0x50] sm:$0xff]
        %v3849 = vld [vmem:[%s3837 + $0x58] sm:$0xff]
        %v3850 = vld [vmem:[%s3837 + $0x60] sm:$0xff]
        %v3851 = vld [vmem:[%s3837 + $0x68] sm:$0xff]
        %v3852 = vld [vmem:[%s3837 + $0x70] sm:$0xff]
        %v3853 = vld [vmem:[%s3837 + $0x78] sm:$0xff]
        %v3854 = vld [vmem:[%s3837 + $0x80] sm:$0xff]
        %v3855 = vld [vmem:[%s3837 + $0x88] sm:$0xff]
        %v3856 = vld [vmem:[%s3837 + $0x90] sm:$0xff]
        %v3857 = vld [vmem:[%s3837 + $0x98] sm:$0xff]
        %v3858 = vld [vmem:[%s3837 + $0xa0] sm:$0xff]
        %v3859 = vld [vmem:[%s3837 + $0xa8] sm:$0xff]
        %v3860 = vld [vmem:[%s3837 + $0xb0] sm:$0xff]
        %v3861 = vld [vmem:[%s3837 + $0xb8] sm:$0xff]
        %v3862 = vld [vmem:[%s3837 + $0xc0] sm:$0xff]
        %v3863 = vld [vmem:[%s3837 + $0xc8] sm:$0xff]
        %v3864 = vld [vmem:[%s3837 + $0xd0] sm:$0xff]
        %v3865 = vld [vmem:[%s3837 + $0xd8] sm:$0xff]
        %v3866 = vld [vmem:[%s3837 + $0xe0] sm:$0xff]
        %v3867 = vld [vmem:[%s3837 + $0xe8] sm:$0xff]
        %v3868 = vld [vmem:[%s3837 + $0xf0] sm:$0xff]
        %v3869 = vld [vmem:[%s3837 + $0xf8] sm:$0xff]
        %v3902 = vunpack.c.l.b16 %v3838
        %v3903 = vunpack.c.h.b16 %v3838
        %v3904 = vunpack.c.l.b16 %v3839
        %v3905 = vunpack.c.h.b16 %v3839
        %v3906 = vunpack.c.l.b16 %v3840
        %v3907 = vunpack.c.h.b16 %v3840
        %v3908 = vunpack.c.l.b16 %v3841
        %v3909 = vunpack.c.h.b16 %v3841
        %v3910 = vunpack.c.l.b16 %v3842
        %v3911 = vunpack.c.h.b16 %v3842
        %v3912 = vunpack.c.l.b16 %v3843
        %v3913 = vunpack.c.h.b16 %v3843
        %v3914 = vunpack.c.l.b16 %v3844
        %v3915 = vunpack.c.h.b16 %v3844
        %v3916 = vunpack.c.l.b16 %v3845
        %v3917 = vunpack.c.h.b16 %v3845
        %v3918 = vunpack.c.l.b16 %v3846
        %v3919 = vunpack.c.h.b16 %v3846
        %v3920 = vunpack.c.l.b16 %v3847
        %v3921 = vunpack.c.h.b16 %v3847
        %v3922 = vunpack.c.l.b16 %v3848
        %v3923 = vunpack.c.h.b16 %v3848
        %v3924 = vunpack.c.l.b16 %v3849
        %v3925 = vunpack.c.h.b16 %v3849
        %v3926 = vunpack.c.l.b16 %v3850
        %v3927 = vunpack.c.h.b16 %v3850
        %v3928 = vunpack.c.l.b16 %v3851
        %v3929 = vunpack.c.h.b16 %v3851
        %v3930 = vunpack.c.l.b16 %v3852
        %v3931 = vunpack.c.h.b16 %v3852
        %v3932 = vunpack.c.l.b16 %v3853
        %v3933 = vunpack.c.h.b16 %v3853
        %v3934 = vunpack.c.l.b16 %v3854
        %v3935 = vunpack.c.h.b16 %v3854
        %v3936 = vunpack.c.l.b16 %v3855
        %v3937 = vunpack.c.h.b16 %v3855
        %v3938 = vunpack.c.l.b16 %v3856
        %v3939 = vunpack.c.h.b16 %v3856
        %v3940 = vunpack.c.l.b16 %v3857
        %v3941 = vunpack.c.h.b16 %v3857
        %v3942 = vunpack.c.l.b16 %v3858
        %v3943 = vunpack.c.h.b16 %v3858
        %v3944 = vunpack.c.l.b16 %v3859
        %v3945 = vunpack.c.h.b16 %v3859
        %v3946 = vunpack.c.l.b16 %v3860
        %v3947 = vunpack.c.h.b16 %v3860
        %v3948 = vunpack.c.l.b16 %v3861
        %v3949 = vunpack.c.h.b16 %v3861
        %v3950 = vunpack.c.l.b16 %v3862
        %v3951 = vunpack.c.h.b16 %v3862
        %v3952 = vunpack.c.l.b16 %v3863
        %v3953 = vunpack.c.h.b16 %v3863
        %v3954 = vunpack.c.l.b16 %v3864
        %v3955 = vunpack.c.h.b16 %v3864
        %v3956 = vunpack.c.l.b16 %v3865
        %v3957 = vunpack.c.h.b16 %v3865
        %v3958 = vunpack.c.l.b16 %v3866
        %v3959 = vunpack.c.h.b16 %v3866
        %v3960 = vunpack.c.l.b16 %v3867
        %v3961 = vunpack.c.h.b16 %v3867
        %v3962 = vunpack.c.l.b16 %v3868
        %v3963 = vunpack.c.h.b16 %v3868
        %v3964 = vunpack.c.l.b16 %v3869
        %v3965 = vunpack.c.h.b16 %v3869
        %v3966 = vpack.c.b16 %v3904, %v3902
        %v3967 = vpack.c.b16 %v3905, %v3903
        %v3968 = vpack.c.b16 %v3908, %v3906
        %v3969 = vpack.c.b16 %v3909, %v3907
        %v3970 = vpack.c.b16 %v3912, %v3910
        %v3971 = vpack.c.b16 %v3913, %v3911
        %v3972 = vpack.c.b16 %v3916, %v3914
        %v3973 = vpack.c.b16 %v3917, %v3915
        %v3974 = vpack.c.b16 %v3920, %v3918
        %v3975 = vpack.c.b16 %v3921, %v3919
        %v3976 = vpack.c.b16 %v3924, %v3922
        %v3977 = vpack.c.b16 %v3925, %v3923
        %v3978 = vpack.c.b16 %v3928, %v3926
        %v3979 = vpack.c.b16 %v3929, %v3927
        %v3980 = vpack.c.b16 %v3932, %v3930
        %v3981 = vpack.c.b16 %v3933, %v3931
        %v3982 = vpack.c.b16 %v3936, %v3934
        %v3983 = vpack.c.b16 %v3937, %v3935
        %v3984 = vpack.c.b16 %v3940, %v3938
        %v3985 = vpack.c.b16 %v3941, %v3939
        %v3986 = vpack.c.b16 %v3944, %v3942
        %v3987 = vpack.c.b16 %v3945, %v3943
        %v3988 = vpack.c.b16 %v3948, %v3946
        %v3989 = vpack.c.b16 %v3949, %v3947
        %v3990 = vpack.c.b16 %v3952, %v3950
        %v3991 = vpack.c.b16 %v3953, %v3951
        %v3992 = vpack.c.b16 %v3956, %v3954
        %v3993 = vpack.c.b16 %v3957, %v3955
        %v3994 = vpack.c.b16 %v3960, %v3958
        %v3995 = vpack.c.b16 %v3961, %v3959
        %v3996 = vpack.c.b16 %v3964, %v3962
        %v3997 = vpack.c.b16 %v3965, %v3963
        %4030 = vmatprep.subr.bf16.mxu0 %v3967
        %4031 = vmatpush1.bf16.msra.mxu0 %v3966
        %4032 = vmatprep.subr.bf16.mxu0 %v3969
        %4033 = vmatpush1.bf16.msra.mxu0 %v3968
        %4034 = vmatprep.subr.bf16.mxu0 %v3971
        %4035 = vmatpush1.bf16.msra.mxu0 %v3970
        %4036 = vmatprep.subr.bf16.mxu0 %v3973
        %4037 = vmatpush1.bf16.msra.mxu0 %v3972
        %4038 = vmatprep.subr.bf16.mxu0 %v3975
        %4039 = vmatpush1.bf16.msra.mxu0 %v3974
        %4040 = vmatprep.subr.bf16.mxu0 %v3977
        %4041 = vmatpush1.bf16.msra.mxu0 %v3976
        %4042 = vmatprep.subr.bf16.mxu0 %v3979
        %4043 = vmatpush1.bf16.msra.mxu0 %v3978
        %4044 = vmatprep.subr.bf16.mxu0 %v3981
        %4045 = vmatpush1.bf16.msra.mxu0 %v3980
        %4046 = vmatprep.subr.bf16.mxu0 %v3983
        %4047 = vmatpush1.bf16.msra.mxu0 %v3982
        %4048 = vmatprep.subr.bf16.mxu0 %v3985
        %4049 = vmatpush1.bf16.msra.mxu0 %v3984
        %4050 = vmatprep.subr.bf16.mxu0 %v3987
        %4051 = vmatpush1.bf16.msra.mxu0 %v3986
        %4052 = vmatprep.subr.bf16.mxu0 %v3989
        %4053 = vmatpush1.bf16.msra.mxu0 %v3988
        %4054 = vmatprep.subr.bf16.mxu0 %v3991
        %4055 = vmatpush1.bf16.msra.mxu0 %v3990
        %4056 = vmatprep.subr.bf16.mxu0 %v3993
        %4057 = vmatpush1.bf16.msra.mxu0 %v3992
        %4058 = vmatprep.subr.bf16.mxu0 %v3995
        %4059 = vmatpush1.bf16.msra.mxu0 %v3994
        %4060 = vmatprep.subr.bf16.mxu0 %v3997
        %4061 = vmatpush1.bf16.msra.mxu0 %v3996
        %4062 = vmatprep.mubr.bf16.mxu0 %v3806
        %4063 = vmatmul.mubr.bf16.gmra.mrb[0].mxu0 %v3805
        %v4064 = vpop.f32.mrb[0].mxu0
        %v4065 = vadd.f32 0.0, %v4064
        %v4066 = vpop.f32.mrb[0].mxu0
        %v4067 = vadd.f32 0.0, %v4066
        %v4068 = vpop.f32.mrb[0].mxu0
        %v4069 = vadd.f32 0.0, %v4068
        %v4070 = vpop.f32.mrb[0].mxu0
        %v4071 = vadd.f32 0.0, %v4070
        %4072 = vmatprep.mubr.bf16.mxu0 %v3808
        %4073 = vmatmul.mubr.bf16.gmra.mrb[0].mxu0 %v3807
        %v4074 = vpop.f32.mrb[0].mxu0
        %v4075 = vadd.f32 0.0, %v4074
        %v4076 = vpop.f32.mrb[0].mxu0
        %v4077 = vadd.f32 0.0, %v4076
        %v4078 = vpop.f32.mrb[0].mxu0
        %v4079 = vadd.f32 0.0, %v4078
        %v4080 = vpop.f32.mrb[0].mxu0
        %v4081 = vadd.f32 0.0, %v4080
        %4082 = vmatprep.mubr.bf16.mxu0 %v3810
        %4083 = vmatmul.mubr.bf16.gmra.mrb[0].mxu0 %v3809
        %v4084 = vpop.f32.mrb[0].mxu0
        %v4085 = vadd.f32 0.0, %v4084
        %v4086 = vpop.f32.mrb[0].mxu0
        %v4087 = vadd.f32 0.0, %v4086
        %v4088 = vpop.f32.mrb[0].mxu0
        %v4089 = vadd.f32 0.0, %v4088
        %v4090 = vpop.f32.mrb[0].mxu0
        %v4091 = vadd.f32 0.0, %v4090
        %4092 = vmatprep.mubr.bf16.mxu0 %v3812
        %4093 = vmatmul.mubr.bf16.gmra.mrb[0].mxu0 %v3811
        %v4094 = vpop.f32.mrb[0].mxu0
        %v4095 = vadd.f32 0.0, %v4094
        %v4096 = vpop.f32.mrb[0].mxu0
        %v4097 = vadd.f32 0.0, %v4096
        %v4098 = vpop.f32.mrb[0].mxu0
        %v4099 = vadd.f32 0.0, %v4098
        %v4100 = vpop.f32.mrb[0].mxu0
        %v4101 = vadd.f32 0.0, %v4100
        %4102 = vmatprep.mubr.bf16.mxu0 %v3814
        %4103 = vmatmul.mubr.bf16.gmra.mrb[0].mxu0 %v3813
        %v4104 = vpop.f32.mrb[0].mxu0
        %v4105 = vadd.f32 0.0, %v4104
        %v4106 = vpop.f32.mrb[0].mxu0
        %v4107 = vadd.f32 0.0, %v4106
        %v4108 = vpop.f32.mrb[0].mxu0
        %v4109 = vadd.f32 0.0, %v4108
        %v4110 = vpop.f32.mrb[0].mxu0
        %v4111 = vadd.f32 0.0, %v4110
        %4112 = vmatprep.mubr.bf16.mxu0 %v3816
        %4113 = vmatmul.mubr.bf16.gmra.mrb[0].mxu0 %v3815
        %v4114 = vpop.f32.mrb[0].mxu0
        %v4115 = vadd.f32 0.0, %v4114
        %v4116 = vpop.f32.mrb[0].mxu0
        %v4117 = vadd.f32 0.0, %v4116
        %v4118 = vpop.f32.mrb[0].mxu0
        %v4119 = vadd.f32 0.0, %v4118
        %v4120 = vpop.f32.mrb[0].mxu0
        %v4121 = vadd.f32 0.0, %v4120
        %4122 = vmatprep.mubr.bf16.mxu0 %v3818
        %4123 = vmatmul.mubr.bf16.gmra.mrb[0].mxu0 %v3817
        %v4124 = vpop.f32.mrb[0].mxu0
        %v4125 = vadd.f32 0.0, %v4124
        %v4126 = vpop.f32.mrb[0].mxu0
        %v4127 = vadd.f32 0.0, %v4126
        %v4128 = vpop.f32.mrb[0].mxu0
        %v4129 = vadd.f32 0.0, %v4128
        %v4130 = vpop.f32.mrb[0].mxu0
        %v4131 = vadd.f32 0.0, %v4130
        %4132 = vmatprep.mubr.bf16.mxu0 %v3820
        %4133 = vmatmul.mubr.bf16.gmra.mrb[0].mxu0 %v3819
        %v4134 = vpop.f32.mrb[0].mxu0
        %v4135 = vadd.f32 0.0, %v4134
        %v4136 = vpop.f32.mrb[0].mxu0
        %v4137 = vadd.f32 0.0, %v4136
        %v4138 = vpop.f32.mrb[0].mxu0
        %v4139 = vadd.f32 0.0, %v4138
        %v4140 = vpop.f32.mrb[0].mxu0
        %v4141 = vadd.f32 0.0, %v4140
        %4142 = vmatprep.mubr.bf16.mxu0 %v3822
        %4143 = vmatmul.mubr.bf16.gmra.mrb[0].mxu0 %v3821
        %v4144 = vpop.f32.mrb[0].mxu0
        %v4145 = vadd.f32 0.0, %v4144
        %v4146 = vpop.f32.mrb[0].mxu0
        %v4147 = vadd.f32 0.0, %v4146
        %v4148 = vpop.f32.mrb[0].mxu0
        %v4149 = vadd.f32 0.0, %v4148
        %v4150 = vpop.f32.mrb[0].mxu0
        %v4151 = vadd.f32 0.0, %v4150
        %4152 = vmatprep.mubr.bf16.mxu0 %v3824
        %4153 = vmatmul.mubr.bf16.gmra.mrb[0].mxu0 %v3823
        %v4154 = vpop.f32.mrb[0].mxu0
        %v4155 = vadd.f32 0.0, %v4154
        %v4156 = vpop.f32.mrb[0].mxu0
        %v4157 = vadd.f32 0.0, %v4156
        %v4158 = vpop.f32.mrb[0].mxu0
        %v4159 = vadd.f32 0.0, %v4158
        %v4160 = vpop.f32.mrb[0].mxu0
        %v4161 = vadd.f32 0.0, %v4160
        %4162 = vmatprep.mubr.bf16.mxu0 %v3826
        %4163 = vmatmul.mubr.bf16.gmra.mrb[0].mxu0 %v3825
        %v4164 = vpop.f32.mrb[0].mxu0
        %v4165 = vadd.f32 0.0, %v4164
        %v4166 = vpop.f32.mrb[0].mxu0
        %v4167 = vadd.f32 0.0, %v4166
        %v4168 = vpop.f32.mrb[0].mxu0
        %v4169 = vadd.f32 0.0, %v4168
        %v4170 = vpop.f32.mrb[0].mxu0
        %v4171 = vadd.f32 0.0, %v4170
        %4172 = vmatprep.mubr.bf16.mxu0 %v3828
        %4173 = vmatmul.mubr.bf16.gmra.mrb[0].mxu0 %v3827
        %v4174 = vpop.f32.mrb[0].mxu0
        %v4175 = vadd.f32 0.0, %v4174
        %v4176 = vpop.f32.mrb[0].mxu0
        %v4177 = vadd.f32 0.0, %v4176
        %v4178 = vpop.f32.mrb[0].mxu0
        %v4179 = vadd.f32 0.0, %v4178
        %v4180 = vpop.f32.mrb[0].mxu0
        %v4181 = vadd.f32 0.0, %v4180
        %4182 = vmatprep.mubr.bf16.mxu0 %v3830
        %4183 = vmatmul.mubr.bf16.gmra.mrb[0].mxu0 %v3829
        %v4184 = vpop.f32.mrb[0].mxu0
        %v4185 = vadd.f32 0.0, %v4184
        %v4186 = vpop.f32.mrb[0].mxu0
        %v4187 = vadd.f32 0.0, %v4186
        %v4188 = vpop.f32.mrb[0].mxu0
        %v4189 = vadd.f32 0.0, %v4188
        %v4190 = vpop.f32.mrb[0].mxu0
        %v4191 = vadd.f32 0.0, %v4190
        %4192 = vmatprep.mubr.bf16.mxu0 %v3832
        %4193 = vmatmul.mubr.bf16.gmra.mrb[0].mxu0 %v3831
        %v4194 = vpop.f32.mrb[0].mxu0
        %v4195 = vadd.f32 0.0, %v4194
        %v4196 = vpop.f32.mrb[0].mxu0
        %v4197 = vadd.f32 0.0, %v4196
        %v4198 = vpop.f32.mrb[0].mxu0
        %v4199 = vadd.f32 0.0, %v4198
        %v4200 = vpop.f32.mrb[0].mxu0
        %v4201 = vadd.f32 0.0, %v4200
        %4202 = vmatprep.mubr.bf16.mxu0 %v3834
        %4203 = vmatmul.mubr.bf16.gmra.mrb[0].mxu0 %v3833
        %v4204 = vpop.f32.mrb[0].mxu0
        %v4205 = vadd.f32 0.0, %v4204
        %v4206 = vpop.f32.mrb[0].mxu0
        %v4207 = vadd.f32 0.0, %v4206
        %v4208 = vpop.f32.mrb[0].mxu0
        %v4209 = vadd.f32 0.0, %v4208
        %v4210 = vpop.f32.mrb[0].mxu0
        %v4211 = vadd.f32 0.0, %v4210
        %4212 = vmatprep.mubr.bf16.mxu0 %v3836
        %4213 = vmatmul.mubr.bf16.gmra.mrb[0].mxu0 %v3835
        %v4214 = vpop.f32.mrb[0].mxu0
        %v4215 = vadd.f32 0.0, %v4214
        %v4216 = vpop.f32.mrb[0].mxu0
        %v4217 = vadd.f32 0.0, %v4216
        %v4218 = vpop.f32.mrb[0].mxu0
        %v4219 = vadd.f32 0.0, %v4218
        %v4220 = vpop.f32.mrb[0].mxu0
        %v4221 = vadd.f32 0.0, %v4220
        %4222 = vdwg.mxu0
        %v4255 = vunpack.c.l.b16 %v3772
        %v4256 = vunpack.c.h.b16 %v3772
        %v4257 = vunpack.c.l.b16 %v3773
        %v4258 = vunpack.c.h.b16 %v3773
        %v4259 = vunpack.c.l.b16 %v3774
        %v4260 = vunpack.c.h.b16 %v3774
        %v4261 = vunpack.c.l.b16 %v3775
        %v4262 = vunpack.c.h.b16 %v3775
        %v4263 = vunpack.c.l.b16 %v3776
        %v4264 = vunpack.c.h.b16 %v3776
        %v4265 = vunpack.c.l.b16 %v3777
        %v4266 = vunpack.c.h.b16 %v3777
        %v4267 = vunpack.c.l.b16 %v3778
        %v4268 = vunpack.c.h.b16 %v3778
        %v4269 = vunpack.c.l.b16 %v3779
        %v4270 = vunpack.c.h.b16 %v3779
        %v4271 = vunpack.c.l.b16 %v3780
        %v4272 = vunpack.c.h.b16 %v3780
        %v4273 = vunpack.c.l.b16 %v3781
        %v4274 = vunpack.c.h.b16 %v3781
        %v4275 = vunpack.c.l.b16 %v3782
        %v4276 = vunpack.c.h.b16 %v3782
        %v4277 = vunpack.c.l.b16 %v3783
        %v4278 = vunpack.c.h.b16 %v3783
        %v4279 = vunpack.c.l.b16 %v3784
        %v4280 = vunpack.c.h.b16 %v3784
        %v4281 = vunpack.c.l.b16 %v3785
        %v4282 = vunpack.c.h.b16 %v3785
        %v4283 = vunpack.c.l.b16 %v3786
        %v4284 = vunpack.c.h.b16 %v3786
        %v4285 = vunpack.c.l.b16 %v3787
        %v4286 = vunpack.c.h.b16 %v3787
        %v4287 = vunpack.c.l.b16 %v3788
        %v4288 = vunpack.c.h.b16 %v3788
        %v4289 = vunpack.c.l.b16 %v3789
        %v4290 = vunpack.c.h.b16 %v3789
        %v4291 = vunpack.c.l.b16 %v3790
        %v4292 = vunpack.c.h.b16 %v3790
        %v4293 = vunpack.c.l.b16 %v3791
        %v4294 = vunpack.c.h.b16 %v3791
        %v4295 = vunpack.c.l.b16 %v3792
        %v4296 = vunpack.c.h.b16 %v3792
        %v4297 = vunpack.c.l.b16 %v3793
        %v4298 = vunpack.c.h.b16 %v3793
        %v4299 = vunpack.c.l.b16 %v3794
        %v4300 = vunpack.c.h.b16 %v3794
        %v4301 = vunpack.c.l.b16 %v3795
        %v4302 = vunpack.c.h.b16 %v3795
        %v4303 = vunpack.c.l.b16 %v3796
        %v4304 = vunpack.c.h.b16 %v3796
        %v4305 = vunpack.c.l.b16 %v3797
        %v4306 = vunpack.c.h.b16 %v3797
        %v4307 = vunpack.c.l.b16 %v3798
        %v4308 = vunpack.c.h.b16 %v3798
        %v4309 = vunpack.c.l.b16 %v3799
        %v4310 = vunpack.c.h.b16 %v3799
        %v4311 = vunpack.c.l.b16 %v3800
        %v4312 = vunpack.c.h.b16 %v3800
        %v4313 = vunpack.c.l.b16 %v3801
        %v4314 = vunpack.c.h.b16 %v3801
        %v4315 = vunpack.c.l.b16 %v3802
        %v4316 = vunpack.c.h.b16 %v3802
        %v4317 = vunpack.c.l.b16 %v3803
        %v4318 = vunpack.c.h.b16 %v3803
        %v4319 = vpack.c.b16 %v4257, %v4255
        %v4320 = vpack.c.b16 %v4258, %v4256
        %v4321 = vpack.c.b16 %v4261, %v4259
        %v4322 = vpack.c.b16 %v4262, %v4260
        %v4323 = vpack.c.b16 %v4265, %v4263
        %v4324 = vpack.c.b16 %v4266, %v4264
        %v4325 = vpack.c.b16 %v4269, %v4267
        %v4326 = vpack.c.b16 %v4270, %v4268
        %v4327 = vpack.c.b16 %v4273, %v4271
        %v4328 = vpack.c.b16 %v4274, %v4272
        %v4329 = vpack.c.b16 %v4277, %v4275
        %v4330 = vpack.c.b16 %v4278, %v4276
        %v4331 = vpack.c.b16 %v4281, %v4279
        %v4332 = vpack.c.b16 %v4282, %v4280
        %v4333 = vpack.c.b16 %v4285, %v4283
        %v4334 = vpack.c.b16 %v4286, %v4284
        %v4335 = vpack.c.b16 %v4289, %v4287
        %v4336 = vpack.c.b16 %v4290, %v4288
        %v4337 = vpack.c.b16 %v4293, %v4291
        %v4338 = vpack.c.b16 %v4294, %v4292
        %v4339 = vpack.c.b16 %v4297, %v4295
        %v4340 = vpack.c.b16 %v4298, %v4296
        %v4341 = vpack.c.b16 %v4301, %v4299
        %v4342 = vpack.c.b16 %v4302, %v4300
        %v4343 = vpack.c.b16 %v4305, %v4303
        %v4344 = vpack.c.b16 %v4306, %v4304
        %v4345 = vpack.c.b16 %v4309, %v4307
        %v4346 = vpack.c.b16 %v4310, %v4308
        %v4347 = vpack.c.b16 %v4313, %v4311
        %v4348 = vpack.c.b16 %v4314, %v4312
        %v4349 = vpack.c.b16 %v4317, %v4315
        %v4350 = vpack.c.b16 %v4318, %v4316
        %4383 = vmatprep.subr.bf16.mxu0 %v4320
        %4384 = vmatpush1.bf16.msra.mxu0 %v4319
        %4385 = vmatprep.subr.bf16.mxu0 %v4322
        %4386 = vmatpush1.bf16.msra.mxu0 %v4321
        %4387 = vmatprep.subr.bf16.mxu0 %v4324
        %4388 = vmatpush1.bf16.msra.mxu0 %v4323
        %4389 = vmatprep.subr.bf16.mxu0 %v4326
        %4390 = vmatpush1.bf16.msra.mxu0 %v4325
        %4391 = vmatprep.subr.bf16.mxu0 %v4328
        %4392 = vmatpush1.bf16.msra.mxu0 %v4327
        %4393 = vmatprep.subr.bf16.mxu0 %v4330
        %4394 = vmatpush1.bf16.msra.mxu0 %v4329
        %4395 = vmatprep.subr.bf16.mxu0 %v4332
        %4396 = vmatpush1.bf16.msra.mxu0 %v4331
        %4397 = vmatprep.subr.bf16.mxu0 %v4334
        %4398 = vmatpush1.bf16.msra.mxu0 %v4333
        %4399 = vmatprep.subr.bf16.mxu0 %v4336
        %4400 = vmatpush1.bf16.msra.mxu0 %v4335
        %4401 = vmatprep.subr.bf16.mxu0 %v4338
        %4402 = vmatpush1.bf16.msra.mxu0 %v4337
        %4403 = vmatprep.subr.bf16.mxu0 %v4340
        %4404 = vmatpush1.bf16.msra.mxu0 %v4339
        %4405 = vmatprep.subr.bf16.mxu0 %v4342
        %4406 = vmatpush1.bf16.msra.mxu0 %v4341
        %4407 = vmatprep.subr.bf16.mxu0 %v4344
        %4408 = vmatpush1.bf16.msra.mxu0 %v4343
        %4409 = vmatprep.subr.bf16.mxu0 %v4346
        %4410 = vmatpush1.bf16.msra.mxu0 %v4345
        %4411 = vmatprep.subr.bf16.mxu0 %v4348
        %4412 = vmatpush1.bf16.msra.mxu0 %v4347
        %4413 = vmatprep.subr.bf16.mxu0 %v4350
        %4414 = vmatpush1.bf16.msra.mxu0 %v4349
        %4415 = vmatprep.mubr.bf16.mxu0 %v3740
        %4416 = vmatmul.mubr.bf16.gmra.mrb[0].mxu0 %v3739
        %v4417 = vpop.f32.mrb[0].mxu0
        %v4418 = vadd.f32 %v4065, %v4417
        %v4419 = vpop.f32.mrb[0].mxu0
        %v4420 = vadd.f32 %v4067, %v4419
        %v4421 = vpop.f32.mrb[0].mxu0
        %v4422 = vadd.f32 %v4069, %v4421
        %v4423 = vpop.f32.mrb[0].mxu0
        %v4424 = vadd.f32 %v4071, %v4423
        %4425 = vmatprep.mubr.bf16.mxu0 %v3742
        %4426 = vmatmul.mubr.bf16.gmra.mrb[0].mxu0 %v3741
        %v4427 = vpop.f32.mrb[0].mxu0
        %v4428 = vadd.f32 %v4075, %v4427
        %v4429 = vpop.f32.mrb[0].mxu0
        %v4430 = vadd.f32 %v4077, %v4429
        %v4431 = vpop.f32.mrb[0].mxu0
        %v4432 = vadd.f32 %v4079, %v4431
        %v4433 = vpop.f32.mrb[0].mxu0
        %v4434 = vadd.f32 %v4081, %v4433
        %4435 = vmatprep.mubr.bf16.mxu0 %v3744
        %4436 = vmatmul.mubr.bf16.gmra.mrb[0].mxu0 %v3743
        %v4437 = vpop.f32.mrb[0].mxu0
        %v4438 = vadd.f32 %v4085, %v4437
        %v4439 = vpop.f32.mrb[0].mxu0
        %v4440 = vadd.f32 %v4087, %v4439
        %v4441 = vpop.f32.mrb[0].mxu0
        %v4442 = vadd.f32 %v4089, %v4441
        %v4443 = vpop.f32.mrb[0].mxu0
        %v4444 = vadd.f32 %v4091, %v4443
        %4445 = vmatprep.mubr.bf16.mxu0 %v3746
        %4446 = vmatmul.mubr.bf16.gmra.mrb[0].mxu0 %v3745
        %v4447 = vpop.f32.mrb[0].mxu0
        %v4448 = vadd.f32 %v4095, %v4447
        %v4449 = vpop.f32.mrb[0].mxu0
        %v4450 = vadd.f32 %v4097, %v4449
        %v4451 = vpop.f32.mrb[0].mxu0
        %v4452 = vadd.f32 %v4099, %v4451
        %v4453 = vpop.f32.mrb[0].mxu0
        %v4454 = vadd.f32 %v4101, %v4453
        %4455 = vmatprep.mubr.bf16.mxu0 %v3748
        %4456 = vmatmul.mubr.bf16.gmra.mrb[0].mxu0 %v3747
        %v4457 = vpop.f32.mrb[0].mxu0
        %v4458 = vadd.f32 %v4105, %v4457
        %v4459 = vpop.f32.mrb[0].mxu0
        %v4460 = vadd.f32 %v4107, %v4459
        %v4461 = vpop.f32.mrb[0].mxu0
        %v4462 = vadd.f32 %v4109, %v4461
        %v4463 = vpop.f32.mrb[0].mxu0
        %v4464 = vadd.f32 %v4111, %v4463
        %4465 = vmatprep.mubr.bf16.mxu0 %v3750
        %4466 = vmatmul.mubr.bf16.gmra.mrb[0].mxu0 %v3749
        %v4467 = vpop.f32.mrb[0].mxu0
        %v4468 = vadd.f32 %v4115, %v4467
        %v4469 = vpop.f32.mrb[0].mxu0
        %v4470 = vadd.f32 %v4117, %v4469
        %v4471 = vpop.f32.mrb[0].mxu0
        %v4472 = vadd.f32 %v4119, %v4471
        %v4473 = vpop.f32.mrb[0].mxu0
        %v4474 = vadd.f32 %v4121, %v4473
        %4475 = vmatprep.mubr.bf16.mxu0 %v3752
        %4476 = vmatmul.mubr.bf16.gmra.mrb[0].mxu0 %v3751
        %v4477 = vpop.f32.mrb[0].mxu0
        %v4478 = vadd.f32 %v4125, %v4477
        %v4479 = vpop.f32.mrb[0].mxu0
        %v4480 = vadd.f32 %v4127, %v4479
        %v4481 = vpop.f32.mrb[0].mxu0
        %v4482 = vadd.f32 %v4129, %v4481
        %v4483 = vpop.f32.mrb[0].mxu0
        %v4484 = vadd.f32 %v4131, %v4483
        %4485 = vmatprep.mubr.bf16.mxu0 %v3754
        %4486 = vmatmul.mubr.bf16.gmra.mrb[0].mxu0 %v3753
        %v4487 = vpop.f32.mrb[0].mxu0
        %v4488 = vadd.f32 %v4135, %v4487
        %v4489 = vpop.f32.mrb[0].mxu0
        %v4490 = vadd.f32 %v4137, %v4489
        %v4491 = vpop.f32.mrb[0].mxu0
        %v4492 = vadd.f32 %v4139, %v4491
        %v4493 = vpop.f32.mrb[0].mxu0
        %v4494 = vadd.f32 %v4141, %v4493
        %4495 = vmatprep.mubr.bf16.mxu0 %v3756
        %4496 = vmatmul.mubr.bf16.gmra.mrb[0].mxu0 %v3755
        %v4497 = vpop.f32.mrb[0].mxu0
        %v4498 = vadd.f32 %v4145, %v4497
        %v4499 = vpop.f32.mrb[0].mxu0
        %v4500 = vadd.f32 %v4147, %v4499
        %v4501 = vpop.f32.mrb[0].mxu0
        %v4502 = vadd.f32 %v4149, %v4501
        %v4503 = vpop.f32.mrb[0].mxu0
        %v4504 = vadd.f32 %v4151, %v4503
        %4505 = vmatprep.mubr.bf16.mxu0 %v3758
        %4506 = vmatmul.mubr.bf16.gmra.mrb[0].mxu0 %v3757
        %v4507 = vpop.f32.mrb[0].mxu0
        %v4508 = vadd.f32 %v4155, %v4507
        %v4509 = vpop.f32.mrb[0].mxu0
        %v4510 = vadd.f32 %v4157, %v4509
        %v4511 = vpop.f32.mrb[0].mxu0
        %v4512 = vadd.f32 %v4159, %v4511
        %v4513 = vpop.f32.mrb[0].mxu0
        %v4514 = vadd.f32 %v4161, %v4513
        %4515 = vmatprep.mubr.bf16.mxu0 %v3760
        %4516 = vmatmul.mubr.bf16.gmra.mrb[0].mxu0 %v3759
        %v4517 = vpop.f32.mrb[0].mxu0
        %v4518 = vadd.f32 %v4165, %v4517
        %v4519 = vpop.f32.mrb[0].mxu0
        %v4520 = vadd.f32 %v4167, %v4519
        %v4521 = vpop.f32.mrb[0].mxu0
        %v4522 = vadd.f32 %v4169, %v4521
        %v4523 = vpop.f32.mrb[0].mxu0
        %v4524 = vadd.f32 %v4171, %v4523
        %4525 = vmatprep.mubr.bf16.mxu0 %v3762
        %4526 = vmatmul.mubr.bf16.gmra.mrb[0].mxu0 %v3761
        %v4527 = vpop.f32.mrb[0].mxu0
        %v4528 = vadd.f32 %v4175, %v4527
        %v4529 = vpop.f32.mrb[0].mxu0
        %v4530 = vadd.f32 %v4177, %v4529
        %v4531 = vpop.f32.mrb[0].mxu0
        %v4532 = vadd.f32 %v4179, %v4531
        %v4533 = vpop.f32.mrb[0].mxu0
        %v4534 = vadd.f32 %v4181, %v4533
        %4535 = vmatprep.mubr.bf16.mxu0 %v3764
        %4536 = vmatmul.mubr.bf16.gmra.mrb[0].mxu0 %v3763
        %v4537 = vpop.f32.mrb[0].mxu0
        %v4538 = vadd.f32 %v4185, %v4537
        %v4539 = vpop.f32.mrb[0].mxu0
        %v4540 = vadd.f32 %v4187, %v4539
        %v4541 = vpop.f32.mrb[0].mxu0
        %v4542 = vadd.f32 %v4189, %v4541
        %v4543 = vpop.f32.mrb[0].mxu0
        %v4544 = vadd.f32 %v4191, %v4543
        %4545 = vmatprep.mubr.bf16.mxu0 %v3766
        %4546 = vmatmul.mubr.bf16.gmra.mrb[0].mxu0 %v3765
        %v4547 = vpop.f32.mrb[0].mxu0
        %v4548 = vadd.f32 %v4195, %v4547
        %v4549 = vpop.f32.mrb[0].mxu0
        %v4550 = vadd.f32 %v4197, %v4549
        %v4551 = vpop.f32.mrb[0].mxu0
        %v4552 = vadd.f32 %v4199, %v4551
        %v4553 = vpop.f32.mrb[0].mxu0
        %v4554 = vadd.f32 %v4201, %v4553
        %4555 = vmatprep.mubr.bf16.mxu0 %v3768
        %4556 = vmatmul.mubr.bf16.gmra.mrb[0].mxu0 %v3767
        %v4557 = vpop.f32.mrb[0].mxu0
        %v4558 = vadd.f32 %v4205, %v4557
        %v4559 = vpop.f32.mrb[0].mxu0
        %v4560 = vadd.f32 %v4207, %v4559
        %v4561 = vpop.f32.mrb[0].mxu0
        %v4562 = vadd.f32 %v4209, %v4561
        %v4563 = vpop.f32.mrb[0].mxu0
        %v4564 = vadd.f32 %v4211, %v4563
        %4565 = vmatprep.mubr.bf16.mxu0 %v3770
        %4566 = vmatmul.mubr.bf16.gmra.mrb[0].mxu0 %v3769
        %v4567 = vpop.f32.mrb[0].mxu0
        %v4568 = vadd.f32 %v4215, %v4567
        %v4569 = vpop.f32.mrb[0].mxu0
        %v4570 = vadd.f32 %v4217, %v4569
        %v4571 = vpop.f32.mrb[0].mxu0
        %v4572 = vadd.f32 %v4219, %v4571
        %v4573 = vpop.f32.mrb[0].mxu0
        %v4574 = vadd.f32 %v4221, %v4573
        %4575 = vdwg.mxu0
        %s4576 = scalar_lea.vmem [#allocation2], 608
        %v4577 = vld [vmem:[%s4576] sm:$0xff]
        %v4578 = vld [vmem:[%s4576 + $0x8] sm:$0xff]
        %v4579 = vld [vmem:[%s4576 + $0x10] sm:$0xff]
        %v4580 = vld [vmem:[%s4576 + $0x18] sm:$0xff]
        %v4581 = vld [vmem:[%s4576 + $0x20] sm:$0xff]
        %v4582 = vld [vmem:[%s4576 + $0x28] sm:$0xff]
        %v4583 = vld [vmem:[%s4576 + $0x30] sm:$0xff]
        %v4584 = vld [vmem:[%s4576 + $0x38] sm:$0xff]
        %v4585 = vld [vmem:[%s4576 + $0x40] sm:$0xff]
        %v4586 = vld [vmem:[%s4576 + $0x48] sm:$0xff]
        %v4587 = vld [vmem:[%s4576 + $0x50] sm:$0xff]
        %v4588 = vld [vmem:[%s4576 + $0x58] sm:$0xff]
        %v4589 = vld [vmem:[%s4576 + $0x60] sm:$0xff]
        %v4590 = vld [vmem:[%s4576 + $0x68] sm:$0xff]
        %v4591 = vld [vmem:[%s4576 + $0x70] sm:$0xff]
        %v4592 = vld [vmem:[%s4576 + $0x78] sm:$0xff]
        %v4593 = vld [vmem:[%s4576 + $0x80] sm:$0xff]
        %v4594 = vld [vmem:[%s4576 + $0x88] sm:$0xff]
        %v4595 = vld [vmem:[%s4576 + $0x90] sm:$0xff]
        %v4596 = vld [vmem:[%s4576 + $0x98] sm:$0xff]
        %v4597 = vld [vmem:[%s4576 + $0xa0] sm:$0xff]
        %v4598 = vld [vmem:[%s4576 + $0xa8] sm:$0xff]
        %v4599 = vld [vmem:[%s4576 + $0xb0] sm:$0xff]
        %v4600 = vld [vmem:[%s4576 + $0xb8] sm:$0xff]
        %v4601 = vld [vmem:[%s4576 + $0xc0] sm:$0xff]
        %v4602 = vld [vmem:[%s4576 + $0xc8] sm:$0xff]
        %v4603 = vld [vmem:[%s4576 + $0xd0] sm:$0xff]
        %v4604 = vld [vmem:[%s4576 + $0xd8] sm:$0xff]
        %v4605 = vld [vmem:[%s4576 + $0xe0] sm:$0xff]
        %v4606 = vld [vmem:[%s4576 + $0xe8] sm:$0xff]
        %v4607 = vld [vmem:[%s4576 + $0xf0] sm:$0xff]
        %v4608 = vld [vmem:[%s4576 + $0xf8] sm:$0xff]
        %s4609 = scalar_lea.vmem %s1, 2048
        %v4610 = vld [vmem:[%s4609] sm:$0xff]
        %v4611 = vld [vmem:[%s4609 + $0x8] sm:$0xff]
        %v4612 = vld [vmem:[%s4609 + $0x10] sm:$0xff]
        %v4613 = vld [vmem:[%s4609 + $0x18] sm:$0xff]
        %v4614 = vld [vmem:[%s4609 + $0x20] sm:$0xff]
        %v4615 = vld [vmem:[%s4609 + $0x28] sm:$0xff]
        %v4616 = vld [vmem:[%s4609 + $0x30] sm:$0xff]
        %v4617 = vld [vmem:[%s4609 + $0x38] sm:$0xff]
        %v4618 = vld [vmem:[%s4609 + $0x40] sm:$0xff]
        %v4619 = vld [vmem:[%s4609 + $0x48] sm:$0xff]
        %v4620 = vld [vmem:[%s4609 + $0x50] sm:$0xff]
        %v4621 = vld [vmem:[%s4609 + $0x58] sm:$0xff]
        %v4622 = vld [vmem:[%s4609 + $0x60] sm:$0xff]
        %v4623 = vld [vmem:[%s4609 + $0x68] sm:$0xff]
        %v4624 = vld [vmem:[%s4609 + $0x70] sm:$0xff]
        %v4625 = vld [vmem:[%s4609 + $0x78] sm:$0xff]
        %v4626 = vld [vmem:[%s4609 + $0x80] sm:$0xff]
        %v4627 = vld [vmem:[%s4609 + $0x88] sm:$0xff]
        %v4628 = vld [vmem:[%s4609 + $0x90] sm:$0xff]
        %v4629 = vld [vmem:[%s4609 + $0x98] sm:$0xff]
        %v4630 = vld [vmem:[%s4609 + $0xa0] sm:$0xff]
        %v4631 = vld [vmem:[%s4609 + $0xa8] sm:$0xff]
        %v4632 = vld [vmem:[%s4609 + $0xb0] sm:$0xff]
        %v4633 = vld [vmem:[%s4609 + $0xb8] sm:$0xff]
        %v4634 = vld [vmem:[%s4609 + $0xc0] sm:$0xff]
        %v4635 = vld [vmem:[%s4609 + $0xc8] sm:$0xff]
        %v4636 = vld [vmem:[%s4609 + $0xd0] sm:$0xff]
        %v4637 = vld [vmem:[%s4609 + $0xd8] sm:$0xff]
        %v4638 = vld [vmem:[%s4609 + $0xe0] sm:$0xff]
        %v4639 = vld [vmem:[%s4609 + $0xe8] sm:$0xff]
        %v4640 = vld [vmem:[%s4609 + $0xf0] sm:$0xff]
        %v4641 = vld [vmem:[%s4609 + $0xf8] sm:$0xff]
        %v4674 = vunpack.c.l.b16 %v4610
        %v4675 = vunpack.c.h.b16 %v4610
        %v4676 = vunpack.c.l.b16 %v4611
        %v4677 = vunpack.c.h.b16 %v4611
        %v4678 = vunpack.c.l.b16 %v4612
        %v4679 = vunpack.c.h.b16 %v4612
        %v4680 = vunpack.c.l.b16 %v4613
        %v4681 = vunpack.c.h.b16 %v4613
        %v4682 = vunpack.c.l.b16 %v4614
        %v4683 = vunpack.c.h.b16 %v4614
        %v4684 = vunpack.c.l.b16 %v4615
        %v4685 = vunpack.c.h.b16 %v4615
        %v4686 = vunpack.c.l.b16 %v4616
        %v4687 = vunpack.c.h.b16 %v4616
        %v4688 = vunpack.c.l.b16 %v4617
        %v4689 = vunpack.c.h.b16 %v4617
        %v4690 = vunpack.c.l.b16 %v4618
        %v4691 = vunpack.c.h.b16 %v4618
        %v4692 = vunpack.c.l.b16 %v4619
        %v4693 = vunpack.c.h.b16 %v4619
        %v4694 = vunpack.c.l.b16 %v4620
        %v4695 = vunpack.c.h.b16 %v4620
        %v4696 = vunpack.c.l.b16 %v4621
        %v4697 = vunpack.c.h.b16 %v4621
        %v4698 = vunpack.c.l.b16 %v4622
        %v4699 = vunpack.c.h.b16 %v4622
        %v4700 = vunpack.c.l.b16 %v4623
        %v4701 = vunpack.c.h.b16 %v4623
        %v4702 = vunpack.c.l.b16 %v4624
        %v4703 = vunpack.c.h.b16 %v4624
        %v4704 = vunpack.c.l.b16 %v4625
        %v4705 = vunpack.c.h.b16 %v4625
        %v4706 = vunpack.c.l.b16 %v4626
        %v4707 = vunpack.c.h.b16 %v4626
        %v4708 = vunpack.c.l.b16 %v4627
        %v4709 = vunpack.c.h.b16 %v4627
        %v4710 = vunpack.c.l.b16 %v4628
        %v4711 = vunpack.c.h.b16 %v4628
        %v4712 = vunpack.c.l.b16 %v4629
        %v4713 = vunpack.c.h.b16 %v4629
        %v4714 = vunpack.c.l.b16 %v4630
        %v4715 = vunpack.c.h.b16 %v4630
        %v4716 = vunpack.c.l.b16 %v4631
        %v4717 = vunpack.c.h.b16 %v4631
        %v4718 = vunpack.c.l.b16 %v4632
        %v4719 = vunpack.c.h.b16 %v4632
        %v4720 = vunpack.c.l.b16 %v4633
        %v4721 = vunpack.c.h.b16 %v4633
        %v4722 = vunpack.c.l.b16 %v4634
        %v4723 = vunpack.c.h.b16 %v4634
        %v4724 = vunpack.c.l.b16 %v4635
        %v4725 = vunpack.c.h.b16 %v4635
        %v4726 = vunpack.c.l.b16 %v4636
        %v4727 = vunpack.c.h.b16 %v4636
        %v4728 = vunpack.c.l.b16 %v4637
        %v4729 = vunpack.c.h.b16 %v4637
        %v4730 = vunpack.c.l.b16 %v4638
        %v4731 = vunpack.c.h.b16 %v4638
        %v4732 = vunpack.c.l.b16 %v4639
        %v4733 = vunpack.c.h.b16 %v4639
        %v4734 = vunpack.c.l.b16 %v4640
        %v4735 = vunpack.c.h.b16 %v4640
        %v4736 = vunpack.c.l.b16 %v4641
        %v4737 = vunpack.c.h.b16 %v4641
        %v4738 = vpack.c.b16 %v4676, %v4674
        %v4739 = vpack.c.b16 %v4677, %v4675
        %v4740 = vpack.c.b16 %v4680, %v4678
        %v4741 = vpack.c.b16 %v4681, %v4679
        %v4742 = vpack.c.b16 %v4684, %v4682
        %v4743 = vpack.c.b16 %v4685, %v4683
        %v4744 = vpack.c.b16 %v4688, %v4686
        %v4745 = vpack.c.b16 %v4689, %v4687
        %v4746 = vpack.c.b16 %v4692, %v4690
        %v4747 = vpack.c.b16 %v4693, %v4691
        %v4748 = vpack.c.b16 %v4696, %v4694
        %v4749 = vpack.c.b16 %v4697, %v4695
        %v4750 = vpack.c.b16 %v4700, %v4698
        %v4751 = vpack.c.b16 %v4701, %v4699
        %v4752 = vpack.c.b16 %v4704, %v4702
        %v4753 = vpack.c.b16 %v4705, %v4703
        %v4754 = vpack.c.b16 %v4708, %v4706
        %v4755 = vpack.c.b16 %v4709, %v4707
        %v4756 = vpack.c.b16 %v4712, %v4710
        %v4757 = vpack.c.b16 %v4713, %v4711
        %v4758 = vpack.c.b16 %v4716, %v4714
        %v4759 = vpack.c.b16 %v4717, %v4715
        %v4760 = vpack.c.b16 %v4720, %v4718
        %v4761 = vpack.c.b16 %v4721, %v4719
        %v4762 = vpack.c.b16 %v4724, %v4722
        %v4763 = vpack.c.b16 %v4725, %v4723
        %v4764 = vpack.c.b16 %v4728, %v4726
        %v4765 = vpack.c.b16 %v4729, %v4727
        %v4766 = vpack.c.b16 %v4732, %v4730
        %v4767 = vpack.c.b16 %v4733, %v4731
        %v4768 = vpack.c.b16 %v4736, %v4734
        %v4769 = vpack.c.b16 %v4737, %v4735
        %4802 = vmatprep.subr.bf16.mxu0 %v4739
        %4803 = vmatpush1.bf16.msra.mxu0 %v4738
        %4804 = vmatprep.subr.bf16.mxu0 %v4741
        %4805 = vmatpush1.bf16.msra.mxu0 %v4740
        %4806 = vmatprep.subr.bf16.mxu0 %v4743
        %4807 = vmatpush1.bf16.msra.mxu0 %v4742
        %4808 = vmatprep.subr.bf16.mxu0 %v4745
        %4809 = vmatpush1.bf16.msra.mxu0 %v4744
        %4810 = vmatprep.subr.bf16.mxu0 %v4747
        %4811 = vmatpush1.bf16.msra.mxu0 %v4746
        %4812 = vmatprep.subr.bf16.mxu0 %v4749
        %4813 = vmatpush1.bf16.msra.mxu0 %v4748
        %4814 = vmatprep.subr.bf16.mxu0 %v4751
        %4815 = vmatpush1.bf16.msra.mxu0 %v4750
        %4816 = vmatprep.subr.bf16.mxu0 %v4753
        %4817 = vmatpush1.bf16.msra.mxu0 %v4752
        %4818 = vmatprep.subr.bf16.mxu0 %v4755
        %4819 = vmatpush1.bf16.msra.mxu0 %v4754
        %4820 = vmatprep.subr.bf16.mxu0 %v4757
        %4821 = vmatpush1.bf16.msra.mxu0 %v4756
        %4822 = vmatprep.subr.bf16.mxu0 %v4759
        %4823 = vmatpush1.bf16.msra.mxu0 %v4758
        %4824 = vmatprep.subr.bf16.mxu0 %v4761
        %4825 = vmatpush1.bf16.msra.mxu0 %v4760
        %4826 = vmatprep.subr.bf16.mxu0 %v4763
        %4827 = vmatpush1.bf16.msra.mxu0 %v4762
        %4828 = vmatprep.subr.bf16.mxu0 %v4765
        %4829 = vmatpush1.bf16.msra.mxu0 %v4764
        %4830 = vmatprep.subr.bf16.mxu0 %v4767
        %4831 = vmatpush1.bf16.msra.mxu0 %v4766
        %4832 = vmatprep.subr.bf16.mxu0 %v4769
        %4833 = vmatpush1.bf16.msra.mxu0 %v4768
        %4834 = vmatprep.mubr.bf16.mxu0 %v4578
        %4835 = vmatmul.mubr.bf16.gmra.mrb[0].mxu0 %v4577
        %v4836 = vpop.f32.mrb[0].mxu0
        %v4837 = vadd.f32 0.0, %v4836
        %v4838 = vpop.f32.mrb[0].mxu0
        %v4839 = vadd.f32 0.0, %v4838
        %v4840 = vpop.f32.mrb[0].mxu0
        %v4841 = vadd.f32 0.0, %v4840
        %v4842 = vpop.f32.mrb[0].mxu0
        %v4843 = vadd.f32 0.0, %v4842
        %4844 = vmatprep.mubr.bf16.mxu0 %v4580
        %4845 = vmatmul.mubr.bf16.gmra.mrb[0].mxu0 %v4579
        %v4846 = vpop.f32.mrb[0].mxu0
        %v4847 = vadd.f32 0.0, %v4846
        %v4848 = vpop.f32.mrb[0].mxu0
        %v4849 = vadd.f32 0.0, %v4848
        %v4850 = vpop.f32.mrb[0].mxu0
        %v4851 = vadd.f32 0.0, %v4850
        %v4852 = vpop.f32.mrb[0].mxu0
        %v4853 = vadd.f32 0.0, %v4852
        %4854 = vmatprep.mubr.bf16.mxu0 %v4582
        %4855 = vmatmul.mubr.bf16.gmra.mrb[0].mxu0 %v4581
        %v4856 = vpop.f32.mrb[0].mxu0
        %v4857 = vadd.f32 0.0, %v4856
        %v4858 = vpop.f32.mrb[0].mxu0
        %v4859 = vadd.f32 0.0, %v4858
        %v4860 = vpop.f32.mrb[0].mxu0
        %v4861 = vadd.f32 0.0, %v4860
        %v4862 = vpop.f32.mrb[0].mxu0
        %v4863 = vadd.f32 0.0, %v4862
        %4864 = vmatprep.mubr.bf16.mxu0 %v4584
        %4865 = vmatmul.mubr.bf16.gmra.mrb[0].mxu0 %v4583
        %v4866 = vpop.f32.mrb[0].mxu0
        %v4867 = vadd.f32 0.0, %v4866
        %v4868 = vpop.f32.mrb[0].mxu0
        %v4869 = vadd.f32 0.0, %v4868
        %v4870 = vpop.f32.mrb[0].mxu0
        %v4871 = vadd.f32 0.0, %v4870
        %v4872 = vpop.f32.mrb[0].mxu0
        %v4873 = vadd.f32 0.0, %v4872
        %4874 = vmatprep.mubr.bf16.mxu0 %v4586
        %4875 = vmatmul.mubr.bf16.gmra.mrb[0].mxu0 %v4585
        %v4876 = vpop.f32.mrb[0].mxu0
        %v4877 = vadd.f32 0.0, %v4876
        %v4878 = vpop.f32.mrb[0].mxu0
        %v4879 = vadd.f32 0.0, %v4878
        %v4880 = vpop.f32.mrb[0].mxu0
        %v4881 = vadd.f32 0.0, %v4880
        %v4882 = vpop.f32.mrb[0].mxu0
        %v4883 = vadd.f32 0.0, %v4882
        %4884 = vmatprep.mubr.bf16.mxu0 %v4588
        %4885 = vmatmul.mubr.bf16.gmra.mrb[0].mxu0 %v4587
        %v4886 = vpop.f32.mrb[0].mxu0
        %v4887 = vadd.f32 0.0, %v4886
        %v4888 = vpop.f32.mrb[0].mxu0
        %v4889 = vadd.f32 0.0, %v4888
        %v4890 = vpop.f32.mrb[0].mxu0
        %v4891 = vadd.f32 0.0, %v4890
        %v4892 = vpop.f32.mrb[0].mxu0
        %v4893 = vadd.f32 0.0, %v4892
        %4894 = vmatprep.mubr.bf16.mxu0 %v4590
        %4895 = vmatmul.mubr.bf16.gmra.mrb[0].mxu0 %v4589
        %v4896 = vpop.f32.mrb[0].mxu0
        %v4897 = vadd.f32 0.0, %v4896
        %v4898 = vpop.f32.mrb[0].mxu0
        %v4899 = vadd.f32 0.0, %v4898
        %v4900 = vpop.f32.mrb[0].mxu0
        %v4901 = vadd.f32 0.0, %v4900
        %v4902 = vpop.f32.mrb[0].mxu0
        %v4903 = vadd.f32 0.0, %v4902
        %4904 = vmatprep.mubr.bf16.mxu0 %v4592
        %4905 = vmatmul.mubr.bf16.gmra.mrb[0].mxu0 %v4591
        %v4906 = vpop.f32.mrb[0].mxu0
        %v4907 = vadd.f32 0.0, %v4906
        %v4908 = vpop.f32.mrb[0].mxu0
        %v4909 = vadd.f32 0.0, %v4908
        %v4910 = vpop.f32.mrb[0].mxu0
        %v4911 = vadd.f32 0.0, %v4910
        %v4912 = vpop.f32.mrb[0].mxu0
        %v4913 = vadd.f32 0.0, %v4912
        %4914 = vmatprep.mubr.bf16.mxu0 %v4594
        %4915 = vmatmul.mubr.bf16.gmra.mrb[0].mxu0 %v4593
        %v4916 = vpop.f32.mrb[0].mxu0
        %v4917 = vadd.f32 0.0, %v4916
        %v4918 = vpop.f32.mrb[0].mxu0
        %v4919 = vadd.f32 0.0, %v4918
        %v4920 = vpop.f32.mrb[0].mxu0
        %v4921 = vadd.f32 0.0, %v4920
        %v4922 = vpop.f32.mrb[0].mxu0
        %v4923 = vadd.f32 0.0, %v4922
        %4924 = vmatprep.mubr.bf16.mxu0 %v4596
        %4925 = vmatmul.mubr.bf16.gmra.mrb[0].mxu0 %v4595
        %v4926 = vpop.f32.mrb[0].mxu0
        %v4927 = vadd.f32 0.0, %v4926
        %v4928 = vpop.f32.mrb[0].mxu0
        %v4929 = vadd.f32 0.0, %v4928
        %v4930 = vpop.f32.mrb[0].mxu0
        %v4931 = vadd.f32 0.0, %v4930
        %v4932 = vpop.f32.mrb[0].mxu0
        %v4933 = vadd.f32 0.0, %v4932
        %4934 = vmatprep.mubr.bf16.mxu0 %v4598
        %4935 = vmatmul.mubr.bf16.gmra.mrb[0].mxu0 %v4597
        %v4936 = vpop.f32.mrb[0].mxu0
        %v4937 = vadd.f32 0.0, %v4936
        %v4938 = vpop.f32.mrb[0].mxu0
        %v4939 = vadd.f32 0.0, %v4938
        %v4940 = vpop.f32.mrb[0].mxu0
        %v4941 = vadd.f32 0.0, %v4940
        %v4942 = vpop.f32.mrb[0].mxu0
        %v4943 = vadd.f32 0.0, %v4942
        %4944 = vmatprep.mubr.bf16.mxu0 %v4600
        %4945 = vmatmul.mubr.bf16.gmra.mrb[0].mxu0 %v4599
        %v4946 = vpop.f32.mrb[0].mxu0
        %v4947 = vadd.f32 0.0, %v4946
        %v4948 = vpop.f32.mrb[0].mxu0
        %v4949 = vadd.f32 0.0, %v4948
        %v4950 = vpop.f32.mrb[0].mxu0
        %v4951 = vadd.f32 0.0, %v4950
        %v4952 = vpop.f32.mrb[0].mxu0
        %v4953 = vadd.f32 0.0, %v4952
        %4954 = vmatprep.mubr.bf16.mxu0 %v4602
        %4955 = vmatmul.mubr.bf16.gmra.mrb[0].mxu0 %v4601
        %v4956 = vpop.f32.mrb[0].mxu0
        %v4957 = vadd.f32 0.0, %v4956
        %v4958 = vpop.f32.mrb[0].mxu0
        %v4959 = vadd.f32 0.0, %v4958
        %v4960 = vpop.f32.mrb[0].mxu0
        %v4961 = vadd.f32 0.0, %v4960
        %v4962 = vpop.f32.mrb[0].mxu0
        %v4963 = vadd.f32 0.0, %v4962
        %4964 = vmatprep.mubr.bf16.mxu0 %v4604
        %4965 = vmatmul.mubr.bf16.gmra.mrb[0].mxu0 %v4603
        %v4966 = vpop.f32.mrb[0].mxu0
        %v4967 = vadd.f32 0.0, %v4966
        %v4968 = vpop.f32.mrb[0].mxu0
        %v4969 = vadd.f32 0.0, %v4968
        %v4970 = vpop.f32.mrb[0].mxu0
        %v4971 = vadd.f32 0.0, %v4970
        %v4972 = vpop.f32.mrb[0].mxu0
        %v4973 = vadd.f32 0.0, %v4972
        %4974 = vmatprep.mubr.bf16.mxu0 %v4606
        %4975 = vmatmul.mubr.bf16.gmra.mrb[0].mxu0 %v4605
        %v4976 = vpop.f32.mrb[0].mxu0
        %v4977 = vadd.f32 0.0, %v4976
        %v4978 = vpop.f32.mrb[0].mxu0
        %v4979 = vadd.f32 0.0, %v4978
        %v4980 = vpop.f32.mrb[0].mxu0
        %v4981 = vadd.f32 0.0, %v4980
        %v4982 = vpop.f32.mrb[0].mxu0
        %v4983 = vadd.f32 0.0, %v4982
        %4984 = vmatprep.mubr.bf16.mxu0 %v4608
        %4985 = vmatmul.mubr.bf16.gmra.mrb[0].mxu0 %v4607
        %v4986 = vpop.f32.mrb[0].mxu0
        %v4987 = vadd.f32 0.0, %v4986
        %v4988 = vpop.f32.mrb[0].mxu0
        %v4989 = vadd.f32 0.0, %v4988
        %v4990 = vpop.f32.mrb[0].mxu0
        %v4991 = vadd.f32 0.0, %v4990
        %v4992 = vpop.f32.mrb[0].mxu0
        %v4993 = vadd.f32 0.0, %v4992
        %4994 = vdwg.mxu0
        %v4995 = vadd.f32 %v4418, %v4837
        %v4996 = vadd.f32 %v4420, %v4839
        %v4997 = vadd.f32 %v4422, %v4841
        %v4998 = vadd.f32 %v4424, %v4843
        %v4999 = vadd.f32 %v4428, %v4847
        %v5000 = vadd.f32 %v4430, %v4849
        %v5001 = vadd.f32 %v4432, %v4851
        %v5002 = vadd.f32 %v4434, %v4853
        %v5003 = vadd.f32 %v4438, %v4857
        %v5004 = vadd.f32 %v4440, %v4859
        %v5005 = vadd.f32 %v4442, %v4861
        %v5006 = vadd.f32 %v4444, %v4863
        %v5007 = vadd.f32 %v4448, %v4867
        %v5008 = vadd.f32 %v4450, %v4869
        %v5009 = vadd.f32 %v4452, %v4871
        %v5010 = vadd.f32 %v4454, %v4873
        %v5011 = vadd.f32 %v4458, %v4877
        %v5012 = vadd.f32 %v4460, %v4879
        %v5013 = vadd.f32 %v4462, %v4881
        %v5014 = vadd.f32 %v4464, %v4883
        %v5015 = vadd.f32 %v4468, %v4887
        %v5016 = vadd.f32 %v4470, %v4889
        %v5017 = vadd.f32 %v4472, %v4891
        %v5018 = vadd.f32 %v4474, %v4893
        %v5019 = vadd.f32 %v4478, %v4897
        %v5020 = vadd.f32 %v4480, %v4899
        %v5021 = vadd.f32 %v4482, %v4901
        %v5022 = vadd.f32 %v4484, %v4903
        %v5023 = vadd.f32 %v4488, %v4907
        %v5024 = vadd.f32 %v4490, %v4909
        %v5025 = vadd.f32 %v4492, %v4911
        %v5026 = vadd.f32 %v4494, %v4913
        %v5027 = vadd.f32 %v4498, %v4917
        %v5028 = vadd.f32 %v4500, %v4919
        %v5029 = vadd.f32 %v4502, %v4921
        %v5030 = vadd.f32 %v4504, %v4923
        %v5031 = vadd.f32 %v4508, %v4927
        %v5032 = vadd.f32 %v4510, %v4929
        %v5033 = vadd.f32 %v4512, %v4931
        %v5034 = vadd.f32 %v4514, %v4933
        %v5035 = vadd.f32 %v4518, %v4937
        %v5036 = vadd.f32 %v4520, %v4939
        %v5037 = vadd.f32 %v4522, %v4941
        %v5038 = vadd.f32 %v4524, %v4943
        %v5039 = vadd.f32 %v4528, %v4947
        %v5040 = vadd.f32 %v4530, %v4949
        %v5041 = vadd.f32 %v4532, %v4951
        %v5042 = vadd.f32 %v4534, %v4953
        %v5043 = vadd.f32 %v4538, %v4957
        %v5044 = vadd.f32 %v4540, %v4959
        %v5045 = vadd.f32 %v4542, %v4961
        %v5046 = vadd.f32 %v4544, %v4963
        %v5047 = vadd.f32 %v4548, %v4967
        %v5048 = vadd.f32 %v4550, %v4969
        %v5049 = vadd.f32 %v4552, %v4971
        %v5050 = vadd.f32 %v4554, %v4973
        %v5051 = vadd.f32 %v4558, %v4977
        %v5052 = vadd.f32 %v4560, %v4979
        %v5053 = vadd.f32 %v4562, %v4981
        %v5054 = vadd.f32 %v4564, %v4983
        %v5055 = vadd.f32 %v4568, %v4987
        %v5056 = vadd.f32 %v4570, %v4989
        %v5057 = vadd.f32 %v4572, %v4991
        %v5058 = vadd.f32 %v4574, %v4993
        %v5059 = vld [vmem:[#allocation3] sm:$0xff]
        %v5060 = vld [vmem:[#allocation3 + $0x8] sm:$0xff]
        %v5061 = vld [vmem:[#allocation3 + $0x10] sm:$0xff]
        %v5062 = vld [vmem:[#allocation3 + $0x18] sm:$0xff]
        %v5063 = vld [vmem:[#allocation3 + $0x20] sm:$0xff]
        %v5064 = vld [vmem:[#allocation3 + $0x28] sm:$0xff]
        %v5065 = vld [vmem:[#allocation3 + $0x30] sm:$0xff]
        %v5066 = vld [vmem:[#allocation3 + $0x38] sm:$0xff]
        %v5067 = vld [vmem:[#allocation3 + $0x40] sm:$0xff]
        %v5068 = vld [vmem:[#allocation3 + $0x48] sm:$0xff]
        %v5069 = vld [vmem:[#allocation3 + $0x50] sm:$0xff]
        %v5070 = vld [vmem:[#allocation3 + $0x58] sm:$0xff]
        %v5071 = vld [vmem:[#allocation3 + $0x60] sm:$0xff]
        %v5072 = vld [vmem:[#allocation3 + $0x68] sm:$0xff]
        %v5073 = vld [vmem:[#allocation3 + $0x70] sm:$0xff]
        %v5074 = vld [vmem:[#allocation3 + $0x78] sm:$0xff]
        %v5075 = vld [vmem:[#allocation3 + $0x80] sm:$0xff]
        %v5076 = vld [vmem:[#allocation3 + $0x88] sm:$0xff]
        %v5077 = vld [vmem:[#allocation3 + $0x90] sm:$0xff]
        %v5078 = vld [vmem:[#allocation3 + $0x98] sm:$0xff]
        %v5079 = vld [vmem:[#allocation3 + $0xa0] sm:$0xff]
        %v5080 = vld [vmem:[#allocation3 + $0xa8] sm:$0xff]
        %v5081 = vld [vmem:[#allocation3 + $0xb0] sm:$0xff]
        %v5082 = vld [vmem:[#allocation3 + $0xb8] sm:$0xff]
        %v5083 = vld [vmem:[#allocation3 + $0xc0] sm:$0xff]
        %v5084 = vld [vmem:[#allocation3 + $0xc8] sm:$0xff]
        %v5085 = vld [vmem:[#allocation3 + $0xd0] sm:$0xff]
        %v5086 = vld [vmem:[#allocation3 + $0xd8] sm:$0xff]
        %v5087 = vld [vmem:[#allocation3 + $0xe0] sm:$0xff]
        %v5088 = vld [vmem:[#allocation3 + $0xe8] sm:$0xff]
        %v5089 = vld [vmem:[#allocation3 + $0xf0] sm:$0xff]
        %v5090 = vld [vmem:[#allocation3 + $0xf8] sm:$0xff]
        %v5091 = vld [vmem:[#allocation3 + $0x100] sm:$0xff]
        %v5092 = vld [vmem:[#allocation3 + $0x108] sm:$0xff]
        %v5093 = vld [vmem:[#allocation3 + $0x110] sm:$0xff]
        %v5094 = vld [vmem:[#allocation3 + $0x118] sm:$0xff]
        %v5095 = vld [vmem:[#allocation3 + $0x120] sm:$0xff]
        %v5096 = vld [vmem:[#allocation3 + $0x128] sm:$0xff]
        %v5097 = vld [vmem:[#allocation3 + $0x130] sm:$0xff]
        %v5098 = vld [vmem:[#allocation3 + $0x138] sm:$0xff]
        %v5099 = vld [vmem:[#allocation3 + $0x140] sm:$0xff]
        %v5100 = vld [vmem:[#allocation3 + $0x148] sm:$0xff]
        %v5101 = vld [vmem:[#allocation3 + $0x150] sm:$0xff]
        %v5102 = vld [vmem:[#allocation3 + $0x158] sm:$0xff]
        %v5103 = vld [vmem:[#allocation3 + $0x160] sm:$0xff]
        %v5104 = vld [vmem:[#allocation3 + $0x168] sm:$0xff]
        %v5105 = vld [vmem:[#allocation3 + $0x170] sm:$0xff]
        %v5106 = vld [vmem:[#allocation3 + $0x178] sm:$0xff]
        %v5107 = vld [vmem:[#allocation3 + $0x180] sm:$0xff]
        %v5108 = vld [vmem:[#allocation3 + $0x188] sm:$0xff]
        %v5109 = vld [vmem:[#allocation3 + $0x190] sm:$0xff]
        %v5110 = vld [vmem:[#allocation3 + $0x198] sm:$0xff]
        %v5111 = vld [vmem:[#allocation3 + $0x1a0] sm:$0xff]
        %v5112 = vld [vmem:[#allocation3 + $0x1a8] sm:$0xff]
        %v5113 = vld [vmem:[#allocation3 + $0x1b0] sm:$0xff]
        %v5114 = vld [vmem:[#allocation3 + $0x1b8] sm:$0xff]
        %v5115 = vld [vmem:[#allocation3 + $0x1c0] sm:$0xff]
        %v5116 = vld [vmem:[#allocation3 + $0x1c8] sm:$0xff]
        %v5117 = vld [vmem:[#allocation3 + $0x1d0] sm:$0xff]
        %v5118 = vld [vmem:[#allocation3 + $0x1d8] sm:$0xff]
        %v5119 = vld [vmem:[#allocation3 + $0x1e0] sm:$0xff]
        %v5120 = vld [vmem:[#allocation3 + $0x1e8] sm:$0xff]
        %v5121 = vld [vmem:[#allocation3 + $0x1f0] sm:$0xff]
        %v5122 = vld [vmem:[#allocation3 + $0x1f8] sm:$0xff]
        %v5123 = vadd.f32 %v5059, %v4995
        %v5124 = vadd.f32 %v5060, %v4996
        %v5125 = vadd.f32 %v5061, %v4997
        %v5126 = vadd.f32 %v5062, %v4998
        %v5127 = vadd.f32 %v5063, %v4999
        %v5128 = vadd.f32 %v5064, %v5000
        %v5129 = vadd.f32 %v5065, %v5001
        %v5130 = vadd.f32 %v5066, %v5002
        %v5131 = vadd.f32 %v5067, %v5003
        %v5132 = vadd.f32 %v5068, %v5004
        %v5133 = vadd.f32 %v5069, %v5005
        %v5134 = vadd.f32 %v5070, %v5006
        %v5135 = vadd.f32 %v5071, %v5007
        %v5136 = vadd.f32 %v5072, %v5008
        %v5137 = vadd.f32 %v5073, %v5009
        %v5138 = vadd.f32 %v5074, %v5010
        %v5139 = vadd.f32 %v5075, %v5011
        %v5140 = vadd.f32 %v5076, %v5012
        %v5141 = vadd.f32 %v5077, %v5013
        %v5142 = vadd.f32 %v5078, %v5014
        %v5143 = vadd.f32 %v5079, %v5015
        %v5144 = vadd.f32 %v5080, %v5016
        %v5145 = vadd.f32 %v5081, %v5017
        %v5146 = vadd.f32 %v5082, %v5018
        %v5147 = vadd.f32 %v5083, %v5019
        %v5148 = vadd.f32 %v5084, %v5020
        %v5149 = vadd.f32 %v5085, %v5021
        %v5150 = vadd.f32 %v5086, %v5022
        %v5151 = vadd.f32 %v5087, %v5023
        %v5152 = vadd.f32 %v5088, %v5024
        %v5153 = vadd.f32 %v5089, %v5025
        %v5154 = vadd.f32 %v5090, %v5026
        %v5155 = vadd.f32 %v5091, %v5027
        %v5156 = vadd.f32 %v5092, %v5028
        %v5157 = vadd.f32 %v5093, %v5029
        %v5158 = vadd.f32 %v5094, %v5030
        %v5159 = vadd.f32 %v5095, %v5031
        %v5160 = vadd.f32 %v5096, %v5032
        %v5161 = vadd.f32 %v5097, %v5033
        %v5162 = vadd.f32 %v5098, %v5034
        %v5163 = vadd.f32 %v5099, %v5035
        %v5164 = vadd.f32 %v5100, %v5036
        %v5165 = vadd.f32 %v5101, %v5037
        %v5166 = vadd.f32 %v5102, %v5038
        %v5167 = vadd.f32 %v5103, %v5039
        %v5168 = vadd.f32 %v5104, %v5040
        %v5169 = vadd.f32 %v5105, %v5041
        %v5170 = vadd.f32 %v5106, %v5042
        %v5171 = vadd.f32 %v5107, %v5043
        %v5172 = vadd.f32 %v5108, %v5044
        %v5173 = vadd.f32 %v5109, %v5045
        %v5174 = vadd.f32 %v5110, %v5046
        %v5175 = vadd.f32 %v5111, %v5047
        %v5176 = vadd.f32 %v5112, %v5048
        %v5177 = vadd.f32 %v5113, %v5049
        %v5178 = vadd.f32 %v5114, %v5050
        %v5179 = vadd.f32 %v5115, %v5051
        %v5180 = vadd.f32 %v5116, %v5052
        %v5181 = vadd.f32 %v5117, %v5053
        %v5182 = vadd.f32 %v5118, %v5054
        %v5183 = vadd.f32 %v5119, %v5055
        %v5184 = vadd.f32 %v5120, %v5056
        %v5185 = vadd.f32 %v5121, %v5057
        %v5186 = vadd.f32 %v5122, %v5058
        %5187 = vst [vmem:[#allocation3] sm:$0xff] %v5123
        %5188 = vst [vmem:[#allocation3 + $0x8] sm:$0xff] %v5124
        %5189 = vst [vmem:[#allocation3 + $0x10] sm:$0xff] %v5125
        %5190 = vst [vmem:[#allocation3 + $0x18] sm:$0xff] %v5126
        %5191 = vst [vmem:[#allocation3 + $0x20] sm:$0xff] %v5127
        %5192 = vst [vmem:[#allocation3 + $0x28] sm:$0xff] %v5128
        %5193 = vst [vmem:[#allocation3 + $0x30] sm:$0xff] %v5129
        %5194 = vst [vmem:[#allocation3 + $0x38] sm:$0xff] %v5130
        %5195 = vst [vmem:[#allocation3 + $0x40] sm:$0xff] %v5131
        %5196 = vst [vmem:[#allocation3 + $0x48] sm:$0xff] %v5132
        %5197 = vst [vmem:[#allocation3 + $0x50] sm:$0xff] %v5133
        %5198 = vst [vmem:[#allocation3 + $0x58] sm:$0xff] %v5134
        %5199 = vst [vmem:[#allocation3 + $0x60] sm:$0xff] %v5135
        %5200 = vst [vmem:[#allocation3 + $0x68] sm:$0xff] %v5136
        %5201 = vst [vmem:[#allocation3 + $0x70] sm:$0xff] %v5137
        %5202 = vst [vmem:[#allocation3 + $0x78] sm:$0xff] %v5138
        %5203 = vst [vmem:[#allocation3 + $0x80] sm:$0xff] %v5139
        %5204 = vst [vmem:[#allocation3 + $0x88] sm:$0xff] %v5140
        %5205 = vst [vmem:[#allocation3 + $0x90] sm:$0xff] %v5141
        %5206 = vst [vmem:[#allocation3 + $0x98] sm:$0xff] %v5142
        %5207 = vst [vmem:[#allocation3 + $0xa0] sm:$0xff] %v5143
        %5208 = vst [vmem:[#allocation3 + $0xa8] sm:$0xff] %v5144
        %5209 = vst [vmem:[#allocation3 + $0xb0] sm:$0xff] %v5145
        %5210 = vst [vmem:[#allocation3 + $0xb8] sm:$0xff] %v5146
        %5211 = vst [vmem:[#allocation3 + $0xc0] sm:$0xff] %v5147
        %5212 = vst [vmem:[#allocation3 + $0xc8] sm:$0xff] %v5148
        %5213 = vst [vmem:[#allocation3 + $0xd0] sm:$0xff] %v5149
        %5214 = vst [vmem:[#allocation3 + $0xd8] sm:$0xff] %v5150
        %5215 = vst [vmem:[#allocation3 + $0xe0] sm:$0xff] %v5151
        %5216 = vst [vmem:[#allocation3 + $0xe8] sm:$0xff] %v5152
        %5217 = vst [vmem:[#allocation3 + $0xf0] sm:$0xff] %v5153
        %5218 = vst [vmem:[#allocation3 + $0xf8] sm:$0xff] %v5154
        %5219 = vst [vmem:[#allocation3 + $0x100] sm:$0xff] %v5155
        %5220 = vst [vmem:[#allocation3 + $0x108] sm:$0xff] %v5156
        %5221 = vst [vmem:[#allocation3 + $0x110] sm:$0xff] %v5157
        %5222 = vst [vmem:[#allocation3 + $0x118] sm:$0xff] %v5158
        %5223 = vst [vmem:[#allocation3 + $0x120] sm:$0xff] %v5159
        %5224 = vst [vmem:[#allocation3 + $0x128] sm:$0xff] %v5160
        %5225 = vst [vmem:[#allocation3 + $0x130] sm:$0xff] %v5161
        %5226 = vst [vmem:[#allocation3 + $0x138] sm:$0xff] %v5162
        %5227 = vst [vmem:[#allocation3 + $0x140] sm:$0xff] %v5163
        %5228 = vst [vmem:[#allocation3 + $0x148] sm:$0xff] %v5164
        %5229 = vst [vmem:[#allocation3 + $0x150] sm:$0xff] %v5165
        %5230 = vst [vmem:[#allocation3 + $0x158] sm:$0xff] %v5166
        %5231 = vst [vmem:[#allocation3 + $0x160] sm:$0xff] %v5167
        %5232 = vst [vmem:[#allocation3 + $0x168] sm:$0xff] %v5168
        %5233 = vst [vmem:[#allocation3 + $0x170] sm:$0xff] %v5169
        %5234 = vst [vmem:[#allocation3 + $0x178] sm:$0xff] %v5170
        %5235 = vst [vmem:[#allocation3 + $0x180] sm:$0xff] %v5171
        %5236 = vst [vmem:[#allocation3 + $0x188] sm:$0xff] %v5172
        %5237 = vst [vmem:[#allocation3 + $0x190] sm:$0xff] %v5173
        %5238 = vst [vmem:[#allocation3 + $0x198] sm:$0xff] %v5174
        %5239 = vst [vmem:[#allocation3 + $0x1a0] sm:$0xff] %v5175
        %5240 = vst [vmem:[#allocation3 + $0x1a8] sm:$0xff] %v5176
        %5241 = vst [vmem:[#allocation3 + $0x1b0] sm:$0xff] %v5177
        %5242 = vst [vmem:[#allocation3 + $0x1b8] sm:$0xff] %v5178
        %5243 = vst [vmem:[#allocation3 + $0x1c0] sm:$0xff] %v5179
        %5244 = vst [vmem:[#allocation3 + $0x1c8] sm:$0xff] %v5180
        %5245 = vst [vmem:[#allocation3 + $0x1d0] sm:$0xff] %v5181
        %5246 = vst [vmem:[#allocation3 + $0x1d8] sm:$0xff] %v5182
        %5247 = vst [vmem:[#allocation3 + $0x1e0] sm:$0xff] %v5183
        %5248 = vst [vmem:[#allocation3 + $0x1e8] sm:$0xff] %v5184
        %5249 = vst [vmem:[#allocation3 + $0x1f0] sm:$0xff] %v5185
        %5250 = vst [vmem:[#allocation3 + $0x1f8] sm:$0xff] %v5186
        %v5251 = vld [vmem:[#allocation3] sm:$0xff]
        %v5252 = vld [vmem:[#allocation3 + $0x8] sm:$0xff]
        %v5253 = vld [vmem:[#allocation3 + $0x10] sm:$0xff]
        %v5254 = vld [vmem:[#allocation3 + $0x18] sm:$0xff]
        %v5255 = vld [vmem:[#allocation3 + $0x20] sm:$0xff]
        %v5256 = vld [vmem:[#allocation3 + $0x28] sm:$0xff]
        %v5257 = vld [vmem:[#allocation3 + $0x30] sm:$0xff]
        %v5258 = vld [vmem:[#allocation3 + $0x38] sm:$0xff]
        %v5259 = vld [vmem:[#allocation3 + $0x40] sm:$0xff]
        %v5260 = vld [vmem:[#allocation3 + $0x48] sm:$0xff]
        %v5261 = vld [vmem:[#allocation3 + $0x50] sm:$0xff]
        %v5262 = vld [vmem:[#allocation3 + $0x58] sm:$0xff]
        %v5263 = vld [vmem:[#allocation3 + $0x60] sm:$0xff]
        %v5264 = vld [vmem:[#allocation3 + $0x68] sm:$0xff]
        %v5265 = vld [vmem:[#allocation3 + $0x70] sm:$0xff]
        %v5266 = vld [vmem:[#allocation3 + $0x78] sm:$0xff]
        %v5267 = vld [vmem:[#allocation3 + $0x80] sm:$0xff]
        %v5268 = vld [vmem:[#allocation3 + $0x88] sm:$0xff]
        %v5269 = vld [vmem:[#allocation3 + $0x90] sm:$0xff]
        %v5270 = vld [vmem:[#allocation3 + $0x98] sm:$0xff]
        %v5271 = vld [vmem:[#allocation3 + $0xa0] sm:$0xff]
        %v5272 = vld [vmem:[#allocation3 + $0xa8] sm:$0xff]
        %v5273 = vld [vmem:[#allocation3 + $0xb0] sm:$0xff]
        %v5274 = vld [vmem:[#allocation3 + $0xb8] sm:$0xff]
        %v5275 = vld [vmem:[#allocation3 + $0xc0] sm:$0xff]
        %v5276 = vld [vmem:[#allocation3 + $0xc8] sm:$0xff]
        %v5277 = vld [vmem:[#allocation3 + $0xd0] sm:$0xff]
        %v5278 = vld [vmem:[#allocation3 + $0xd8] sm:$0xff]
        %v5279 = vld [vmem:[#allocation3 + $0xe0] sm:$0xff]
        %v5280 = vld [vmem:[#allocation3 + $0xe8] sm:$0xff]
        %v5281 = vld [vmem:[#allocation3 + $0xf0] sm:$0xff]
        %v5282 = vld [vmem:[#allocation3 + $0xf8] sm:$0xff]
        %v5283 = vld [vmem:[#allocation3 + $0x100] sm:$0xff]
        %v5284 = vld [vmem:[#allocation3 + $0x108] sm:$0xff]
        %v5285 = vld [vmem:[#allocation3 + $0x110] sm:$0xff]
        %v5286 = vld [vmem:[#allocation3 + $0x118] sm:$0xff]
        %v5287 = vld [vmem:[#allocation3 + $0x120] sm:$0xff]
        %v5288 = vld [vmem:[#allocation3 + $0x128] sm:$0xff]
        %v5289 = vld [vmem:[#allocation3 + $0x130] sm:$0xff]
        %v5290 = vld [vmem:[#allocation3 + $0x138] sm:$0xff]
        %v5291 = vld [vmem:[#allocation3 + $0x140] sm:$0xff]
        %v5292 = vld [vmem:[#allocation3 + $0x148] sm:$0xff]
        %v5293 = vld [vmem:[#allocation3 + $0x150] sm:$0xff]
        %v5294 = vld [vmem:[#allocation3 + $0x158] sm:$0xff]
        %v5295 = vld [vmem:[#allocation3 + $0x160] sm:$0xff]
        %v5296 = vld [vmem:[#allocation3 + $0x168] sm:$0xff]
        %v5297 = vld [vmem:[#allocation3 + $0x170] sm:$0xff]
        %v5298 = vld [vmem:[#allocation3 + $0x178] sm:$0xff]
        %v5299 = vld [vmem:[#allocation3 + $0x180] sm:$0xff]
        %v5300 = vld [vmem:[#allocation3 + $0x188] sm:$0xff]
        %v5301 = vld [vmem:[#allocation3 + $0x190] sm:$0xff]
        %v5302 = vld [vmem:[#allocation3 + $0x198] sm:$0xff]
        %v5303 = vld [vmem:[#allocation3 + $0x1a0] sm:$0xff]
        %v5304 = vld [vmem:[#allocation3 + $0x1a8] sm:$0xff]
        %v5305 = vld [vmem:[#allocation3 + $0x1b0] sm:$0xff]
        %v5306 = vld [vmem:[#allocation3 + $0x1b8] sm:$0xff]
        %v5307 = vld [vmem:[#allocation3 + $0x1c0] sm:$0xff]
        %v5308 = vld [vmem:[#allocation3 + $0x1c8] sm:$0xff]
        %v5309 = vld [vmem:[#allocation3 + $0x1d0] sm:$0xff]
        %v5310 = vld [vmem:[#allocation3 + $0x1d8] sm:$0xff]
        %v5311 = vld [vmem:[#allocation3 + $0x1e0] sm:$0xff]
        %v5312 = vld [vmem:[#allocation3 + $0x1e8] sm:$0xff]
        %v5313 = vld [vmem:[#allocation3 + $0x1f0] sm:$0xff]
        %v5314 = vld [vmem:[#allocation3 + $0x1f8] sm:$0xff]
        %v5315 = vmax.f32 %v5251, 0.0
        %v5316 = vmax.f32 %v5252, 0.0
        %v5317 = vmax.f32 %v5253, 0.0
        %v5318 = vmax.f32 %v5254, 0.0
        %v5319 = vmax.f32 %v5255, 0.0
        %v5320 = vmax.f32 %v5256, 0.0
        %v5321 = vmax.f32 %v5257, 0.0
        %v5322 = vmax.f32 %v5258, 0.0
        %v5323 = vmax.f32 %v5259, 0.0
        %v5324 = vmax.f32 %v5260, 0.0
        %v5325 = vmax.f32 %v5261, 0.0
        %v5326 = vmax.f32 %v5262, 0.0
        %v5327 = vmax.f32 %v5263, 0.0
        %v5328 = vmax.f32 %v5264, 0.0
        %v5329 = vmax.f32 %v5265, 0.0
        %v5330 = vmax.f32 %v5266, 0.0
        %v5331 = vmax.f32 %v5267, 0.0
        %v5332 = vmax.f32 %v5268, 0.0
        %v5333 = vmax.f32 %v5269, 0.0
        %v5334 = vmax.f32 %v5270, 0.0
        %v5335 = vmax.f32 %v5271, 0.0
        %v5336 = vmax.f32 %v5272, 0.0
        %v5337 = vmax.f32 %v5273, 0.0
        %v5338 = vmax.f32 %v5274, 0.0
        %v5339 = vmax.f32 %v5275, 0.0
        %v5340 = vmax.f32 %v5276, 0.0
        %v5341 = vmax.f32 %v5277, 0.0
        %v5342 = vmax.f32 %v5278, 0.0
        %v5343 = vmax.f32 %v5279, 0.0
        %v5344 = vmax.f32 %v5280, 0.0
        %v5345 = vmax.f32 %v5281, 0.0
        %v5346 = vmax.f32 %v5282, 0.0
        %v5347 = vmax.f32 %v5283, 0.0
        %v5348 = vmax.f32 %v5284, 0.0
        %v5349 = vmax.f32 %v5285, 0.0
        %v5350 = vmax.f32 %v5286, 0.0
        %v5351 = vmax.f32 %v5287, 0.0
        %v5352 = vmax.f32 %v5288, 0.0
        %v5353 = vmax.f32 %v5289, 0.0
        %v5354 = vmax.f32 %v5290, 0.0
        %v5355 = vmax.f32 %v5291, 0.0
        %v5356 = vmax.f32 %v5292, 0.0
        %v5357 = vmax.f32 %v5293, 0.0
        %v5358 = vmax.f32 %v5294, 0.0
        %v5359 = vmax.f32 %v5295, 0.0
        %v5360 = vmax.f32 %v5296, 0.0
        %v5361 = vmax.f32 %v5297, 0.0
        %v5362 = vmax.f32 %v5298, 0.0
        %v5363 = vmax.f32 %v5299, 0.0
        %v5364 = vmax.f32 %v5300, 0.0
        %v5365 = vmax.f32 %v5301, 0.0
        %v5366 = vmax.f32 %v5302, 0.0
        %v5367 = vmax.f32 %v5303, 0.0
        %v5368 = vmax.f32 %v5304, 0.0
        %v5369 = vmax.f32 %v5305, 0.0
        %v5370 = vmax.f32 %v5306, 0.0
        %v5371 = vmax.f32 %v5307, 0.0
        %v5372 = vmax.f32 %v5308, 0.0
        %v5373 = vmax.f32 %v5309, 0.0
        %v5374 = vmax.f32 %v5310, 0.0
        %v5375 = vmax.f32 %v5311, 0.0
        %v5376 = vmax.f32 %v5312, 0.0
        %v5377 = vmax.f32 %v5313, 0.0
        %v5378 = vmax.f32 %v5314, 0.0
        %v5379 = vrot.slane %v5315, 7
        %v5380 = vrot.slane %v5316, 7
        %v5381 = vrot.slane %v5319, 7
        %v5382 = vrot.slane %v5320, 7
        %v5383 = vrot.slane %v5323, 7
        %v5384 = vrot.slane %v5324, 7
        %v5385 = vrot.slane %v5327, 7
        %v5386 = vrot.slane %v5328, 7
        %v5387 = vrot.slane %v5331, 7
        %v5388 = vrot.slane %v5332, 7
        %v5389 = vrot.slane %v5335, 7
        %v5390 = vrot.slane %v5336, 7
        %v5391 = vrot.slane %v5339, 7
        %v5392 = vrot.slane %v5340, 7
        %v5393 = vrot.slane %v5343, 7
        %v5394 = vrot.slane %v5344, 7
        %v5395 = vrot.slane %v5347, 7
        %v5396 = vrot.slane %v5348, 7
        %v5397 = vrot.slane %v5351, 7
        %v5398 = vrot.slane %v5352, 7
        %v5399 = vrot.slane %v5355, 7
        %v5400 = vrot.slane %v5356, 7
        %v5401 = vrot.slane %v5359, 7
        %v5402 = vrot.slane %v5360, 7
        %v5403 = vrot.slane %v5363, 7
        %v5404 = vrot.slane %v5364, 7
        %v5405 = vrot.slane %v5367, 7
        %v5406 = vrot.slane %v5368, 7
        %v5407 = vrot.slane %v5371, 7
        %v5408 = vrot.slane %v5372, 7
        %v5409 = vrot.slane %v5375, 7
        %v5410 = vrot.slane %v5376, 7
        %v5411 = vrot.slane %v5317, 7
        %v5412 = vrot.slane %v5318, 7
        %v5413 = vrot.slane %v5321, 7
        %v5414 = vrot.slane %v5322, 7
        %v5415 = vrot.slane %v5325, 7
        %v5416 = vrot.slane %v5326, 7
        %v5417 = vrot.slane %v5329, 7
        %v5418 = vrot.slane %v5330, 7
        %v5419 = vrot.slane %v5333, 7
        %v5420 = vrot.slane %v5334, 7
        %v5421 = vrot.slane %v5337, 7
        %v5422 = vrot.slane %v5338, 7
        %v5423 = vrot.slane %v5341, 7
        %v5424 = vrot.slane %v5342, 7
        %v5425 = vrot.slane %v5345, 7
        %v5426 = vrot.slane %v5346, 7
        %v5427 = vrot.slane %v5349, 7
        %v5428 = vrot.slane %v5350, 7
        %v5429 = vrot.slane %v5353, 7
        %v5430 = vrot.slane %v5354, 7
        %v5431 = vrot.slane %v5357, 7
        %v5432 = vrot.slane %v5358, 7
        %v5433 = vrot.slane %v5361, 7
        %v5434 = vrot.slane %v5362, 7
        %v5435 = vrot.slane %v5365, 7
        %v5436 = vrot.slane %v5366, 7
        %v5437 = vrot.slane %v5369, 7
        %v5438 = vrot.slane %v5370, 7
        %v5439 = vrot.slane %v5373, 7
        %v5440 = vrot.slane %v5374, 7
        %v5441 = vrot.slane %v5377, 7
        %v5442 = vrot.slane %v5378, 7
        %v5443 = vsel %vm322, %v5379, %v5411
        %v5444 = vsel %vm322, %v5380, %v5412
        %v5445 = vsel %vm322, %v5381, %v5413
        %v5446 = vsel %vm322, %v5382, %v5414
        %v5447 = vsel %vm322, %v5383, %v5415
        %v5448 = vsel %vm322, %v5384, %v5416
        %v5449 = vsel %vm322, %v5385, %v5417
        %v5450 = vsel %vm322, %v5386, %v5418
        %v5451 = vsel %vm322, %v5387, %v5419
        %v5452 = vsel %vm322, %v5388, %v5420
        %v5453 = vsel %vm322, %v5389, %v5421
        %v5454 = vsel %vm322, %v5390, %v5422
        %v5455 = vsel %vm322, %v5391, %v5423
        %v5456 = vsel %vm322, %v5392, %v5424
        %v5457 = vsel %vm322, %v5393, %v5425
        %v5458 = vsel %vm322, %v5394, %v5426
        %v5459 = vsel %vm322, %v5395, %v5427
        %v5460 = vsel %vm322, %v5396, %v5428
        %v5461 = vsel %vm322, %v5397, %v5429
        %v5462 = vsel %vm322, %v5398, %v5430
        %v5463 = vsel %vm322, %v5399, %v5431
        %v5464 = vsel %vm322, %v5400, %v5432
        %v5465 = vsel %vm322, %v5401, %v5433
        %v5466 = vsel %vm322, %v5402, %v5434
        %v5467 = vsel %vm322, %v5403, %v5435
        %v5468 = vsel %vm322, %v5404, %v5436
        %v5469 = vsel %vm322, %v5405, %v5437
        %v5470 = vsel %vm322, %v5406, %v5438
        %v5471 = vsel %vm322, %v5407, %v5439
        %v5472 = vsel %vm322, %v5408, %v5440
        %v5473 = vsel %vm322, %v5409, %v5441
        %v5474 = vsel %vm322, %v5410, %v5442
        %v5475 = vsel %vm322, %v5411, %v5379
        %v5476 = vsel %vm322, %v5412, %v5380
        %v5477 = vsel %vm322, %v5413, %v5381
        %v5478 = vsel %vm322, %v5414, %v5382
        %v5479 = vsel %vm322, %v5415, %v5383
        %v5480 = vsel %vm322, %v5416, %v5384
        %v5481 = vsel %vm322, %v5417, %v5385
        %v5482 = vsel %vm322, %v5418, %v5386
        %v5483 = vsel %vm322, %v5419, %v5387
        %v5484 = vsel %vm322, %v5420, %v5388
        %v5485 = vsel %vm322, %v5421, %v5389
        %v5486 = vsel %vm322, %v5422, %v5390
        %v5487 = vsel %vm322, %v5423, %v5391
        %v5488 = vsel %vm322, %v5424, %v5392
        %v5489 = vsel %vm322, %v5425, %v5393
        %v5490 = vsel %vm322, %v5426, %v5394
        %v5491 = vsel %vm322, %v5427, %v5395
        %v5492 = vsel %vm322, %v5428, %v5396
        %v5493 = vsel %vm322, %v5429, %v5397
        %v5494 = vsel %vm322, %v5430, %v5398
        %v5495 = vsel %vm322, %v5431, %v5399
        %v5496 = vsel %vm322, %v5432, %v5400
        %v5497 = vsel %vm322, %v5433, %v5401
        %v5498 = vsel %vm322, %v5434, %v5402
        %v5499 = vsel %vm322, %v5435, %v5403
        %v5500 = vsel %vm322, %v5436, %v5404
        %v5501 = vsel %vm322, %v5437, %v5405
        %v5502 = vsel %vm322, %v5438, %v5406
        %v5503 = vsel %vm322, %v5439, %v5407
        %v5504 = vsel %vm322, %v5440, %v5408
        %v5505 = vsel %vm322, %v5441, %v5409
        %v5506 = vsel %vm322, %v5442, %v5410
        %v5507 = vsel %vm389, %v5475, 0.0
        %v5508 = vsel %vm389, %v5476, 0.0
        %v5509 = vsel %vm390, %v5443, 0.0
        %v5510 = vsel %vm390, %v5444, 0.0
        %v5511 = vsel %vm389, %v5477, 0.0
        %v5512 = vsel %vm389, %v5478, 0.0
        %v5513 = vsel %vm390, %v5445, 0.0
        %v5514 = vsel %vm390, %v5446, 0.0
        %v5515 = vsel %vm389, %v5479, 0.0
        %v5516 = vsel %vm389, %v5480, 0.0
        %v5517 = vsel %vm390, %v5447, 0.0
        %v5518 = vsel %vm390, %v5448, 0.0
        %v5519 = vsel %vm389, %v5481, 0.0
        %v5520 = vsel %vm389, %v5482, 0.0
        %v5521 = vsel %vm390, %v5449, 0.0
        %v5522 = vsel %vm390, %v5450, 0.0
        %v5523 = vsel %vm389, %v5483, 0.0
        %v5524 = vsel %vm389, %v5484, 0.0
        %v5525 = vsel %vm390, %v5451, 0.0
        %v5526 = vsel %vm390, %v5452, 0.0
        %v5527 = vsel %vm389, %v5485, 0.0
        %v5528 = vsel %vm389, %v5486, 0.0
        %v5529 = vsel %vm390, %v5453, 0.0
        %v5530 = vsel %vm390, %v5454, 0.0
        %v5531 = vsel %vm389, %v5487, 0.0
        %v5532 = vsel %vm389, %v5488, 0.0
        %v5533 = vsel %vm390, %v5455, 0.0
        %v5534 = vsel %vm390, %v5456, 0.0
        %v5535 = vsel %vm389, %v5489, 0.0
        %v5536 = vsel %vm389, %v5490, 0.0
        %v5537 = vsel %vm390, %v5457, 0.0
        %v5538 = vsel %vm390, %v5458, 0.0
        %v5539 = vsel %vm389, %v5491, 0.0
        %v5540 = vsel %vm389, %v5492, 0.0
        %v5541 = vsel %vm390, %v5459, 0.0
        %v5542 = vsel %vm390, %v5460, 0.0
        %v5543 = vsel %vm389, %v5493, 0.0
        %v5544 = vsel %vm389, %v5494, 0.0
        %v5545 = vsel %vm390, %v5461, 0.0
        %v5546 = vsel %vm390, %v5462, 0.0
        %v5547 = vsel %vm389, %v5495, 0.0
        %v5548 = vsel %vm389, %v5496, 0.0
        %v5549 = vsel %vm390, %v5463, 0.0
        %v5550 = vsel %vm390, %v5464, 0.0
        %v5551 = vsel %vm389, %v5497, 0.0
        %v5552 = vsel %vm389, %v5498, 0.0
        %v5553 = vsel %vm390, %v5465, 0.0
        %v5554 = vsel %vm390, %v5466, 0.0
        %v5555 = vsel %vm389, %v5499, 0.0
        %v5556 = vsel %vm389, %v5500, 0.0
        %v5557 = vsel %vm390, %v5467, 0.0
        %v5558 = vsel %vm390, %v5468, 0.0
        %v5559 = vsel %vm389, %v5501, 0.0
        %v5560 = vsel %vm389, %v5502, 0.0
        %v5561 = vsel %vm390, %v5469, 0.0
        %v5562 = vsel %vm390, %v5470, 0.0
        %v5563 = vsel %vm389, %v5503, 0.0
        %v5564 = vsel %vm389, %v5504, 0.0
        %v5565 = vsel %vm390, %v5471, 0.0
        %v5566 = vsel %vm390, %v5472, 0.0
        %v5567 = vsel %vm389, %v5505, 0.0
        %v5568 = vsel %vm389, %v5506, 0.0
        %v5569 = vsel %vm390, %v5473, 0.0
        %v5570 = vsel %vm390, %v5474, 0.0
        %v5571 = vpack.c.bf16 %v5509, %v5507
        %v5572 = vpack.c.bf16 %v5510, %v5508
        %v5573 = vpack.c.bf16 %v5513, %v5511
        %v5574 = vpack.c.bf16 %v5514, %v5512
        %v5575 = vpack.c.bf16 %v5517, %v5515
        %v5576 = vpack.c.bf16 %v5518, %v5516
        %v5577 = vpack.c.bf16 %v5521, %v5519
        %v5578 = vpack.c.bf16 %v5522, %v5520
        %v5579 = vpack.c.bf16 %v5525, %v5523
        %v5580 = vpack.c.bf16 %v5526, %v5524
        %v5581 = vpack.c.bf16 %v5529, %v5527
        %v5582 = vpack.c.bf16 %v5530, %v5528
        %v5583 = vpack.c.bf16 %v5533, %v5531
        %v5584 = vpack.c.bf16 %v5534, %v5532
        %v5585 = vpack.c.bf16 %v5537, %v5535
        %v5586 = vpack.c.bf16 %v5538, %v5536
        %v5587 = vpack.c.bf16 %v5541, %v5539
        %v5588 = vpack.c.bf16 %v5542, %v5540
        %v5589 = vpack.c.bf16 %v5545, %v5543
        %v5590 = vpack.c.bf16 %v5546, %v5544
        %v5591 = vpack.c.bf16 %v5549, %v5547
        %v5592 = vpack.c.bf16 %v5550, %v5548
        %v5593 = vpack.c.bf16 %v5553, %v5551
        %v5594 = vpack.c.bf16 %v5554, %v5552
        %v5595 = vpack.c.bf16 %v5557, %v5555
        %v5596 = vpack.c.bf16 %v5558, %v5556
        %v5597 = vpack.c.bf16 %v5561, %v5559
        %v5598 = vpack.c.bf16 %v5562, %v5560
        %v5599 = vpack.c.bf16 %v5565, %v5563
        %v5600 = vpack.c.bf16 %v5566, %v5564
        %v5601 = vpack.c.bf16 %v5569, %v5567
        %v5602 = vpack.c.bf16 %v5570, %v5568
        %5603 = vst [vmem:[%s487] sm:$0xff] %v5571
        %5604 = vst [vmem:[%s487 + $0x8] sm:$0xff] %v5572
        %5605 = vst [vmem:[%s487 + $0x10] sm:$0xff] %v5573
        %5606 = vst [vmem:[%s487 + $0x18] sm:$0xff] %v5574
        %5607 = vst [vmem:[%s487 + $0x20] sm:$0xff] %v5575
        %5608 = vst [vmem:[%s487 + $0x28] sm:$0xff] %v5576
        %5609 = vst [vmem:[%s487 + $0x30] sm:$0xff] %v5577
        %5610 = vst [vmem:[%s487 + $0x38] sm:$0xff] %v5578
        %5611 = vst [vmem:[%s487 + $0x40] sm:$0xff] %v5579
        %5612 = vst [vmem:[%s487 + $0x48] sm:$0xff] %v5580
        %5613 = vst [vmem:[%s487 + $0x50] sm:$0xff] %v5581
        %5614 = vst [vmem:[%s487 + $0x58] sm:$0xff] %v5582
        %5615 = vst [vmem:[%s487 + $0x60] sm:$0xff] %v5583
        %5616 = vst [vmem:[%s487 + $0x68] sm:$0xff] %v5584
        %5617 = vst [vmem:[%s487 + $0x70] sm:$0xff] %v5585
        %5618 = vst [vmem:[%s487 + $0x78] sm:$0xff] %v5586
        %5619 = vst [vmem:[%s487 + $0x80] sm:$0xff] %v5587
        %5620 = vst [vmem:[%s487 + $0x88] sm:$0xff] %v5588
        %5621 = vst [vmem:[%s487 + $0x90] sm:$0xff] %v5589
        %5622 = vst [vmem:[%s487 + $0x98] sm:$0xff] %v5590
        %5623 = vst [vmem:[%s487 + $0xa0] sm:$0xff] %v5591
        %5624 = vst [vmem:[%s487 + $0xa8] sm:$0xff] %v5592
        %5625 = vst [vmem:[%s487 + $0xb0] sm:$0xff] %v5593
        %5626 = vst [vmem:[%s487 + $0xb8] sm:$0xff] %v5594
        %5627 = vst [vmem:[%s487 + $0xc0] sm:$0xff] %v5595
        %5628 = vst [vmem:[%s487 + $0xc8] sm:$0xff] %v5596
        %5629 = vst [vmem:[%s487 + $0xd0] sm:$0xff] %v5597
        %5630 = vst [vmem:[%s487 + $0xd8] sm:$0xff] %v5598
        %5631 = vst [vmem:[%s487 + $0xe0] sm:$0xff] %v5599
        %5632 = vst [vmem:[%s487 + $0xe8] sm:$0xff] %v5600
        %5633 = vst [vmem:[%s487 + $0xf0] sm:$0xff] %v5601
        %5634 = vst [vmem:[%s487 + $0xf8] sm:$0xff] %v5602
        %v5635 = vpack.c.bf16 %v5317, %v5315
        %v5636 = vpack.c.bf16 %v5318, %v5316
        %v5637 = vpack.c.bf16 %v5321, %v5319
        %v5638 = vpack.c.bf16 %v5322, %v5320
        %v5639 = vpack.c.bf16 %v5325, %v5323
        %v5640 = vpack.c.bf16 %v5326, %v5324
        %v5641 = vpack.c.bf16 %v5329, %v5327
        %v5642 = vpack.c.bf16 %v5330, %v5328
        %v5643 = vpack.c.bf16 %v5333, %v5331
        %v5644 = vpack.c.bf16 %v5334, %v5332
        %v5645 = vpack.c.bf16 %v5337, %v5335
        %v5646 = vpack.c.bf16 %v5338, %v5336
        %v5647 = vpack.c.bf16 %v5341, %v5339
        %v5648 = vpack.c.bf16 %v5342, %v5340
        %v5649 = vpack.c.bf16 %v5345, %v5343
        %v5650 = vpack.c.bf16 %v5346, %v5344
        %v5651 = vpack.c.bf16 %v5349, %v5347
        %v5652 = vpack.c.bf16 %v5350, %v5348
        %v5653 = vpack.c.bf16 %v5353, %v5351
        %v5654 = vpack.c.bf16 %v5354, %v5352
        %v5655 = vpack.c.bf16 %v5357, %v5355
        %v5656 = vpack.c.bf16 %v5358, %v5356
        %v5657 = vpack.c.bf16 %v5361, %v5359
        %v5658 = vpack.c.bf16 %v5362, %v5360
        %v5659 = vpack.c.bf16 %v5365, %v5363
        %v5660 = vpack.c.bf16 %v5366, %v5364
        %v5661 = vpack.c.bf16 %v5369, %v5367
        %v5662 = vpack.c.bf16 %v5370, %v5368
        %v5663 = vpack.c.bf16 %v5373, %v5371
        %v5664 = vpack.c.bf16 %v5374, %v5372
        %v5665 = vpack.c.bf16 %v5377, %v5375
        %v5666 = vpack.c.bf16 %v5378, %v5376
        %5667 = vst [vmem:[%s552] sm:$0xff] %v5635
        %5668 = vst [vmem:[%s552 + $0x8] sm:$0xff] %v5636
        %5669 = vst [vmem:[%s552 + $0x10] sm:$0xff] %v5637
        %5670 = vst [vmem:[%s552 + $0x18] sm:$0xff] %v5638
        %5671 = vst [vmem:[%s552 + $0x20] sm:$0xff] %v5639
        %5672 = vst [vmem:[%s552 + $0x28] sm:$0xff] %v5640
        %5673 = vst [vmem:[%s552 + $0x30] sm:$0xff] %v5641
        %5674 = vst [vmem:[%s552 + $0x38] sm:$0xff] %v5642
        %5675 = vst [vmem:[%s552 + $0x40] sm:$0xff] %v5643
        %5676 = vst [vmem:[%s552 + $0x48] sm:$0xff] %v5644
        %5677 = vst [vmem:[%s552 + $0x50] sm:$0xff] %v5645
        %5678 = vst [vmem:[%s552 + $0x58] sm:$0xff] %v5646
        %5679 = vst [vmem:[%s552 + $0x60] sm:$0xff] %v5647
        %5680 = vst [vmem:[%s552 + $0x68] sm:$0xff] %v5648
        %5681 = vst [vmem:[%s552 + $0x70] sm:$0xff] %v5649
        %5682 = vst [vmem:[%s552 + $0x78] sm:$0xff] %v5650
        %5683 = vst [vmem:[%s552 + $0x80] sm:$0xff] %v5651
        %5684 = vst [vmem:[%s552 + $0x88] sm:$0xff] %v5652
        %5685 = vst [vmem:[%s552 + $0x90] sm:$0xff] %v5653
        %5686 = vst [vmem:[%s552 + $0x98] sm:$0xff] %v5654
        %5687 = vst [vmem:[%s552 + $0xa0] sm:$0xff] %v5655
        %5688 = vst [vmem:[%s552 + $0xa8] sm:$0xff] %v5656
        %5689 = vst [vmem:[%s552 + $0xb0] sm:$0xff] %v5657
        %5690 = vst [vmem:[%s552 + $0xb8] sm:$0xff] %v5658
        %5691 = vst [vmem:[%s552 + $0xc0] sm:$0xff] %v5659
        %5692 = vst [vmem:[%s552 + $0xc8] sm:$0xff] %v5660
        %5693 = vst [vmem:[%s552 + $0xd0] sm:$0xff] %v5661
        %5694 = vst [vmem:[%s552 + $0xd8] sm:$0xff] %v5662
        %5695 = vst [vmem:[%s552 + $0xe0] sm:$0xff] %v5663
        %5696 = vst [vmem:[%s552 + $0xe8] sm:$0xff] %v5664
        %5697 = vst [vmem:[%s552 + $0xf0] sm:$0xff] %v5665
        %5698 = vst [vmem:[%s552 + $0xf8] sm:$0xff] %v5666
        %v5699 = vrot.slane %v5315, 1
        %v5700 = vrot.slane %v5316, 1
        %v5701 = vrot.slane %v5319, 1
        %v5702 = vrot.slane %v5320, 1
        %v5703 = vrot.slane %v5323, 1
        %v5704 = vrot.slane %v5324, 1
        %v5705 = vrot.slane %v5327, 1
        %v5706 = vrot.slane %v5328, 1
        %v5707 = vrot.slane %v5331, 1
        %v5708 = vrot.slane %v5332, 1
        %v5709 = vrot.slane %v5335, 1
        %v5710 = vrot.slane %v5336, 1
        %v5711 = vrot.slane %v5339, 1
        %v5712 = vrot.slane %v5340, 1
        %v5713 = vrot.slane %v5343, 1
        %v5714 = vrot.slane %v5344, 1
        %v5715 = vrot.slane %v5347, 1
        %v5716 = vrot.slane %v5348, 1
        %v5717 = vrot.slane %v5351, 1
        %v5718 = vrot.slane %v5352, 1
        %v5719 = vrot.slane %v5355, 1
        %v5720 = vrot.slane %v5356, 1
        %v5721 = vrot.slane %v5359, 1
        %v5722 = vrot.slane %v5360, 1
        %v5723 = vrot.slane %v5363, 1
        %v5724 = vrot.slane %v5364, 1
        %v5725 = vrot.slane %v5367, 1
        %v5726 = vrot.slane %v5368, 1
        %v5727 = vrot.slane %v5371, 1
        %v5728 = vrot.slane %v5372, 1
        %v5729 = vrot.slane %v5375, 1
        %v5730 = vrot.slane %v5376, 1
        %v5731 = vrot.slane %v5317, 1
        %v5732 = vrot.slane %v5318, 1
        %v5733 = vrot.slane %v5321, 1
        %v5734 = vrot.slane %v5322, 1
        %v5735 = vrot.slane %v5325, 1
        %v5736 = vrot.slane %v5326, 1
        %v5737 = vrot.slane %v5329, 1
        %v5738 = vrot.slane %v5330, 1
        %v5739 = vrot.slane %v5333, 1
        %v5740 = vrot.slane %v5334, 1
        %v5741 = vrot.slane %v5337, 1
        %v5742 = vrot.slane %v5338, 1
        %v5743 = vrot.slane %v5341, 1
        %v5744 = vrot.slane %v5342, 1
        %v5745 = vrot.slane %v5345, 1
        %v5746 = vrot.slane %v5346, 1
        %v5747 = vrot.slane %v5349, 1
        %v5748 = vrot.slane %v5350, 1
        %v5749 = vrot.slane %v5353, 1
        %v5750 = vrot.slane %v5354, 1
        %v5751 = vrot.slane %v5357, 1
        %v5752 = vrot.slane %v5358, 1
        %v5753 = vrot.slane %v5361, 1
        %v5754 = vrot.slane %v5362, 1
        %v5755 = vrot.slane %v5365, 1
        %v5756 = vrot.slane %v5366, 1
        %v5757 = vrot.slane %v5369, 1
        %v5758 = vrot.slane %v5370, 1
        %v5759 = vrot.slane %v5373, 1
        %v5760 = vrot.slane %v5374, 1
        %v5761 = vrot.slane %v5377, 1
        %v5762 = vrot.slane %v5378, 1
        %v5763 = vsel %vm649, %v5699, %v5731
        %v5764 = vsel %vm649, %v5700, %v5732
        %v5765 = vsel %vm649, %v5701, %v5733
        %v5766 = vsel %vm649, %v5702, %v5734
        %v5767 = vsel %vm649, %v5703, %v5735
        %v5768 = vsel %vm649, %v5704, %v5736
        %v5769 = vsel %vm649, %v5705, %v5737
        %v5770 = vsel %vm649, %v5706, %v5738
        %v5771 = vsel %vm649, %v5707, %v5739
        %v5772 = vsel %vm649, %v5708, %v5740
        %v5773 = vsel %vm649, %v5709, %v5741
        %v5774 = vsel %vm649, %v5710, %v5742
        %v5775 = vsel %vm649, %v5711, %v5743
        %v5776 = vsel %vm649, %v5712, %v5744
        %v5777 = vsel %vm649, %v5713, %v5745
        %v5778 = vsel %vm649, %v5714, %v5746
        %v5779 = vsel %vm649, %v5715, %v5747
        %v5780 = vsel %vm649, %v5716, %v5748
        %v5781 = vsel %vm649, %v5717, %v5749
        %v5782 = vsel %vm649, %v5718, %v5750
        %v5783 = vsel %vm649, %v5719, %v5751
        %v5784 = vsel %vm649, %v5720, %v5752
        %v5785 = vsel %vm649, %v5721, %v5753
        %v5786 = vsel %vm649, %v5722, %v5754
        %v5787 = vsel %vm649, %v5723, %v5755
        %v5788 = vsel %vm649, %v5724, %v5756
        %v5789 = vsel %vm649, %v5725, %v5757
        %v5790 = vsel %vm649, %v5726, %v5758
        %v5791 = vsel %vm649, %v5727, %v5759
        %v5792 = vsel %vm649, %v5728, %v5760
        %v5793 = vsel %vm649, %v5729, %v5761
        %v5794 = vsel %vm649, %v5730, %v5762
        %v5795 = vsel %vm649, %v5731, %v5699
        %v5796 = vsel %vm649, %v5732, %v5700
        %v5797 = vsel %vm649, %v5733, %v5701
        %v5798 = vsel %vm649, %v5734, %v5702
        %v5799 = vsel %vm649, %v5735, %v5703
        %v5800 = vsel %vm649, %v5736, %v5704
        %v5801 = vsel %vm649, %v5737, %v5705
        %v5802 = vsel %vm649, %v5738, %v5706
        %v5803 = vsel %vm649, %v5739, %v5707
        %v5804 = vsel %vm649, %v5740, %v5708
        %v5805 = vsel %vm649, %v5741, %v5709
        %v5806 = vsel %vm649, %v5742, %v5710
        %v5807 = vsel %vm649, %v5743, %v5711
        %v5808 = vsel %vm649, %v5744, %v5712
        %v5809 = vsel %vm649, %v5745, %v5713
        %v5810 = vsel %vm649, %v5746, %v5714
        %v5811 = vsel %vm649, %v5747, %v5715
        %v5812 = vsel %vm649, %v5748, %v5716
        %v5813 = vsel %vm649, %v5749, %v5717
        %v5814 = vsel %vm649, %v5750, %v5718
        %v5815 = vsel %vm649, %v5751, %v5719
        %v5816 = vsel %vm649, %v5752, %v5720
        %v5817 = vsel %vm649, %v5753, %v5721
        %v5818 = vsel %vm649, %v5754, %v5722
        %v5819 = vsel %vm649, %v5755, %v5723
        %v5820 = vsel %vm649, %v5756, %v5724
        %v5821 = vsel %vm649, %v5757, %v5725
        %v5822 = vsel %vm649, %v5758, %v5726
        %v5823 = vsel %vm649, %v5759, %v5727
        %v5824 = vsel %vm649, %v5760, %v5728
        %v5825 = vsel %vm649, %v5761, %v5729
        %v5826 = vsel %vm649, %v5762, %v5730
        %v5827 = vsel %vm716, %v5763, 0.0
        %v5828 = vsel %vm716, %v5764, 0.0
        %v5829 = vsel %vm717, %v5795, 0.0
        %v5830 = vsel %vm717, %v5796, 0.0
        %v5831 = vsel %vm716, %v5765, 0.0
        %v5832 = vsel %vm716, %v5766, 0.0
        %v5833 = vsel %vm717, %v5797, 0.0
        %v5834 = vsel %vm717, %v5798, 0.0
        %v5835 = vsel %vm716, %v5767, 0.0
        %v5836 = vsel %vm716, %v5768, 0.0
        %v5837 = vsel %vm717, %v5799, 0.0
        %v5838 = vsel %vm717, %v5800, 0.0
        %v5839 = vsel %vm716, %v5769, 0.0
        %v5840 = vsel %vm716, %v5770, 0.0
        %v5841 = vsel %vm717, %v5801, 0.0
        %v5842 = vsel %vm717, %v5802, 0.0
        %v5843 = vsel %vm716, %v5771, 0.0
        %v5844 = vsel %vm716, %v5772, 0.0
        %v5845 = vsel %vm717, %v5803, 0.0
        %v5846 = vsel %vm717, %v5804, 0.0
        %v5847 = vsel %vm716, %v5773, 0.0
        %v5848 = vsel %vm716, %v5774, 0.0
        %v5849 = vsel %vm717, %v5805, 0.0
        %v5850 = vsel %vm717, %v5806, 0.0
        %v5851 = vsel %vm716, %v5775, 0.0
        %v5852 = vsel %vm716, %v5776, 0.0
        %v5853 = vsel %vm717, %v5807, 0.0
        %v5854 = vsel %vm717, %v5808, 0.0
        %v5855 = vsel %vm716, %v5777, 0.0
        %v5856 = vsel %vm716, %v5778, 0.0
        %v5857 = vsel %vm717, %v5809, 0.0
        %v5858 = vsel %vm717, %v5810, 0.0
        %v5859 = vsel %vm716, %v5779, 0.0
        %v5860 = vsel %vm716, %v5780, 0.0
        %v5861 = vsel %vm717, %v5811, 0.0
        %v5862 = vsel %vm717, %v5812, 0.0
        %v5863 = vsel %vm716, %v5781, 0.0
        %v5864 = vsel %vm716, %v5782, 0.0
        %v5865 = vsel %vm717, %v5813, 0.0
        %v5866 = vsel %vm717, %v5814, 0.0
        %v5867 = vsel %vm716, %v5783, 0.0
        %v5868 = vsel %vm716, %v5784, 0.0
        %v5869 = vsel %vm717, %v5815, 0.0
        %v5870 = vsel %vm717, %v5816, 0.0
        %v5871 = vsel %vm716, %v5785, 0.0
        %v5872 = vsel %vm716, %v5786, 0.0
        %v5873 = vsel %vm717, %v5817, 0.0
        %v5874 = vsel %vm717, %v5818, 0.0
        %v5875 = vsel %vm716, %v5787, 0.0
        %v5876 = vsel %vm716, %v5788, 0.0
        %v5877 = vsel %vm717, %v5819, 0.0
        %v5878 = vsel %vm717, %v5820, 0.0
        %v5879 = vsel %vm716, %v5789, 0.0
        %v5880 = vsel %vm716, %v5790, 0.0
        %v5881 = vsel %vm717, %v5821, 0.0
        %v5882 = vsel %vm717, %v5822, 0.0
        %v5883 = vsel %vm716, %v5791, 0.0
        %v5884 = vsel %vm716, %v5792, 0.0
        %v5885 = vsel %vm717, %v5823, 0.0
        %v5886 = vsel %vm717, %v5824, 0.0
        %v5887 = vsel %vm716, %v5793, 0.0
        %v5888 = vsel %vm716, %v5794, 0.0
        %v5889 = vsel %vm717, %v5825, 0.0
        %v5890 = vsel %vm717, %v5826, 0.0
        %v5891 = vpack.c.bf16 %v5829, %v5827
        %v5892 = vpack.c.bf16 %v5830, %v5828
        %v5893 = vpack.c.bf16 %v5833, %v5831
        %v5894 = vpack.c.bf16 %v5834, %v5832
        %v5895 = vpack.c.bf16 %v5837, %v5835
        %v5896 = vpack.c.bf16 %v5838, %v5836
        %v5897 = vpack.c.bf16 %v5841, %v5839
        %v5898 = vpack.c.bf16 %v5842, %v5840
        %v5899 = vpack.c.bf16 %v5845, %v5843
        %v5900 = vpack.c.bf16 %v5846, %v5844
        %v5901 = vpack.c.bf16 %v5849, %v5847
        %v5902 = vpack.c.bf16 %v5850, %v5848
        %v5903 = vpack.c.bf16 %v5853, %v5851
        %v5904 = vpack.c.bf16 %v5854, %v5852
        %v5905 = vpack.c.bf16 %v5857, %v5855
        %v5906 = vpack.c.bf16 %v5858, %v5856
        %v5907 = vpack.c.bf16 %v5861, %v5859
        %v5908 = vpack.c.bf16 %v5862, %v5860
        %v5909 = vpack.c.bf16 %v5865, %v5863
        %v5910 = vpack.c.bf16 %v5866, %v5864
        %v5911 = vpack.c.bf16 %v5869, %v5867
        %v5912 = vpack.c.bf16 %v5870, %v5868
        %v5913 = vpack.c.bf16 %v5873, %v5871
        %v5914 = vpack.c.bf16 %v5874, %v5872
        %v5915 = vpack.c.bf16 %v5877, %v5875
        %v5916 = vpack.c.bf16 %v5878, %v5876
        %v5917 = vpack.c.bf16 %v5881, %v5879
        %v5918 = vpack.c.bf16 %v5882, %v5880
        %v5919 = vpack.c.bf16 %v5885, %v5883
        %v5920 = vpack.c.bf16 %v5886, %v5884
        %v5921 = vpack.c.bf16 %v5889, %v5887
        %v5922 = vpack.c.bf16 %v5890, %v5888
        %5923 = vst [vmem:[%s814] sm:$0xff] %v5891
        %5924 = vst [vmem:[%s814 + $0x8] sm:$0xff] %v5892
        %5925 = vst [vmem:[%s814 + $0x10] sm:$0xff] %v5893
        %5926 = vst [vmem:[%s814 + $0x18] sm:$0xff] %v5894
        %5927 = vst [vmem:[%s814 + $0x20] sm:$0xff] %v5895
        %5928 = vst [vmem:[%s814 + $0x28] sm:$0xff] %v5896
        %5929 = vst [vmem:[%s814 + $0x30] sm:$0xff] %v5897
        %5930 = vst [vmem:[%s814 + $0x38] sm:$0xff] %v5898
        %5931 = vst [vmem:[%s814 + $0x40] sm:$0xff] %v5899
        %5932 = vst [vmem:[%s814 + $0x48] sm:$0xff] %v5900
        %5933 = vst [vmem:[%s814 + $0x50] sm:$0xff] %v5901
        %5934 = vst [vmem:[%s814 + $0x58] sm:$0xff] %v5902
        %5935 = vst [vmem:[%s814 + $0x60] sm:$0xff] %v5903
        %5936 = vst [vmem:[%s814 + $0x68] sm:$0xff] %v5904
        %5937 = vst [vmem:[%s814 + $0x70] sm:$0xff] %v5905
        %5938 = vst [vmem:[%s814 + $0x78] sm:$0xff] %v5906
        %5939 = vst [vmem:[%s814 + $0x80] sm:$0xff] %v5907
        %5940 = vst [vmem:[%s814 + $0x88] sm:$0xff] %v5908
        %5941 = vst [vmem:[%s814 + $0x90] sm:$0xff] %v5909
        %5942 = vst [vmem:[%s814 + $0x98] sm:$0xff] %v5910
        %5943 = vst [vmem:[%s814 + $0xa0] sm:$0xff] %v5911
        %5944 = vst [vmem:[%s814 + $0xa8] sm:$0xff] %v5912
        %5945 = vst [vmem:[%s814 + $0xb0] sm:$0xff] %v5913
        %5946 = vst [vmem:[%s814 + $0xb8] sm:$0xff] %v5914
        %5947 = vst [vmem:[%s814 + $0xc0] sm:$0xff] %v5915
        %5948 = vst [vmem:[%s814 + $0xc8] sm:$0xff] %v5916
        %5949 = vst [vmem:[%s814 + $0xd0] sm:$0xff] %v5917
        %5950 = vst [vmem:[%s814 + $0xd8] sm:$0xff] %v5918
        %5951 = vst [vmem:[%s814 + $0xe0] sm:$0xff] %v5919
        %5952 = vst [vmem:[%s814 + $0xe8] sm:$0xff] %v5920
        %5953 = vst [vmem:[%s814 + $0xf0] sm:$0xff] %v5921
        %5954 = vst [vmem:[%s814 + $0xf8] sm:$0xff] %v5922
        %v5955 = vld [vmem:[#allocation2] sm:$0xff]
        %v5956 = vld [vmem:[#allocation2 + $0x8] sm:$0xff]
        %v5957 = vld [vmem:[#allocation2 + $0x10] sm:$0xff]
        %v5958 = vld [vmem:[#allocation2 + $0x18] sm:$0xff]
        %v5959 = vld [vmem:[#allocation2 + $0x20] sm:$0xff]
        %v5960 = vld [vmem:[#allocation2 + $0x28] sm:$0xff]
        %v5961 = vld [vmem:[#allocation2 + $0x30] sm:$0xff]
        %v5962 = vld [vmem:[#allocation2 + $0x38] sm:$0xff]
        %v5963 = vld [vmem:[#allocation2 + $0x40] sm:$0xff]
        %v5964 = vld [vmem:[#allocation2 + $0x48] sm:$0xff]
        %v5965 = vld [vmem:[#allocation2 + $0x50] sm:$0xff]
        %v5966 = vld [vmem:[#allocation2 + $0x58] sm:$0xff]
        %v5967 = vld [vmem:[#allocation2 + $0x60] sm:$0xff]
        %v5968 = vld [vmem:[#allocation2 + $0x68] sm:$0xff]
        %v5969 = vld [vmem:[#allocation2 + $0x70] sm:$0xff]
        %v5970 = vld [vmem:[#allocation2 + $0x78] sm:$0xff]
        %v5971 = vld [vmem:[#allocation2 + $0x80] sm:$0xff]
        %v5972 = vld [vmem:[#allocation2 + $0x88] sm:$0xff]
        %v5973 = vld [vmem:[#allocation2 + $0x90] sm:$0xff]
        %v5974 = vld [vmem:[#allocation2 + $0x98] sm:$0xff]
        %v5975 = vld [vmem:[#allocation2 + $0xa0] sm:$0xff]
        %v5976 = vld [vmem:[#allocation2 + $0xa8] sm:$0xff]
        %v5977 = vld [vmem:[#allocation2 + $0xb0] sm:$0xff]
        %v5978 = vld [vmem:[#allocation2 + $0xb8] sm:$0xff]
        %v5979 = vld [vmem:[#allocation2 + $0xc0] sm:$0xff]
        %v5980 = vld [vmem:[#allocation2 + $0xc8] sm:$0xff]
        %v5981 = vld [vmem:[#allocation2 + $0xd0] sm:$0xff]
        %v5982 = vld [vmem:[#allocation2 + $0xd8] sm:$0xff]
        %v5983 = vld [vmem:[#allocation2 + $0xe0] sm:$0xff]
        %v5984 = vld [vmem:[#allocation2 + $0xe8] sm:$0xff]
        %v5985 = vld [vmem:[#allocation2 + $0xf0] sm:$0xff]
        %v5986 = vld [vmem:[#allocation2 + $0xf8] sm:$0xff]
        %v5987 = vld [vmem:[%s2] sm:$0xff]
        %v5988 = vld [vmem:[%s2 + $0x8] sm:$0xff]
        %v5989 = vld [vmem:[%s2 + $0x10] sm:$0xff]
        %v5990 = vld [vmem:[%s2 + $0x18] sm:$0xff]
        %v5991 = vld [vmem:[%s2 + $0x20] sm:$0xff]
        %v5992 = vld [vmem:[%s2 + $0x28] sm:$0xff]
        %v5993 = vld [vmem:[%s2 + $0x30] sm:$0xff]
        %v5994 = vld [vmem:[%s2 + $0x38] sm:$0xff]
        %v5995 = vld [vmem:[%s2 + $0x40] sm:$0xff]
        %v5996 = vld [vmem:[%s2 + $0x48] sm:$0xff]
        %v5997 = vld [vmem:[%s2 + $0x50] sm:$0xff]
        %v5998 = vld [vmem:[%s2 + $0x58] sm:$0xff]
        %v5999 = vld [vmem:[%s2 + $0x60] sm:$0xff]
        %v6000 = vld [vmem:[%s2 + $0x68] sm:$0xff]
        %v6001 = vld [vmem:[%s2 + $0x70] sm:$0xff]
        %v6002 = vld [vmem:[%s2 + $0x78] sm:$0xff]
        %v6003 = vld [vmem:[%s2 + $0x80] sm:$0xff]
        %v6004 = vld [vmem:[%s2 + $0x88] sm:$0xff]
        %v6005 = vld [vmem:[%s2 + $0x90] sm:$0xff]
        %v6006 = vld [vmem:[%s2 + $0x98] sm:$0xff]
        %v6007 = vld [vmem:[%s2 + $0xa0] sm:$0xff]
        %v6008 = vld [vmem:[%s2 + $0xa8] sm:$0xff]
        %v6009 = vld [vmem:[%s2 + $0xb0] sm:$0xff]
        %v6010 = vld [vmem:[%s2 + $0xb8] sm:$0xff]
        %v6011 = vld [vmem:[%s2 + $0xc0] sm:$0xff]
        %v6012 = vld [vmem:[%s2 + $0xc8] sm:$0xff]
        %v6013 = vld [vmem:[%s2 + $0xd0] sm:$0xff]
        %v6014 = vld [vmem:[%s2 + $0xd8] sm:$0xff]
        %v6015 = vld [vmem:[%s2 + $0xe0] sm:$0xff]
        %v6016 = vld [vmem:[%s2 + $0xe8] sm:$0xff]
        %v6017 = vld [vmem:[%s2 + $0xf0] sm:$0xff]
        %v6018 = vld [vmem:[%s2 + $0xf8] sm:$0xff]
        %v6019 = vld [vmem:[%s175] sm:$0xff]
        %v6020 = vld [vmem:[%s175 + $0x8] sm:$0xff]
        %v6021 = vld [vmem:[%s175 + $0x10] sm:$0xff]
        %v6022 = vld [vmem:[%s175 + $0x18] sm:$0xff]
        %v6023 = vld [vmem:[%s175 + $0x20] sm:$0xff]
        %v6024 = vld [vmem:[%s175 + $0x28] sm:$0xff]
        %v6025 = vld [vmem:[%s175 + $0x30] sm:$0xff]
        %v6026 = vld [vmem:[%s175 + $0x38] sm:$0xff]
        %v6027 = vld [vmem:[%s175 + $0x40] sm:$0xff]
        %v6028 = vld [vmem:[%s175 + $0x48] sm:$0xff]
        %v6029 = vld [vmem:[%s175 + $0x50] sm:$0xff]
        %v6030 = vld [vmem:[%s175 + $0x58] sm:$0xff]
        %v6031 = vld [vmem:[%s175 + $0x60] sm:$0xff]
        %v6032 = vld [vmem:[%s175 + $0x68] sm:$0xff]
        %v6033 = vld [vmem:[%s175 + $0x70] sm:$0xff]
        %v6034 = vld [vmem:[%s175 + $0x78] sm:$0xff]
        %v6035 = vld [vmem:[%s175 + $0x80] sm:$0xff]
        %v6036 = vld [vmem:[%s175 + $0x88] sm:$0xff]
        %v6037 = vld [vmem:[%s175 + $0x90] sm:$0xff]
        %v6038 = vld [vmem:[%s175 + $0x98] sm:$0xff]
        %v6039 = vld [vmem:[%s175 + $0xa0] sm:$0xff]
        %v6040 = vld [vmem:[%s175 + $0xa8] sm:$0xff]
        %v6041 = vld [vmem:[%s175 + $0xb0] sm:$0xff]
        %v6042 = vld [vmem:[%s175 + $0xb8] sm:$0xff]
        %v6043 = vld [vmem:[%s175 + $0xc0] sm:$0xff]
        %v6044 = vld [vmem:[%s175 + $0xc8] sm:$0xff]
        %v6045 = vld [vmem:[%s175 + $0xd0] sm:$0xff]
        %v6046 = vld [vmem:[%s175 + $0xd8] sm:$0xff]
        %v6047 = vld [vmem:[%s175 + $0xe0] sm:$0xff]
        %v6048 = vld [vmem:[%s175 + $0xe8] sm:$0xff]
        %v6049 = vld [vmem:[%s175 + $0xf0] sm:$0xff]
        %v6050 = vld [vmem:[%s175 + $0xf8] sm:$0xff]
        %s6051 = scalar_lea.vmem %s2, 256
        %v6052 = vld [vmem:[%s6051] sm:$0xff]
        %v6053 = vld [vmem:[%s6051 + $0x8] sm:$0xff]
        %v6054 = vld [vmem:[%s6051 + $0x10] sm:$0xff]
        %v6055 = vld [vmem:[%s6051 + $0x18] sm:$0xff]
        %v6056 = vld [vmem:[%s6051 + $0x20] sm:$0xff]
        %v6057 = vld [vmem:[%s6051 + $0x28] sm:$0xff]
        %v6058 = vld [vmem:[%s6051 + $0x30] sm:$0xff]
        %v6059 = vld [vmem:[%s6051 + $0x38] sm:$0xff]
        %v6060 = vld [vmem:[%s6051 + $0x40] sm:$0xff]
        %v6061 = vld [vmem:[%s6051 + $0x48] sm:$0xff]
        %v6062 = vld [vmem:[%s6051 + $0x50] sm:$0xff]
        %v6063 = vld [vmem:[%s6051 + $0x58] sm:$0xff]
        %v6064 = vld [vmem:[%s6051 + $0x60] sm:$0xff]
        %v6065 = vld [vmem:[%s6051 + $0x68] sm:$0xff]
        %v6066 = vld [vmem:[%s6051 + $0x70] sm:$0xff]
        %v6067 = vld [vmem:[%s6051 + $0x78] sm:$0xff]
        %v6068 = vld [vmem:[%s6051 + $0x80] sm:$0xff]
        %v6069 = vld [vmem:[%s6051 + $0x88] sm:$0xff]
        %v6070 = vld [vmem:[%s6051 + $0x90] sm:$0xff]
        %v6071 = vld [vmem:[%s6051 + $0x98] sm:$0xff]
        %v6072 = vld [vmem:[%s6051 + $0xa0] sm:$0xff]
        %v6073 = vld [vmem:[%s6051 + $0xa8] sm:$0xff]
        %v6074 = vld [vmem:[%s6051 + $0xb0] sm:$0xff]
        %v6075 = vld [vmem:[%s6051 + $0xb8] sm:$0xff]
        %v6076 = vld [vmem:[%s6051 + $0xc0] sm:$0xff]
        %v6077 = vld [vmem:[%s6051 + $0xc8] sm:$0xff]
        %v6078 = vld [vmem:[%s6051 + $0xd0] sm:$0xff]
        %v6079 = vld [vmem:[%s6051 + $0xd8] sm:$0xff]
        %v6080 = vld [vmem:[%s6051 + $0xe0] sm:$0xff]
        %v6081 = vld [vmem:[%s6051 + $0xe8] sm:$0xff]
        %v6082 = vld [vmem:[%s6051 + $0xf0] sm:$0xff]
        %v6083 = vld [vmem:[%s6051 + $0xf8] sm:$0xff]
        %v6116 = vunpack.c.l.b16 %v6052
        %v6117 = vunpack.c.h.b16 %v6052
        %v6118 = vunpack.c.l.b16 %v6053
        %v6119 = vunpack.c.h.b16 %v6053
        %v6120 = vunpack.c.l.b16 %v6054
        %v6121 = vunpack.c.h.b16 %v6054
        %v6122 = vunpack.c.l.b16 %v6055
        %v6123 = vunpack.c.h.b16 %v6055
        %v6124 = vunpack.c.l.b16 %v6056
        %v6125 = vunpack.c.h.b16 %v6056
        %v6126 = vunpack.c.l.b16 %v6057
        %v6127 = vunpack.c.h.b16 %v6057
        %v6128 = vunpack.c.l.b16 %v6058
        %v6129 = vunpack.c.h.b16 %v6058
        %v6130 = vunpack.c.l.b16 %v6059
        %v6131 = vunpack.c.h.b16 %v6059
        %v6132 = vunpack.c.l.b16 %v6060
        %v6133 = vunpack.c.h.b16 %v6060
        %v6134 = vunpack.c.l.b16 %v6061
        %v6135 = vunpack.c.h.b16 %v6061
        %v6136 = vunpack.c.l.b16 %v6062
        %v6137 = vunpack.c.h.b16 %v6062
        %v6138 = vunpack.c.l.b16 %v6063
        %v6139 = vunpack.c.h.b16 %v6063
        %v6140 = vunpack.c.l.b16 %v6064
        %v6141 = vunpack.c.h.b16 %v6064
        %v6142 = vunpack.c.l.b16 %v6065
        %v6143 = vunpack.c.h.b16 %v6065
        %v6144 = vunpack.c.l.b16 %v6066
        %v6145 = vunpack.c.h.b16 %v6066
        %v6146 = vunpack.c.l.b16 %v6067
        %v6147 = vunpack.c.h.b16 %v6067
        %v6148 = vunpack.c.l.b16 %v6068
        %v6149 = vunpack.c.h.b16 %v6068
        %v6150 = vunpack.c.l.b16 %v6069
        %v6151 = vunpack.c.h.b16 %v6069
        %v6152 = vunpack.c.l.b16 %v6070
        %v6153 = vunpack.c.h.b16 %v6070
        %v6154 = vunpack.c.l.b16 %v6071
        %v6155 = vunpack.c.h.b16 %v6071
        %v6156 = vunpack.c.l.b16 %v6072
        %v6157 = vunpack.c.h.b16 %v6072
        %v6158 = vunpack.c.l.b16 %v6073
        %v6159 = vunpack.c.h.b16 %v6073
        %v6160 = vunpack.c.l.b16 %v6074
        %v6161 = vunpack.c.h.b16 %v6074
        %v6162 = vunpack.c.l.b16 %v6075
        %v6163 = vunpack.c.h.b16 %v6075
        %v6164 = vunpack.c.l.b16 %v6076
        %v6165 = vunpack.c.h.b16 %v6076
        %v6166 = vunpack.c.l.b16 %v6077
        %v6167 = vunpack.c.h.b16 %v6077
        %v6168 = vunpack.c.l.b16 %v6078
        %v6169 = vunpack.c.h.b16 %v6078
        %v6170 = vunpack.c.l.b16 %v6079
        %v6171 = vunpack.c.h.b16 %v6079
        %v6172 = vunpack.c.l.b16 %v6080
        %v6173 = vunpack.c.h.b16 %v6080
        %v6174 = vunpack.c.l.b16 %v6081
        %v6175 = vunpack.c.h.b16 %v6081
        %v6176 = vunpack.c.l.b16 %v6082
        %v6177 = vunpack.c.h.b16 %v6082
        %v6178 = vunpack.c.l.b16 %v6083
        %v6179 = vunpack.c.h.b16 %v6083
        %v6180 = vpack.c.b16 %v6118, %v6116
        %v6181 = vpack.c.b16 %v6119, %v6117
        %v6182 = vpack.c.b16 %v6122, %v6120
        %v6183 = vpack.c.b16 %v6123, %v6121
        %v6184 = vpack.c.b16 %v6126, %v6124
        %v6185 = vpack.c.b16 %v6127, %v6125
        %v6186 = vpack.c.b16 %v6130, %v6128
        %v6187 = vpack.c.b16 %v6131, %v6129
        %v6188 = vpack.c.b16 %v6134, %v6132
        %v6189 = vpack.c.b16 %v6135, %v6133
        %v6190 = vpack.c.b16 %v6138, %v6136
        %v6191 = vpack.c.b16 %v6139, %v6137
        %v6192 = vpack.c.b16 %v6142, %v6140
        %v6193 = vpack.c.b16 %v6143, %v6141
        %v6194 = vpack.c.b16 %v6146, %v6144
        %v6195 = vpack.c.b16 %v6147, %v6145
        %v6196 = vpack.c.b16 %v6150, %v6148
        %v6197 = vpack.c.b16 %v6151, %v6149
        %v6198 = vpack.c.b16 %v6154, %v6152
        %v6199 = vpack.c.b16 %v6155, %v6153
        %v6200 = vpack.c.b16 %v6158, %v6156
        %v6201 = vpack.c.b16 %v6159, %v6157
        %v6202 = vpack.c.b16 %v6162, %v6160
        %v6203 = vpack.c.b16 %v6163, %v6161
        %v6204 = vpack.c.b16 %v6166, %v6164
        %v6205 = vpack.c.b16 %v6167, %v6165
        %v6206 = vpack.c.b16 %v6170, %v6168
        %v6207 = vpack.c.b16 %v6171, %v6169
        %v6208 = vpack.c.b16 %v6174, %v6172
        %v6209 = vpack.c.b16 %v6175, %v6173
        %v6210 = vpack.c.b16 %v6178, %v6176
        %v6211 = vpack.c.b16 %v6179, %v6177
        %6244 = vmatprep.subr.bf16.mxu0 %v6181
        %6245 = vmatpush1.bf16.msra.mxu0 %v6180
        %6246 = vmatprep.subr.bf16.mxu0 %v6183
        %6247 = vmatpush1.bf16.msra.mxu0 %v6182
        %6248 = vmatprep.subr.bf16.mxu0 %v6185
        %6249 = vmatpush1.bf16.msra.mxu0 %v6184
        %6250 = vmatprep.subr.bf16.mxu0 %v6187
        %6251 = vmatpush1.bf16.msra.mxu0 %v6186
        %6252 = vmatprep.subr.bf16.mxu0 %v6189
        %6253 = vmatpush1.bf16.msra.mxu0 %v6188
        %6254 = vmatprep.subr.bf16.mxu0 %v6191
        %6255 = vmatpush1.bf16.msra.mxu0 %v6190
        %6256 = vmatprep.subr.bf16.mxu0 %v6193
        %6257 = vmatpush1.bf16.msra.mxu0 %v6192
        %6258 = vmatprep.subr.bf16.mxu0 %v6195
        %6259 = vmatpush1.bf16.msra.mxu0 %v6194
        %6260 = vmatprep.subr.bf16.mxu0 %v6197
        %6261 = vmatpush1.bf16.msra.mxu0 %v6196
        %6262 = vmatprep.subr.bf16.mxu0 %v6199
        %6263 = vmatpush1.bf16.msra.mxu0 %v6198
        %6264 = vmatprep.subr.bf16.mxu0 %v6201
        %6265 = vmatpush1.bf16.msra.mxu0 %v6200
        %6266 = vmatprep.subr.bf16.mxu0 %v6203
        %6267 = vmatpush1.bf16.msra.mxu0 %v6202
        %6268 = vmatprep.subr.bf16.mxu0 %v6205
        %6269 = vmatpush1.bf16.msra.mxu0 %v6204
        %6270 = vmatprep.subr.bf16.mxu0 %v6207
        %6271 = vmatpush1.bf16.msra.mxu0 %v6206
        %6272 = vmatprep.subr.bf16.mxu0 %v6209
        %6273 = vmatpush1.bf16.msra.mxu0 %v6208
        %6274 = vmatprep.subr.bf16.mxu0 %v6211
        %6275 = vmatpush1.bf16.msra.mxu0 %v6210
        %6276 = vmatprep.mubr.bf16.mxu0 %v6020
        %6277 = vmatmul.mubr.bf16.gmra.mrb[0].mxu0 %v6019
        %v6278 = vpop.f32.mrb[0].mxu0
        %v6279 = vadd.f32 0.0, %v6278
        %v6280 = vpop.f32.mrb[0].mxu0
        %v6281 = vadd.f32 0.0, %v6280
        %v6282 = vpop.f32.mrb[0].mxu0
        %v6283 = vadd.f32 0.0, %v6282
        %v6284 = vpop.f32.mrb[0].mxu0
        %v6285 = vadd.f32 0.0, %v6284
        %6286 = vmatprep.mubr.bf16.mxu0 %v6022
        %6287 = vmatmul.mubr.bf16.gmra.mrb[0].mxu0 %v6021
        %v6288 = vpop.f32.mrb[0].mxu0
        %v6289 = vadd.f32 0.0, %v6288
        %v6290 = vpop.f32.mrb[0].mxu0
        %v6291 = vadd.f32 0.0, %v6290
        %v6292 = vpop.f32.mrb[0].mxu0
        %v6293 = vadd.f32 0.0, %v6292
        %v6294 = vpop.f32.mrb[0].mxu0
        %v6295 = vadd.f32 0.0, %v6294
        %6296 = vmatprep.mubr.bf16.mxu0 %v6024
        %6297 = vmatmul.mubr.bf16.gmra.mrb[0].mxu0 %v6023
        %v6298 = vpop.f32.mrb[0].mxu0
        %v6299 = vadd.f32 0.0, %v6298
        %v6300 = vpop.f32.mrb[0].mxu0
        %v6301 = vadd.f32 0.0, %v6300
        %v6302 = vpop.f32.mrb[0].mxu0
        %v6303 = vadd.f32 0.0, %v6302
        %v6304 = vpop.f32.mrb[0].mxu0
        %v6305 = vadd.f32 0.0, %v6304
        %6306 = vmatprep.mubr.bf16.mxu0 %v6026
        %6307 = vmatmul.mubr.bf16.gmra.mrb[0].mxu0 %v6025
        %v6308 = vpop.f32.mrb[0].mxu0
        %v6309 = vadd.f32 0.0, %v6308
        %v6310 = vpop.f32.mrb[0].mxu0
        %v6311 = vadd.f32 0.0, %v6310
        %v6312 = vpop.f32.mrb[0].mxu0
        %v6313 = vadd.f32 0.0, %v6312
        %v6314 = vpop.f32.mrb[0].mxu0
        %v6315 = vadd.f32 0.0, %v6314
        %6316 = vmatprep.mubr.bf16.mxu0 %v6028
        %6317 = vmatmul.mubr.bf16.gmra.mrb[0].mxu0 %v6027
        %v6318 = vpop.f32.mrb[0].mxu0
        %v6319 = vadd.f32 0.0, %v6318
        %v6320 = vpop.f32.mrb[0].mxu0
        %v6321 = vadd.f32 0.0, %v6320
        %v6322 = vpop.f32.mrb[0].mxu0
        %v6323 = vadd.f32 0.0, %v6322
        %v6324 = vpop.f32.mrb[0].mxu0
        %v6325 = vadd.f32 0.0, %v6324
        %6326 = vmatprep.mubr.bf16.mxu0 %v6030
        %6327 = vmatmul.mubr.bf16.gmra.mrb[0].mxu0 %v6029
        %v6328 = vpop.f32.mrb[0].mxu0
        %v6329 = vadd.f32 0.0, %v6328
        %v6330 = vpop.f32.mrb[0].mxu0
        %v6331 = vadd.f32 0.0, %v6330
        %v6332 = vpop.f32.mrb[0].mxu0
        %v6333 = vadd.f32 0.0, %v6332
        %v6334 = vpop.f32.mrb[0].mxu0
        %v6335 = vadd.f32 0.0, %v6334
        %6336 = vmatprep.mubr.bf16.mxu0 %v6032
        %6337 = vmatmul.mubr.bf16.gmra.mrb[0].mxu0 %v6031
        %v6338 = vpop.f32.mrb[0].mxu0
        %v6339 = vadd.f32 0.0, %v6338
        %v6340 = vpop.f32.mrb[0].mxu0
        %v6341 = vadd.f32 0.0, %v6340
        %v6342 = vpop.f32.mrb[0].mxu0
        %v6343 = vadd.f32 0.0, %v6342
        %v6344 = vpop.f32.mrb[0].mxu0
        %v6345 = vadd.f32 0.0, %v6344
        %6346 = vmatprep.mubr.bf16.mxu0 %v6034
        %6347 = vmatmul.mubr.bf16.gmra.mrb[0].mxu0 %v6033
        %v6348 = vpop.f32.mrb[0].mxu0
        %v6349 = vadd.f32 0.0, %v6348
        %v6350 = vpop.f32.mrb[0].mxu0
        %v6351 = vadd.f32 0.0, %v6350
        %v6352 = vpop.f32.mrb[0].mxu0
        %v6353 = vadd.f32 0.0, %v6352
        %v6354 = vpop.f32.mrb[0].mxu0
        %v6355 = vadd.f32 0.0, %v6354
        %6356 = vmatprep.mubr.bf16.mxu0 %v6036
        %6357 = vmatmul.mubr.bf16.gmra.mrb[0].mxu0 %v6035
        %v6358 = vpop.f32.mrb[0].mxu0
        %v6359 = vadd.f32 0.0, %v6358
        %v6360 = vpop.f32.mrb[0].mxu0
        %v6361 = vadd.f32 0.0, %v6360
        %v6362 = vpop.f32.mrb[0].mxu0
        %v6363 = vadd.f32 0.0, %v6362
        %v6364 = vpop.f32.mrb[0].mxu0
        %v6365 = vadd.f32 0.0, %v6364
        %6366 = vmatprep.mubr.bf16.mxu0 %v6038
        %6367 = vmatmul.mubr.bf16.gmra.mrb[0].mxu0 %v6037
        %v6368 = vpop.f32.mrb[0].mxu0
        %v6369 = vadd.f32 0.0, %v6368
        %v6370 = vpop.f32.mrb[0].mxu0
        %v6371 = vadd.f32 0.0, %v6370
        %v6372 = vpop.f32.mrb[0].mxu0
        %v6373 = vadd.f32 0.0, %v6372
        %v6374 = vpop.f32.mrb[0].mxu0
        %v6375 = vadd.f32 0.0, %v6374
        %6376 = vmatprep.mubr.bf16.mxu0 %v6040
        %6377 = vmatmul.mubr.bf16.gmra.mrb[0].mxu0 %v6039
        %v6378 = vpop.f32.mrb[0].mxu0
        %v6379 = vadd.f32 0.0, %v6378
        %v6380 = vpop.f32.mrb[0].mxu0
        %v6381 = vadd.f32 0.0, %v6380
        %v6382 = vpop.f32.mrb[0].mxu0
        %v6383 = vadd.f32 0.0, %v6382
        %v6384 = vpop.f32.mrb[0].mxu0
        %v6385 = vadd.f32 0.0, %v6384
        %6386 = vmatprep.mubr.bf16.mxu0 %v6042
        %6387 = vmatmul.mubr.bf16.gmra.mrb[0].mxu0 %v6041
        %v6388 = vpop.f32.mrb[0].mxu0
        %v6389 = vadd.f32 0.0, %v6388
        %v6390 = vpop.f32.mrb[0].mxu0
        %v6391 = vadd.f32 0.0, %v6390
        %v6392 = vpop.f32.mrb[0].mxu0
        %v6393 = vadd.f32 0.0, %v6392
        %v6394 = vpop.f32.mrb[0].mxu0
        %v6395 = vadd.f32 0.0, %v6394
        %6396 = vmatprep.mubr.bf16.mxu0 %v6044
        %6397 = vmatmul.mubr.bf16.gmra.mrb[0].mxu0 %v6043
        %v6398 = vpop.f32.mrb[0].mxu0
        %v6399 = vadd.f32 0.0, %v6398
        %v6400 = vpop.f32.mrb[0].mxu0
        %v6401 = vadd.f32 0.0, %v6400
        %v6402 = vpop.f32.mrb[0].mxu0
        %v6403 = vadd.f32 0.0, %v6402
        %v6404 = vpop.f32.mrb[0].mxu0
        %v6405 = vadd.f32 0.0, %v6404
        %6406 = vmatprep.mubr.bf16.mxu0 %v6046
        %6407 = vmatmul.mubr.bf16.gmra.mrb[0].mxu0 %v6045
        %v6408 = vpop.f32.mrb[0].mxu0
        %v6409 = vadd.f32 0.0, %v6408
        %v6410 = vpop.f32.mrb[0].mxu0
        %v6411 = vadd.f32 0.0, %v6410
        %v6412 = vpop.f32.mrb[0].mxu0
        %v6413 = vadd.f32 0.0, %v6412
        %v6414 = vpop.f32.mrb[0].mxu0
        %v6415 = vadd.f32 0.0, %v6414
        %6416 = vmatprep.mubr.bf16.mxu0 %v6048
        %6417 = vmatmul.mubr.bf16.gmra.mrb[0].mxu0 %v6047
        %v6418 = vpop.f32.mrb[0].mxu0
        %v6419 = vadd.f32 0.0, %v6418
        %v6420 = vpop.f32.mrb[0].mxu0
        %v6421 = vadd.f32 0.0, %v6420
        %v6422 = vpop.f32.mrb[0].mxu0
        %v6423 = vadd.f32 0.0, %v6422
        %v6424 = vpop.f32.mrb[0].mxu0
        %v6425 = vadd.f32 0.0, %v6424
        %6426 = vmatprep.mubr.bf16.mxu0 %v6050
        %6427 = vmatmul.mubr.bf16.gmra.mrb[0].mxu0 %v6049
        %v6428 = vpop.f32.mrb[0].mxu0
        %v6429 = vadd.f32 0.0, %v6428
        %v6430 = vpop.f32.mrb[0].mxu0
        %v6431 = vadd.f32 0.0, %v6430
        %v6432 = vpop.f32.mrb[0].mxu0
        %v6433 = vadd.f32 0.0, %v6432
        %v6434 = vpop.f32.mrb[0].mxu0
        %v6435 = vadd.f32 0.0, %v6434
        %6436 = vdwg.mxu0
        %v6469 = vunpack.c.l.b16 %v5987
        %v6470 = vunpack.c.h.b16 %v5987
        %v6471 = vunpack.c.l.b16 %v5988
        %v6472 = vunpack.c.h.b16 %v5988
        %v6473 = vunpack.c.l.b16 %v5989
        %v6474 = vunpack.c.h.b16 %v5989
        %v6475 = vunpack.c.l.b16 %v5990
        %v6476 = vunpack.c.h.b16 %v5990
        %v6477 = vunpack.c.l.b16 %v5991
        %v6478 = vunpack.c.h.b16 %v5991
        %v6479 = vunpack.c.l.b16 %v5992
        %v6480 = vunpack.c.h.b16 %v5992
        %v6481 = vunpack.c.l.b16 %v5993
        %v6482 = vunpack.c.h.b16 %v5993
        %v6483 = vunpack.c.l.b16 %v5994
        %v6484 = vunpack.c.h.b16 %v5994
        %v6485 = vunpack.c.l.b16 %v5995
        %v6486 = vunpack.c.h.b16 %v5995
        %v6487 = vunpack.c.l.b16 %v5996
        %v6488 = vunpack.c.h.b16 %v5996
        %v6489 = vunpack.c.l.b16 %v5997
        %v6490 = vunpack.c.h.b16 %v5997
        %v6491 = vunpack.c.l.b16 %v5998
        %v6492 = vunpack.c.h.b16 %v5998
        %v6493 = vunpack.c.l.b16 %v5999
        %v6494 = vunpack.c.h.b16 %v5999
        %v6495 = vunpack.c.l.b16 %v6000
        %v6496 = vunpack.c.h.b16 %v6000
        %v6497 = vunpack.c.l.b16 %v6001
        %v6498 = vunpack.c.h.b16 %v6001
        %v6499 = vunpack.c.l.b16 %v6002
        %v6500 = vunpack.c.h.b16 %v6002
        %v6501 = vunpack.c.l.b16 %v6003
        %v6502 = vunpack.c.h.b16 %v6003
        %v6503 = vunpack.c.l.b16 %v6004
        %v6504 = vunpack.c.h.b16 %v6004
        %v6505 = vunpack.c.l.b16 %v6005
        %v6506 = vunpack.c.h.b16 %v6005
        %v6507 = vunpack.c.l.b16 %v6006
        %v6508 = vunpack.c.h.b16 %v6006
        %v6509 = vunpack.c.l.b16 %v6007
        %v6510 = vunpack.c.h.b16 %v6007
        %v6511 = vunpack.c.l.b16 %v6008
        %v6512 = vunpack.c.h.b16 %v6008
        %v6513 = vunpack.c.l.b16 %v6009
        %v6514 = vunpack.c.h.b16 %v6009
        %v6515 = vunpack.c.l.b16 %v6010
        %v6516 = vunpack.c.h.b16 %v6010
        %v6517 = vunpack.c.l.b16 %v6011
        %v6518 = vunpack.c.h.b16 %v6011
        %v6519 = vunpack.c.l.b16 %v6012
        %v6520 = vunpack.c.h.b16 %v6012
        %v6521 = vunpack.c.l.b16 %v6013
        %v6522 = vunpack.c.h.b16 %v6013
        %v6523 = vunpack.c.l.b16 %v6014
        %v6524 = vunpack.c.h.b16 %v6014
        %v6525 = vunpack.c.l.b16 %v6015
        %v6526 = vunpack.c.h.b16 %v6015
        %v6527 = vunpack.c.l.b16 %v6016
        %v6528 = vunpack.c.h.b16 %v6016
        %v6529 = vunpack.c.l.b16 %v6017
        %v6530 = vunpack.c.h.b16 %v6017
        %v6531 = vunpack.c.l.b16 %v6018
        %v6532 = vunpack.c.h.b16 %v6018
        %v6533 = vpack.c.b16 %v6471, %v6469
        %v6534 = vpack.c.b16 %v6472, %v6470
        %v6535 = vpack.c.b16 %v6475, %v6473
        %v6536 = vpack.c.b16 %v6476, %v6474
        %v6537 = vpack.c.b16 %v6479, %v6477
        %v6538 = vpack.c.b16 %v6480, %v6478
        %v6539 = vpack.c.b16 %v6483, %v6481
        %v6540 = vpack.c.b16 %v6484, %v6482
        %v6541 = vpack.c.b16 %v6487, %v6485
        %v6542 = vpack.c.b16 %v6488, %v6486
        %v6543 = vpack.c.b16 %v6491, %v6489
        %v6544 = vpack.c.b16 %v6492, %v6490
        %v6545 = vpack.c.b16 %v6495, %v6493
        %v6546 = vpack.c.b16 %v6496, %v6494
        %v6547 = vpack.c.b16 %v6499, %v6497
        %v6548 = vpack.c.b16 %v6500, %v6498
        %v6549 = vpack.c.b16 %v6503, %v6501
        %v6550 = vpack.c.b16 %v6504, %v6502
        %v6551 = vpack.c.b16 %v6507, %v6505
        %v6552 = vpack.c.b16 %v6508, %v6506
        %v6553 = vpack.c.b16 %v6511, %v6509
        %v6554 = vpack.c.b16 %v6512, %v6510
        %v6555 = vpack.c.b16 %v6515, %v6513
        %v6556 = vpack.c.b16 %v6516, %v6514
        %v6557 = vpack.c.b16 %v6519, %v6517
        %v6558 = vpack.c.b16 %v6520, %v6518
        %v6559 = vpack.c.b16 %v6523, %v6521
        %v6560 = vpack.c.b16 %v6524, %v6522
        %v6561 = vpack.c.b16 %v6527, %v6525
        %v6562 = vpack.c.b16 %v6528, %v6526
        %v6563 = vpack.c.b16 %v6531, %v6529
        %v6564 = vpack.c.b16 %v6532, %v6530
        %6597 = vmatprep.subr.bf16.mxu0 %v6534
        %6598 = vmatpush1.bf16.msra.mxu0 %v6533
        %6599 = vmatprep.subr.bf16.mxu0 %v6536
        %6600 = vmatpush1.bf16.msra.mxu0 %v6535
        %6601 = vmatprep.subr.bf16.mxu0 %v6538
        %6602 = vmatpush1.bf16.msra.mxu0 %v6537
        %6603 = vmatprep.subr.bf16.mxu0 %v6540
        %6604 = vmatpush1.bf16.msra.mxu0 %v6539
        %6605 = vmatprep.subr.bf16.mxu0 %v6542
        %6606 = vmatpush1.bf16.msra.mxu0 %v6541
        %6607 = vmatprep.subr.bf16.mxu0 %v6544
        %6608 = vmatpush1.bf16.msra.mxu0 %v6543
        %6609 = vmatprep.subr.bf16.mxu0 %v6546
        %6610 = vmatpush1.bf16.msra.mxu0 %v6545
        %6611 = vmatprep.subr.bf16.mxu0 %v6548
        %6612 = vmatpush1.bf16.msra.mxu0 %v6547
        %6613 = vmatprep.subr.bf16.mxu0 %v6550
        %6614 = vmatpush1.bf16.msra.mxu0 %v6549
        %6615 = vmatprep.subr.bf16.mxu0 %v6552
        %6616 = vmatpush1.bf16.msra.mxu0 %v6551
        %6617 = vmatprep.subr.bf16.mxu0 %v6554
        %6618 = vmatpush1.bf16.msra.mxu0 %v6553
        %6619 = vmatprep.subr.bf16.mxu0 %v6556
        %6620 = vmatpush1.bf16.msra.mxu0 %v6555
        %6621 = vmatprep.subr.bf16.mxu0 %v6558
        %6622 = vmatpush1.bf16.msra.mxu0 %v6557
        %6623 = vmatprep.subr.bf16.mxu0 %v6560
        %6624 = vmatpush1.bf16.msra.mxu0 %v6559
        %6625 = vmatprep.subr.bf16.mxu0 %v6562
        %6626 = vmatpush1.bf16.msra.mxu0 %v6561
        %6627 = vmatprep.subr.bf16.mxu0 %v6564
        %6628 = vmatpush1.bf16.msra.mxu0 %v6563
        %6629 = vmatprep.mubr.bf16.mxu0 %v5956
        %6630 = vmatmul.mubr.bf16.gmra.mrb[0].mxu0 %v5955
        %v6631 = vpop.f32.mrb[0].mxu0
        %v6632 = vadd.f32 %v6279, %v6631
        %v6633 = vpop.f32.mrb[0].mxu0
        %v6634 = vadd.f32 %v6281, %v6633
        %v6635 = vpop.f32.mrb[0].mxu0
        %v6636 = vadd.f32 %v6283, %v6635
        %v6637 = vpop.f32.mrb[0].mxu0
        %v6638 = vadd.f32 %v6285, %v6637
        %6639 = vmatprep.mubr.bf16.mxu0 %v5958
        %6640 = vmatmul.mubr.bf16.gmra.mrb[0].mxu0 %v5957
        %v6641 = vpop.f32.mrb[0].mxu0
        %v6642 = vadd.f32 %v6289, %v6641
        %v6643 = vpop.f32.mrb[0].mxu0
        %v6644 = vadd.f32 %v6291, %v6643
        %v6645 = vpop.f32.mrb[0].mxu0
        %v6646 = vadd.f32 %v6293, %v6645
        %v6647 = vpop.f32.mrb[0].mxu0
        %v6648 = vadd.f32 %v6295, %v6647
        %6649 = vmatprep.mubr.bf16.mxu0 %v5960
        %6650 = vmatmul.mubr.bf16.gmra.mrb[0].mxu0 %v5959
        %v6651 = vpop.f32.mrb[0].mxu0
        %v6652 = vadd.f32 %v6299, %v6651
        %v6653 = vpop.f32.mrb[0].mxu0
        %v6654 = vadd.f32 %v6301, %v6653
        %v6655 = vpop.f32.mrb[0].mxu0
        %v6656 = vadd.f32 %v6303, %v6655
        %v6657 = vpop.f32.mrb[0].mxu0
        %v6658 = vadd.f32 %v6305, %v6657
        %6659 = vmatprep.mubr.bf16.mxu0 %v5962
        %6660 = vmatmul.mubr.bf16.gmra.mrb[0].mxu0 %v5961
        %v6661 = vpop.f32.mrb[0].mxu0
        %v6662 = vadd.f32 %v6309, %v6661
        %v6663 = vpop.f32.mrb[0].mxu0
        %v6664 = vadd.f32 %v6311, %v6663
        %v6665 = vpop.f32.mrb[0].mxu0
        %v6666 = vadd.f32 %v6313, %v6665
        %v6667 = vpop.f32.mrb[0].mxu0
        %v6668 = vadd.f32 %v6315, %v6667
        %6669 = vmatprep.mubr.bf16.mxu0 %v5964
        %6670 = vmatmul.mubr.bf16.gmra.mrb[0].mxu0 %v5963
        %v6671 = vpop.f32.mrb[0].mxu0
        %v6672 = vadd.f32 %v6319, %v6671
        %v6673 = vpop.f32.mrb[0].mxu0
        %v6674 = vadd.f32 %v6321, %v6673
        %v6675 = vpop.f32.mrb[0].mxu0
        %v6676 = vadd.f32 %v6323, %v6675
        %v6677 = vpop.f32.mrb[0].mxu0
        %v6678 = vadd.f32 %v6325, %v6677
        %6679 = vmatprep.mubr.bf16.mxu0 %v5966
        %6680 = vmatmul.mubr.bf16.gmra.mrb[0].mxu0 %v5965
        %v6681 = vpop.f32.mrb[0].mxu0
        %v6682 = vadd.f32 %v6329, %v6681
        %v6683 = vpop.f32.mrb[0].mxu0
        %v6684 = vadd.f32 %v6331, %v6683
        %v6685 = vpop.f32.mrb[0].mxu0
        %v6686 = vadd.f32 %v6333, %v6685
        %v6687 = vpop.f32.mrb[0].mxu0
        %v6688 = vadd.f32 %v6335, %v6687
        %6689 = vmatprep.mubr.bf16.mxu0 %v5968
        %6690 = vmatmul.mubr.bf16.gmra.mrb[0].mxu0 %v5967
        %v6691 = vpop.f32.mrb[0].mxu0
        %v6692 = vadd.f32 %v6339, %v6691
        %v6693 = vpop.f32.mrb[0].mxu0
        %v6694 = vadd.f32 %v6341, %v6693
        %v6695 = vpop.f32.mrb[0].mxu0
        %v6696 = vadd.f32 %v6343, %v6695
        %v6697 = vpop.f32.mrb[0].mxu0
        %v6698 = vadd.f32 %v6345, %v6697
        %6699 = vmatprep.mubr.bf16.mxu0 %v5970
        %6700 = vmatmul.mubr.bf16.gmra.mrb[0].mxu0 %v5969
        %v6701 = vpop.f32.mrb[0].mxu0
        %v6702 = vadd.f32 %v6349, %v6701
        %v6703 = vpop.f32.mrb[0].mxu0
        %v6704 = vadd.f32 %v6351, %v6703
        %v6705 = vpop.f32.mrb[0].mxu0
        %v6706 = vadd.f32 %v6353, %v6705
        %v6707 = vpop.f32.mrb[0].mxu0
        %v6708 = vadd.f32 %v6355, %v6707
        %6709 = vmatprep.mubr.bf16.mxu0 %v5972
        %6710 = vmatmul.mubr.bf16.gmra.mrb[0].mxu0 %v5971
        %v6711 = vpop.f32.mrb[0].mxu0
        %v6712 = vadd.f32 %v6359, %v6711
        %v6713 = vpop.f32.mrb[0].mxu0
        %v6714 = vadd.f32 %v6361, %v6713
        %v6715 = vpop.f32.mrb[0].mxu0
        %v6716 = vadd.f32 %v6363, %v6715
        %v6717 = vpop.f32.mrb[0].mxu0
        %v6718 = vadd.f32 %v6365, %v6717
        %6719 = vmatprep.mubr.bf16.mxu0 %v5974
        %6720 = vmatmul.mubr.bf16.gmra.mrb[0].mxu0 %v5973
        %v6721 = vpop.f32.mrb[0].mxu0
        %v6722 = vadd.f32 %v6369, %v6721
        %v6723 = vpop.f32.mrb[0].mxu0
        %v6724 = vadd.f32 %v6371, %v6723
        %v6725 = vpop.f32.mrb[0].mxu0
        %v6726 = vadd.f32 %v6373, %v6725
        %v6727 = vpop.f32.mrb[0].mxu0
        %v6728 = vadd.f32 %v6375, %v6727
        %6729 = vmatprep.mubr.bf16.mxu0 %v5976
        %6730 = vmatmul.mubr.bf16.gmra.mrb[0].mxu0 %v5975
        %v6731 = vpop.f32.mrb[0].mxu0
        %v6732 = vadd.f32 %v6379, %v6731
        %v6733 = vpop.f32.mrb[0].mxu0
        %v6734 = vadd.f32 %v6381, %v6733
        %v6735 = vpop.f32.mrb[0].mxu0
        %v6736 = vadd.f32 %v6383, %v6735
        %v6737 = vpop.f32.mrb[0].mxu0
        %v6738 = vadd.f32 %v6385, %v6737
        %6739 = vmatprep.mubr.bf16.mxu0 %v5978
        %6740 = vmatmul.mubr.bf16.gmra.mrb[0].mxu0 %v5977
        %v6741 = vpop.f32.mrb[0].mxu0
        %v6742 = vadd.f32 %v6389, %v6741
        %v6743 = vpop.f32.mrb[0].mxu0
        %v6744 = vadd.f32 %v6391, %v6743
        %v6745 = vpop.f32.mrb[0].mxu0
        %v6746 = vadd.f32 %v6393, %v6745
        %v6747 = vpop.f32.mrb[0].mxu0
        %v6748 = vadd.f32 %v6395, %v6747
        %6749 = vmatprep.mubr.bf16.mxu0 %v5980
        %6750 = vmatmul.mubr.bf16.gmra.mrb[0].mxu0 %v5979
        %v6751 = vpop.f32.mrb[0].mxu0
        %v6752 = vadd.f32 %v6399, %v6751
        %v6753 = vpop.f32.mrb[0].mxu0
        %v6754 = vadd.f32 %v6401, %v6753
        %v6755 = vpop.f32.mrb[0].mxu0
        %v6756 = vadd.f32 %v6403, %v6755
        %v6757 = vpop.f32.mrb[0].mxu0
        %v6758 = vadd.f32 %v6405, %v6757
        %6759 = vmatprep.mubr.bf16.mxu0 %v5982
        %6760 = vmatmul.mubr.bf16.gmra.mrb[0].mxu0 %v5981
        %v6761 = vpop.f32.mrb[0].mxu0
        %v6762 = vadd.f32 %v6409, %v6761
        %v6763 = vpop.f32.mrb[0].mxu0
        %v6764 = vadd.f32 %v6411, %v6763
        %v6765 = vpop.f32.mrb[0].mxu0
        %v6766 = vadd.f32 %v6413, %v6765
        %v6767 = vpop.f32.mrb[0].mxu0
        %v6768 = vadd.f32 %v6415, %v6767
        %6769 = vmatprep.mubr.bf16.mxu0 %v5984
        %6770 = vmatmul.mubr.bf16.gmra.mrb[0].mxu0 %v5983
        %v6771 = vpop.f32.mrb[0].mxu0
        %v6772 = vadd.f32 %v6419, %v6771
        %v6773 = vpop.f32.mrb[0].mxu0
        %v6774 = vadd.f32 %v6421, %v6773
        %v6775 = vpop.f32.mrb[0].mxu0
        %v6776 = vadd.f32 %v6423, %v6775
        %v6777 = vpop.f32.mrb[0].mxu0
        %v6778 = vadd.f32 %v6425, %v6777
        %6779 = vmatprep.mubr.bf16.mxu0 %v5986
        %6780 = vmatmul.mubr.bf16.gmra.mrb[0].mxu0 %v5985
        %v6781 = vpop.f32.mrb[0].mxu0
        %v6782 = vadd.f32 %v6429, %v6781
        %v6783 = vpop.f32.mrb[0].mxu0
        %v6784 = vadd.f32 %v6431, %v6783
        %v6785 = vpop.f32.mrb[0].mxu0
        %v6786 = vadd.f32 %v6433, %v6785
        %v6787 = vpop.f32.mrb[0].mxu0
        %v6788 = vadd.f32 %v6435, %v6787
        %6789 = vdwg.mxu0
        %v6790 = vld [vmem:[%s181] sm:$0xff]
        %v6791 = vld [vmem:[%s181 + $0x8] sm:$0xff]
        %v6792 = vld [vmem:[%s181 + $0x10] sm:$0xff]
        %v6793 = vld [vmem:[%s181 + $0x18] sm:$0xff]
        %v6794 = vld [vmem:[%s181 + $0x20] sm:$0xff]
        %v6795 = vld [vmem:[%s181 + $0x28] sm:$0xff]
        %v6796 = vld [vmem:[%s181 + $0x30] sm:$0xff]
        %v6797 = vld [vmem:[%s181 + $0x38] sm:$0xff]
        %v6798 = vld [vmem:[%s181 + $0x40] sm:$0xff]
        %v6799 = vld [vmem:[%s181 + $0x48] sm:$0xff]
        %v6800 = vld [vmem:[%s181 + $0x50] sm:$0xff]
        %v6801 = vld [vmem:[%s181 + $0x58] sm:$0xff]
        %v6802 = vld [vmem:[%s181 + $0x60] sm:$0xff]
        %v6803 = vld [vmem:[%s181 + $0x68] sm:$0xff]
        %v6804 = vld [vmem:[%s181 + $0x70] sm:$0xff]
        %v6805 = vld [vmem:[%s181 + $0x78] sm:$0xff]
        %v6806 = vld [vmem:[%s181 + $0x80] sm:$0xff]
        %v6807 = vld [vmem:[%s181 + $0x88] sm:$0xff]
        %v6808 = vld [vmem:[%s181 + $0x90] sm:$0xff]
        %v6809 = vld [vmem:[%s181 + $0x98] sm:$0xff]
        %v6810 = vld [vmem:[%s181 + $0xa0] sm:$0xff]
        %v6811 = vld [vmem:[%s181 + $0xa8] sm:$0xff]
        %v6812 = vld [vmem:[%s181 + $0xb0] sm:$0xff]
        %v6813 = vld [vmem:[%s181 + $0xb8] sm:$0xff]
        %v6814 = vld [vmem:[%s181 + $0xc0] sm:$0xff]
        %v6815 = vld [vmem:[%s181 + $0xc8] sm:$0xff]
        %v6816 = vld [vmem:[%s181 + $0xd0] sm:$0xff]
        %v6817 = vld [vmem:[%s181 + $0xd8] sm:$0xff]
        %v6818 = vld [vmem:[%s181 + $0xe0] sm:$0xff]
        %v6819 = vld [vmem:[%s181 + $0xe8] sm:$0xff]
        %v6820 = vld [vmem:[%s181 + $0xf0] sm:$0xff]
        %v6821 = vld [vmem:[%s181 + $0xf8] sm:$0xff]
        %s6822 = scalar_lea.vmem %s2, 512
        %v6823 = vld [vmem:[%s6822] sm:$0xff]
        %v6824 = vld [vmem:[%s6822 + $0x8] sm:$0xff]
        %v6825 = vld [vmem:[%s6822 + $0x10] sm:$0xff]
        %v6826 = vld [vmem:[%s6822 + $0x18] sm:$0xff]
        %v6827 = vld [vmem:[%s6822 + $0x20] sm:$0xff]
        %v6828 = vld [vmem:[%s6822 + $0x28] sm:$0xff]
        %v6829 = vld [vmem:[%s6822 + $0x30] sm:$0xff]
        %v6830 = vld [vmem:[%s6822 + $0x38] sm:$0xff]
        %v6831 = vld [vmem:[%s6822 + $0x40] sm:$0xff]
        %v6832 = vld [vmem:[%s6822 + $0x48] sm:$0xff]
        %v6833 = vld [vmem:[%s6822 + $0x50] sm:$0xff]
        %v6834 = vld [vmem:[%s6822 + $0x58] sm:$0xff]
        %v6835 = vld [vmem:[%s6822 + $0x60] sm:$0xff]
        %v6836 = vld [vmem:[%s6822 + $0x68] sm:$0xff]
        %v6837 = vld [vmem:[%s6822 + $0x70] sm:$0xff]
        %v6838 = vld [vmem:[%s6822 + $0x78] sm:$0xff]
        %v6839 = vld [vmem:[%s6822 + $0x80] sm:$0xff]
        %v6840 = vld [vmem:[%s6822 + $0x88] sm:$0xff]
        %v6841 = vld [vmem:[%s6822 + $0x90] sm:$0xff]
        %v6842 = vld [vmem:[%s6822 + $0x98] sm:$0xff]
        %v6843 = vld [vmem:[%s6822 + $0xa0] sm:$0xff]
        %v6844 = vld [vmem:[%s6822 + $0xa8] sm:$0xff]
        %v6845 = vld [vmem:[%s6822 + $0xb0] sm:$0xff]
        %v6846 = vld [vmem:[%s6822 + $0xb8] sm:$0xff]
        %v6847 = vld [vmem:[%s6822 + $0xc0] sm:$0xff]
        %v6848 = vld [vmem:[%s6822 + $0xc8] sm:$0xff]
        %v6849 = vld [vmem:[%s6822 + $0xd0] sm:$0xff]
        %v6850 = vld [vmem:[%s6822 + $0xd8] sm:$0xff]
        %v6851 = vld [vmem:[%s6822 + $0xe0] sm:$0xff]
        %v6852 = vld [vmem:[%s6822 + $0xe8] sm:$0xff]
        %v6853 = vld [vmem:[%s6822 + $0xf0] sm:$0xff]
        %v6854 = vld [vmem:[%s6822 + $0xf8] sm:$0xff]
        %v6887 = vunpack.c.l.b16 %v6823
        %v6888 = vunpack.c.h.b16 %v6823
        %v6889 = vunpack.c.l.b16 %v6824
        %v6890 = vunpack.c.h.b16 %v6824
        %v6891 = vunpack.c.l.b16 %v6825
        %v6892 = vunpack.c.h.b16 %v6825
        %v6893 = vunpack.c.l.b16 %v6826
        %v6894 = vunpack.c.h.b16 %v6826
        %v6895 = vunpack.c.l.b16 %v6827
        %v6896 = vunpack.c.h.b16 %v6827
        %v6897 = vunpack.c.l.b16 %v6828
        %v6898 = vunpack.c.h.b16 %v6828
        %v6899 = vunpack.c.l.b16 %v6829
        %v6900 = vunpack.c.h.b16 %v6829
        %v6901 = vunpack.c.l.b16 %v6830
        %v6902 = vunpack.c.h.b16 %v6830
        %v6903 = vunpack.c.l.b16 %v6831
        %v6904 = vunpack.c.h.b16 %v6831
        %v6905 = vunpack.c.l.b16 %v6832
        %v6906 = vunpack.c.h.b16 %v6832
        %v6907 = vunpack.c.l.b16 %v6833
        %v6908 = vunpack.c.h.b16 %v6833
        %v6909 = vunpack.c.l.b16 %v6834
        %v6910 = vunpack.c.h.b16 %v6834
        %v6911 = vunpack.c.l.b16 %v6835
        %v6912 = vunpack.c.h.b16 %v6835
        %v6913 = vunpack.c.l.b16 %v6836
        %v6914 = vunpack.c.h.b16 %v6836
        %v6915 = vunpack.c.l.b16 %v6837
        %v6916 = vunpack.c.h.b16 %v6837
        %v6917 = vunpack.c.l.b16 %v6838
        %v6918 = vunpack.c.h.b16 %v6838
        %v6919 = vunpack.c.l.b16 %v6839
        %v6920 = vunpack.c.h.b16 %v6839
        %v6921 = vunpack.c.l.b16 %v6840
        %v6922 = vunpack.c.h.b16 %v6840
        %v6923 = vunpack.c.l.b16 %v6841
        %v6924 = vunpack.c.h.b16 %v6841
        %v6925 = vunpack.c.l.b16 %v6842
        %v6926 = vunpack.c.h.b16 %v6842
        %v6927 = vunpack.c.l.b16 %v6843
        %v6928 = vunpack.c.h.b16 %v6843
        %v6929 = vunpack.c.l.b16 %v6844
        %v6930 = vunpack.c.h.b16 %v6844
        %v6931 = vunpack.c.l.b16 %v6845
        %v6932 = vunpack.c.h.b16 %v6845
        %v6933 = vunpack.c.l.b16 %v6846
        %v6934 = vunpack.c.h.b16 %v6846
        %v6935 = vunpack.c.l.b16 %v6847
        %v6936 = vunpack.c.h.b16 %v6847
        %v6937 = vunpack.c.l.b16 %v6848
        %v6938 = vunpack.c.h.b16 %v6848
        %v6939 = vunpack.c.l.b16 %v6849
        %v6940 = vunpack.c.h.b16 %v6849
        %v6941 = vunpack.c.l.b16 %v6850
        %v6942 = vunpack.c.h.b16 %v6850
        %v6943 = vunpack.c.l.b16 %v6851
        %v6944 = vunpack.c.h.b16 %v6851
        %v6945 = vunpack.c.l.b16 %v6852
        %v6946 = vunpack.c.h.b16 %v6852
        %v6947 = vunpack.c.l.b16 %v6853
        %v6948 = vunpack.c.h.b16 %v6853
        %v6949 = vunpack.c.l.b16 %v6854
        %v6950 = vunpack.c.h.b16 %v6854
        %v6951 = vpack.c.b16 %v6889, %v6887
        %v6952 = vpack.c.b16 %v6890, %v6888
        %v6953 = vpack.c.b16 %v6893, %v6891
        %v6954 = vpack.c.b16 %v6894, %v6892
        %v6955 = vpack.c.b16 %v6897, %v6895
        %v6956 = vpack.c.b16 %v6898, %v6896
        %v6957 = vpack.c.b16 %v6901, %v6899
        %v6958 = vpack.c.b16 %v6902, %v6900
        %v6959 = vpack.c.b16 %v6905, %v6903
        %v6960 = vpack.c.b16 %v6906, %v6904
        %v6961 = vpack.c.b16 %v6909, %v6907
        %v6962 = vpack.c.b16 %v6910, %v6908
        %v6963 = vpack.c.b16 %v6913, %v6911
        %v6964 = vpack.c.b16 %v6914, %v6912
        %v6965 = vpack.c.b16 %v6917, %v6915
        %v6966 = vpack.c.b16 %v6918, %v6916
        %v6967 = vpack.c.b16 %v6921, %v6919
        %v6968 = vpack.c.b16 %v6922, %v6920
        %v6969 = vpack.c.b16 %v6925, %v6923
        %v6970 = vpack.c.b16 %v6926, %v6924
        %v6971 = vpack.c.b16 %v6929, %v6927
        %v6972 = vpack.c.b16 %v6930, %v6928
        %v6973 = vpack.c.b16 %v6933, %v6931
        %v6974 = vpack.c.b16 %v6934, %v6932
        %v6975 = vpack.c.b16 %v6937, %v6935
        %v6976 = vpack.c.b16 %v6938, %v6936
        %v6977 = vpack.c.b16 %v6941, %v6939
        %v6978 = vpack.c.b16 %v6942, %v6940
        %v6979 = vpack.c.b16 %v6945, %v6943
        %v6980 = vpack.c.b16 %v6946, %v6944
        %v6981 = vpack.c.b16 %v6949, %v6947
        %v6982 = vpack.c.b16 %v6950, %v6948
        %7015 = vmatprep.subr.bf16.mxu0 %v6952
        %7016 = vmatpush1.bf16.msra.mxu0 %v6951
        %7017 = vmatprep.subr.bf16.mxu0 %v6954
        %7018 = vmatpush1.bf16.msra.mxu0 %v6953
        %7019 = vmatprep.subr.bf16.mxu0 %v6956
        %7020 = vmatpush1.bf16.msra.mxu0 %v6955
        %7021 = vmatprep.subr.bf16.mxu0 %v6958
        %7022 = vmatpush1.bf16.msra.mxu0 %v6957
        %7023 = vmatprep.subr.bf16.mxu0 %v6960
        %7024 = vmatpush1.bf16.msra.mxu0 %v6959
        %7025 = vmatprep.subr.bf16.mxu0 %v6962
        %7026 = vmatpush1.bf16.msra.mxu0 %v6961
        %7027 = vmatprep.subr.bf16.mxu0 %v6964
        %7028 = vmatpush1.bf16.msra.mxu0 %v6963
        %7029 = vmatprep.subr.bf16.mxu0 %v6966
        %7030 = vmatpush1.bf16.msra.mxu0 %v6965
        %7031 = vmatprep.subr.bf16.mxu0 %v6968
        %7032 = vmatpush1.bf16.msra.mxu0 %v6967
        %7033 = vmatprep.subr.bf16.mxu0 %v6970
        %7034 = vmatpush1.bf16.msra.mxu0 %v6969
        %7035 = vmatprep.subr.bf16.mxu0 %v6972
        %7036 = vmatpush1.bf16.msra.mxu0 %v6971
        %7037 = vmatprep.subr.bf16.mxu0 %v6974
        %7038 = vmatpush1.bf16.msra.mxu0 %v6973
        %7039 = vmatprep.subr.bf16.mxu0 %v6976
        %7040 = vmatpush1.bf16.msra.mxu0 %v6975
        %7041 = vmatprep.subr.bf16.mxu0 %v6978
        %7042 = vmatpush1.bf16.msra.mxu0 %v6977
        %7043 = vmatprep.subr.bf16.mxu0 %v6980
        %7044 = vmatpush1.bf16.msra.mxu0 %v6979
        %7045 = vmatprep.subr.bf16.mxu0 %v6982
        %7046 = vmatpush1.bf16.msra.mxu0 %v6981
        %7047 = vmatprep.mubr.bf16.mxu0 %v6791
        %7048 = vmatmul.mubr.bf16.gmra.mrb[0].mxu0 %v6790
        %v7049 = vpop.f32.mrb[0].mxu0
        %v7050 = vadd.f32 0.0, %v7049
        %v7051 = vpop.f32.mrb[0].mxu0
        %v7052 = vadd.f32 0.0, %v7051
        %v7053 = vpop.f32.mrb[0].mxu0
        %v7054 = vadd.f32 0.0, %v7053
        %v7055 = vpop.f32.mrb[0].mxu0
        %v7056 = vadd.f32 0.0, %v7055
        %7057 = vmatprep.mubr.bf16.mxu0 %v6793
        %7058 = vmatmul.mubr.bf16.gmra.mrb[0].mxu0 %v6792
        %v7059 = vpop.f32.mrb[0].mxu0
        %v7060 = vadd.f32 0.0, %v7059
        %v7061 = vpop.f32.mrb[0].mxu0
        %v7062 = vadd.f32 0.0, %v7061
        %v7063 = vpop.f32.mrb[0].mxu0
        %v7064 = vadd.f32 0.0, %v7063
        %v7065 = vpop.f32.mrb[0].mxu0
        %v7066 = vadd.f32 0.0, %v7065
        %7067 = vmatprep.mubr.bf16.mxu0 %v6795
        %7068 = vmatmul.mubr.bf16.gmra.mrb[0].mxu0 %v6794
        %v7069 = vpop.f32.mrb[0].mxu0
        %v7070 = vadd.f32 0.0, %v7069
        %v7071 = vpop.f32.mrb[0].mxu0
        %v7072 = vadd.f32 0.0, %v7071
        %v7073 = vpop.f32.mrb[0].mxu0
        %v7074 = vadd.f32 0.0, %v7073
        %v7075 = vpop.f32.mrb[0].mxu0
        %v7076 = vadd.f32 0.0, %v7075
        %7077 = vmatprep.mubr.bf16.mxu0 %v6797
        %7078 = vmatmul.mubr.bf16.gmra.mrb[0].mxu0 %v6796
        %v7079 = vpop.f32.mrb[0].mxu0
        %v7080 = vadd.f32 0.0, %v7079
        %v7081 = vpop.f32.mrb[0].mxu0
        %v7082 = vadd.f32 0.0, %v7081
        %v7083 = vpop.f32.mrb[0].mxu0
        %v7084 = vadd.f32 0.0, %v7083
        %v7085 = vpop.f32.mrb[0].mxu0
        %v7086 = vadd.f32 0.0, %v7085
        %7087 = vmatprep.mubr.bf16.mxu0 %v6799
        %7088 = vmatmul.mubr.bf16.gmra.mrb[0].mxu0 %v6798
        %v7089 = vpop.f32.mrb[0].mxu0
        %v7090 = vadd.f32 0.0, %v7089
        %v7091 = vpop.f32.mrb[0].mxu0
        %v7092 = vadd.f32 0.0, %v7091
        %v7093 = vpop.f32.mrb[0].mxu0
        %v7094 = vadd.f32 0.0, %v7093
        %v7095 = vpop.f32.mrb[0].mxu0
        %v7096 = vadd.f32 0.0, %v7095
        %7097 = vmatprep.mubr.bf16.mxu0 %v6801
        %7098 = vmatmul.mubr.bf16.gmra.mrb[0].mxu0 %v6800
        %v7099 = vpop.f32.mrb[0].mxu0
        %v7100 = vadd.f32 0.0, %v7099
        %v7101 = vpop.f32.mrb[0].mxu0
        %v7102 = vadd.f32 0.0, %v7101
        %v7103 = vpop.f32.mrb[0].mxu0
        %v7104 = vadd.f32 0.0, %v7103
        %v7105 = vpop.f32.mrb[0].mxu0
        %v7106 = vadd.f32 0.0, %v7105
        %7107 = vmatprep.mubr.bf16.mxu0 %v6803
        %7108 = vmatmul.mubr.bf16.gmra.mrb[0].mxu0 %v6802
        %v7109 = vpop.f32.mrb[0].mxu0
        %v7110 = vadd.f32 0.0, %v7109
        %v7111 = vpop.f32.mrb[0].mxu0
        %v7112 = vadd.f32 0.0, %v7111
        %v7113 = vpop.f32.mrb[0].mxu0
        %v7114 = vadd.f32 0.0, %v7113
        %v7115 = vpop.f32.mrb[0].mxu0
        %v7116 = vadd.f32 0.0, %v7115
        %7117 = vmatprep.mubr.bf16.mxu0 %v6805
        %7118 = vmatmul.mubr.bf16.gmra.mrb[0].mxu0 %v6804
        %v7119 = vpop.f32.mrb[0].mxu0
        %v7120 = vadd.f32 0.0, %v7119
        %v7121 = vpop.f32.mrb[0].mxu0
        %v7122 = vadd.f32 0.0, %v7121
        %v7123 = vpop.f32.mrb[0].mxu0
        %v7124 = vadd.f32 0.0, %v7123
        %v7125 = vpop.f32.mrb[0].mxu0
        %v7126 = vadd.f32 0.0, %v7125
        %7127 = vmatprep.mubr.bf16.mxu0 %v6807
        %7128 = vmatmul.mubr.bf16.gmra.mrb[0].mxu0 %v6806
        %v7129 = vpop.f32.mrb[0].mxu0
        %v7130 = vadd.f32 0.0, %v7129
        %v7131 = vpop.f32.mrb[0].mxu0
        %v7132 = vadd.f32 0.0, %v7131
        %v7133 = vpop.f32.mrb[0].mxu0
        %v7134 = vadd.f32 0.0, %v7133
        %v7135 = vpop.f32.mrb[0].mxu0
        %v7136 = vadd.f32 0.0, %v7135
        %7137 = vmatprep.mubr.bf16.mxu0 %v6809
        %7138 = vmatmul.mubr.bf16.gmra.mrb[0].mxu0 %v6808
        %v7139 = vpop.f32.mrb[0].mxu0
        %v7140 = vadd.f32 0.0, %v7139
        %v7141 = vpop.f32.mrb[0].mxu0
        %v7142 = vadd.f32 0.0, %v7141
        %v7143 = vpop.f32.mrb[0].mxu0
        %v7144 = vadd.f32 0.0, %v7143
        %v7145 = vpop.f32.mrb[0].mxu0
        %v7146 = vadd.f32 0.0, %v7145
        %7147 = vmatprep.mubr.bf16.mxu0 %v6811
        %7148 = vmatmul.mubr.bf16.gmra.mrb[0].mxu0 %v6810
        %v7149 = vpop.f32.mrb[0].mxu0
        %v7150 = vadd.f32 0.0, %v7149
        %v7151 = vpop.f32.mrb[0].mxu0
        %v7152 = vadd.f32 0.0, %v7151
        %v7153 = vpop.f32.mrb[0].mxu0
        %v7154 = vadd.f32 0.0, %v7153
        %v7155 = vpop.f32.mrb[0].mxu0
        %v7156 = vadd.f32 0.0, %v7155
        %7157 = vmatprep.mubr.bf16.mxu0 %v6813
        %7158 = vmatmul.mubr.bf16.gmra.mrb[0].mxu0 %v6812
        %v7159 = vpop.f32.mrb[0].mxu0
        %v7160 = vadd.f32 0.0, %v7159
        %v7161 = vpop.f32.mrb[0].mxu0
        %v7162 = vadd.f32 0.0, %v7161
        %v7163 = vpop.f32.mrb[0].mxu0
        %v7164 = vadd.f32 0.0, %v7163
        %v7165 = vpop.f32.mrb[0].mxu0
        %v7166 = vadd.f32 0.0, %v7165
        %7167 = vmatprep.mubr.bf16.mxu0 %v6815
        %7168 = vmatmul.mubr.bf16.gmra.mrb[0].mxu0 %v6814
        %v7169 = vpop.f32.mrb[0].mxu0
        %v7170 = vadd.f32 0.0, %v7169
        %v7171 = vpop.f32.mrb[0].mxu0
        %v7172 = vadd.f32 0.0, %v7171
        %v7173 = vpop.f32.mrb[0].mxu0
        %v7174 = vadd.f32 0.0, %v7173
        %v7175 = vpop.f32.mrb[0].mxu0
        %v7176 = vadd.f32 0.0, %v7175
        %7177 = vmatprep.mubr.bf16.mxu0 %v6817
        %7178 = vmatmul.mubr.bf16.gmra.mrb[0].mxu0 %v6816
        %v7179 = vpop.f32.mrb[0].mxu0
        %v7180 = vadd.f32 0.0, %v7179
        %v7181 = vpop.f32.mrb[0].mxu0
        %v7182 = vadd.f32 0.0, %v7181
        %v7183 = vpop.f32.mrb[0].mxu0
        %v7184 = vadd.f32 0.0, %v7183
        %v7185 = vpop.f32.mrb[0].mxu0
        %v7186 = vadd.f32 0.0, %v7185
        %7187 = vmatprep.mubr.bf16.mxu0 %v6819
        %7188 = vmatmul.mubr.bf16.gmra.mrb[0].mxu0 %v6818
        %v7189 = vpop.f32.mrb[0].mxu0
        %v7190 = vadd.f32 0.0, %v7189
        %v7191 = vpop.f32.mrb[0].mxu0
        %v7192 = vadd.f32 0.0, %v7191
        %v7193 = vpop.f32.mrb[0].mxu0
        %v7194 = vadd.f32 0.0, %v7193
        %v7195 = vpop.f32.mrb[0].mxu0
        %v7196 = vadd.f32 0.0, %v7195
        %7197 = vmatprep.mubr.bf16.mxu0 %v6821
        %7198 = vmatmul.mubr.bf16.gmra.mrb[0].mxu0 %v6820
        %v7199 = vpop.f32.mrb[0].mxu0
        %v7200 = vadd.f32 0.0, %v7199
        %v7201 = vpop.f32.mrb[0].mxu0
        %v7202 = vadd.f32 0.0, %v7201
        %v7203 = vpop.f32.mrb[0].mxu0
        %v7204 = vadd.f32 0.0, %v7203
        %v7205 = vpop.f32.mrb[0].mxu0
        %v7206 = vadd.f32 0.0, %v7205
        %7207 = vdwg.mxu0
        %v7208 = vadd.f32 %v6632, %v7050
        %v7209 = vadd.f32 %v6634, %v7052
        %v7210 = vadd.f32 %v6636, %v7054
        %v7211 = vadd.f32 %v6638, %v7056
        %v7212 = vadd.f32 %v6642, %v7060
        %v7213 = vadd.f32 %v6644, %v7062
        %v7214 = vadd.f32 %v6646, %v7064
        %v7215 = vadd.f32 %v6648, %v7066
        %v7216 = vadd.f32 %v6652, %v7070
        %v7217 = vadd.f32 %v6654, %v7072
        %v7218 = vadd.f32 %v6656, %v7074
        %v7219 = vadd.f32 %v6658, %v7076
        %v7220 = vadd.f32 %v6662, %v7080
        %v7221 = vadd.f32 %v6664, %v7082
        %v7222 = vadd.f32 %v6666, %v7084
        %v7223 = vadd.f32 %v6668, %v7086
        %v7224 = vadd.f32 %v6672, %v7090
        %v7225 = vadd.f32 %v6674, %v7092
        %v7226 = vadd.f32 %v6676, %v7094
        %v7227 = vadd.f32 %v6678, %v7096
        %v7228 = vadd.f32 %v6682, %v7100
        %v7229 = vadd.f32 %v6684, %v7102
        %v7230 = vadd.f32 %v6686, %v7104
        %v7231 = vadd.f32 %v6688, %v7106
        %v7232 = vadd.f32 %v6692, %v7110
        %v7233 = vadd.f32 %v6694, %v7112
        %v7234 = vadd.f32 %v6696, %v7114
        %v7235 = vadd.f32 %v6698, %v7116
        %v7236 = vadd.f32 %v6702, %v7120
        %v7237 = vadd.f32 %v6704, %v7122
        %v7238 = vadd.f32 %v6706, %v7124
        %v7239 = vadd.f32 %v6708, %v7126
        %v7240 = vadd.f32 %v6712, %v7130
        %v7241 = vadd.f32 %v6714, %v7132
        %v7242 = vadd.f32 %v6716, %v7134
        %v7243 = vadd.f32 %v6718, %v7136
        %v7244 = vadd.f32 %v6722, %v7140
        %v7245 = vadd.f32 %v6724, %v7142
        %v7246 = vadd.f32 %v6726, %v7144
        %v7247 = vadd.f32 %v6728, %v7146
        %v7248 = vadd.f32 %v6732, %v7150
        %v7249 = vadd.f32 %v6734, %v7152
        %v7250 = vadd.f32 %v6736, %v7154
        %v7251 = vadd.f32 %v6738, %v7156
        %v7252 = vadd.f32 %v6742, %v7160
        %v7253 = vadd.f32 %v6744, %v7162
        %v7254 = vadd.f32 %v6746, %v7164
        %v7255 = vadd.f32 %v6748, %v7166
        %v7256 = vadd.f32 %v6752, %v7170
        %v7257 = vadd.f32 %v6754, %v7172
        %v7258 = vadd.f32 %v6756, %v7174
        %v7259 = vadd.f32 %v6758, %v7176
        %v7260 = vadd.f32 %v6762, %v7180
        %v7261 = vadd.f32 %v6764, %v7182
        %v7262 = vadd.f32 %v6766, %v7184
        %v7263 = vadd.f32 %v6768, %v7186
        %v7264 = vadd.f32 %v6772, %v7190
        %v7265 = vadd.f32 %v6774, %v7192
        %v7266 = vadd.f32 %v6776, %v7194
        %v7267 = vadd.f32 %v6778, %v7196
        %v7268 = vadd.f32 %v6782, %v7200
        %v7269 = vadd.f32 %v6784, %v7202
        %v7270 = vadd.f32 %v6786, %v7204
        %v7271 = vadd.f32 %v6788, %v7206
        %7272 = vst [vmem:[#allocation3] sm:$0xff] %v7208
        %7273 = vst [vmem:[#allocation3 + $0x8] sm:$0xff] %v7209
        %7274 = vst [vmem:[#allocation3 + $0x10] sm:$0xff] %v7210
        %7275 = vst [vmem:[#allocation3 + $0x18] sm:$0xff] %v7211
        %7276 = vst [vmem:[#allocation3 + $0x20] sm:$0xff] %v7212
        %7277 = vst [vmem:[#allocation3 + $0x28] sm:$0xff] %v7213
        %7278 = vst [vmem:[#allocation3 + $0x30] sm:$0xff] %v7214
        %7279 = vst [vmem:[#allocation3 + $0x38] sm:$0xff] %v7215
        %7280 = vst [vmem:[#allocation3 + $0x40] sm:$0xff] %v7216
        %7281 = vst [vmem:[#allocation3 + $0x48] sm:$0xff] %v7217
        %7282 = vst [vmem:[#allocation3 + $0x50] sm:$0xff] %v7218
        %7283 = vst [vmem:[#allocation3 + $0x58] sm:$0xff] %v7219
        %7284 = vst [vmem:[#allocation3 + $0x60] sm:$0xff] %v7220
        %7285 = vst [vmem:[#allocation3 + $0x68] sm:$0xff] %v7221
        %7286 = vst [vmem:[#allocation3 + $0x70] sm:$0xff] %v7222
        %7287 = vst [vmem:[#allocation3 + $0x78] sm:$0xff] %v7223
        %7288 = vst [vmem:[#allocation3 + $0x80] sm:$0xff] %v7224
        %7289 = vst [vmem:[#allocation3 + $0x88] sm:$0xff] %v7225
        %7290 = vst [vmem:[#allocation3 + $0x90] sm:$0xff] %v7226
        %7291 = vst [vmem:[#allocation3 + $0x98] sm:$0xff] %v7227
        %7292 = vst [vmem:[#allocation3 + $0xa0] sm:$0xff] %v7228
        %7293 = vst [vmem:[#allocation3 + $0xa8] sm:$0xff] %v7229
        %7294 = vst [vmem:[#allocation3 + $0xb0] sm:$0xff] %v7230
        %7295 = vst [vmem:[#allocation3 + $0xb8] sm:$0xff] %v7231
        %7296 = vst [vmem:[#allocation3 + $0xc0] sm:$0xff] %v7232
        %7297 = vst [vmem:[#allocation3 + $0xc8] sm:$0xff] %v7233
        %7298 = vst [vmem:[#allocation3 + $0xd0] sm:$0xff] %v7234
        %7299 = vst [vmem:[#allocation3 + $0xd8] sm:$0xff] %v7235
        %7300 = vst [vmem:[#allocation3 + $0xe0] sm:$0xff] %v7236
        %7301 = vst [vmem:[#allocation3 + $0xe8] sm:$0xff] %v7237
        %7302 = vst [vmem:[#allocation3 + $0xf0] sm:$0xff] %v7238
        %7303 = vst [vmem:[#allocation3 + $0xf8] sm:$0xff] %v7239
        %7304 = vst [vmem:[#allocation3 + $0x100] sm:$0xff] %v7240
        %7305 = vst [vmem:[#allocation3 + $0x108] sm:$0xff] %v7241
        %7306 = vst [vmem:[#allocation3 + $0x110] sm:$0xff] %v7242
        %7307 = vst [vmem:[#allocation3 + $0x118] sm:$0xff] %v7243
        %7308 = vst [vmem:[#allocation3 + $0x120] sm:$0xff] %v7244
        %7309 = vst [vmem:[#allocation3 + $0x128] sm:$0xff] %v7245
        %7310 = vst [vmem:[#allocation3 + $0x130] sm:$0xff] %v7246
        %7311 = vst [vmem:[#allocation3 + $0x138] sm:$0xff] %v7247
        %7312 = vst [vmem:[#allocation3 + $0x140] sm:$0xff] %v7248
        %7313 = vst [vmem:[#allocation3 + $0x148] sm:$0xff] %v7249
        %7314 = vst [vmem:[#allocation3 + $0x150] sm:$0xff] %v7250
        %7315 = vst [vmem:[#allocation3 + $0x158] sm:$0xff] %v7251
        %7316 = vst [vmem:[#allocation3 + $0x160] sm:$0xff] %v7252
        %7317 = vst [vmem:[#allocation3 + $0x168] sm:$0xff] %v7253
        %7318 = vst [vmem:[#allocation3 + $0x170] sm:$0xff] %v7254
        %7319 = vst [vmem:[#allocation3 + $0x178] sm:$0xff] %v7255
        %7320 = vst [vmem:[#allocation3 + $0x180] sm:$0xff] %v7256
        %7321 = vst [vmem:[#allocation3 + $0x188] sm:$0xff] %v7257
        %7322 = vst [vmem:[#allocation3 + $0x190] sm:$0xff] %v7258
        %7323 = vst [vmem:[#allocation3 + $0x198] sm:$0xff] %v7259
        %7324 = vst [vmem:[#allocation3 + $0x1a0] sm:$0xff] %v7260
        %7325 = vst [vmem:[#allocation3 + $0x1a8] sm:$0xff] %v7261
        %7326 = vst [vmem:[#allocation3 + $0x1b0] sm:$0xff] %v7262
        %7327 = vst [vmem:[#allocation3 + $0x1b8] sm:$0xff] %v7263
        %7328 = vst [vmem:[#allocation3 + $0x1c0] sm:$0xff] %v7264
        %7329 = vst [vmem:[#allocation3 + $0x1c8] sm:$0xff] %v7265
        %7330 = vst [vmem:[#allocation3 + $0x1d0] sm:$0xff] %v7266
        %7331 = vst [vmem:[#allocation3 + $0x1d8] sm:$0xff] %v7267
        %7332 = vst [vmem:[#allocation3 + $0x1e0] sm:$0xff] %v7268
        %7333 = vst [vmem:[#allocation3 + $0x1e8] sm:$0xff] %v7269
        %7334 = vst [vmem:[#allocation3 + $0x1f0] sm:$0xff] %v7270
        %7335 = vst [vmem:[#allocation3 + $0x1f8] sm:$0xff] %v7271
        %v7336 = vld [vmem:[%s487] sm:$0xff]
        %v7337 = vld [vmem:[%s487 + $0x8] sm:$0xff]
        %v7338 = vld [vmem:[%s487 + $0x10] sm:$0xff]
        %v7339 = vld [vmem:[%s487 + $0x18] sm:$0xff]
        %v7340 = vld [vmem:[%s487 + $0x20] sm:$0xff]
        %v7341 = vld [vmem:[%s487 + $0x28] sm:$0xff]
        %v7342 = vld [vmem:[%s487 + $0x30] sm:$0xff]
        %v7343 = vld [vmem:[%s487 + $0x38] sm:$0xff]
        %v7344 = vld [vmem:[%s487 + $0x40] sm:$0xff]
        %v7345 = vld [vmem:[%s487 + $0x48] sm:$0xff]
        %v7346 = vld [vmem:[%s487 + $0x50] sm:$0xff]
        %v7347 = vld [vmem:[%s487 + $0x58] sm:$0xff]
        %v7348 = vld [vmem:[%s487 + $0x60] sm:$0xff]
        %v7349 = vld [vmem:[%s487 + $0x68] sm:$0xff]
        %v7350 = vld [vmem:[%s487 + $0x70] sm:$0xff]
        %v7351 = vld [vmem:[%s487 + $0x78] sm:$0xff]
        %v7352 = vld [vmem:[%s487 + $0x80] sm:$0xff]
        %v7353 = vld [vmem:[%s487 + $0x88] sm:$0xff]
        %v7354 = vld [vmem:[%s487 + $0x90] sm:$0xff]
        %v7355 = vld [vmem:[%s487 + $0x98] sm:$0xff]
        %v7356 = vld [vmem:[%s487 + $0xa0] sm:$0xff]
        %v7357 = vld [vmem:[%s487 + $0xa8] sm:$0xff]
        %v7358 = vld [vmem:[%s487 + $0xb0] sm:$0xff]
        %v7359 = vld [vmem:[%s487 + $0xb8] sm:$0xff]
        %v7360 = vld [vmem:[%s487 + $0xc0] sm:$0xff]
        %v7361 = vld [vmem:[%s487 + $0xc8] sm:$0xff]
        %v7362 = vld [vmem:[%s487 + $0xd0] sm:$0xff]
        %v7363 = vld [vmem:[%s487 + $0xd8] sm:$0xff]
        %v7364 = vld [vmem:[%s487 + $0xe0] sm:$0xff]
        %v7365 = vld [vmem:[%s487 + $0xe8] sm:$0xff]
        %v7366 = vld [vmem:[%s487 + $0xf0] sm:$0xff]
        %v7367 = vld [vmem:[%s487 + $0xf8] sm:$0xff]
        %s7368 = scalar_lea.vmem %s2, 768
        %v7369 = vld [vmem:[%s7368] sm:$0xff]
        %v7370 = vld [vmem:[%s7368 + $0x8] sm:$0xff]
        %v7371 = vld [vmem:[%s7368 + $0x10] sm:$0xff]
        %v7372 = vld [vmem:[%s7368 + $0x18] sm:$0xff]
        %v7373 = vld [vmem:[%s7368 + $0x20] sm:$0xff]
        %v7374 = vld [vmem:[%s7368 + $0x28] sm:$0xff]
        %v7375 = vld [vmem:[%s7368 + $0x30] sm:$0xff]
        %v7376 = vld [vmem:[%s7368 + $0x38] sm:$0xff]
        %v7377 = vld [vmem:[%s7368 + $0x40] sm:$0xff]
        %v7378 = vld [vmem:[%s7368 + $0x48] sm:$0xff]
        %v7379 = vld [vmem:[%s7368 + $0x50] sm:$0xff]
        %v7380 = vld [vmem:[%s7368 + $0x58] sm:$0xff]
        %v7381 = vld [vmem:[%s7368 + $0x60] sm:$0xff]
        %v7382 = vld [vmem:[%s7368 + $0x68] sm:$0xff]
        %v7383 = vld [vmem:[%s7368 + $0x70] sm:$0xff]
        %v7384 = vld [vmem:[%s7368 + $0x78] sm:$0xff]
        %v7385 = vld [vmem:[%s7368 + $0x80] sm:$0xff]
        %v7386 = vld [vmem:[%s7368 + $0x88] sm:$0xff]
        %v7387 = vld [vmem:[%s7368 + $0x90] sm:$0xff]
        %v7388 = vld [vmem:[%s7368 + $0x98] sm:$0xff]
        %v7389 = vld [vmem:[%s7368 + $0xa0] sm:$0xff]
        %v7390 = vld [vmem:[%s7368 + $0xa8] sm:$0xff]
        %v7391 = vld [vmem:[%s7368 + $0xb0] sm:$0xff]
        %v7392 = vld [vmem:[%s7368 + $0xb8] sm:$0xff]
        %v7393 = vld [vmem:[%s7368 + $0xc0] sm:$0xff]
        %v7394 = vld [vmem:[%s7368 + $0xc8] sm:$0xff]
        %v7395 = vld [vmem:[%s7368 + $0xd0] sm:$0xff]
        %v7396 = vld [vmem:[%s7368 + $0xd8] sm:$0xff]
        %v7397 = vld [vmem:[%s7368 + $0xe0] sm:$0xff]
        %v7398 = vld [vmem:[%s7368 + $0xe8] sm:$0xff]
        %v7399 = vld [vmem:[%s7368 + $0xf0] sm:$0xff]
        %v7400 = vld [vmem:[%s7368 + $0xf8] sm:$0xff]
        %v7401 = vld [vmem:[%s552] sm:$0xff]
        %v7402 = vld [vmem:[%s552 + $0x8] sm:$0xff]
        %v7403 = vld [vmem:[%s552 + $0x10] sm:$0xff]
        %v7404 = vld [vmem:[%s552 + $0x18] sm:$0xff]
        %v7405 = vld [vmem:[%s552 + $0x20] sm:$0xff]
        %v7406 = vld [vmem:[%s552 + $0x28] sm:$0xff]
        %v7407 = vld [vmem:[%s552 + $0x30] sm:$0xff]
        %v7408 = vld [vmem:[%s552 + $0x38] sm:$0xff]
        %v7409 = vld [vmem:[%s552 + $0x40] sm:$0xff]
        %v7410 = vld [vmem:[%s552 + $0x48] sm:$0xff]
        %v7411 = vld [vmem:[%s552 + $0x50] sm:$0xff]
        %v7412 = vld [vmem:[%s552 + $0x58] sm:$0xff]
        %v7413 = vld [vmem:[%s552 + $0x60] sm:$0xff]
        %v7414 = vld [vmem:[%s552 + $0x68] sm:$0xff]
        %v7415 = vld [vmem:[%s552 + $0x70] sm:$0xff]
        %v7416 = vld [vmem:[%s552 + $0x78] sm:$0xff]
        %v7417 = vld [vmem:[%s552 + $0x80] sm:$0xff]
        %v7418 = vld [vmem:[%s552 + $0x88] sm:$0xff]
        %v7419 = vld [vmem:[%s552 + $0x90] sm:$0xff]
        %v7420 = vld [vmem:[%s552 + $0x98] sm:$0xff]
        %v7421 = vld [vmem:[%s552 + $0xa0] sm:$0xff]
        %v7422 = vld [vmem:[%s552 + $0xa8] sm:$0xff]
        %v7423 = vld [vmem:[%s552 + $0xb0] sm:$0xff]
        %v7424 = vld [vmem:[%s552 + $0xb8] sm:$0xff]
        %v7425 = vld [vmem:[%s552 + $0xc0] sm:$0xff]
        %v7426 = vld [vmem:[%s552 + $0xc8] sm:$0xff]
        %v7427 = vld [vmem:[%s552 + $0xd0] sm:$0xff]
        %v7428 = vld [vmem:[%s552 + $0xd8] sm:$0xff]
        %v7429 = vld [vmem:[%s552 + $0xe0] sm:$0xff]
        %v7430 = vld [vmem:[%s552 + $0xe8] sm:$0xff]
        %v7431 = vld [vmem:[%s552 + $0xf0] sm:$0xff]
        %v7432 = vld [vmem:[%s552 + $0xf8] sm:$0xff]
        %s7433 = scalar_lea.vmem %s2, 1024
        %v7434 = vld [vmem:[%s7433] sm:$0xff]
        %v7435 = vld [vmem:[%s7433 + $0x8] sm:$0xff]
        %v7436 = vld [vmem:[%s7433 + $0x10] sm:$0xff]
        %v7437 = vld [vmem:[%s7433 + $0x18] sm:$0xff]
        %v7438 = vld [vmem:[%s7433 + $0x20] sm:$0xff]
        %v7439 = vld [vmem:[%s7433 + $0x28] sm:$0xff]
        %v7440 = vld [vmem:[%s7433 + $0x30] sm:$0xff]
        %v7441 = vld [vmem:[%s7433 + $0x38] sm:$0xff]
        %v7442 = vld [vmem:[%s7433 + $0x40] sm:$0xff]
        %v7443 = vld [vmem:[%s7433 + $0x48] sm:$0xff]
        %v7444 = vld [vmem:[%s7433 + $0x50] sm:$0xff]
        %v7445 = vld [vmem:[%s7433 + $0x58] sm:$0xff]
        %v7446 = vld [vmem:[%s7433 + $0x60] sm:$0xff]
        %v7447 = vld [vmem:[%s7433 + $0x68] sm:$0xff]
        %v7448 = vld [vmem:[%s7433 + $0x70] sm:$0xff]
        %v7449 = vld [vmem:[%s7433 + $0x78] sm:$0xff]
        %v7450 = vld [vmem:[%s7433 + $0x80] sm:$0xff]
        %v7451 = vld [vmem:[%s7433 + $0x88] sm:$0xff]
        %v7452 = vld [vmem:[%s7433 + $0x90] sm:$0xff]
        %v7453 = vld [vmem:[%s7433 + $0x98] sm:$0xff]
        %v7454 = vld [vmem:[%s7433 + $0xa0] sm:$0xff]
        %v7455 = vld [vmem:[%s7433 + $0xa8] sm:$0xff]
        %v7456 = vld [vmem:[%s7433 + $0xb0] sm:$0xff]
        %v7457 = vld [vmem:[%s7433 + $0xb8] sm:$0xff]
        %v7458 = vld [vmem:[%s7433 + $0xc0] sm:$0xff]
        %v7459 = vld [vmem:[%s7433 + $0xc8] sm:$0xff]
        %v7460 = vld [vmem:[%s7433 + $0xd0] sm:$0xff]
        %v7461 = vld [vmem:[%s7433 + $0xd8] sm:$0xff]
        %v7462 = vld [vmem:[%s7433 + $0xe0] sm:$0xff]
        %v7463 = vld [vmem:[%s7433 + $0xe8] sm:$0xff]
        %v7464 = vld [vmem:[%s7433 + $0xf0] sm:$0xff]
        %v7465 = vld [vmem:[%s7433 + $0xf8] sm:$0xff]
        %v7498 = vunpack.c.l.b16 %v7434
        %v7499 = vunpack.c.h.b16 %v7434
        %v7500 = vunpack.c.l.b16 %v7435
        %v7501 = vunpack.c.h.b16 %v7435
        %v7502 = vunpack.c.l.b16 %v7436
        %v7503 = vunpack.c.h.b16 %v7436
        %v7504 = vunpack.c.l.b16 %v7437
        %v7505 = vunpack.c.h.b16 %v7437
        %v7506 = vunpack.c.l.b16 %v7438
        %v7507 = vunpack.c.h.b16 %v7438
        %v7508 = vunpack.c.l.b16 %v7439
        %v7509 = vunpack.c.h.b16 %v7439
        %v7510 = vunpack.c.l.b16 %v7440
        %v7511 = vunpack.c.h.b16 %v7440
        %v7512 = vunpack.c.l.b16 %v7441
        %v7513 = vunpack.c.h.b16 %v7441
        %v7514 = vunpack.c.l.b16 %v7442
        %v7515 = vunpack.c.h.b16 %v7442
        %v7516 = vunpack.c.l.b16 %v7443
        %v7517 = vunpack.c.h.b16 %v7443
        %v7518 = vunpack.c.l.b16 %v7444
        %v7519 = vunpack.c.h.b16 %v7444
        %v7520 = vunpack.c.l.b16 %v7445
        %v7521 = vunpack.c.h.b16 %v7445
        %v7522 = vunpack.c.l.b16 %v7446
        %v7523 = vunpack.c.h.b16 %v7446
        %v7524 = vunpack.c.l.b16 %v7447
        %v7525 = vunpack.c.h.b16 %v7447
        %v7526 = vunpack.c.l.b16 %v7448
        %v7527 = vunpack.c.h.b16 %v7448
        %v7528 = vunpack.c.l.b16 %v7449
        %v7529 = vunpack.c.h.b16 %v7449
        %v7530 = vunpack.c.l.b16 %v7450
        %v7531 = vunpack.c.h.b16 %v7450
        %v7532 = vunpack.c.l.b16 %v7451
        %v7533 = vunpack.c.h.b16 %v7451
        %v7534 = vunpack.c.l.b16 %v7452
        %v7535 = vunpack.c.h.b16 %v7452
        %v7536 = vunpack.c.l.b16 %v7453
        %v7537 = vunpack.c.h.b16 %v7453
        %v7538 = vunpack.c.l.b16 %v7454
        %v7539 = vunpack.c.h.b16 %v7454
        %v7540 = vunpack.c.l.b16 %v7455
        %v7541 = vunpack.c.h.b16 %v7455
        %v7542 = vunpack.c.l.b16 %v7456
        %v7543 = vunpack.c.h.b16 %v7456
        %v7544 = vunpack.c.l.b16 %v7457
        %v7545 = vunpack.c.h.b16 %v7457
        %v7546 = vunpack.c.l.b16 %v7458
        %v7547 = vunpack.c.h.b16 %v7458
        %v7548 = vunpack.c.l.b16 %v7459
        %v7549 = vunpack.c.h.b16 %v7459
        %v7550 = vunpack.c.l.b16 %v7460
        %v7551 = vunpack.c.h.b16 %v7460
        %v7552 = vunpack.c.l.b16 %v7461
        %v7553 = vunpack.c.h.b16 %v7461
        %v7554 = vunpack.c.l.b16 %v7462
        %v7555 = vunpack.c.h.b16 %v7462
        %v7556 = vunpack.c.l.b16 %v7463
        %v7557 = vunpack.c.h.b16 %v7463
        %v7558 = vunpack.c.l.b16 %v7464
        %v7559 = vunpack.c.h.b16 %v7464
        %v7560 = vunpack.c.l.b16 %v7465
        %v7561 = vunpack.c.h.b16 %v7465
        %v7562 = vpack.c.b16 %v7500, %v7498
        %v7563 = vpack.c.b16 %v7501, %v7499
        %v7564 = vpack.c.b16 %v7504, %v7502
        %v7565 = vpack.c.b16 %v7505, %v7503
        %v7566 = vpack.c.b16 %v7508, %v7506
        %v7567 = vpack.c.b16 %v7509, %v7507
        %v7568 = vpack.c.b16 %v7512, %v7510
        %v7569 = vpack.c.b16 %v7513, %v7511
        %v7570 = vpack.c.b16 %v7516, %v7514
        %v7571 = vpack.c.b16 %v7517, %v7515
        %v7572 = vpack.c.b16 %v7520, %v7518
        %v7573 = vpack.c.b16 %v7521, %v7519
        %v7574 = vpack.c.b16 %v7524, %v7522
        %v7575 = vpack.c.b16 %v7525, %v7523
        %v7576 = vpack.c.b16 %v7528, %v7526
        %v7577 = vpack.c.b16 %v7529, %v7527
        %v7578 = vpack.c.b16 %v7532, %v7530
        %v7579 = vpack.c.b16 %v7533, %v7531
        %v7580 = vpack.c.b16 %v7536, %v7534
        %v7581 = vpack.c.b16 %v7537, %v7535
        %v7582 = vpack.c.b16 %v7540, %v7538
        %v7583 = vpack.c.b16 %v7541, %v7539
        %v7584 = vpack.c.b16 %v7544, %v7542
        %v7585 = vpack.c.b16 %v7545, %v7543
        %v7586 = vpack.c.b16 %v7548, %v7546
        %v7587 = vpack.c.b16 %v7549, %v7547
        %v7588 = vpack.c.b16 %v7552, %v7550
        %v7589 = vpack.c.b16 %v7553, %v7551
        %v7590 = vpack.c.b16 %v7556, %v7554
        %v7591 = vpack.c.b16 %v7557, %v7555
        %v7592 = vpack.c.b16 %v7560, %v7558
        %v7593 = vpack.c.b16 %v7561, %v7559
        %7626 = vmatprep.subr.bf16.mxu0 %v7563
        %7627 = vmatpush1.bf16.msra.mxu0 %v7562
        %7628 = vmatprep.subr.bf16.mxu0 %v7565
        %7629 = vmatpush1.bf16.msra.mxu0 %v7564
        %7630 = vmatprep.subr.bf16.mxu0 %v7567
        %7631 = vmatpush1.bf16.msra.mxu0 %v7566
        %7632 = vmatprep.subr.bf16.mxu0 %v7569
        %7633 = vmatpush1.bf16.msra.mxu0 %v7568
        %7634 = vmatprep.subr.bf16.mxu0 %v7571
        %7635 = vmatpush1.bf16.msra.mxu0 %v7570
        %7636 = vmatprep.subr.bf16.mxu0 %v7573
        %7637 = vmatpush1.bf16.msra.mxu0 %v7572
        %7638 = vmatprep.subr.bf16.mxu0 %v7575
        %7639 = vmatpush1.bf16.msra.mxu0 %v7574
        %7640 = vmatprep.subr.bf16.mxu0 %v7577
        %7641 = vmatpush1.bf16.msra.mxu0 %v7576
        %7642 = vmatprep.subr.bf16.mxu0 %v7579
        %7643 = vmatpush1.bf16.msra.mxu0 %v7578
        %7644 = vmatprep.subr.bf16.mxu0 %v7581
        %7645 = vmatpush1.bf16.msra.mxu0 %v7580
        %7646 = vmatprep.subr.bf16.mxu0 %v7583
        %7647 = vmatpush1.bf16.msra.mxu0 %v7582
        %7648 = vmatprep.subr.bf16.mxu0 %v7585
        %7649 = vmatpush1.bf16.msra.mxu0 %v7584
        %7650 = vmatprep.subr.bf16.mxu0 %v7587
        %7651 = vmatpush1.bf16.msra.mxu0 %v7586
        %7652 = vmatprep.subr.bf16.mxu0 %v7589
        %7653 = vmatpush1.bf16.msra.mxu0 %v7588
        %7654 = vmatprep.subr.bf16.mxu0 %v7591
        %7655 = vmatpush1.bf16.msra.mxu0 %v7590
        %7656 = vmatprep.subr.bf16.mxu0 %v7593
        %7657 = vmatpush1.bf16.msra.mxu0 %v7592
        %7658 = vmatprep.mubr.bf16.mxu0 %v7402
        %7659 = vmatmul.mubr.bf16.gmra.mrb[0].mxu0 %v7401
        %v7660 = vpop.f32.mrb[0].mxu0
        %v7661 = vadd.f32 0.0, %v7660
        %v7662 = vpop.f32.mrb[0].mxu0
        %v7663 = vadd.f32 0.0, %v7662
        %v7664 = vpop.f32.mrb[0].mxu0
        %v7665 = vadd.f32 0.0, %v7664
        %v7666 = vpop.f32.mrb[0].mxu0
        %v7667 = vadd.f32 0.0, %v7666
        %7668 = vmatprep.mubr.bf16.mxu0 %v7404
        %7669 = vmatmul.mubr.bf16.gmra.mrb[0].mxu0 %v7403
        %v7670 = vpop.f32.mrb[0].mxu0
        %v7671 = vadd.f32 0.0, %v7670
        %v7672 = vpop.f32.mrb[0].mxu0
        %v7673 = vadd.f32 0.0, %v7672
        %v7674 = vpop.f32.mrb[0].mxu0
        %v7675 = vadd.f32 0.0, %v7674
        %v7676 = vpop.f32.mrb[0].mxu0
        %v7677 = vadd.f32 0.0, %v7676
        %7678 = vmatprep.mubr.bf16.mxu0 %v7406
        %7679 = vmatmul.mubr.bf16.gmra.mrb[0].mxu0 %v7405
        %v7680 = vpop.f32.mrb[0].mxu0
        %v7681 = vadd.f32 0.0, %v7680
        %v7682 = vpop.f32.mrb[0].mxu0
        %v7683 = vadd.f32 0.0, %v7682
        %v7684 = vpop.f32.mrb[0].mxu0
        %v7685 = vadd.f32 0.0, %v7684
        %v7686 = vpop.f32.mrb[0].mxu0
        %v7687 = vadd.f32 0.0, %v7686
        %7688 = vmatprep.mubr.bf16.mxu0 %v7408
        %7689 = vmatmul.mubr.bf16.gmra.mrb[0].mxu0 %v7407
        %v7690 = vpop.f32.mrb[0].mxu0
        %v7691 = vadd.f32 0.0, %v7690
        %v7692 = vpop.f32.mrb[0].mxu0
        %v7693 = vadd.f32 0.0, %v7692
        %v7694 = vpop.f32.mrb[0].mxu0
        %v7695 = vadd.f32 0.0, %v7694
        %v7696 = vpop.f32.mrb[0].mxu0
        %v7697 = vadd.f32 0.0, %v7696
        %7698 = vmatprep.mubr.bf16.mxu0 %v7410
        %7699 = vmatmul.mubr.bf16.gmra.mrb[0].mxu0 %v7409
        %v7700 = vpop.f32.mrb[0].mxu0
        %v7701 = vadd.f32 0.0, %v7700
        %v7702 = vpop.f32.mrb[0].mxu0
        %v7703 = vadd.f32 0.0, %v7702
        %v7704 = vpop.f32.mrb[0].mxu0
        %v7705 = vadd.f32 0.0, %v7704
        %v7706 = vpop.f32.mrb[0].mxu0
        %v7707 = vadd.f32 0.0, %v7706
        %7708 = vmatprep.mubr.bf16.mxu0 %v7412
        %7709 = vmatmul.mubr.bf16.gmra.mrb[0].mxu0 %v7411
        %v7710 = vpop.f32.mrb[0].mxu0
        %v7711 = vadd.f32 0.0, %v7710
        %v7712 = vpop.f32.mrb[0].mxu0
        %v7713 = vadd.f32 0.0, %v7712
        %v7714 = vpop.f32.mrb[0].mxu0
        %v7715 = vadd.f32 0.0, %v7714
        %v7716 = vpop.f32.mrb[0].mxu0
        %v7717 = vadd.f32 0.0, %v7716
        %7718 = vmatprep.mubr.bf16.mxu0 %v7414
        %7719 = vmatmul.mubr.bf16.gmra.mrb[0].mxu0 %v7413
        %v7720 = vpop.f32.mrb[0].mxu0
        %v7721 = vadd.f32 0.0, %v7720
        %v7722 = vpop.f32.mrb[0].mxu0
        %v7723 = vadd.f32 0.0, %v7722
        %v7724 = vpop.f32.mrb[0].mxu0
        %v7725 = vadd.f32 0.0, %v7724
        %v7726 = vpop.f32.mrb[0].mxu0
        %v7727 = vadd.f32 0.0, %v7726
        %7728 = vmatprep.mubr.bf16.mxu0 %v7416
        %7729 = vmatmul.mubr.bf16.gmra.mrb[0].mxu0 %v7415
        %v7730 = vpop.f32.mrb[0].mxu0
        %v7731 = vadd.f32 0.0, %v7730
        %v7732 = vpop.f32.mrb[0].mxu0
        %v7733 = vadd.f32 0.0, %v7732
        %v7734 = vpop.f32.mrb[0].mxu0
        %v7735 = vadd.f32 0.0, %v7734
        %v7736 = vpop.f32.mrb[0].mxu0
        %v7737 = vadd.f32 0.0, %v7736
        %7738 = vmatprep.mubr.bf16.mxu0 %v7418
        %7739 = vmatmul.mubr.bf16.gmra.mrb[0].mxu0 %v7417
        %v7740 = vpop.f32.mrb[0].mxu0
        %v7741 = vadd.f32 0.0, %v7740
        %v7742 = vpop.f32.mrb[0].mxu0
        %v7743 = vadd.f32 0.0, %v7742
        %v7744 = vpop.f32.mrb[0].mxu0
        %v7745 = vadd.f32 0.0, %v7744
        %v7746 = vpop.f32.mrb[0].mxu0
        %v7747 = vadd.f32 0.0, %v7746
        %7748 = vmatprep.mubr.bf16.mxu0 %v7420
        %7749 = vmatmul.mubr.bf16.gmra.mrb[0].mxu0 %v7419
        %v7750 = vpop.f32.mrb[0].mxu0
        %v7751 = vadd.f32 0.0, %v7750
        %v7752 = vpop.f32.mrb[0].mxu0
        %v7753 = vadd.f32 0.0, %v7752
        %v7754 = vpop.f32.mrb[0].mxu0
        %v7755 = vadd.f32 0.0, %v7754
        %v7756 = vpop.f32.mrb[0].mxu0
        %v7757 = vadd.f32 0.0, %v7756
        %7758 = vmatprep.mubr.bf16.mxu0 %v7422
        %7759 = vmatmul.mubr.bf16.gmra.mrb[0].mxu0 %v7421
        %v7760 = vpop.f32.mrb[0].mxu0
        %v7761 = vadd.f32 0.0, %v7760
        %v7762 = vpop.f32.mrb[0].mxu0
        %v7763 = vadd.f32 0.0, %v7762
        %v7764 = vpop.f32.mrb[0].mxu0
        %v7765 = vadd.f32 0.0, %v7764
        %v7766 = vpop.f32.mrb[0].mxu0
        %v7767 = vadd.f32 0.0, %v7766
        %7768 = vmatprep.mubr.bf16.mxu0 %v7424
        %7769 = vmatmul.mubr.bf16.gmra.mrb[0].mxu0 %v7423
        %v7770 = vpop.f32.mrb[0].mxu0
        %v7771 = vadd.f32 0.0, %v7770
        %v7772 = vpop.f32.mrb[0].mxu0
        %v7773 = vadd.f32 0.0, %v7772
        %v7774 = vpop.f32.mrb[0].mxu0
        %v7775 = vadd.f32 0.0, %v7774
        %v7776 = vpop.f32.mrb[0].mxu0
        %v7777 = vadd.f32 0.0, %v7776
        %7778 = vmatprep.mubr.bf16.mxu0 %v7426
        %7779 = vmatmul.mubr.bf16.gmra.mrb[0].mxu0 %v7425
        %v7780 = vpop.f32.mrb[0].mxu0
        %v7781 = vadd.f32 0.0, %v7780
        %v7782 = vpop.f32.mrb[0].mxu0
        %v7783 = vadd.f32 0.0, %v7782
        %v7784 = vpop.f32.mrb[0].mxu0
        %v7785 = vadd.f32 0.0, %v7784
        %v7786 = vpop.f32.mrb[0].mxu0
        %v7787 = vadd.f32 0.0, %v7786
        %7788 = vmatprep.mubr.bf16.mxu0 %v7428
        %7789 = vmatmul.mubr.bf16.gmra.mrb[0].mxu0 %v7427
        %v7790 = vpop.f32.mrb[0].mxu0
        %v7791 = vadd.f32 0.0, %v7790
        %v7792 = vpop.f32.mrb[0].mxu0
        %v7793 = vadd.f32 0.0, %v7792
        %v7794 = vpop.f32.mrb[0].mxu0
        %v7795 = vadd.f32 0.0, %v7794
        %v7796 = vpop.f32.mrb[0].mxu0
        %v7797 = vadd.f32 0.0, %v7796
        %7798 = vmatprep.mubr.bf16.mxu0 %v7430
        %7799 = vmatmul.mubr.bf16.gmra.mrb[0].mxu0 %v7429
        %v7800 = vpop.f32.mrb[0].mxu0
        %v7801 = vadd.f32 0.0, %v7800
        %v7802 = vpop.f32.mrb[0].mxu0
        %v7803 = vadd.f32 0.0, %v7802
        %v7804 = vpop.f32.mrb[0].mxu0
        %v7805 = vadd.f32 0.0, %v7804
        %v7806 = vpop.f32.mrb[0].mxu0
        %v7807 = vadd.f32 0.0, %v7806
        %7808 = vmatprep.mubr.bf16.mxu0 %v7432
        %7809 = vmatmul.mubr.bf16.gmra.mrb[0].mxu0 %v7431
        %v7810 = vpop.f32.mrb[0].mxu0
        %v7811 = vadd.f32 0.0, %v7810
        %v7812 = vpop.f32.mrb[0].mxu0
        %v7813 = vadd.f32 0.0, %v7812
        %v7814 = vpop.f32.mrb[0].mxu0
        %v7815 = vadd.f32 0.0, %v7814
        %v7816 = vpop.f32.mrb[0].mxu0
        %v7817 = vadd.f32 0.0, %v7816
        %7818 = vdwg.mxu0
        %v7851 = vunpack.c.l.b16 %v7369
        %v7852 = vunpack.c.h.b16 %v7369
        %v7853 = vunpack.c.l.b16 %v7370
        %v7854 = vunpack.c.h.b16 %v7370
        %v7855 = vunpack.c.l.b16 %v7371
        %v7856 = vunpack.c.h.b16 %v7371
        %v7857 = vunpack.c.l.b16 %v7372
        %v7858 = vunpack.c.h.b16 %v7372
        %v7859 = vunpack.c.l.b16 %v7373
        %v7860 = vunpack.c.h.b16 %v7373
        %v7861 = vunpack.c.l.b16 %v7374
        %v7862 = vunpack.c.h.b16 %v7374
        %v7863 = vunpack.c.l.b16 %v7375
        %v7864 = vunpack.c.h.b16 %v7375
        %v7865 = vunpack.c.l.b16 %v7376
        %v7866 = vunpack.c.h.b16 %v7376
        %v7867 = vunpack.c.l.b16 %v7377
        %v7868 = vunpack.c.h.b16 %v7377
        %v7869 = vunpack.c.l.b16 %v7378
        %v7870 = vunpack.c.h.b16 %v7378
        %v7871 = vunpack.c.l.b16 %v7379
        %v7872 = vunpack.c.h.b16 %v7379
        %v7873 = vunpack.c.l.b16 %v7380
        %v7874 = vunpack.c.h.b16 %v7380
        %v7875 = vunpack.c.l.b16 %v7381
        %v7876 = vunpack.c.h.b16 %v7381
        %v7877 = vunpack.c.l.b16 %v7382
        %v7878 = vunpack.c.h.b16 %v7382
        %v7879 = vunpack.c.l.b16 %v7383
        %v7880 = vunpack.c.h.b16 %v7383
        %v7881 = vunpack.c.l.b16 %v7384
        %v7882 = vunpack.c.h.b16 %v7384
        %v7883 = vunpack.c.l.b16 %v7385
        %v7884 = vunpack.c.h.b16 %v7385
        %v7885 = vunpack.c.l.b16 %v7386
        %v7886 = vunpack.c.h.b16 %v7386
        %v7887 = vunpack.c.l.b16 %v7387
        %v7888 = vunpack.c.h.b16 %v7387
        %v7889 = vunpack.c.l.b16 %v7388
        %v7890 = vunpack.c.h.b16 %v7388
        %v7891 = vunpack.c.l.b16 %v7389
        %v7892 = vunpack.c.h.b16 %v7389
        %v7893 = vunpack.c.l.b16 %v7390
        %v7894 = vunpack.c.h.b16 %v7390
        %v7895 = vunpack.c.l.b16 %v7391
        %v7896 = vunpack.c.h.b16 %v7391
        %v7897 = vunpack.c.l.b16 %v7392
        %v7898 = vunpack.c.h.b16 %v7392
        %v7899 = vunpack.c.l.b16 %v7393
        %v7900 = vunpack.c.h.b16 %v7393
        %v7901 = vunpack.c.l.b16 %v7394
        %v7902 = vunpack.c.h.b16 %v7394
        %v7903 = vunpack.c.l.b16 %v7395
        %v7904 = vunpack.c.h.b16 %v7395
        %v7905 = vunpack.c.l.b16 %v7396
        %v7906 = vunpack.c.h.b16 %v7396
        %v7907 = vunpack.c.l.b16 %v7397
        %v7908 = vunpack.c.h.b16 %v7397
        %v7909 = vunpack.c.l.b16 %v7398
        %v7910 = vunpack.c.h.b16 %v7398
        %v7911 = vunpack.c.l.b16 %v7399
        %v7912 = vunpack.c.h.b16 %v7399
        %v7913 = vunpack.c.l.b16 %v7400
        %v7914 = vunpack.c.h.b16 %v7400
        %v7915 = vpack.c.b16 %v7853, %v7851
        %v7916 = vpack.c.b16 %v7854, %v7852
        %v7917 = vpack.c.b16 %v7857, %v7855
        %v7918 = vpack.c.b16 %v7858, %v7856
        %v7919 = vpack.c.b16 %v7861, %v7859
        %v7920 = vpack.c.b16 %v7862, %v7860
        %v7921 = vpack.c.b16 %v7865, %v7863
        %v7922 = vpack.c.b16 %v7866, %v7864
        %v7923 = vpack.c.b16 %v7869, %v7867
        %v7924 = vpack.c.b16 %v7870, %v7868
        %v7925 = vpack.c.b16 %v7873, %v7871
        %v7926 = vpack.c.b16 %v7874, %v7872
        %v7927 = vpack.c.b16 %v7877, %v7875
        %v7928 = vpack.c.b16 %v7878, %v7876
        %v7929 = vpack.c.b16 %v7881, %v7879
        %v7930 = vpack.c.b16 %v7882, %v7880
        %v7931 = vpack.c.b16 %v7885, %v7883
        %v7932 = vpack.c.b16 %v7886, %v7884
        %v7933 = vpack.c.b16 %v7889, %v7887
        %v7934 = vpack.c.b16 %v7890, %v7888
        %v7935 = vpack.c.b16 %v7893, %v7891
        %v7936 = vpack.c.b16 %v7894, %v7892
        %v7937 = vpack.c.b16 %v7897, %v7895
        %v7938 = vpack.c.b16 %v7898, %v7896
        %v7939 = vpack.c.b16 %v7901, %v7899
        %v7940 = vpack.c.b16 %v7902, %v7900
        %v7941 = vpack.c.b16 %v7905, %v7903
        %v7942 = vpack.c.b16 %v7906, %v7904
        %v7943 = vpack.c.b16 %v7909, %v7907
        %v7944 = vpack.c.b16 %v7910, %v7908
        %v7945 = vpack.c.b16 %v7913, %v7911
        %v7946 = vpack.c.b16 %v7914, %v7912
        %7979 = vmatprep.subr.bf16.mxu0 %v7916
        %7980 = vmatpush1.bf16.msra.mxu0 %v7915
        %7981 = vmatprep.subr.bf16.mxu0 %v7918
        %7982 = vmatpush1.bf16.msra.mxu0 %v7917
        %7983 = vmatprep.subr.bf16.mxu0 %v7920
        %7984 = vmatpush1.bf16.msra.mxu0 %v7919
        %7985 = vmatprep.subr.bf16.mxu0 %v7922
        %7986 = vmatpush1.bf16.msra.mxu0 %v7921
        %7987 = vmatprep.subr.bf16.mxu0 %v7924
        %7988 = vmatpush1.bf16.msra.mxu0 %v7923
        %7989 = vmatprep.subr.bf16.mxu0 %v7926
        %7990 = vmatpush1.bf16.msra.mxu0 %v7925
        %7991 = vmatprep.subr.bf16.mxu0 %v7928
        %7992 = vmatpush1.bf16.msra.mxu0 %v7927
        %7993 = vmatprep.subr.bf16.mxu0 %v7930
        %7994 = vmatpush1.bf16.msra.mxu0 %v7929
        %7995 = vmatprep.subr.bf16.mxu0 %v7932
        %7996 = vmatpush1.bf16.msra.mxu0 %v7931
        %7997 = vmatprep.subr.bf16.mxu0 %v7934
        %7998 = vmatpush1.bf16.msra.mxu0 %v7933
        %7999 = vmatprep.subr.bf16.mxu0 %v7936
        %8000 = vmatpush1.bf16.msra.mxu0 %v7935
        %8001 = vmatprep.subr.bf16.mxu0 %v7938
        %8002 = vmatpush1.bf16.msra.mxu0 %v7937
        %8003 = vmatprep.subr.bf16.mxu0 %v7940
        %8004 = vmatpush1.bf16.msra.mxu0 %v7939
        %8005 = vmatprep.subr.bf16.mxu0 %v7942
        %8006 = vmatpush1.bf16.msra.mxu0 %v7941
        %8007 = vmatprep.subr.bf16.mxu0 %v7944
        %8008 = vmatpush1.bf16.msra.mxu0 %v7943
        %8009 = vmatprep.subr.bf16.mxu0 %v7946
        %8010 = vmatpush1.bf16.msra.mxu0 %v7945
        %8011 = vmatprep.mubr.bf16.mxu0 %v7337
        %8012 = vmatmul.mubr.bf16.gmra.mrb[0].mxu0 %v7336
        %v8013 = vpop.f32.mrb[0].mxu0
        %v8014 = vadd.f32 %v7661, %v8013
        %v8015 = vpop.f32.mrb[0].mxu0
        %v8016 = vadd.f32 %v7663, %v8015
        %v8017 = vpop.f32.mrb[0].mxu0
        %v8018 = vadd.f32 %v7665, %v8017
        %v8019 = vpop.f32.mrb[0].mxu0
        %v8020 = vadd.f32 %v7667, %v8019
        %8021 = vmatprep.mubr.bf16.mxu0 %v7339
        %8022 = vmatmul.mubr.bf16.gmra.mrb[0].mxu0 %v7338
        %v8023 = vpop.f32.mrb[0].mxu0
        %v8024 = vadd.f32 %v7671, %v8023
        %v8025 = vpop.f32.mrb[0].mxu0
        %v8026 = vadd.f32 %v7673, %v8025
        %v8027 = vpop.f32.mrb[0].mxu0
        %v8028 = vadd.f32 %v7675, %v8027
        %v8029 = vpop.f32.mrb[0].mxu0
        %v8030 = vadd.f32 %v7677, %v8029
        %8031 = vmatprep.mubr.bf16.mxu0 %v7341
        %8032 = vmatmul.mubr.bf16.gmra.mrb[0].mxu0 %v7340
        %v8033 = vpop.f32.mrb[0].mxu0
        %v8034 = vadd.f32 %v7681, %v8033
        %v8035 = vpop.f32.mrb[0].mxu0
        %v8036 = vadd.f32 %v7683, %v8035
        %v8037 = vpop.f32.mrb[0].mxu0
        %v8038 = vadd.f32 %v7685, %v8037
        %v8039 = vpop.f32.mrb[0].mxu0
        %v8040 = vadd.f32 %v7687, %v8039
        %8041 = vmatprep.mubr.bf16.mxu0 %v7343
        %8042 = vmatmul.mubr.bf16.gmra.mrb[0].mxu0 %v7342
        %v8043 = vpop.f32.mrb[0].mxu0
        %v8044 = vadd.f32 %v7691, %v8043
        %v8045 = vpop.f32.mrb[0].mxu0
        %v8046 = vadd.f32 %v7693, %v8045
        %v8047 = vpop.f32.mrb[0].mxu0
        %v8048 = vadd.f32 %v7695, %v8047
        %v8049 = vpop.f32.mrb[0].mxu0
        %v8050 = vadd.f32 %v7697, %v8049
        %8051 = vmatprep.mubr.bf16.mxu0 %v7345
        %8052 = vmatmul.mubr.bf16.gmra.mrb[0].mxu0 %v7344
        %v8053 = vpop.f32.mrb[0].mxu0
        %v8054 = vadd.f32 %v7701, %v8053
        %v8055 = vpop.f32.mrb[0].mxu0
        %v8056 = vadd.f32 %v7703, %v8055
        %v8057 = vpop.f32.mrb[0].mxu0
        %v8058 = vadd.f32 %v7705, %v8057
        %v8059 = vpop.f32.mrb[0].mxu0
        %v8060 = vadd.f32 %v7707, %v8059
        %8061 = vmatprep.mubr.bf16.mxu0 %v7347
        %8062 = vmatmul.mubr.bf16.gmra.mrb[0].mxu0 %v7346
        %v8063 = vpop.f32.mrb[0].mxu0
        %v8064 = vadd.f32 %v7711, %v8063
        %v8065 = vpop.f32.mrb[0].mxu0
        %v8066 = vadd.f32 %v7713, %v8065
        %v8067 = vpop.f32.mrb[0].mxu0
        %v8068 = vadd.f32 %v7715, %v8067
        %v8069 = vpop.f32.mrb[0].mxu0
        %v8070 = vadd.f32 %v7717, %v8069
        %8071 = vmatprep.mubr.bf16.mxu0 %v7349
        %8072 = vmatmul.mubr.bf16.gmra.mrb[0].mxu0 %v7348
        %v8073 = vpop.f32.mrb[0].mxu0
        %v8074 = vadd.f32 %v7721, %v8073
        %v8075 = vpop.f32.mrb[0].mxu0
        %v8076 = vadd.f32 %v7723, %v8075
        %v8077 = vpop.f32.mrb[0].mxu0
        %v8078 = vadd.f32 %v7725, %v8077
        %v8079 = vpop.f32.mrb[0].mxu0
        %v8080 = vadd.f32 %v7727, %v8079
        %8081 = vmatprep.mubr.bf16.mxu0 %v7351
        %8082 = vmatmul.mubr.bf16.gmra.mrb[0].mxu0 %v7350
        %v8083 = vpop.f32.mrb[0].mxu0
        %v8084 = vadd.f32 %v7731, %v8083
        %v8085 = vpop.f32.mrb[0].mxu0
        %v8086 = vadd.f32 %v7733, %v8085
        %v8087 = vpop.f32.mrb[0].mxu0
        %v8088 = vadd.f32 %v7735, %v8087
        %v8089 = vpop.f32.mrb[0].mxu0
        %v8090 = vadd.f32 %v7737, %v8089
        %8091 = vmatprep.mubr.bf16.mxu0 %v7353
        %8092 = vmatmul.mubr.bf16.gmra.mrb[0].mxu0 %v7352
        %v8093 = vpop.f32.mrb[0].mxu0
        %v8094 = vadd.f32 %v7741, %v8093
        %v8095 = vpop.f32.mrb[0].mxu0
        %v8096 = vadd.f32 %v7743, %v8095
        %v8097 = vpop.f32.mrb[0].mxu0
        %v8098 = vadd.f32 %v7745, %v8097
        %v8099 = vpop.f32.mrb[0].mxu0
        %v8100 = vadd.f32 %v7747, %v8099
        %8101 = vmatprep.mubr.bf16.mxu0 %v7355
        %8102 = vmatmul.mubr.bf16.gmra.mrb[0].mxu0 %v7354
        %v8103 = vpop.f32.mrb[0].mxu0
        %v8104 = vadd.f32 %v7751, %v8103
        %v8105 = vpop.f32.mrb[0].mxu0
        %v8106 = vadd.f32 %v7753, %v8105
        %v8107 = vpop.f32.mrb[0].mxu0
        %v8108 = vadd.f32 %v7755, %v8107
        %v8109 = vpop.f32.mrb[0].mxu0
        %v8110 = vadd.f32 %v7757, %v8109
        %8111 = vmatprep.mubr.bf16.mxu0 %v7357
        %8112 = vmatmul.mubr.bf16.gmra.mrb[0].mxu0 %v7356
        %v8113 = vpop.f32.mrb[0].mxu0
        %v8114 = vadd.f32 %v7761, %v8113
        %v8115 = vpop.f32.mrb[0].mxu0
        %v8116 = vadd.f32 %v7763, %v8115
        %v8117 = vpop.f32.mrb[0].mxu0
        %v8118 = vadd.f32 %v7765, %v8117
        %v8119 = vpop.f32.mrb[0].mxu0
        %v8120 = vadd.f32 %v7767, %v8119
        %8121 = vmatprep.mubr.bf16.mxu0 %v7359
        %8122 = vmatmul.mubr.bf16.gmra.mrb[0].mxu0 %v7358
        %v8123 = vpop.f32.mrb[0].mxu0
        %v8124 = vadd.f32 %v7771, %v8123
        %v8125 = vpop.f32.mrb[0].mxu0
        %v8126 = vadd.f32 %v7773, %v8125
        %v8127 = vpop.f32.mrb[0].mxu0
        %v8128 = vadd.f32 %v7775, %v8127
        %v8129 = vpop.f32.mrb[0].mxu0
        %v8130 = vadd.f32 %v7777, %v8129
        %8131 = vmatprep.mubr.bf16.mxu0 %v7361
        %8132 = vmatmul.mubr.bf16.gmra.mrb[0].mxu0 %v7360
        %v8133 = vpop.f32.mrb[0].mxu0
        %v8134 = vadd.f32 %v7781, %v8133
        %v8135 = vpop.f32.mrb[0].mxu0
        %v8136 = vadd.f32 %v7783, %v8135
        %v8137 = vpop.f32.mrb[0].mxu0
        %v8138 = vadd.f32 %v7785, %v8137
        %v8139 = vpop.f32.mrb[0].mxu0
        %v8140 = vadd.f32 %v7787, %v8139
        %8141 = vmatprep.mubr.bf16.mxu0 %v7363
        %8142 = vmatmul.mubr.bf16.gmra.mrb[0].mxu0 %v7362
        %v8143 = vpop.f32.mrb[0].mxu0
        %v8144 = vadd.f32 %v7791, %v8143
        %v8145 = vpop.f32.mrb[0].mxu0
        %v8146 = vadd.f32 %v7793, %v8145
        %v8147 = vpop.f32.mrb[0].mxu0
        %v8148 = vadd.f32 %v7795, %v8147
        %v8149 = vpop.f32.mrb[0].mxu0
        %v8150 = vadd.f32 %v7797, %v8149
        %8151 = vmatprep.mubr.bf16.mxu0 %v7365
        %8152 = vmatmul.mubr.bf16.gmra.mrb[0].mxu0 %v7364
        %v8153 = vpop.f32.mrb[0].mxu0
        %v8154 = vadd.f32 %v7801, %v8153
        %v8155 = vpop.f32.mrb[0].mxu0
        %v8156 = vadd.f32 %v7803, %v8155
        %v8157 = vpop.f32.mrb[0].mxu0
        %v8158 = vadd.f32 %v7805, %v8157
        %v8159 = vpop.f32.mrb[0].mxu0
        %v8160 = vadd.f32 %v7807, %v8159
        %8161 = vmatprep.mubr.bf16.mxu0 %v7367
        %8162 = vmatmul.mubr.bf16.gmra.mrb[0].mxu0 %v7366
        %v8163 = vpop.f32.mrb[0].mxu0
        %v8164 = vadd.f32 %v7811, %v8163
        %v8165 = vpop.f32.mrb[0].mxu0
        %v8166 = vadd.f32 %v7813, %v8165
        %v8167 = vpop.f32.mrb[0].mxu0
        %v8168 = vadd.f32 %v7815, %v8167
        %v8169 = vpop.f32.mrb[0].mxu0
        %v8170 = vadd.f32 %v7817, %v8169
        %8171 = vdwg.mxu0
        %v8172 = vld [vmem:[%s814] sm:$0xff]
        %v8173 = vld [vmem:[%s814 + $0x8] sm:$0xff]
        %v8174 = vld [vmem:[%s814 + $0x10] sm:$0xff]
        %v8175 = vld [vmem:[%s814 + $0x18] sm:$0xff]
        %v8176 = vld [vmem:[%s814 + $0x20] sm:$0xff]
        %v8177 = vld [vmem:[%s814 + $0x28] sm:$0xff]
        %v8178 = vld [vmem:[%s814 + $0x30] sm:$0xff]
        %v8179 = vld [vmem:[%s814 + $0x38] sm:$0xff]
        %v8180 = vld [vmem:[%s814 + $0x40] sm:$0xff]
        %v8181 = vld [vmem:[%s814 + $0x48] sm:$0xff]
        %v8182 = vld [vmem:[%s814 + $0x50] sm:$0xff]
        %v8183 = vld [vmem:[%s814 + $0x58] sm:$0xff]
        %v8184 = vld [vmem:[%s814 + $0x60] sm:$0xff]
        %v8185 = vld [vmem:[%s814 + $0x68] sm:$0xff]
        %v8186 = vld [vmem:[%s814 + $0x70] sm:$0xff]
        %v8187 = vld [vmem:[%s814 + $0x78] sm:$0xff]
        %v8188 = vld [vmem:[%s814 + $0x80] sm:$0xff]
        %v8189 = vld [vmem:[%s814 + $0x88] sm:$0xff]
        %v8190 = vld [vmem:[%s814 + $0x90] sm:$0xff]
        %v8191 = vld [vmem:[%s814 + $0x98] sm:$0xff]
        %v8192 = vld [vmem:[%s814 + $0xa0] sm:$0xff]
        %v8193 = vld [vmem:[%s814 + $0xa8] sm:$0xff]
        %v8194 = vld [vmem:[%s814 + $0xb0] sm:$0xff]
        %v8195 = vld [vmem:[%s814 + $0xb8] sm:$0xff]
        %v8196 = vld [vmem:[%s814 + $0xc0] sm:$0xff]
        %v8197 = vld [vmem:[%s814 + $0xc8] sm:$0xff]
        %v8198 = vld [vmem:[%s814 + $0xd0] sm:$0xff]
        %v8199 = vld [vmem:[%s814 + $0xd8] sm:$0xff]
        %v8200 = vld [vmem:[%s814 + $0xe0] sm:$0xff]
        %v8201 = vld [vmem:[%s814 + $0xe8] sm:$0xff]
        %v8202 = vld [vmem:[%s814 + $0xf0] sm:$0xff]
        %v8203 = vld [vmem:[%s814 + $0xf8] sm:$0xff]
        %s8204 = scalar_lea.vmem %s2, 1280
        %v8205 = vld [vmem:[%s8204] sm:$0xff]
        %v8206 = vld [vmem:[%s8204 + $0x8] sm:$0xff]
        %v8207 = vld [vmem:[%s8204 + $0x10] sm:$0xff]
        %v8208 = vld [vmem:[%s8204 + $0x18] sm:$0xff]
        %v8209 = vld [vmem:[%s8204 + $0x20] sm:$0xff]
        %v8210 = vld [vmem:[%s8204 + $0x28] sm:$0xff]
        %v8211 = vld [vmem:[%s8204 + $0x30] sm:$0xff]
        %v8212 = vld [vmem:[%s8204 + $0x38] sm:$0xff]
        %v8213 = vld [vmem:[%s8204 + $0x40] sm:$0xff]
        %v8214 = vld [vmem:[%s8204 + $0x48] sm:$0xff]
        %v8215 = vld [vmem:[%s8204 + $0x50] sm:$0xff]
        %v8216 = vld [vmem:[%s8204 + $0x58] sm:$0xff]
        %v8217 = vld [vmem:[%s8204 + $0x60] sm:$0xff]
        %v8218 = vld [vmem:[%s8204 + $0x68] sm:$0xff]
        %v8219 = vld [vmem:[%s8204 + $0x70] sm:$0xff]
        %v8220 = vld [vmem:[%s8204 + $0x78] sm:$0xff]
        %v8221 = vld [vmem:[%s8204 + $0x80] sm:$0xff]
        %v8222 = vld [vmem:[%s8204 + $0x88] sm:$0xff]
        %v8223 = vld [vmem:[%s8204 + $0x90] sm:$0xff]
        %v8224 = vld [vmem:[%s8204 + $0x98] sm:$0xff]
        %v8225 = vld [vmem:[%s8204 + $0xa0] sm:$0xff]
        %v8226 = vld [vmem:[%s8204 + $0xa8] sm:$0xff]
        %v8227 = vld [vmem:[%s8204 + $0xb0] sm:$0xff]
        %v8228 = vld [vmem:[%s8204 + $0xb8] sm:$0xff]
        %v8229 = vld [vmem:[%s8204 + $0xc0] sm:$0xff]
        %v8230 = vld [vmem:[%s8204 + $0xc8] sm:$0xff]
        %v8231 = vld [vmem:[%s8204 + $0xd0] sm:$0xff]
        %v8232 = vld [vmem:[%s8204 + $0xd8] sm:$0xff]
        %v8233 = vld [vmem:[%s8204 + $0xe0] sm:$0xff]
        %v8234 = vld [vmem:[%s8204 + $0xe8] sm:$0xff]
        %v8235 = vld [vmem:[%s8204 + $0xf0] sm:$0xff]
        %v8236 = vld [vmem:[%s8204 + $0xf8] sm:$0xff]
        %v8269 = vunpack.c.l.b16 %v8205
        %v8270 = vunpack.c.h.b16 %v8205
        %v8271 = vunpack.c.l.b16 %v8206
        %v8272 = vunpack.c.h.b16 %v8206
        %v8273 = vunpack.c.l.b16 %v8207
        %v8274 = vunpack.c.h.b16 %v8207
        %v8275 = vunpack.c.l.b16 %v8208
        %v8276 = vunpack.c.h.b16 %v8208
        %v8277 = vunpack.c.l.b16 %v8209
        %v8278 = vunpack.c.h.b16 %v8209
        %v8279 = vunpack.c.l.b16 %v8210
        %v8280 = vunpack.c.h.b16 %v8210
        %v8281 = vunpack.c.l.b16 %v8211
        %v8282 = vunpack.c.h.b16 %v8211
        %v8283 = vunpack.c.l.b16 %v8212
        %v8284 = vunpack.c.h.b16 %v8212
        %v8285 = vunpack.c.l.b16 %v8213
        %v8286 = vunpack.c.h.b16 %v8213
        %v8287 = vunpack.c.l.b16 %v8214
        %v8288 = vunpack.c.h.b16 %v8214
        %v8289 = vunpack.c.l.b16 %v8215
        %v8290 = vunpack.c.h.b16 %v8215
        %v8291 = vunpack.c.l.b16 %v8216
        %v8292 = vunpack.c.h.b16 %v8216
        %v8293 = vunpack.c.l.b16 %v8217
        %v8294 = vunpack.c.h.b16 %v8217
        %v8295 = vunpack.c.l.b16 %v8218
        %v8296 = vunpack.c.h.b16 %v8218
        %v8297 = vunpack.c.l.b16 %v8219
        %v8298 = vunpack.c.h.b16 %v8219
        %v8299 = vunpack.c.l.b16 %v8220
        %v8300 = vunpack.c.h.b16 %v8220
        %v8301 = vunpack.c.l.b16 %v8221
        %v8302 = vunpack.c.h.b16 %v8221
        %v8303 = vunpack.c.l.b16 %v8222
        %v8304 = vunpack.c.h.b16 %v8222
        %v8305 = vunpack.c.l.b16 %v8223
        %v8306 = vunpack.c.h.b16 %v8223
        %v8307 = vunpack.c.l.b16 %v8224
        %v8308 = vunpack.c.h.b16 %v8224
        %v8309 = vunpack.c.l.b16 %v8225
        %v8310 = vunpack.c.h.b16 %v8225
        %v8311 = vunpack.c.l.b16 %v8226
        %v8312 = vunpack.c.h.b16 %v8226
        %v8313 = vunpack.c.l.b16 %v8227
        %v8314 = vunpack.c.h.b16 %v8227
        %v8315 = vunpack.c.l.b16 %v8228
        %v8316 = vunpack.c.h.b16 %v8228
        %v8317 = vunpack.c.l.b16 %v8229
        %v8318 = vunpack.c.h.b16 %v8229
        %v8319 = vunpack.c.l.b16 %v8230
        %v8320 = vunpack.c.h.b16 %v8230
        %v8321 = vunpack.c.l.b16 %v8231
        %v8322 = vunpack.c.h.b16 %v8231
        %v8323 = vunpack.c.l.b16 %v8232
        %v8324 = vunpack.c.h.b16 %v8232
        %v8325 = vunpack.c.l.b16 %v8233
        %v8326 = vunpack.c.h.b16 %v8233
        %v8327 = vunpack.c.l.b16 %v8234
        %v8328 = vunpack.c.h.b16 %v8234
        %v8329 = vunpack.c.l.b16 %v8235
        %v8330 = vunpack.c.h.b16 %v8235
        %v8331 = vunpack.c.l.b16 %v8236
        %v8332 = vunpack.c.h.b16 %v8236
        %v8333 = vpack.c.b16 %v8271, %v8269
        %v8334 = vpack.c.b16 %v8272, %v8270
        %v8335 = vpack.c.b16 %v8275, %v8273
        %v8336 = vpack.c.b16 %v8276, %v8274
        %v8337 = vpack.c.b16 %v8279, %v8277
        %v8338 = vpack.c.b16 %v8280, %v8278
        %v8339 = vpack.c.b16 %v8283, %v8281
        %v8340 = vpack.c.b16 %v8284, %v8282
        %v8341 = vpack.c.b16 %v8287, %v8285
        %v8342 = vpack.c.b16 %v8288, %v8286
        %v8343 = vpack.c.b16 %v8291, %v8289
        %v8344 = vpack.c.b16 %v8292, %v8290
        %v8345 = vpack.c.b16 %v8295, %v8293
        %v8346 = vpack.c.b16 %v8296, %v8294
        %v8347 = vpack.c.b16 %v8299, %v8297
        %v8348 = vpack.c.b16 %v8300, %v8298
        %v8349 = vpack.c.b16 %v8303, %v8301
        %v8350 = vpack.c.b16 %v8304, %v8302
        %v8351 = vpack.c.b16 %v8307, %v8305
        %v8352 = vpack.c.b16 %v8308, %v8306
        %v8353 = vpack.c.b16 %v8311, %v8309
        %v8354 = vpack.c.b16 %v8312, %v8310
        %v8355 = vpack.c.b16 %v8315, %v8313
        %v8356 = vpack.c.b16 %v8316, %v8314
        %v8357 = vpack.c.b16 %v8319, %v8317
        %v8358 = vpack.c.b16 %v8320, %v8318
        %v8359 = vpack.c.b16 %v8323, %v8321
        %v8360 = vpack.c.b16 %v8324, %v8322
        %v8361 = vpack.c.b16 %v8327, %v8325
        %v8362 = vpack.c.b16 %v8328, %v8326
        %v8363 = vpack.c.b16 %v8331, %v8329
        %v8364 = vpack.c.b16 %v8332, %v8330
        %8397 = vmatprep.subr.bf16.mxu0 %v8334
        %8398 = vmatpush1.bf16.msra.mxu0 %v8333
        %8399 = vmatprep.subr.bf16.mxu0 %v8336
        %8400 = vmatpush1.bf16.msra.mxu0 %v8335
        %8401 = vmatprep.subr.bf16.mxu0 %v8338
        %8402 = vmatpush1.bf16.msra.mxu0 %v8337
        %8403 = vmatprep.subr.bf16.mxu0 %v8340
        %8404 = vmatpush1.bf16.msra.mxu0 %v8339
        %8405 = vmatprep.subr.bf16.mxu0 %v8342
        %8406 = vmatpush1.bf16.msra.mxu0 %v8341
        %8407 = vmatprep.subr.bf16.mxu0 %v8344
        %8408 = vmatpush1.bf16.msra.mxu0 %v8343
        %8409 = vmatprep.subr.bf16.mxu0 %v8346
        %8410 = vmatpush1.bf16.msra.mxu0 %v8345
        %8411 = vmatprep.subr.bf16.mxu0 %v8348
        %8412 = vmatpush1.bf16.msra.mxu0 %v8347
        %8413 = vmatprep.subr.bf16.mxu0 %v8350
        %8414 = vmatpush1.bf16.msra.mxu0 %v8349
        %8415 = vmatprep.subr.bf16.mxu0 %v8352
        %8416 = vmatpush1.bf16.msra.mxu0 %v8351
        %8417 = vmatprep.subr.bf16.mxu0 %v8354
        %8418 = vmatpush1.bf16.msra.mxu0 %v8353
        %8419 = vmatprep.subr.bf16.mxu0 %v8356
        %8420 = vmatpush1.bf16.msra.mxu0 %v8355
        %8421 = vmatprep.subr.bf16.mxu0 %v8358
        %8422 = vmatpush1.bf16.msra.mxu0 %v8357
        %8423 = vmatprep.subr.bf16.mxu0 %v8360
        %8424 = vmatpush1.bf16.msra.mxu0 %v8359
        %8425 = vmatprep.subr.bf16.mxu0 %v8362
        %8426 = vmatpush1.bf16.msra.mxu0 %v8361
        %8427 = vmatprep.subr.bf16.mxu0 %v8364
        %8428 = vmatpush1.bf16.msra.mxu0 %v8363
        %8429 = vmatprep.mubr.bf16.mxu0 %v8173
        %8430 = vmatmul.mubr.bf16.gmra.mrb[0].mxu0 %v8172
        %v8431 = vpop.f32.mrb[0].mxu0
        %v8432 = vadd.f32 0.0, %v8431
        %v8433 = vpop.f32.mrb[0].mxu0
        %v8434 = vadd.f32 0.0, %v8433
        %v8435 = vpop.f32.mrb[0].mxu0
        %v8436 = vadd.f32 0.0, %v8435
        %v8437 = vpop.f32.mrb[0].mxu0
        %v8438 = vadd.f32 0.0, %v8437
        %8439 = vmatprep.mubr.bf16.mxu0 %v8175
        %8440 = vmatmul.mubr.bf16.gmra.mrb[0].mxu0 %v8174
        %v8441 = vpop.f32.mrb[0].mxu0
        %v8442 = vadd.f32 0.0, %v8441
        %v8443 = vpop.f32.mrb[0].mxu0
        %v8444 = vadd.f32 0.0, %v8443
        %v8445 = vpop.f32.mrb[0].mxu0
        %v8446 = vadd.f32 0.0, %v8445
        %v8447 = vpop.f32.mrb[0].mxu0
        %v8448 = vadd.f32 0.0, %v8447
        %8449 = vmatprep.mubr.bf16.mxu0 %v8177
        %8450 = vmatmul.mubr.bf16.gmra.mrb[0].mxu0 %v8176
        %v8451 = vpop.f32.mrb[0].mxu0
        %v8452 = vadd.f32 0.0, %v8451
        %v8453 = vpop.f32.mrb[0].mxu0
        %v8454 = vadd.f32 0.0, %v8453
        %v8455 = vpop.f32.mrb[0].mxu0
        %v8456 = vadd.f32 0.0, %v8455
        %v8457 = vpop.f32.mrb[0].mxu0
        %v8458 = vadd.f32 0.0, %v8457
        %8459 = vmatprep.mubr.bf16.mxu0 %v8179
        %8460 = vmatmul.mubr.bf16.gmra.mrb[0].mxu0 %v8178
        %v8461 = vpop.f32.mrb[0].mxu0
        %v8462 = vadd.f32 0.0, %v8461
        %v8463 = vpop.f32.mrb[0].mxu0
        %v8464 = vadd.f32 0.0, %v8463
        %v8465 = vpop.f32.mrb[0].mxu0
        %v8466 = vadd.f32 0.0, %v8465
        %v8467 = vpop.f32.mrb[0].mxu0
        %v8468 = vadd.f32 0.0, %v8467
        %8469 = vmatprep.mubr.bf16.mxu0 %v8181
        %8470 = vmatmul.mubr.bf16.gmra.mrb[0].mxu0 %v8180
        %v8471 = vpop.f32.mrb[0].mxu0
        %v8472 = vadd.f32 0.0, %v8471
        %v8473 = vpop.f32.mrb[0].mxu0
        %v8474 = vadd.f32 0.0, %v8473
        %v8475 = vpop.f32.mrb[0].mxu0
        %v8476 = vadd.f32 0.0, %v8475
        %v8477 = vpop.f32.mrb[0].mxu0
        %v8478 = vadd.f32 0.0, %v8477
        %8479 = vmatprep.mubr.bf16.mxu0 %v8183
        %8480 = vmatmul.mubr.bf16.gmra.mrb[0].mxu0 %v8182
        %v8481 = vpop.f32.mrb[0].mxu0
        %v8482 = vadd.f32 0.0, %v8481
        %v8483 = vpop.f32.mrb[0].mxu0
        %v8484 = vadd.f32 0.0, %v8483
        %v8485 = vpop.f32.mrb[0].mxu0
        %v8486 = vadd.f32 0.0, %v8485
        %v8487 = vpop.f32.mrb[0].mxu0
        %v8488 = vadd.f32 0.0, %v8487
        %8489 = vmatprep.mubr.bf16.mxu0 %v8185
        %8490 = vmatmul.mubr.bf16.gmra.mrb[0].mxu0 %v8184
        %v8491 = vpop.f32.mrb[0].mxu0
        %v8492 = vadd.f32 0.0, %v8491
        %v8493 = vpop.f32.mrb[0].mxu0
        %v8494 = vadd.f32 0.0, %v8493
        %v8495 = vpop.f32.mrb[0].mxu0
        %v8496 = vadd.f32 0.0, %v8495
        %v8497 = vpop.f32.mrb[0].mxu0
        %v8498 = vadd.f32 0.0, %v8497
        %8499 = vmatprep.mubr.bf16.mxu0 %v8187
        %8500 = vmatmul.mubr.bf16.gmra.mrb[0].mxu0 %v8186
        %v8501 = vpop.f32.mrb[0].mxu0
        %v8502 = vadd.f32 0.0, %v8501
        %v8503 = vpop.f32.mrb[0].mxu0
        %v8504 = vadd.f32 0.0, %v8503
        %v8505 = vpop.f32.mrb[0].mxu0
        %v8506 = vadd.f32 0.0, %v8505
        %v8507 = vpop.f32.mrb[0].mxu0
        %v8508 = vadd.f32 0.0, %v8507
        %8509 = vmatprep.mubr.bf16.mxu0 %v8189
        %8510 = vmatmul.mubr.bf16.gmra.mrb[0].mxu0 %v8188
        %v8511 = vpop.f32.mrb[0].mxu0
        %v8512 = vadd.f32 0.0, %v8511
        %v8513 = vpop.f32.mrb[0].mxu0
        %v8514 = vadd.f32 0.0, %v8513
        %v8515 = vpop.f32.mrb[0].mxu0
        %v8516 = vadd.f32 0.0, %v8515
        %v8517 = vpop.f32.mrb[0].mxu0
        %v8518 = vadd.f32 0.0, %v8517
        %8519 = vmatprep.mubr.bf16.mxu0 %v8191
        %8520 = vmatmul.mubr.bf16.gmra.mrb[0].mxu0 %v8190
        %v8521 = vpop.f32.mrb[0].mxu0
        %v8522 = vadd.f32 0.0, %v8521
        %v8523 = vpop.f32.mrb[0].mxu0
        %v8524 = vadd.f32 0.0, %v8523
        %v8525 = vpop.f32.mrb[0].mxu0
        %v8526 = vadd.f32 0.0, %v8525
        %v8527 = vpop.f32.mrb[0].mxu0
        %v8528 = vadd.f32 0.0, %v8527
        %8529 = vmatprep.mubr.bf16.mxu0 %v8193
        %8530 = vmatmul.mubr.bf16.gmra.mrb[0].mxu0 %v8192
        %v8531 = vpop.f32.mrb[0].mxu0
        %v8532 = vadd.f32 0.0, %v8531
        %v8533 = vpop.f32.mrb[0].mxu0
        %v8534 = vadd.f32 0.0, %v8533
        %v8535 = vpop.f32.mrb[0].mxu0
        %v8536 = vadd.f32 0.0, %v8535
        %v8537 = vpop.f32.mrb[0].mxu0
        %v8538 = vadd.f32 0.0, %v8537
        %8539 = vmatprep.mubr.bf16.mxu0 %v8195
        %8540 = vmatmul.mubr.bf16.gmra.mrb[0].mxu0 %v8194
        %v8541 = vpop.f32.mrb[0].mxu0
        %v8542 = vadd.f32 0.0, %v8541
        %v8543 = vpop.f32.mrb[0].mxu0
        %v8544 = vadd.f32 0.0, %v8543
        %v8545 = vpop.f32.mrb[0].mxu0
        %v8546 = vadd.f32 0.0, %v8545
        %v8547 = vpop.f32.mrb[0].mxu0
        %v8548 = vadd.f32 0.0, %v8547
        %8549 = vmatprep.mubr.bf16.mxu0 %v8197
        %8550 = vmatmul.mubr.bf16.gmra.mrb[0].mxu0 %v8196
        %v8551 = vpop.f32.mrb[0].mxu0
        %v8552 = vadd.f32 0.0, %v8551
        %v8553 = vpop.f32.mrb[0].mxu0
        %v8554 = vadd.f32 0.0, %v8553
        %v8555 = vpop.f32.mrb[0].mxu0
        %v8556 = vadd.f32 0.0, %v8555
        %v8557 = vpop.f32.mrb[0].mxu0
        %v8558 = vadd.f32 0.0, %v8557
        %8559 = vmatprep.mubr.bf16.mxu0 %v8199
        %8560 = vmatmul.mubr.bf16.gmra.mrb[0].mxu0 %v8198
        %v8561 = vpop.f32.mrb[0].mxu0
        %v8562 = vadd.f32 0.0, %v8561
        %v8563 = vpop.f32.mrb[0].mxu0
        %v8564 = vadd.f32 0.0, %v8563
        %v8565 = vpop.f32.mrb[0].mxu0
        %v8566 = vadd.f32 0.0, %v8565
        %v8567 = vpop.f32.mrb[0].mxu0
        %v8568 = vadd.f32 0.0, %v8567
        %8569 = vmatprep.mubr.bf16.mxu0 %v8201
        %8570 = vmatmul.mubr.bf16.gmra.mrb[0].mxu0 %v8200
        %v8571 = vpop.f32.mrb[0].mxu0
        %v8572 = vadd.f32 0.0, %v8571
        %v8573 = vpop.f32.mrb[0].mxu0
        %v8574 = vadd.f32 0.0, %v8573
        %v8575 = vpop.f32.mrb[0].mxu0
        %v8576 = vadd.f32 0.0, %v8575
        %v8577 = vpop.f32.mrb[0].mxu0
        %v8578 = vadd.f32 0.0, %v8577
        %8579 = vmatprep.mubr.bf16.mxu0 %v8203
        %8580 = vmatmul.mubr.bf16.gmra.mrb[0].mxu0 %v8202
        %v8581 = vpop.f32.mrb[0].mxu0
        %v8582 = vadd.f32 0.0, %v8581
        %v8583 = vpop.f32.mrb[0].mxu0
        %v8584 = vadd.f32 0.0, %v8583
        %v8585 = vpop.f32.mrb[0].mxu0
        %v8586 = vadd.f32 0.0, %v8585
        %v8587 = vpop.f32.mrb[0].mxu0
        %v8588 = vadd.f32 0.0, %v8587
        %8589 = vdwg.mxu0
        %v8590 = vadd.f32 %v8014, %v8432
        %v8591 = vadd.f32 %v8016, %v8434
        %v8592 = vadd.f32 %v8018, %v8436
        %v8593 = vadd.f32 %v8020, %v8438
        %v8594 = vadd.f32 %v8024, %v8442
        %v8595 = vadd.f32 %v8026, %v8444
        %v8596 = vadd.f32 %v8028, %v8446
        %v8597 = vadd.f32 %v8030, %v8448
        %v8598 = vadd.f32 %v8034, %v8452
        %v8599 = vadd.f32 %v8036, %v8454
        %v8600 = vadd.f32 %v8038, %v8456
        %v8601 = vadd.f32 %v8040, %v8458
        %v8602 = vadd.f32 %v8044, %v8462
        %v8603 = vadd.f32 %v8046, %v8464
        %v8604 = vadd.f32 %v8048, %v8466
        %v8605 = vadd.f32 %v8050, %v8468
        %v8606 = vadd.f32 %v8054, %v8472
        %v8607 = vadd.f32 %v8056, %v8474
        %v8608 = vadd.f32 %v8058, %v8476
        %v8609 = vadd.f32 %v8060, %v8478
        %v8610 = vadd.f32 %v8064, %v8482
        %v8611 = vadd.f32 %v8066, %v8484
        %v8612 = vadd.f32 %v8068, %v8486
        %v8613 = vadd.f32 %v8070, %v8488
        %v8614 = vadd.f32 %v8074, %v8492
        %v8615 = vadd.f32 %v8076, %v8494
        %v8616 = vadd.f32 %v8078, %v8496
        %v8617 = vadd.f32 %v8080, %v8498
        %v8618 = vadd.f32 %v8084, %v8502
        %v8619 = vadd.f32 %v8086, %v8504
        %v8620 = vadd.f32 %v8088, %v8506
        %v8621 = vadd.f32 %v8090, %v8508
        %v8622 = vadd.f32 %v8094, %v8512
        %v8623 = vadd.f32 %v8096, %v8514
        %v8624 = vadd.f32 %v8098, %v8516
        %v8625 = vadd.f32 %v8100, %v8518
        %v8626 = vadd.f32 %v8104, %v8522
        %v8627 = vadd.f32 %v8106, %v8524
        %v8628 = vadd.f32 %v8108, %v8526
        %v8629 = vadd.f32 %v8110, %v8528
        %v8630 = vadd.f32 %v8114, %v8532
        %v8631 = vadd.f32 %v8116, %v8534
        %v8632 = vadd.f32 %v8118, %v8536
        %v8633 = vadd.f32 %v8120, %v8538
        %v8634 = vadd.f32 %v8124, %v8542
        %v8635 = vadd.f32 %v8126, %v8544
        %v8636 = vadd.f32 %v8128, %v8546
        %v8637 = vadd.f32 %v8130, %v8548
        %v8638 = vadd.f32 %v8134, %v8552
        %v8639 = vadd.f32 %v8136, %v8554
        %v8640 = vadd.f32 %v8138, %v8556
        %v8641 = vadd.f32 %v8140, %v8558
        %v8642 = vadd.f32 %v8144, %v8562
        %v8643 = vadd.f32 %v8146, %v8564
        %v8644 = vadd.f32 %v8148, %v8566
        %v8645 = vadd.f32 %v8150, %v8568
        %v8646 = vadd.f32 %v8154, %v8572
        %v8647 = vadd.f32 %v8156, %v8574
        %v8648 = vadd.f32 %v8158, %v8576
        %v8649 = vadd.f32 %v8160, %v8578
        %v8650 = vadd.f32 %v8164, %v8582
        %v8651 = vadd.f32 %v8166, %v8584
        %v8652 = vadd.f32 %v8168, %v8586
        %v8653 = vadd.f32 %v8170, %v8588
        %v8654 = vld [vmem:[#allocation3] sm:$0xff]
        %v8655 = vld [vmem:[#allocation3 + $0x8] sm:$0xff]
        %v8656 = vld [vmem:[#allocation3 + $0x10] sm:$0xff]
        %v8657 = vld [vmem:[#allocation3 + $0x18] sm:$0xff]
        %v8658 = vld [vmem:[#allocation3 + $0x20] sm:$0xff]
        %v8659 = vld [vmem:[#allocation3 + $0x28] sm:$0xff]
        %v8660 = vld [vmem:[#allocation3 + $0x30] sm:$0xff]
        %v8661 = vld [vmem:[#allocation3 + $0x38] sm:$0xff]
        %v8662 = vld [vmem:[#allocation3 + $0x40] sm:$0xff]
        %v8663 = vld [vmem:[#allocation3 + $0x48] sm:$0xff]
        %v8664 = vld [vmem:[#allocation3 + $0x50] sm:$0xff]
        %v8665 = vld [vmem:[#allocation3 + $0x58] sm:$0xff]
        %v8666 = vld [vmem:[#allocation3 + $0x60] sm:$0xff]
        %v8667 = vld [vmem:[#allocation3 + $0x68] sm:$0xff]
        %v8668 = vld [vmem:[#allocation3 + $0x70] sm:$0xff]
        %v8669 = vld [vmem:[#allocation3 + $0x78] sm:$0xff]
        %v8670 = vld [vmem:[#allocation3 + $0x80] sm:$0xff]
        %v8671 = vld [vmem:[#allocation3 + $0x88] sm:$0xff]
        %v8672 = vld [vmem:[#allocation3 + $0x90] sm:$0xff]
        %v8673 = vld [vmem:[#allocation3 + $0x98] sm:$0xff]
        %v8674 = vld [vmem:[#allocation3 + $0xa0] sm:$0xff]
        %v8675 = vld [vmem:[#allocation3 + $0xa8] sm:$0xff]
        %v8676 = vld [vmem:[#allocation3 + $0xb0] sm:$0xff]
        %v8677 = vld [vmem:[#allocation3 + $0xb8] sm:$0xff]
        %v8678 = vld [vmem:[#allocation3 + $0xc0] sm:$0xff]
        %v8679 = vld [vmem:[#allocation3 + $0xc8] sm:$0xff]
        %v8680 = vld [vmem:[#allocation3 + $0xd0] sm:$0xff]
        %v8681 = vld [vmem:[#allocation3 + $0xd8] sm:$0xff]
        %v8682 = vld [vmem:[#allocation3 + $0xe0] sm:$0xff]
        %v8683 = vld [vmem:[#allocation3 + $0xe8] sm:$0xff]
        %v8684 = vld [vmem:[#allocation3 + $0xf0] sm:$0xff]
        %v8685 = vld [vmem:[#allocation3 + $0xf8] sm:$0xff]
        %v8686 = vld [vmem:[#allocation3 + $0x100] sm:$0xff]
        %v8687 = vld [vmem:[#allocation3 + $0x108] sm:$0xff]
        %v8688 = vld [vmem:[#allocation3 + $0x110] sm:$0xff]
        %v8689 = vld [vmem:[#allocation3 + $0x118] sm:$0xff]
        %v8690 = vld [vmem:[#allocation3 + $0x120] sm:$0xff]
        %v8691 = vld [vmem:[#allocation3 + $0x128] sm:$0xff]
        %v8692 = vld [vmem:[#allocation3 + $0x130] sm:$0xff]
        %v8693 = vld [vmem:[#allocation3 + $0x138] sm:$0xff]
        %v8694 = vld [vmem:[#allocation3 + $0x140] sm:$0xff]
        %v8695 = vld [vmem:[#allocation3 + $0x148] sm:$0xff]
        %v8696 = vld [vmem:[#allocation3 + $0x150] sm:$0xff]
        %v8697 = vld [vmem:[#allocation3 + $0x158] sm:$0xff]
        %v8698 = vld [vmem:[#allocation3 + $0x160] sm:$0xff]
        %v8699 = vld [vmem:[#allocation3 + $0x168] sm:$0xff]
        %v8700 = vld [vmem:[#allocation3 + $0x170] sm:$0xff]
        %v8701 = vld [vmem:[#allocation3 + $0x178] sm:$0xff]
        %v8702 = vld [vmem:[#allocation3 + $0x180] sm:$0xff]
        %v8703 = vld [vmem:[#allocation3 + $0x188] sm:$0xff]
        %v8704 = vld [vmem:[#allocation3 + $0x190] sm:$0xff]
        %v8705 = vld [vmem:[#allocation3 + $0x198] sm:$0xff]
        %v8706 = vld [vmem:[#allocation3 + $0x1a0] sm:$0xff]
        %v8707 = vld [vmem:[#allocation3 + $0x1a8] sm:$0xff]
        %v8708 = vld [vmem:[#allocation3 + $0x1b0] sm:$0xff]
        %v8709 = vld [vmem:[#allocation3 + $0x1b8] sm:$0xff]
        %v8710 = vld [vmem:[#allocation3 + $0x1c0] sm:$0xff]
        %v8711 = vld [vmem:[#allocation3 + $0x1c8] sm:$0xff]
        %v8712 = vld [vmem:[#allocation3 + $0x1d0] sm:$0xff]
        %v8713 = vld [vmem:[#allocation3 + $0x1d8] sm:$0xff]
        %v8714 = vld [vmem:[#allocation3 + $0x1e0] sm:$0xff]
        %v8715 = vld [vmem:[#allocation3 + $0x1e8] sm:$0xff]
        %v8716 = vld [vmem:[#allocation3 + $0x1f0] sm:$0xff]
        %v8717 = vld [vmem:[#allocation3 + $0x1f8] sm:$0xff]
        %v8718 = vadd.f32 %v8654, %v8590
        %v8719 = vadd.f32 %v8655, %v8591
        %v8720 = vadd.f32 %v8656, %v8592
        %v8721 = vadd.f32 %v8657, %v8593
        %v8722 = vadd.f32 %v8658, %v8594
        %v8723 = vadd.f32 %v8659, %v8595
        %v8724 = vadd.f32 %v8660, %v8596
        %v8725 = vadd.f32 %v8661, %v8597
        %v8726 = vadd.f32 %v8662, %v8598
        %v8727 = vadd.f32 %v8663, %v8599
        %v8728 = vadd.f32 %v8664, %v8600
        %v8729 = vadd.f32 %v8665, %v8601
        %v8730 = vadd.f32 %v8666, %v8602
        %v8731 = vadd.f32 %v8667, %v8603
        %v8732 = vadd.f32 %v8668, %v8604
        %v8733 = vadd.f32 %v8669, %v8605
        %v8734 = vadd.f32 %v8670, %v8606
        %v8735 = vadd.f32 %v8671, %v8607
        %v8736 = vadd.f32 %v8672, %v8608
        %v8737 = vadd.f32 %v8673, %v8609
        %v8738 = vadd.f32 %v8674, %v8610
        %v8739 = vadd.f32 %v8675, %v8611
        %v8740 = vadd.f32 %v8676, %v8612
        %v8741 = vadd.f32 %v8677, %v8613
        %v8742 = vadd.f32 %v8678, %v8614
        %v8743 = vadd.f32 %v8679, %v8615
        %v8744 = vadd.f32 %v8680, %v8616
        %v8745 = vadd.f32 %v8681, %v8617
        %v8746 = vadd.f32 %v8682, %v8618
        %v8747 = vadd.f32 %v8683, %v8619
        %v8748 = vadd.f32 %v8684, %v8620
        %v8749 = vadd.f32 %v8685, %v8621
        %v8750 = vadd.f32 %v8686, %v8622
        %v8751 = vadd.f32 %v8687, %v8623
        %v8752 = vadd.f32 %v8688, %v8624
        %v8753 = vadd.f32 %v8689, %v8625
        %v8754 = vadd.f32 %v8690, %v8626
        %v8755 = vadd.f32 %v8691, %v8627
        %v8756 = vadd.f32 %v8692, %v8628
        %v8757 = vadd.f32 %v8693, %v8629
        %v8758 = vadd.f32 %v8694, %v8630
        %v8759 = vadd.f32 %v8695, %v8631
        %v8760 = vadd.f32 %v8696, %v8632
        %v8761 = vadd.f32 %v8697, %v8633
        %v8762 = vadd.f32 %v8698, %v8634
        %v8763 = vadd.f32 %v8699, %v8635
        %v8764 = vadd.f32 %v8700, %v8636
        %v8765 = vadd.f32 %v8701, %v8637
        %v8766 = vadd.f32 %v8702, %v8638
        %v8767 = vadd.f32 %v8703, %v8639
        %v8768 = vadd.f32 %v8704, %v8640
        %v8769 = vadd.f32 %v8705, %v8641
        %v8770 = vadd.f32 %v8706, %v8642
        %v8771 = vadd.f32 %v8707, %v8643
        %v8772 = vadd.f32 %v8708, %v8644
        %v8773 = vadd.f32 %v8709, %v8645
        %v8774 = vadd.f32 %v8710, %v8646
        %v8775 = vadd.f32 %v8711, %v8647
        %v8776 = vadd.f32 %v8712, %v8648
        %v8777 = vadd.f32 %v8713, %v8649
        %v8778 = vadd.f32 %v8714, %v8650
        %v8779 = vadd.f32 %v8715, %v8651
        %v8780 = vadd.f32 %v8716, %v8652
        %v8781 = vadd.f32 %v8717, %v8653
        %8782 = vst [vmem:[#allocation3] sm:$0xff] %v8718
        %8783 = vst [vmem:[#allocation3 + $0x8] sm:$0xff] %v8719
        %8784 = vst [vmem:[#allocation3 + $0x10] sm:$0xff] %v8720
        %8785 = vst [vmem:[#allocation3 + $0x18] sm:$0xff] %v8721
        %8786 = vst [vmem:[#allocation3 + $0x20] sm:$0xff] %v8722
        %8787 = vst [vmem:[#allocation3 + $0x28] sm:$0xff] %v8723
        %8788 = vst [vmem:[#allocation3 + $0x30] sm:$0xff] %v8724
        %8789 = vst [vmem:[#allocation3 + $0x38] sm:$0xff] %v8725
        %8790 = vst [vmem:[#allocation3 + $0x40] sm:$0xff] %v8726
        %8791 = vst [vmem:[#allocation3 + $0x48] sm:$0xff] %v8727
        %8792 = vst [vmem:[#allocation3 + $0x50] sm:$0xff] %v8728
        %8793 = vst [vmem:[#allocation3 + $0x58] sm:$0xff] %v8729
        %8794 = vst [vmem:[#allocation3 + $0x60] sm:$0xff] %v8730
        %8795 = vst [vmem:[#allocation3 + $0x68] sm:$0xff] %v8731
        %8796 = vst [vmem:[#allocation3 + $0x70] sm:$0xff] %v8732
        %8797 = vst [vmem:[#allocation3 + $0x78] sm:$0xff] %v8733
        %8798 = vst [vmem:[#allocation3 + $0x80] sm:$0xff] %v8734
        %8799 = vst [vmem:[#allocation3 + $0x88] sm:$0xff] %v8735
        %8800 = vst [vmem:[#allocation3 + $0x90] sm:$0xff] %v8736
        %8801 = vst [vmem:[#allocation3 + $0x98] sm:$0xff] %v8737
        %8802 = vst [vmem:[#allocation3 + $0xa0] sm:$0xff] %v8738
        %8803 = vst [vmem:[#allocation3 + $0xa8] sm:$0xff] %v8739
        %8804 = vst [vmem:[#allocation3 + $0xb0] sm:$0xff] %v8740
        %8805 = vst [vmem:[#allocation3 + $0xb8] sm:$0xff] %v8741
        %8806 = vst [vmem:[#allocation3 + $0xc0] sm:$0xff] %v8742
        %8807 = vst [vmem:[#allocation3 + $0xc8] sm:$0xff] %v8743
        %8808 = vst [vmem:[#allocation3 + $0xd0] sm:$0xff] %v8744
        %8809 = vst [vmem:[#allocation3 + $0xd8] sm:$0xff] %v8745
        %8810 = vst [vmem:[#allocation3 + $0xe0] sm:$0xff] %v8746
        %8811 = vst [vmem:[#allocation3 + $0xe8] sm:$0xff] %v8747
        %8812 = vst [vmem:[#allocation3 + $0xf0] sm:$0xff] %v8748
        %8813 = vst [vmem:[#allocation3 + $0xf8] sm:$0xff] %v8749
        %8814 = vst [vmem:[#allocation3 + $0x100] sm:$0xff] %v8750
        %8815 = vst [vmem:[#allocation3 + $0x108] sm:$0xff] %v8751
        %8816 = vst [vmem:[#allocation3 + $0x110] sm:$0xff] %v8752
        %8817 = vst [vmem:[#allocation3 + $0x118] sm:$0xff] %v8753
        %8818 = vst [vmem:[#allocation3 + $0x120] sm:$0xff] %v8754
        %8819 = vst [vmem:[#allocation3 + $0x128] sm:$0xff] %v8755
        %8820 = vst [vmem:[#allocation3 + $0x130] sm:$0xff] %v8756
        %8821 = vst [vmem:[#allocation3 + $0x138] sm:$0xff] %v8757
        %8822 = vst [vmem:[#allocation3 + $0x140] sm:$0xff] %v8758
        %8823 = vst [vmem:[#allocation3 + $0x148] sm:$0xff] %v8759
        %8824 = vst [vmem:[#allocation3 + $0x150] sm:$0xff] %v8760
        %8825 = vst [vmem:[#allocation3 + $0x158] sm:$0xff] %v8761
        %8826 = vst [vmem:[#allocation3 + $0x160] sm:$0xff] %v8762
        %8827 = vst [vmem:[#allocation3 + $0x168] sm:$0xff] %v8763
        %8828 = vst [vmem:[#allocation3 + $0x170] sm:$0xff] %v8764
        %8829 = vst [vmem:[#allocation3 + $0x178] sm:$0xff] %v8765
        %8830 = vst [vmem:[#allocation3 + $0x180] sm:$0xff] %v8766
        %8831 = vst [vmem:[#allocation3 + $0x188] sm:$0xff] %v8767
        %8832 = vst [vmem:[#allocation3 + $0x190] sm:$0xff] %v8768
        %8833 = vst [vmem:[#allocation3 + $0x198] sm:$0xff] %v8769
        %8834 = vst [vmem:[#allocation3 + $0x1a0] sm:$0xff] %v8770
        %8835 = vst [vmem:[#allocation3 + $0x1a8] sm:$0xff] %v8771
        %8836 = vst [vmem:[#allocation3 + $0x1b0] sm:$0xff] %v8772
        %8837 = vst [vmem:[#allocation3 + $0x1b8] sm:$0xff] %v8773
        %8838 = vst [vmem:[#allocation3 + $0x1c0] sm:$0xff] %v8774
        %8839 = vst [vmem:[#allocation3 + $0x1c8] sm:$0xff] %v8775
        %8840 = vst [vmem:[#allocation3 + $0x1d0] sm:$0xff] %v8776
        %8841 = vst [vmem:[#allocation3 + $0x1d8] sm:$0xff] %v8777
        %8842 = vst [vmem:[#allocation3 + $0x1e0] sm:$0xff] %v8778
        %8843 = vst [vmem:[#allocation3 + $0x1e8] sm:$0xff] %v8779
        %8844 = vst [vmem:[#allocation3 + $0x1f0] sm:$0xff] %v8780
        %8845 = vst [vmem:[#allocation3 + $0x1f8] sm:$0xff] %v8781
        %v8846 = vld [vmem:[%s3738] sm:$0xff]
        %v8847 = vld [vmem:[%s3738 + $0x8] sm:$0xff]
        %v8848 = vld [vmem:[%s3738 + $0x10] sm:$0xff]
        %v8849 = vld [vmem:[%s3738 + $0x18] sm:$0xff]
        %v8850 = vld [vmem:[%s3738 + $0x20] sm:$0xff]
        %v8851 = vld [vmem:[%s3738 + $0x28] sm:$0xff]
        %v8852 = vld [vmem:[%s3738 + $0x30] sm:$0xff]
        %v8853 = vld [vmem:[%s3738 + $0x38] sm:$0xff]
        %v8854 = vld [vmem:[%s3738 + $0x40] sm:$0xff]
        %v8855 = vld [vmem:[%s3738 + $0x48] sm:$0xff]
        %v8856 = vld [vmem:[%s3738 + $0x50] sm:$0xff]
        %v8857 = vld [vmem:[%s3738 + $0x58] sm:$0xff]
        %v8858 = vld [vmem:[%s3738 + $0x60] sm:$0xff]
        %v8859 = vld [vmem:[%s3738 + $0x68] sm:$0xff]
        %v8860 = vld [vmem:[%s3738 + $0x70] sm:$0xff]
        %v8861 = vld [vmem:[%s3738 + $0x78] sm:$0xff]
        %v8862 = vld [vmem:[%s3738 + $0x80] sm:$0xff]
        %v8863 = vld [vmem:[%s3738 + $0x88] sm:$0xff]
        %v8864 = vld [vmem:[%s3738 + $0x90] sm:$0xff]
        %v8865 = vld [vmem:[%s3738 + $0x98] sm:$0xff]
        %v8866 = vld [vmem:[%s3738 + $0xa0] sm:$0xff]
        %v8867 = vld [vmem:[%s3738 + $0xa8] sm:$0xff]
        %v8868 = vld [vmem:[%s3738 + $0xb0] sm:$0xff]
        %v8869 = vld [vmem:[%s3738 + $0xb8] sm:$0xff]
        %v8870 = vld [vmem:[%s3738 + $0xc0] sm:$0xff]
        %v8871 = vld [vmem:[%s3738 + $0xc8] sm:$0xff]
        %v8872 = vld [vmem:[%s3738 + $0xd0] sm:$0xff]
        %v8873 = vld [vmem:[%s3738 + $0xd8] sm:$0xff]
        %v8874 = vld [vmem:[%s3738 + $0xe0] sm:$0xff]
        %v8875 = vld [vmem:[%s3738 + $0xe8] sm:$0xff]
        %v8876 = vld [vmem:[%s3738 + $0xf0] sm:$0xff]
        %v8877 = vld [vmem:[%s3738 + $0xf8] sm:$0xff]
        %s8878 = scalar_lea.vmem %s2, 1536
        %v8879 = vld [vmem:[%s8878] sm:$0xff]
        %v8880 = vld [vmem:[%s8878 + $0x8] sm:$0xff]
        %v8881 = vld [vmem:[%s8878 + $0x10] sm:$0xff]
        %v8882 = vld [vmem:[%s8878 + $0x18] sm:$0xff]
        %v8883 = vld [vmem:[%s8878 + $0x20] sm:$0xff]
        %v8884 = vld [vmem:[%s8878 + $0x28] sm:$0xff]
        %v8885 = vld [vmem:[%s8878 + $0x30] sm:$0xff]
        %v8886 = vld [vmem:[%s8878 + $0x38] sm:$0xff]
        %v8887 = vld [vmem:[%s8878 + $0x40] sm:$0xff]
        %v8888 = vld [vmem:[%s8878 + $0x48] sm:$0xff]
        %v8889 = vld [vmem:[%s8878 + $0x50] sm:$0xff]
        %v8890 = vld [vmem:[%s8878 + $0x58] sm:$0xff]
        %v8891 = vld [vmem:[%s8878 + $0x60] sm:$0xff]
        %v8892 = vld [vmem:[%s8878 + $0x68] sm:$0xff]
        %v8893 = vld [vmem:[%s8878 + $0x70] sm:$0xff]
        %v8894 = vld [vmem:[%s8878 + $0x78] sm:$0xff]
        %v8895 = vld [vmem:[%s8878 + $0x80] sm:$0xff]
        %v8896 = vld [vmem:[%s8878 + $0x88] sm:$0xff]
        %v8897 = vld [vmem:[%s8878 + $0x90] sm:$0xff]
        %v8898 = vld [vmem:[%s8878 + $0x98] sm:$0xff]
        %v8899 = vld [vmem:[%s8878 + $0xa0] sm:$0xff]
        %v8900 = vld [vmem:[%s8878 + $0xa8] sm:$0xff]
        %v8901 = vld [vmem:[%s8878 + $0xb0] sm:$0xff]
        %v8902 = vld [vmem:[%s8878 + $0xb8] sm:$0xff]
        %v8903 = vld [vmem:[%s8878 + $0xc0] sm:$0xff]
        %v8904 = vld [vmem:[%s8878 + $0xc8] sm:$0xff]
        %v8905 = vld [vmem:[%s8878 + $0xd0] sm:$0xff]
        %v8906 = vld [vmem:[%s8878 + $0xd8] sm:$0xff]
        %v8907 = vld [vmem:[%s8878 + $0xe0] sm:$0xff]
        %v8908 = vld [vmem:[%s8878 + $0xe8] sm:$0xff]
        %v8909 = vld [vmem:[%s8878 + $0xf0] sm:$0xff]
        %v8910 = vld [vmem:[%s8878 + $0xf8] sm:$0xff]
        %v8911 = vld [vmem:[%s3804] sm:$0xff]
        %v8912 = vld [vmem:[%s3804 + $0x8] sm:$0xff]
        %v8913 = vld [vmem:[%s3804 + $0x10] sm:$0xff]
        %v8914 = vld [vmem:[%s3804 + $0x18] sm:$0xff]
        %v8915 = vld [vmem:[%s3804 + $0x20] sm:$0xff]
        %v8916 = vld [vmem:[%s3804 + $0x28] sm:$0xff]
        %v8917 = vld [vmem:[%s3804 + $0x30] sm:$0xff]
        %v8918 = vld [vmem:[%s3804 + $0x38] sm:$0xff]
        %v8919 = vld [vmem:[%s3804 + $0x40] sm:$0xff]
        %v8920 = vld [vmem:[%s3804 + $0x48] sm:$0xff]
        %v8921 = vld [vmem:[%s3804 + $0x50] sm:$0xff]
        %v8922 = vld [vmem:[%s3804 + $0x58] sm:$0xff]
        %v8923 = vld [vmem:[%s3804 + $0x60] sm:$0xff]
        %v8924 = vld [vmem:[%s3804 + $0x68] sm:$0xff]
        %v8925 = vld [vmem:[%s3804 + $0x70] sm:$0xff]
        %v8926 = vld [vmem:[%s3804 + $0x78] sm:$0xff]
        %v8927 = vld [vmem:[%s3804 + $0x80] sm:$0xff]
        %v8928 = vld [vmem:[%s3804 + $0x88] sm:$0xff]
        %v8929 = vld [vmem:[%s3804 + $0x90] sm:$0xff]
        %v8930 = vld [vmem:[%s3804 + $0x98] sm:$0xff]
        %v8931 = vld [vmem:[%s3804 + $0xa0] sm:$0xff]
        %v8932 = vld [vmem:[%s3804 + $0xa8] sm:$0xff]
        %v8933 = vld [vmem:[%s3804 + $0xb0] sm:$0xff]
        %v8934 = vld [vmem:[%s3804 + $0xb8] sm:$0xff]
        %v8935 = vld [vmem:[%s3804 + $0xc0] sm:$0xff]
        %v8936 = vld [vmem:[%s3804 + $0xc8] sm:$0xff]
        %v8937 = vld [vmem:[%s3804 + $0xd0] sm:$0xff]
        %v8938 = vld [vmem:[%s3804 + $0xd8] sm:$0xff]
        %v8939 = vld [vmem:[%s3804 + $0xe0] sm:$0xff]
        %v8940 = vld [vmem:[%s3804 + $0xe8] sm:$0xff]
        %v8941 = vld [vmem:[%s3804 + $0xf0] sm:$0xff]
        %v8942 = vld [vmem:[%s3804 + $0xf8] sm:$0xff]
        %s8943 = scalar_lea.vmem %s2, 1792
        %v8944 = vld [vmem:[%s8943] sm:$0xff]
        %v8945 = vld [vmem:[%s8943 + $0x8] sm:$0xff]
        %v8946 = vld [vmem:[%s8943 + $0x10] sm:$0xff]
        %v8947 = vld [vmem:[%s8943 + $0x18] sm:$0xff]
        %v8948 = vld [vmem:[%s8943 + $0x20] sm:$0xff]
        %v8949 = vld [vmem:[%s8943 + $0x28] sm:$0xff]
        %v8950 = vld [vmem:[%s8943 + $0x30] sm:$0xff]
        %v8951 = vld [vmem:[%s8943 + $0x38] sm:$0xff]
        %v8952 = vld [vmem:[%s8943 + $0x40] sm:$0xff]
        %v8953 = vld [vmem:[%s8943 + $0x48] sm:$0xff]
        %v8954 = vld [vmem:[%s8943 + $0x50] sm:$0xff]
        %v8955 = vld [vmem:[%s8943 + $0x58] sm:$0xff]
        %v8956 = vld [vmem:[%s8943 + $0x60] sm:$0xff]
        %v8957 = vld [vmem:[%s8943 + $0x68] sm:$0xff]
        %v8958 = vld [vmem:[%s8943 + $0x70] sm:$0xff]
        %v8959 = vld [vmem:[%s8943 + $0x78] sm:$0xff]
        %v8960 = vld [vmem:[%s8943 + $0x80] sm:$0xff]
        %v8961 = vld [vmem:[%s8943 + $0x88] sm:$0xff]
        %v8962 = vld [vmem:[%s8943 + $0x90] sm:$0xff]
        %v8963 = vld [vmem:[%s8943 + $0x98] sm:$0xff]
        %v8964 = vld [vmem:[%s8943 + $0xa0] sm:$0xff]
        %v8965 = vld [vmem:[%s8943 + $0xa8] sm:$0xff]
        %v8966 = vld [vmem:[%s8943 + $0xb0] sm:$0xff]
        %v8967 = vld [vmem:[%s8943 + $0xb8] sm:$0xff]
        %v8968 = vld [vmem:[%s8943 + $0xc0] sm:$0xff]
        %v8969 = vld [vmem:[%s8943 + $0xc8] sm:$0xff]
        %v8970 = vld [vmem:[%s8943 + $0xd0] sm:$0xff]
        %v8971 = vld [vmem:[%s8943 + $0xd8] sm:$0xff]
        %v8972 = vld [vmem:[%s8943 + $0xe0] sm:$0xff]
        %v8973 = vld [vmem:[%s8943 + $0xe8] sm:$0xff]
        %v8974 = vld [vmem:[%s8943 + $0xf0] sm:$0xff]
        %v8975 = vld [vmem:[%s8943 + $0xf8] sm:$0xff]
        %v9008 = vunpack.c.l.b16 %v8944
        %v9009 = vunpack.c.h.b16 %v8944
        %v9010 = vunpack.c.l.b16 %v8945
        %v9011 = vunpack.c.h.b16 %v8945
        %v9012 = vunpack.c.l.b16 %v8946
        %v9013 = vunpack.c.h.b16 %v8946
        %v9014 = vunpack.c.l.b16 %v8947
        %v9015 = vunpack.c.h.b16 %v8947
        %v9016 = vunpack.c.l.b16 %v8948
        %v9017 = vunpack.c.h.b16 %v8948
        %v9018 = vunpack.c.l.b16 %v8949
        %v9019 = vunpack.c.h.b16 %v8949
        %v9020 = vunpack.c.l.b16 %v8950
        %v9021 = vunpack.c.h.b16 %v8950
        %v9022 = vunpack.c.l.b16 %v8951
        %v9023 = vunpack.c.h.b16 %v8951
        %v9024 = vunpack.c.l.b16 %v8952
        %v9025 = vunpack.c.h.b16 %v8952
        %v9026 = vunpack.c.l.b16 %v8953
        %v9027 = vunpack.c.h.b16 %v8953
        %v9028 = vunpack.c.l.b16 %v8954
        %v9029 = vunpack.c.h.b16 %v8954
        %v9030 = vunpack.c.l.b16 %v8955
        %v9031 = vunpack.c.h.b16 %v8955
        %v9032 = vunpack.c.l.b16 %v8956
        %v9033 = vunpack.c.h.b16 %v8956
        %v9034 = vunpack.c.l.b16 %v8957
        %v9035 = vunpack.c.h.b16 %v8957
        %v9036 = vunpack.c.l.b16 %v8958
        %v9037 = vunpack.c.h.b16 %v8958
        %v9038 = vunpack.c.l.b16 %v8959
        %v9039 = vunpack.c.h.b16 %v8959
        %v9040 = vunpack.c.l.b16 %v8960
        %v9041 = vunpack.c.h.b16 %v8960
        %v9042 = vunpack.c.l.b16 %v8961
        %v9043 = vunpack.c.h.b16 %v8961
        %v9044 = vunpack.c.l.b16 %v8962
        %v9045 = vunpack.c.h.b16 %v8962
        %v9046 = vunpack.c.l.b16 %v8963
        %v9047 = vunpack.c.h.b16 %v8963
        %v9048 = vunpack.c.l.b16 %v8964
        %v9049 = vunpack.c.h.b16 %v8964
        %v9050 = vunpack.c.l.b16 %v8965
        %v9051 = vunpack.c.h.b16 %v8965
        %v9052 = vunpack.c.l.b16 %v8966
        %v9053 = vunpack.c.h.b16 %v8966
        %v9054 = vunpack.c.l.b16 %v8967
        %v9055 = vunpack.c.h.b16 %v8967
        %v9056 = vunpack.c.l.b16 %v8968
        %v9057 = vunpack.c.h.b16 %v8968
        %v9058 = vunpack.c.l.b16 %v8969
        %v9059 = vunpack.c.h.b16 %v8969
        %v9060 = vunpack.c.l.b16 %v8970
        %v9061 = vunpack.c.h.b16 %v8970
        %v9062 = vunpack.c.l.b16 %v8971
        %v9063 = vunpack.c.h.b16 %v8971
        %v9064 = vunpack.c.l.b16 %v8972
        %v9065 = vunpack.c.h.b16 %v8972
        %v9066 = vunpack.c.l.b16 %v8973
        %v9067 = vunpack.c.h.b16 %v8973
        %v9068 = vunpack.c.l.b16 %v8974
        %v9069 = vunpack.c.h.b16 %v8974
        %v9070 = vunpack.c.l.b16 %v8975
        %v9071 = vunpack.c.h.b16 %v8975
        %v9072 = vpack.c.b16 %v9010, %v9008
        %v9073 = vpack.c.b16 %v9011, %v9009
        %v9074 = vpack.c.b16 %v9014, %v9012
        %v9075 = vpack.c.b16 %v9015, %v9013
        %v9076 = vpack.c.b16 %v9018, %v9016
        %v9077 = vpack.c.b16 %v9019, %v9017
        %v9078 = vpack.c.b16 %v9022, %v9020
        %v9079 = vpack.c.b16 %v9023, %v9021
        %v9080 = vpack.c.b16 %v9026, %v9024
        %v9081 = vpack.c.b16 %v9027, %v9025
        %v9082 = vpack.c.b16 %v9030, %v9028
        %v9083 = vpack.c.b16 %v9031, %v9029
        %v9084 = vpack.c.b16 %v9034, %v9032
        %v9085 = vpack.c.b16 %v9035, %v9033
        %v9086 = vpack.c.b16 %v9038, %v9036
        %v9087 = vpack.c.b16 %v9039, %v9037
        %v9088 = vpack.c.b16 %v9042, %v9040
        %v9089 = vpack.c.b16 %v9043, %v9041
        %v9090 = vpack.c.b16 %v9046, %v9044
        %v9091 = vpack.c.b16 %v9047, %v9045
        %v9092 = vpack.c.b16 %v9050, %v9048
        %v9093 = vpack.c.b16 %v9051, %v9049
        %v9094 = vpack.c.b16 %v9054, %v9052
        %v9095 = vpack.c.b16 %v9055, %v9053
        %v9096 = vpack.c.b16 %v9058, %v9056
        %v9097 = vpack.c.b16 %v9059, %v9057
        %v9098 = vpack.c.b16 %v9062, %v9060
        %v9099 = vpack.c.b16 %v9063, %v9061
        %v9100 = vpack.c.b16 %v9066, %v9064
        %v9101 = vpack.c.b16 %v9067, %v9065
        %v9102 = vpack.c.b16 %v9070, %v9068
        %v9103 = vpack.c.b16 %v9071, %v9069
        %9136 = vmatprep.subr.bf16.mxu0 %v9073
        %9137 = vmatpush1.bf16.msra.mxu0 %v9072
        %9138 = vmatprep.subr.bf16.mxu0 %v9075
        %9139 = vmatpush1.bf16.msra.mxu0 %v9074
        %9140 = vmatprep.subr.bf16.mxu0 %v9077
        %9141 = vmatpush1.bf16.msra.mxu0 %v9076
        %9142 = vmatprep.subr.bf16.mxu0 %v9079
        %9143 = vmatpush1.bf16.msra.mxu0 %v9078
        %9144 = vmatprep.subr.bf16.mxu0 %v9081
        %9145 = vmatpush1.bf16.msra.mxu0 %v9080
        %9146 = vmatprep.subr.bf16.mxu0 %v9083
        %9147 = vmatpush1.bf16.msra.mxu0 %v9082
        %9148 = vmatprep.subr.bf16.mxu0 %v9085
        %9149 = vmatpush1.bf16.msra.mxu0 %v9084
        %9150 = vmatprep.subr.bf16.mxu0 %v9087
        %9151 = vmatpush1.bf16.msra.mxu0 %v9086
        %9152 = vmatprep.subr.bf16.mxu0 %v9089
        %9153 = vmatpush1.bf16.msra.mxu0 %v9088
        %9154 = vmatprep.subr.bf16.mxu0 %v9091
        %9155 = vmatpush1.bf16.msra.mxu0 %v9090
        %9156 = vmatprep.subr.bf16.mxu0 %v9093
        %9157 = vmatpush1.bf16.msra.mxu0 %v9092
        %9158 = vmatprep.subr.bf16.mxu0 %v9095
        %9159 = vmatpush1.bf16.msra.mxu0 %v9094
        %9160 = vmatprep.subr.bf16.mxu0 %v9097
        %9161 = vmatpush1.bf16.msra.mxu0 %v9096
        %9162 = vmatprep.subr.bf16.mxu0 %v9099
        %9163 = vmatpush1.bf16.msra.mxu0 %v9098
        %9164 = vmatprep.subr.bf16.mxu0 %v9101
        %9165 = vmatpush1.bf16.msra.mxu0 %v9100
        %9166 = vmatprep.subr.bf16.mxu0 %v9103
        %9167 = vmatpush1.bf16.msra.mxu0 %v9102
        %9168 = vmatprep.mubr.bf16.mxu0 %v8912
        %9169 = vmatmul.mubr.bf16.gmra.mrb[0].mxu0 %v8911
        %v9170 = vpop.f32.mrb[0].mxu0
        %v9171 = vadd.f32 0.0, %v9170
        %v9172 = vpop.f32.mrb[0].mxu0
        %v9173 = vadd.f32 0.0, %v9172
        %v9174 = vpop.f32.mrb[0].mxu0
        %v9175 = vadd.f32 0.0, %v9174
        %v9176 = vpop.f32.mrb[0].mxu0
        %v9177 = vadd.f32 0.0, %v9176
        %9178 = vmatprep.mubr.bf16.mxu0 %v8914
        %9179 = vmatmul.mubr.bf16.gmra.mrb[0].mxu0 %v8913
        %v9180 = vpop.f32.mrb[0].mxu0
        %v9181 = vadd.f32 0.0, %v9180
        %v9182 = vpop.f32.mrb[0].mxu0
        %v9183 = vadd.f32 0.0, %v9182
        %v9184 = vpop.f32.mrb[0].mxu0
        %v9185 = vadd.f32 0.0, %v9184
        %v9186 = vpop.f32.mrb[0].mxu0
        %v9187 = vadd.f32 0.0, %v9186
        %9188 = vmatprep.mubr.bf16.mxu0 %v8916
        %9189 = vmatmul.mubr.bf16.gmra.mrb[0].mxu0 %v8915
        %v9190 = vpop.f32.mrb[0].mxu0
        %v9191 = vadd.f32 0.0, %v9190
        %v9192 = vpop.f32.mrb[0].mxu0
        %v9193 = vadd.f32 0.0, %v9192
        %v9194 = vpop.f32.mrb[0].mxu0
        %v9195 = vadd.f32 0.0, %v9194
        %v9196 = vpop.f32.mrb[0].mxu0
        %v9197 = vadd.f32 0.0, %v9196
        %9198 = vmatprep.mubr.bf16.mxu0 %v8918
        %9199 = vmatmul.mubr.bf16.gmra.mrb[0].mxu0 %v8917
        %v9200 = vpop.f32.mrb[0].mxu0
        %v9201 = vadd.f32 0.0, %v9200
        %v9202 = vpop.f32.mrb[0].mxu0
        %v9203 = vadd.f32 0.0, %v9202
        %v9204 = vpop.f32.mrb[0].mxu0
        %v9205 = vadd.f32 0.0, %v9204
        %v9206 = vpop.f32.mrb[0].mxu0
        %v9207 = vadd.f32 0.0, %v9206
        %9208 = vmatprep.mubr.bf16.mxu0 %v8920
        %9209 = vmatmul.mubr.bf16.gmra.mrb[0].mxu0 %v8919
        %v9210 = vpop.f32.mrb[0].mxu0
        %v9211 = vadd.f32 0.0, %v9210
        %v9212 = vpop.f32.mrb[0].mxu0
        %v9213 = vadd.f32 0.0, %v9212
        %v9214 = vpop.f32.mrb[0].mxu0
        %v9215 = vadd.f32 0.0, %v9214
        %v9216 = vpop.f32.mrb[0].mxu0
        %v9217 = vadd.f32 0.0, %v9216
        %9218 = vmatprep.mubr.bf16.mxu0 %v8922
        %9219 = vmatmul.mubr.bf16.gmra.mrb[0].mxu0 %v8921
        %v9220 = vpop.f32.mrb[0].mxu0
        %v9221 = vadd.f32 0.0, %v9220
        %v9222 = vpop.f32.mrb[0].mxu0
        %v9223 = vadd.f32 0.0, %v9222
        %v9224 = vpop.f32.mrb[0].mxu0
        %v9225 = vadd.f32 0.0, %v9224
        %v9226 = vpop.f32.mrb[0].mxu0
        %v9227 = vadd.f32 0.0, %v9226
        %9228 = vmatprep.mubr.bf16.mxu0 %v8924
        %9229 = vmatmul.mubr.bf16.gmra.mrb[0].mxu0 %v8923
        %v9230 = vpop.f32.mrb[0].mxu0
        %v9231 = vadd.f32 0.0, %v9230
        %v9232 = vpop.f32.mrb[0].mxu0
        %v9233 = vadd.f32 0.0, %v9232
        %v9234 = vpop.f32.mrb[0].mxu0
        %v9235 = vadd.f32 0.0, %v9234
        %v9236 = vpop.f32.mrb[0].mxu0
        %v9237 = vadd.f32 0.0, %v9236
        %9238 = vmatprep.mubr.bf16.mxu0 %v8926
        %9239 = vmatmul.mubr.bf16.gmra.mrb[0].mxu0 %v8925
        %v9240 = vpop.f32.mrb[0].mxu0
        %v9241 = vadd.f32 0.0, %v9240
        %v9242 = vpop.f32.mrb[0].mxu0
        %v9243 = vadd.f32 0.0, %v9242
        %v9244 = vpop.f32.mrb[0].mxu0
        %v9245 = vadd.f32 0.0, %v9244
        %v9246 = vpop.f32.mrb[0].mxu0
        %v9247 = vadd.f32 0.0, %v9246
        %9248 = vmatprep.mubr.bf16.mxu0 %v8928
        %9249 = vmatmul.mubr.bf16.gmra.mrb[0].mxu0 %v8927
        %v9250 = vpop.f32.mrb[0].mxu0
        %v9251 = vadd.f32 0.0, %v9250
        %v9252 = vpop.f32.mrb[0].mxu0
        %v9253 = vadd.f32 0.0, %v9252
        %v9254 = vpop.f32.mrb[0].mxu0
        %v9255 = vadd.f32 0.0, %v9254
        %v9256 = vpop.f32.mrb[0].mxu0
        %v9257 = vadd.f32 0.0, %v9256
        %9258 = vmatprep.mubr.bf16.mxu0 %v8930
        %9259 = vmatmul.mubr.bf16.gmra.mrb[0].mxu0 %v8929
        %v9260 = vpop.f32.mrb[0].mxu0
        %v9261 = vadd.f32 0.0, %v9260
        %v9262 = vpop.f32.mrb[0].mxu0
        %v9263 = vadd.f32 0.0, %v9262
        %v9264 = vpop.f32.mrb[0].mxu0
        %v9265 = vadd.f32 0.0, %v9264
        %v9266 = vpop.f32.mrb[0].mxu0
        %v9267 = vadd.f32 0.0, %v9266
        %9268 = vmatprep.mubr.bf16.mxu0 %v8932
        %9269 = vmatmul.mubr.bf16.gmra.mrb[0].mxu0 %v8931
        %v9270 = vpop.f32.mrb[0].mxu0
        %v9271 = vadd.f32 0.0, %v9270
        %v9272 = vpop.f32.mrb[0].mxu0
        %v9273 = vadd.f32 0.0, %v9272
        %v9274 = vpop.f32.mrb[0].mxu0
        %v9275 = vadd.f32 0.0, %v9274
        %v9276 = vpop.f32.mrb[0].mxu0
        %v9277 = vadd.f32 0.0, %v9276
        %9278 = vmatprep.mubr.bf16.mxu0 %v8934
        %9279 = vmatmul.mubr.bf16.gmra.mrb[0].mxu0 %v8933
        %v9280 = vpop.f32.mrb[0].mxu0
        %v9281 = vadd.f32 0.0, %v9280
        %v9282 = vpop.f32.mrb[0].mxu0
        %v9283 = vadd.f32 0.0, %v9282
        %v9284 = vpop.f32.mrb[0].mxu0
        %v9285 = vadd.f32 0.0, %v9284
        %v9286 = vpop.f32.mrb[0].mxu0
        %v9287 = vadd.f32 0.0, %v9286
        %9288 = vmatprep.mubr.bf16.mxu0 %v8936
        %9289 = vmatmul.mubr.bf16.gmra.mrb[0].mxu0 %v8935
        %v9290 = vpop.f32.mrb[0].mxu0
        %v9291 = vadd.f32 0.0, %v9290
        %v9292 = vpop.f32.mrb[0].mxu0
        %v9293 = vadd.f32 0.0, %v9292
        %v9294 = vpop.f32.mrb[0].mxu0
        %v9295 = vadd.f32 0.0, %v9294
        %v9296 = vpop.f32.mrb[0].mxu0
        %v9297 = vadd.f32 0.0, %v9296
        %9298 = vmatprep.mubr.bf16.mxu0 %v8938
        %9299 = vmatmul.mubr.bf16.gmra.mrb[0].mxu0 %v8937
        %v9300 = vpop.f32.mrb[0].mxu0
        %v9301 = vadd.f32 0.0, %v9300
        %v9302 = vpop.f32.mrb[0].mxu0
        %v9303 = vadd.f32 0.0, %v9302
        %v9304 = vpop.f32.mrb[0].mxu0
        %v9305 = vadd.f32 0.0, %v9304
        %v9306 = vpop.f32.mrb[0].mxu0
        %v9307 = vadd.f32 0.0, %v9306
        %9308 = vmatprep.mubr.bf16.mxu0 %v8940
        %9309 = vmatmul.mubr.bf16.gmra.mrb[0].mxu0 %v8939
        %v9310 = vpop.f32.mrb[0].mxu0
        %v9311 = vadd.f32 0.0, %v9310
        %v9312 = vpop.f32.mrb[0].mxu0
        %v9313 = vadd.f32 0.0, %v9312
        %v9314 = vpop.f32.mrb[0].mxu0
        %v9315 = vadd.f32 0.0, %v9314
        %v9316 = vpop.f32.mrb[0].mxu0
        %v9317 = vadd.f32 0.0, %v9316
        %9318 = vmatprep.mubr.bf16.mxu0 %v8942
        %9319 = vmatmul.mubr.bf16.gmra.mrb[0].mxu0 %v8941
        %v9320 = vpop.f32.mrb[0].mxu0
        %v9321 = vadd.f32 0.0, %v9320
        %v9322 = vpop.f32.mrb[0].mxu0
        %v9323 = vadd.f32 0.0, %v9322
        %v9324 = vpop.f32.mrb[0].mxu0
        %v9325 = vadd.f32 0.0, %v9324
        %v9326 = vpop.f32.mrb[0].mxu0
        %v9327 = vadd.f32 0.0, %v9326
        %9328 = vdwg.mxu0
        %v9361 = vunpack.c.l.b16 %v8879
        %v9362 = vunpack.c.h.b16 %v8879
        %v9363 = vunpack.c.l.b16 %v8880
        %v9364 = vunpack.c.h.b16 %v8880
        %v9365 = vunpack.c.l.b16 %v8881
        %v9366 = vunpack.c.h.b16 %v8881
        %v9367 = vunpack.c.l.b16 %v8882
        %v9368 = vunpack.c.h.b16 %v8882
        %v9369 = vunpack.c.l.b16 %v8883
        %v9370 = vunpack.c.h.b16 %v8883
        %v9371 = vunpack.c.l.b16 %v8884
        %v9372 = vunpack.c.h.b16 %v8884
        %v9373 = vunpack.c.l.b16 %v8885
        %v9374 = vunpack.c.h.b16 %v8885
        %v9375 = vunpack.c.l.b16 %v8886
        %v9376 = vunpack.c.h.b16 %v8886
        %v9377 = vunpack.c.l.b16 %v8887
        %v9378 = vunpack.c.h.b16 %v8887
        %v9379 = vunpack.c.l.b16 %v8888
        %v9380 = vunpack.c.h.b16 %v8888
        %v9381 = vunpack.c.l.b16 %v8889
        %v9382 = vunpack.c.h.b16 %v8889
        %v9383 = vunpack.c.l.b16 %v8890
        %v9384 = vunpack.c.h.b16 %v8890
        %v9385 = vunpack.c.l.b16 %v8891
        %v9386 = vunpack.c.h.b16 %v8891
        %v9387 = vunpack.c.l.b16 %v8892
        %v9388 = vunpack.c.h.b16 %v8892
        %v9389 = vunpack.c.l.b16 %v8893
        %v9390 = vunpack.c.h.b16 %v8893
        %v9391 = vunpack.c.l.b16 %v8894
        %v9392 = vunpack.c.h.b16 %v8894
        %v9393 = vunpack.c.l.b16 %v8895
        %v9394 = vunpack.c.h.b16 %v8895
        %v9395 = vunpack.c.l.b16 %v8896
        %v9396 = vunpack.c.h.b16 %v8896
        %v9397 = vunpack.c.l.b16 %v8897
        %v9398 = vunpack.c.h.b16 %v8897
        %v9399 = vunpack.c.l.b16 %v8898
        %v9400 = vunpack.c.h.b16 %v8898
        %v9401 = vunpack.c.l.b16 %v8899
        %v9402 = vunpack.c.h.b16 %v8899
        %v9403 = vunpack.c.l.b16 %v8900
        %v9404 = vunpack.c.h.b16 %v8900
        %v9405 = vunpack.c.l.b16 %v8901
        %v9406 = vunpack.c.h.b16 %v8901
        %v9407 = vunpack.c.l.b16 %v8902
        %v9408 = vunpack.c.h.b16 %v8902
        %v9409 = vunpack.c.l.b16 %v8903
        %v9410 = vunpack.c.h.b16 %v8903
        %v9411 = vunpack.c.l.b16 %v8904
        %v9412 = vunpack.c.h.b16 %v8904
        %v9413 = vunpack.c.l.b16 %v8905
        %v9414 = vunpack.c.h.b16 %v8905
        %v9415 = vunpack.c.l.b16 %v8906
        %v9416 = vunpack.c.h.b16 %v8906
        %v9417 = vunpack.c.l.b16 %v8907
        %v9418 = vunpack.c.h.b16 %v8907
        %v9419 = vunpack.c.l.b16 %v8908
        %v9420 = vunpack.c.h.b16 %v8908
        %v9421 = vunpack.c.l.b16 %v8909
        %v9422 = vunpack.c.h.b16 %v8909
        %v9423 = vunpack.c.l.b16 %v8910
        %v9424 = vunpack.c.h.b16 %v8910
        %v9425 = vpack.c.b16 %v9363, %v9361
        %v9426 = vpack.c.b16 %v9364, %v9362
        %v9427 = vpack.c.b16 %v9367, %v9365
        %v9428 = vpack.c.b16 %v9368, %v9366
        %v9429 = vpack.c.b16 %v9371, %v9369
        %v9430 = vpack.c.b16 %v9372, %v9370
        %v9431 = vpack.c.b16 %v9375, %v9373
        %v9432 = vpack.c.b16 %v9376, %v9374
        %v9433 = vpack.c.b16 %v9379, %v9377
        %v9434 = vpack.c.b16 %v9380, %v9378
        %v9435 = vpack.c.b16 %v9383, %v9381
        %v9436 = vpack.c.b16 %v9384, %v9382
        %v9437 = vpack.c.b16 %v9387, %v9385
        %v9438 = vpack.c.b16 %v9388, %v9386
        %v9439 = vpack.c.b16 %v9391, %v9389
        %v9440 = vpack.c.b16 %v9392, %v9390
        %v9441 = vpack.c.b16 %v9395, %v9393
        %v9442 = vpack.c.b16 %v9396, %v9394
        %v9443 = vpack.c.b16 %v9399, %v9397
        %v9444 = vpack.c.b16 %v9400, %v9398
        %v9445 = vpack.c.b16 %v9403, %v9401
        %v9446 = vpack.c.b16 %v9404, %v9402
        %v9447 = vpack.c.b16 %v9407, %v9405
        %v9448 = vpack.c.b16 %v9408, %v9406
        %v9449 = vpack.c.b16 %v9411, %v9409
        %v9450 = vpack.c.b16 %v9412, %v9410
        %v9451 = vpack.c.b16 %v9415, %v9413
        %v9452 = vpack.c.b16 %v9416, %v9414
        %v9453 = vpack.c.b16 %v9419, %v9417
        %v9454 = vpack.c.b16 %v9420, %v9418
        %v9455 = vpack.c.b16 %v9423, %v9421
        %v9456 = vpack.c.b16 %v9424, %v9422
        %9489 = vmatprep.subr.bf16.mxu0 %v9426
        %9490 = vmatpush1.bf16.msra.mxu0 %v9425
        %9491 = vmatprep.subr.bf16.mxu0 %v9428
        %9492 = vmatpush1.bf16.msra.mxu0 %v9427
        %9493 = vmatprep.subr.bf16.mxu0 %v9430
        %9494 = vmatpush1.bf16.msra.mxu0 %v9429
        %9495 = vmatprep.subr.bf16.mxu0 %v9432
        %9496 = vmatpush1.bf16.msra.mxu0 %v9431
        %9497 = vmatprep.subr.bf16.mxu0 %v9434
        %9498 = vmatpush1.bf16.msra.mxu0 %v9433
        %9499 = vmatprep.subr.bf16.mxu0 %v9436
        %9500 = vmatpush1.bf16.msra.mxu0 %v9435
        %9501 = vmatprep.subr.bf16.mxu0 %v9438
        %9502 = vmatpush1.bf16.msra.mxu0 %v9437
        %9503 = vmatprep.subr.bf16.mxu0 %v9440
        %9504 = vmatpush1.bf16.msra.mxu0 %v9439
        %9505 = vmatprep.subr.bf16.mxu0 %v9442
        %9506 = vmatpush1.bf16.msra.mxu0 %v9441
        %9507 = vmatprep.subr.bf16.mxu0 %v9444
        %9508 = vmatpush1.bf16.msra.mxu0 %v9443
        %9509 = vmatprep.subr.bf16.mxu0 %v9446
        %9510 = vmatpush1.bf16.msra.mxu0 %v9445
        %9511 = vmatprep.subr.bf16.mxu0 %v9448
        %9512 = vmatpush1.bf16.msra.mxu0 %v9447
        %9513 = vmatprep.subr.bf16.mxu0 %v9450
        %9514 = vmatpush1.bf16.msra.mxu0 %v9449
        %9515 = vmatprep.subr.bf16.mxu0 %v9452
        %9516 = vmatpush1.bf16.msra.mxu0 %v9451
        %9517 = vmatprep.subr.bf16.mxu0 %v9454
        %9518 = vmatpush1.bf16.msra.mxu0 %v9453
        %9519 = vmatprep.subr.bf16.mxu0 %v9456
        %9520 = vmatpush1.bf16.msra.mxu0 %v9455
        %9521 = vmatprep.mubr.bf16.mxu0 %v8847
        %9522 = vmatmul.mubr.bf16.gmra.mrb[0].mxu0 %v8846
        %v9523 = vpop.f32.mrb[0].mxu0
        %v9524 = vadd.f32 %v9171, %v9523
        %v9525 = vpop.f32.mrb[0].mxu0
        %v9526 = vadd.f32 %v9173, %v9525
        %v9527 = vpop.f32.mrb[0].mxu0
        %v9528 = vadd.f32 %v9175, %v9527
        %v9529 = vpop.f32.mrb[0].mxu0
        %v9530 = vadd.f32 %v9177, %v9529
        %9531 = vmatprep.mubr.bf16.mxu0 %v8849
        %9532 = vmatmul.mubr.bf16.gmra.mrb[0].mxu0 %v8848
        %v9533 = vpop.f32.mrb[0].mxu0
        %v9534 = vadd.f32 %v9181, %v9533
        %v9535 = vpop.f32.mrb[0].mxu0
        %v9536 = vadd.f32 %v9183, %v9535
        %v9537 = vpop.f32.mrb[0].mxu0
        %v9538 = vadd.f32 %v9185, %v9537
        %v9539 = vpop.f32.mrb[0].mxu0
        %v9540 = vadd.f32 %v9187, %v9539
        %9541 = vmatprep.mubr.bf16.mxu0 %v8851
        %9542 = vmatmul.mubr.bf16.gmra.mrb[0].mxu0 %v8850
        %v9543 = vpop.f32.mrb[0].mxu0
        %v9544 = vadd.f32 %v9191, %v9543
        %v9545 = vpop.f32.mrb[0].mxu0
        %v9546 = vadd.f32 %v9193, %v9545
        %v9547 = vpop.f32.mrb[0].mxu0
        %v9548 = vadd.f32 %v9195, %v9547
        %v9549 = vpop.f32.mrb[0].mxu0
        %v9550 = vadd.f32 %v9197, %v9549
        %9551 = vmatprep.mubr.bf16.mxu0 %v8853
        %9552 = vmatmul.mubr.bf16.gmra.mrb[0].mxu0 %v8852
        %v9553 = vpop.f32.mrb[0].mxu0
        %v9554 = vadd.f32 %v9201, %v9553
        %v9555 = vpop.f32.mrb[0].mxu0
        %v9556 = vadd.f32 %v9203, %v9555
        %v9557 = vpop.f32.mrb[0].mxu0
        %v9558 = vadd.f32 %v9205, %v9557
        %v9559 = vpop.f32.mrb[0].mxu0
        %v9560 = vadd.f32 %v9207, %v9559
        %9561 = vmatprep.mubr.bf16.mxu0 %v8855
        %9562 = vmatmul.mubr.bf16.gmra.mrb[0].mxu0 %v8854
        %v9563 = vpop.f32.mrb[0].mxu0
        %v9564 = vadd.f32 %v9211, %v9563
        %v9565 = vpop.f32.mrb[0].mxu0
        %v9566 = vadd.f32 %v9213, %v9565
        %v9567 = vpop.f32.mrb[0].mxu0
        %v9568 = vadd.f32 %v9215, %v9567
        %v9569 = vpop.f32.mrb[0].mxu0
        %v9570 = vadd.f32 %v9217, %v9569
        %9571 = vmatprep.mubr.bf16.mxu0 %v8857
        %9572 = vmatmul.mubr.bf16.gmra.mrb[0].mxu0 %v8856
        %v9573 = vpop.f32.mrb[0].mxu0
        %v9574 = vadd.f32 %v9221, %v9573
        %v9575 = vpop.f32.mrb[0].mxu0
        %v9576 = vadd.f32 %v9223, %v9575
        %v9577 = vpop.f32.mrb[0].mxu0
        %v9578 = vadd.f32 %v9225, %v9577
        %v9579 = vpop.f32.mrb[0].mxu0
        %v9580 = vadd.f32 %v9227, %v9579
        %9581 = vmatprep.mubr.bf16.mxu0 %v8859
        %9582 = vmatmul.mubr.bf16.gmra.mrb[0].mxu0 %v8858
        %v9583 = vpop.f32.mrb[0].mxu0
        %v9584 = vadd.f32 %v9231, %v9583
        %v9585 = vpop.f32.mrb[0].mxu0
        %v9586 = vadd.f32 %v9233, %v9585
        %v9587 = vpop.f32.mrb[0].mxu0
        %v9588 = vadd.f32 %v9235, %v9587
        %v9589 = vpop.f32.mrb[0].mxu0
        %v9590 = vadd.f32 %v9237, %v9589
        %9591 = vmatprep.mubr.bf16.mxu0 %v8861
        %9592 = vmatmul.mubr.bf16.gmra.mrb[0].mxu0 %v8860
        %v9593 = vpop.f32.mrb[0].mxu0
        %v9594 = vadd.f32 %v9241, %v9593
        %v9595 = vpop.f32.mrb[0].mxu0
        %v9596 = vadd.f32 %v9243, %v9595
        %v9597 = vpop.f32.mrb[0].mxu0
        %v9598 = vadd.f32 %v9245, %v9597
        %v9599 = vpop.f32.mrb[0].mxu0
        %v9600 = vadd.f32 %v9247, %v9599
        %9601 = vmatprep.mubr.bf16.mxu0 %v8863
        %9602 = vmatmul.mubr.bf16.gmra.mrb[0].mxu0 %v8862
        %v9603 = vpop.f32.mrb[0].mxu0
        %v9604 = vadd.f32 %v9251, %v9603
        %v9605 = vpop.f32.mrb[0].mxu0
        %v9606 = vadd.f32 %v9253, %v9605
        %v9607 = vpop.f32.mrb[0].mxu0
        %v9608 = vadd.f32 %v9255, %v9607
        %v9609 = vpop.f32.mrb[0].mxu0
        %v9610 = vadd.f32 %v9257, %v9609
        %9611 = vmatprep.mubr.bf16.mxu0 %v8865
        %9612 = vmatmul.mubr.bf16.gmra.mrb[0].mxu0 %v8864
        %v9613 = vpop.f32.mrb[0].mxu0
        %v9614 = vadd.f32 %v9261, %v9613
        %v9615 = vpop.f32.mrb[0].mxu0
        %v9616 = vadd.f32 %v9263, %v9615
        %v9617 = vpop.f32.mrb[0].mxu0
        %v9618 = vadd.f32 %v9265, %v9617
        %v9619 = vpop.f32.mrb[0].mxu0
        %v9620 = vadd.f32 %v9267, %v9619
        %9621 = vmatprep.mubr.bf16.mxu0 %v8867
        %9622 = vmatmul.mubr.bf16.gmra.mrb[0].mxu0 %v8866
        %v9623 = vpop.f32.mrb[0].mxu0
        %v9624 = vadd.f32 %v9271, %v9623
        %v9625 = vpop.f32.mrb[0].mxu0
        %v9626 = vadd.f32 %v9273, %v9625
        %v9627 = vpop.f32.mrb[0].mxu0
        %v9628 = vadd.f32 %v9275, %v9627
        %v9629 = vpop.f32.mrb[0].mxu0
        %v9630 = vadd.f32 %v9277, %v9629
        %9631 = vmatprep.mubr.bf16.mxu0 %v8869
        %9632 = vmatmul.mubr.bf16.gmra.mrb[0].mxu0 %v8868
        %v9633 = vpop.f32.mrb[0].mxu0
        %v9634 = vadd.f32 %v9281, %v9633
        %v9635 = vpop.f32.mrb[0].mxu0
        %v9636 = vadd.f32 %v9283, %v9635
        %v9637 = vpop.f32.mrb[0].mxu0
        %v9638 = vadd.f32 %v9285, %v9637
        %v9639 = vpop.f32.mrb[0].mxu0
        %v9640 = vadd.f32 %v9287, %v9639
        %9641 = vmatprep.mubr.bf16.mxu0 %v8871
        %9642 = vmatmul.mubr.bf16.gmra.mrb[0].mxu0 %v8870
        %v9643 = vpop.f32.mrb[0].mxu0
        %v9644 = vadd.f32 %v9291, %v9643
        %v9645 = vpop.f32.mrb[0].mxu0
        %v9646 = vadd.f32 %v9293, %v9645
        %v9647 = vpop.f32.mrb[0].mxu0
        %v9648 = vadd.f32 %v9295, %v9647
        %v9649 = vpop.f32.mrb[0].mxu0
        %v9650 = vadd.f32 %v9297, %v9649
        %9651 = vmatprep.mubr.bf16.mxu0 %v8873
        %9652 = vmatmul.mubr.bf16.gmra.mrb[0].mxu0 %v8872
        %v9653 = vpop.f32.mrb[0].mxu0
        %v9654 = vadd.f32 %v9301, %v9653
        %v9655 = vpop.f32.mrb[0].mxu0
        %v9656 = vadd.f32 %v9303, %v9655
        %v9657 = vpop.f32.mrb[0].mxu0
        %v9658 = vadd.f32 %v9305, %v9657
        %v9659 = vpop.f32.mrb[0].mxu0
        %v9660 = vadd.f32 %v9307, %v9659
        %9661 = vmatprep.mubr.bf16.mxu0 %v8875
        %9662 = vmatmul.mubr.bf16.gmra.mrb[0].mxu0 %v8874
        %v9663 = vpop.f32.mrb[0].mxu0
        %v9664 = vadd.f32 %v9311, %v9663
        %v9665 = vpop.f32.mrb[0].mxu0
        %v9666 = vadd.f32 %v9313, %v9665
        %v9667 = vpop.f32.mrb[0].mxu0
        %v9668 = vadd.f32 %v9315, %v9667
        %v9669 = vpop.f32.mrb[0].mxu0
        %v9670 = vadd.f32 %v9317, %v9669
        %9671 = vmatprep.mubr.bf16.mxu0 %v8877
        %9672 = vmatmul.mubr.bf16.gmra.mrb[0].mxu0 %v8876
        %v9673 = vpop.f32.mrb[0].mxu0
        %v9674 = vadd.f32 %v9321, %v9673
        %v9675 = vpop.f32.mrb[0].mxu0
        %v9676 = vadd.f32 %v9323, %v9675
        %v9677 = vpop.f32.mrb[0].mxu0
        %v9678 = vadd.f32 %v9325, %v9677
        %v9679 = vpop.f32.mrb[0].mxu0
        %v9680 = vadd.f32 %v9327, %v9679
        %9681 = vdwg.mxu0
        %v9682 = vld [vmem:[%s4576] sm:$0xff]
        %v9683 = vld [vmem:[%s4576 + $0x8] sm:$0xff]
        %v9684 = vld [vmem:[%s4576 + $0x10] sm:$0xff]
        %v9685 = vld [vmem:[%s4576 + $0x18] sm:$0xff]
        %v9686 = vld [vmem:[%s4576 + $0x20] sm:$0xff]
        %v9687 = vld [vmem:[%s4576 + $0x28] sm:$0xff]
        %v9688 = vld [vmem:[%s4576 + $0x30] sm:$0xff]
        %v9689 = vld [vmem:[%s4576 + $0x38] sm:$0xff]
        %v9690 = vld [vmem:[%s4576 + $0x40] sm:$0xff]
        %v9691 = vld [vmem:[%s4576 + $0x48] sm:$0xff]
        %v9692 = vld [vmem:[%s4576 + $0x50] sm:$0xff]
        %v9693 = vld [vmem:[%s4576 + $0x58] sm:$0xff]
        %v9694 = vld [vmem:[%s4576 + $0x60] sm:$0xff]
        %v9695 = vld [vmem:[%s4576 + $0x68] sm:$0xff]
        %v9696 = vld [vmem:[%s4576 + $0x70] sm:$0xff]
        %v9697 = vld [vmem:[%s4576 + $0x78] sm:$0xff]
        %v9698 = vld [vmem:[%s4576 + $0x80] sm:$0xff]
        %v9699 = vld [vmem:[%s4576 + $0x88] sm:$0xff]
        %v9700 = vld [vmem:[%s4576 + $0x90] sm:$0xff]
        %v9701 = vld [vmem:[%s4576 + $0x98] sm:$0xff]
        %v9702 = vld [vmem:[%s4576 + $0xa0] sm:$0xff]
        %v9703 = vld [vmem:[%s4576 + $0xa8] sm:$0xff]
        %v9704 = vld [vmem:[%s4576 + $0xb0] sm:$0xff]
        %v9705 = vld [vmem:[%s4576 + $0xb8] sm:$0xff]
        %v9706 = vld [vmem:[%s4576 + $0xc0] sm:$0xff]
        %v9707 = vld [vmem:[%s4576 + $0xc8] sm:$0xff]
        %v9708 = vld [vmem:[%s4576 + $0xd0] sm:$0xff]
        %v9709 = vld [vmem:[%s4576 + $0xd8] sm:$0xff]
        %v9710 = vld [vmem:[%s4576 + $0xe0] sm:$0xff]
        %v9711 = vld [vmem:[%s4576 + $0xe8] sm:$0xff]
        %v9712 = vld [vmem:[%s4576 + $0xf0] sm:$0xff]
        %v9713 = vld [vmem:[%s4576 + $0xf8] sm:$0xff]
        %s9714 = scalar_lea.vmem %s2, 2048
        %v9715 = vld [vmem:[%s9714] sm:$0xff]
        %v9716 = vld [vmem:[%s9714 + $0x8] sm:$0xff]
        %v9717 = vld [vmem:[%s9714 + $0x10] sm:$0xff]
        %v9718 = vld [vmem:[%s9714 + $0x18] sm:$0xff]
        %v9719 = vld [vmem:[%s9714 + $0x20] sm:$0xff]
        %v9720 = vld [vmem:[%s9714 + $0x28] sm:$0xff]
        %v9721 = vld [vmem:[%s9714 + $0x30] sm:$0xff]
        %v9722 = vld [vmem:[%s9714 + $0x38] sm:$0xff]
        %v9723 = vld [vmem:[%s9714 + $0x40] sm:$0xff]
        %v9724 = vld [vmem:[%s9714 + $0x48] sm:$0xff]
        %v9725 = vld [vmem:[%s9714 + $0x50] sm:$0xff]
        %v9726 = vld [vmem:[%s9714 + $0x58] sm:$0xff]
        %v9727 = vld [vmem:[%s9714 + $0x60] sm:$0xff]
        %v9728 = vld [vmem:[%s9714 + $0x68] sm:$0xff]
        %v9729 = vld [vmem:[%s9714 + $0x70] sm:$0xff]
        %v9730 = vld [vmem:[%s9714 + $0x78] sm:$0xff]
        %v9731 = vld [vmem:[%s9714 + $0x80] sm:$0xff]
        %v9732 = vld [vmem:[%s9714 + $0x88] sm:$0xff]
        %v9733 = vld [vmem:[%s9714 + $0x90] sm:$0xff]
        %v9734 = vld [vmem:[%s9714 + $0x98] sm:$0xff]
        %v9735 = vld [vmem:[%s9714 + $0xa0] sm:$0xff]
        %v9736 = vld [vmem:[%s9714 + $0xa8] sm:$0xff]
        %v9737 = vld [vmem:[%s9714 + $0xb0] sm:$0xff]
        %v9738 = vld [vmem:[%s9714 + $0xb8] sm:$0xff]
        %v9739 = vld [vmem:[%s9714 + $0xc0] sm:$0xff]
        %v9740 = vld [vmem:[%s9714 + $0xc8] sm:$0xff]
        %v9741 = vld [vmem:[%s9714 + $0xd0] sm:$0xff]
        %v9742 = vld [vmem:[%s9714 + $0xd8] sm:$0xff]
        %v9743 = vld [vmem:[%s9714 + $0xe0] sm:$0xff]
        %v9744 = vld [vmem:[%s9714 + $0xe8] sm:$0xff]
        %v9745 = vld [vmem:[%s9714 + $0xf0] sm:$0xff]
        %v9746 = vld [vmem:[%s9714 + $0xf8] sm:$0xff]
        %v9779 = vunpack.c.l.b16 %v9715
        %v9780 = vunpack.c.h.b16 %v9715
        %v9781 = vunpack.c.l.b16 %v9716
        %v9782 = vunpack.c.h.b16 %v9716
        %v9783 = vunpack.c.l.b16 %v9717
        %v9784 = vunpack.c.h.b16 %v9717
        %v9785 = vunpack.c.l.b16 %v9718
        %v9786 = vunpack.c.h.b16 %v9718
        %v9787 = vunpack.c.l.b16 %v9719
        %v9788 = vunpack.c.h.b16 %v9719
        %v9789 = vunpack.c.l.b16 %v9720
        %v9790 = vunpack.c.h.b16 %v9720
        %v9791 = vunpack.c.l.b16 %v9721
        %v9792 = vunpack.c.h.b16 %v9721
        %v9793 = vunpack.c.l.b16 %v9722
        %v9794 = vunpack.c.h.b16 %v9722
        %v9795 = vunpack.c.l.b16 %v9723
        %v9796 = vunpack.c.h.b16 %v9723
        %v9797 = vunpack.c.l.b16 %v9724
        %v9798 = vunpack.c.h.b16 %v9724
        %v9799 = vunpack.c.l.b16 %v9725
        %v9800 = vunpack.c.h.b16 %v9725
        %v9801 = vunpack.c.l.b16 %v9726
        %v9802 = vunpack.c.h.b16 %v9726
        %v9803 = vunpack.c.l.b16 %v9727
        %v9804 = vunpack.c.h.b16 %v9727
        %v9805 = vunpack.c.l.b16 %v9728
        %v9806 = vunpack.c.h.b16 %v9728
        %v9807 = vunpack.c.l.b16 %v9729
        %v9808 = vunpack.c.h.b16 %v9729
        %v9809 = vunpack.c.l.b16 %v9730
        %v9810 = vunpack.c.h.b16 %v9730
        %v9811 = vunpack.c.l.b16 %v9731
        %v9812 = vunpack.c.h.b16 %v9731
        %v9813 = vunpack.c.l.b16 %v9732
        %v9814 = vunpack.c.h.b16 %v9732
        %v9815 = vunpack.c.l.b16 %v9733
        %v9816 = vunpack.c.h.b16 %v9733
        %v9817 = vunpack.c.l.b16 %v9734
        %v9818 = vunpack.c.h.b16 %v9734
        %v9819 = vunpack.c.l.b16 %v9735
        %v9820 = vunpack.c.h.b16 %v9735
        %v9821 = vunpack.c.l.b16 %v9736
        %v9822 = vunpack.c.h.b16 %v9736
        %v9823 = vunpack.c.l.b16 %v9737
        %v9824 = vunpack.c.h.b16 %v9737
        %v9825 = vunpack.c.l.b16 %v9738
        %v9826 = vunpack.c.h.b16 %v9738
        %v9827 = vunpack.c.l.b16 %v9739
        %v9828 = vunpack.c.h.b16 %v9739
        %v9829 = vunpack.c.l.b16 %v9740
        %v9830 = vunpack.c.h.b16 %v9740
        %v9831 = vunpack.c.l.b16 %v9741
        %v9832 = vunpack.c.h.b16 %v9741
        %v9833 = vunpack.c.l.b16 %v9742
        %v9834 = vunpack.c.h.b16 %v9742
        %v9835 = vunpack.c.l.b16 %v9743
        %v9836 = vunpack.c.h.b16 %v9743
        %v9837 = vunpack.c.l.b16 %v9744
        %v9838 = vunpack.c.h.b16 %v9744
        %v9839 = vunpack.c.l.b16 %v9745
        %v9840 = vunpack.c.h.b16 %v9745
        %v9841 = vunpack.c.l.b16 %v9746
        %v9842 = vunpack.c.h.b16 %v9746
        %v9843 = vpack.c.b16 %v9781, %v9779
        %v9844 = vpack.c.b16 %v9782, %v9780
        %v9845 = vpack.c.b16 %v9785, %v9783
        %v9846 = vpack.c.b16 %v9786, %v9784
        %v9847 = vpack.c.b16 %v9789, %v9787
        %v9848 = vpack.c.b16 %v9790, %v9788
        %v9849 = vpack.c.b16 %v9793, %v9791
        %v9850 = vpack.c.b16 %v9794, %v9792
        %v9851 = vpack.c.b16 %v9797, %v9795
        %v9852 = vpack.c.b16 %v9798, %v9796
        %v9853 = vpack.c.b16 %v9801, %v9799
        %v9854 = vpack.c.b16 %v9802, %v9800
        %v9855 = vpack.c.b16 %v9805, %v9803
        %v9856 = vpack.c.b16 %v9806, %v9804
        %v9857 = vpack.c.b16 %v9809, %v9807
        %v9858 = vpack.c.b16 %v9810, %v9808
        %v9859 = vpack.c.b16 %v9813, %v9811
        %v9860 = vpack.c.b16 %v9814, %v9812
        %v9861 = vpack.c.b16 %v9817, %v9815
        %v9862 = vpack.c.b16 %v9818, %v9816
        %v9863 = vpack.c.b16 %v9821, %v9819
        %v9864 = vpack.c.b16 %v9822, %v9820
        %v9865 = vpack.c.b16 %v9825, %v9823
        %v9866 = vpack.c.b16 %v9826, %v9824
        %v9867 = vpack.c.b16 %v9829, %v9827
        %v9868 = vpack.c.b16 %v9830, %v9828
        %v9869 = vpack.c.b16 %v9833, %v9831
        %v9870 = vpack.c.b16 %v9834, %v9832
        %v9871 = vpack.c.b16 %v9837, %v9835
        %v9872 = vpack.c.b16 %v9838, %v9836
        %v9873 = vpack.c.b16 %v9841, %v9839
        %v9874 = vpack.c.b16 %v9842, %v9840
        %9907 = vmatprep.subr.bf16.mxu0 %v9844
        %9908 = vmatpush1.bf16.msra.mxu0 %v9843
        %9909 = vmatprep.subr.bf16.mxu0 %v9846
        %9910 = vmatpush1.bf16.msra.mxu0 %v9845
        %9911 = vmatprep.subr.bf16.mxu0 %v9848
        %9912 = vmatpush1.bf16.msra.mxu0 %v9847
        %9913 = vmatprep.subr.bf16.mxu0 %v9850
        %9914 = vmatpush1.bf16.msra.mxu0 %v9849
        %9915 = vmatprep.subr.bf16.mxu0 %v9852
        %9916 = vmatpush1.bf16.msra.mxu0 %v9851
        %9917 = vmatprep.subr.bf16.mxu0 %v9854
        %9918 = vmatpush1.bf16.msra.mxu0 %v9853
        %9919 = vmatprep.subr.bf16.mxu0 %v9856
        %9920 = vmatpush1.bf16.msra.mxu0 %v9855
        %9921 = vmatprep.subr.bf16.mxu0 %v9858
        %9922 = vmatpush1.bf16.msra.mxu0 %v9857
        %9923 = vmatprep.subr.bf16.mxu0 %v9860
        %9924 = vmatpush1.bf16.msra.mxu0 %v9859
        %9925 = vmatprep.subr.bf16.mxu0 %v9862
        %9926 = vmatpush1.bf16.msra.mxu0 %v9861
        %9927 = vmatprep.subr.bf16.mxu0 %v9864
        %9928 = vmatpush1.bf16.msra.mxu0 %v9863
        %9929 = vmatprep.subr.bf16.mxu0 %v9866
        %9930 = vmatpush1.bf16.msra.mxu0 %v9865
        %9931 = vmatprep.subr.bf16.mxu0 %v9868
        %9932 = vmatpush1.bf16.msra.mxu0 %v9867
        %9933 = vmatprep.subr.bf16.mxu0 %v9870
        %9934 = vmatpush1.bf16.msra.mxu0 %v9869
        %9935 = vmatprep.subr.bf16.mxu0 %v9872
        %9936 = vmatpush1.bf16.msra.mxu0 %v9871
        %9937 = vmatprep.subr.bf16.mxu0 %v9874
        %9938 = vmatpush1.bf16.msra.mxu0 %v9873
        %9939 = vmatprep.mubr.bf16.mxu0 %v9683
        %9940 = vmatmul.mubr.bf16.gmra.mrb[0].mxu0 %v9682
        %v9941 = vpop.f32.mrb[0].mxu0
        %v9942 = vadd.f32 0.0, %v9941
        %v9943 = vpop.f32.mrb[0].mxu0
        %v9944 = vadd.f32 0.0, %v9943
        %v9945 = vpop.f32.mrb[0].mxu0
        %v9946 = vadd.f32 0.0, %v9945
        %v9947 = vpop.f32.mrb[0].mxu0
        %v9948 = vadd.f32 0.0, %v9947
        %9949 = vmatprep.mubr.bf16.mxu0 %v9685
        %9950 = vmatmul.mubr.bf16.gmra.mrb[0].mxu0 %v9684
        %v9951 = vpop.f32.mrb[0].mxu0
        %v9952 = vadd.f32 0.0, %v9951
        %v9953 = vpop.f32.mrb[0].mxu0
        %v9954 = vadd.f32 0.0, %v9953
        %v9955 = vpop.f32.mrb[0].mxu0
        %v9956 = vadd.f32 0.0, %v9955
        %v9957 = vpop.f32.mrb[0].mxu0
        %v9958 = vadd.f32 0.0, %v9957
        %9959 = vmatprep.mubr.bf16.mxu0 %v9687
        %9960 = vmatmul.mubr.bf16.gmra.mrb[0].mxu0 %v9686
        %v9961 = vpop.f32.mrb[0].mxu0
        %v9962 = vadd.f32 0.0, %v9961
        %v9963 = vpop.f32.mrb[0].mxu0
        %v9964 = vadd.f32 0.0, %v9963
        %v9965 = vpop.f32.mrb[0].mxu0
        %v9966 = vadd.f32 0.0, %v9965
        %v9967 = vpop.f32.mrb[0].mxu0
        %v9968 = vadd.f32 0.0, %v9967
        %9969 = vmatprep.mubr.bf16.mxu0 %v9689
        %9970 = vmatmul.mubr.bf16.gmra.mrb[0].mxu0 %v9688
        %v9971 = vpop.f32.mrb[0].mxu0
        %v9972 = vadd.f32 0.0, %v9971
        %v9973 = vpop.f32.mrb[0].mxu0
        %v9974 = vadd.f32 0.0, %v9973
        %v9975 = vpop.f32.mrb[0].mxu0
        %v9976 = vadd.f32 0.0, %v9975
        %v9977 = vpop.f32.mrb[0].mxu0
        %v9978 = vadd.f32 0.0, %v9977
        %9979 = vmatprep.mubr.bf16.mxu0 %v9691
        %9980 = vmatmul.mubr.bf16.gmra.mrb[0].mxu0 %v9690
        %v9981 = vpop.f32.mrb[0].mxu0
        %v9982 = vadd.f32 0.0, %v9981
        %v9983 = vpop.f32.mrb[0].mxu0
        %v9984 = vadd.f32 0.0, %v9983
        %v9985 = vpop.f32.mrb[0].mxu0
        %v9986 = vadd.f32 0.0, %v9985
        %v9987 = vpop.f32.mrb[0].mxu0
        %v9988 = vadd.f32 0.0, %v9987
        %9989 = vmatprep.mubr.bf16.mxu0 %v9693
        %9990 = vmatmul.mubr.bf16.gmra.mrb[0].mxu0 %v9692
        %v9991 = vpop.f32.mrb[0].mxu0
        %v9992 = vadd.f32 0.0, %v9991
        %v9993 = vpop.f32.mrb[0].mxu0
        %v9994 = vadd.f32 0.0, %v9993
        %v9995 = vpop.f32.mrb[0].mxu0
        %v9996 = vadd.f32 0.0, %v9995
        %v9997 = vpop.f32.mrb[0].mxu0
        %v9998 = vadd.f32 0.0, %v9997
        %9999 = vmatprep.mubr.bf16.mxu0 %v9695
        %10000 = vmatmul.mubr.bf16.gmra.mrb[0].mxu0 %v9694
        %v10001 = vpop.f32.mrb[0].mxu0
        %v10002 = vadd.f32 0.0, %v10001
        %v10003 = vpop.f32.mrb[0].mxu0
        %v10004 = vadd.f32 0.0, %v10003
        %v10005 = vpop.f32.mrb[0].mxu0
        %v10006 = vadd.f32 0.0, %v10005
        %v10007 = vpop.f32.mrb[0].mxu0
        %v10008 = vadd.f32 0.0, %v10007
        %10009 = vmatprep.mubr.bf16.mxu0 %v9697
        %10010 = vmatmul.mubr.bf16.gmra.mrb[0].mxu0 %v9696
        %v10011 = vpop.f32.mrb[0].mxu0
        %v10012 = vadd.f32 0.0, %v10011
        %v10013 = vpop.f32.mrb[0].mxu0
        %v10014 = vadd.f32 0.0, %v10013
        %v10015 = vpop.f32.mrb[0].mxu0
        %v10016 = vadd.f32 0.0, %v10015
        %v10017 = vpop.f32.mrb[0].mxu0
        %v10018 = vadd.f32 0.0, %v10017
        %10019 = vmatprep.mubr.bf16.mxu0 %v9699
        %10020 = vmatmul.mubr.bf16.gmra.mrb[0].mxu0 %v9698
        %v10021 = vpop.f32.mrb[0].mxu0
        %v10022 = vadd.f32 0.0, %v10021
        %v10023 = vpop.f32.mrb[0].mxu0
        %v10024 = vadd.f32 0.0, %v10023
        %v10025 = vpop.f32.mrb[0].mxu0
        %v10026 = vadd.f32 0.0, %v10025
        %v10027 = vpop.f32.mrb[0].mxu0
        %v10028 = vadd.f32 0.0, %v10027
        %10029 = vmatprep.mubr.bf16.mxu0 %v9701
        %10030 = vmatmul.mubr.bf16.gmra.mrb[0].mxu0 %v9700
        %v10031 = vpop.f32.mrb[0].mxu0
        %v10032 = vadd.f32 0.0, %v10031
        %v10033 = vpop.f32.mrb[0].mxu0
        %v10034 = vadd.f32 0.0, %v10033
        %v10035 = vpop.f32.mrb[0].mxu0
        %v10036 = vadd.f32 0.0, %v10035
        %v10037 = vpop.f32.mrb[0].mxu0
        %v10038 = vadd.f32 0.0, %v10037
        %10039 = vmatprep.mubr.bf16.mxu0 %v9703
        %10040 = vmatmul.mubr.bf16.gmra.mrb[0].mxu0 %v9702
        %v10041 = vpop.f32.mrb[0].mxu0
        %v10042 = vadd.f32 0.0, %v10041
        %v10043 = vpop.f32.mrb[0].mxu0
        %v10044 = vadd.f32 0.0, %v10043
        %v10045 = vpop.f32.mrb[0].mxu0
        %v10046 = vadd.f32 0.0, %v10045
        %v10047 = vpop.f32.mrb[0].mxu0
        %v10048 = vadd.f32 0.0, %v10047
        %10049 = vmatprep.mubr.bf16.mxu0 %v9705
        %10050 = vmatmul.mubr.bf16.gmra.mrb[0].mxu0 %v9704
        %v10051 = vpop.f32.mrb[0].mxu0
        %v10052 = vadd.f32 0.0, %v10051
        %v10053 = vpop.f32.mrb[0].mxu0
        %v10054 = vadd.f32 0.0, %v10053
        %v10055 = vpop.f32.mrb[0].mxu0
        %v10056 = vadd.f32 0.0, %v10055
        %v10057 = vpop.f32.mrb[0].mxu0
        %v10058 = vadd.f32 0.0, %v10057
        %10059 = vmatprep.mubr.bf16.mxu0 %v9707
        %10060 = vmatmul.mubr.bf16.gmra.mrb[0].mxu0 %v9706
        %v10061 = vpop.f32.mrb[0].mxu0
        %v10062 = vadd.f32 0.0, %v10061
        %v10063 = vpop.f32.mrb[0].mxu0
        %v10064 = vadd.f32 0.0, %v10063
        %v10065 = vpop.f32.mrb[0].mxu0
        %v10066 = vadd.f32 0.0, %v10065
        %v10067 = vpop.f32.mrb[0].mxu0
        %v10068 = vadd.f32 0.0, %v10067
        %10069 = vmatprep.mubr.bf16.mxu0 %v9709
        %10070 = vmatmul.mubr.bf16.gmra.mrb[0].mxu0 %v9708
        %v10071 = vpop.f32.mrb[0].mxu0
        %v10072 = vadd.f32 0.0, %v10071
        %v10073 = vpop.f32.mrb[0].mxu0
        %v10074 = vadd.f32 0.0, %v10073
        %v10075 = vpop.f32.mrb[0].mxu0
        %v10076 = vadd.f32 0.0, %v10075
        %v10077 = vpop.f32.mrb[0].mxu0
        %v10078 = vadd.f32 0.0, %v10077
        %10079 = vmatprep.mubr.bf16.mxu0 %v9711
        %10080 = vmatmul.mubr.bf16.gmra.mrb[0].mxu0 %v9710
        %v10081 = vpop.f32.mrb[0].mxu0
        %v10082 = vadd.f32 0.0, %v10081
        %v10083 = vpop.f32.mrb[0].mxu0
        %v10084 = vadd.f32 0.0, %v10083
        %v10085 = vpop.f32.mrb[0].mxu0
        %v10086 = vadd.f32 0.0, %v10085
        %v10087 = vpop.f32.mrb[0].mxu0
        %v10088 = vadd.f32 0.0, %v10087
        %10089 = vmatprep.mubr.bf16.mxu0 %v9713
        %10090 = vmatmul.mubr.bf16.gmra.mrb[0].mxu0 %v9712
        %v10091 = vpop.f32.mrb[0].mxu0
        %v10092 = vadd.f32 0.0, %v10091
        %v10093 = vpop.f32.mrb[0].mxu0
        %v10094 = vadd.f32 0.0, %v10093
        %v10095 = vpop.f32.mrb[0].mxu0
        %v10096 = vadd.f32 0.0, %v10095
        %v10097 = vpop.f32.mrb[0].mxu0
        %v10098 = vadd.f32 0.0, %v10097
        %10099 = vdwg.mxu0
        %v10100 = vadd.f32 %v9524, %v9942
        %v10101 = vadd.f32 %v9526, %v9944
        %v10102 = vadd.f32 %v9528, %v9946
        %v10103 = vadd.f32 %v9530, %v9948
        %v10104 = vadd.f32 %v9534, %v9952
        %v10105 = vadd.f32 %v9536, %v9954
        %v10106 = vadd.f32 %v9538, %v9956
        %v10107 = vadd.f32 %v9540, %v9958
        %v10108 = vadd.f32 %v9544, %v9962
        %v10109 = vadd.f32 %v9546, %v9964
        %v10110 = vadd.f32 %v9548, %v9966
        %v10111 = vadd.f32 %v9550, %v9968
        %v10112 = vadd.f32 %v9554, %v9972
        %v10113 = vadd.f32 %v9556, %v9974
        %v10114 = vadd.f32 %v9558, %v9976
        %v10115 = vadd.f32 %v9560, %v9978
        %v10116 = vadd.f32 %v9564, %v9982
        %v10117 = vadd.f32 %v9566, %v9984
        %v10118 = vadd.f32 %v9568, %v9986
        %v10119 = vadd.f32 %v9570, %v9988
        %v10120 = vadd.f32 %v9574, %v9992
        %v10121 = vadd.f32 %v9576, %v9994
        %v10122 = vadd.f32 %v9578, %v9996
        %v10123 = vadd.f32 %v9580, %v9998
        %v10124 = vadd.f32 %v9584, %v10002
        %v10125 = vadd.f32 %v9586, %v10004
        %v10126 = vadd.f32 %v9588, %v10006
        %v10127 = vadd.f32 %v9590, %v10008
        %v10128 = vadd.f32 %v9594, %v10012
        %v10129 = vadd.f32 %v9596, %v10014
        %v10130 = vadd.f32 %v9598, %v10016
        %v10131 = vadd.f32 %v9600, %v10018
        %v10132 = vadd.f32 %v9604, %v10022
        %v10133 = vadd.f32 %v9606, %v10024
        %v10134 = vadd.f32 %v9608, %v10026
        %v10135 = vadd.f32 %v9610, %v10028
        %v10136 = vadd.f32 %v9614, %v10032
        %v10137 = vadd.f32 %v9616, %v10034
        %v10138 = vadd.f32 %v9618, %v10036
        %v10139 = vadd.f32 %v9620, %v10038
        %v10140 = vadd.f32 %v9624, %v10042
        %v10141 = vadd.f32 %v9626, %v10044
        %v10142 = vadd.f32 %v9628, %v10046
        %v10143 = vadd.f32 %v9630, %v10048
        %v10144 = vadd.f32 %v9634, %v10052
        %v10145 = vadd.f32 %v9636, %v10054
        %v10146 = vadd.f32 %v9638, %v10056
        %v10147 = vadd.f32 %v9640, %v10058
        %v10148 = vadd.f32 %v9644, %v10062
        %v10149 = vadd.f32 %v9646, %v10064
        %v10150 = vadd.f32 %v9648, %v10066
        %v10151 = vadd.f32 %v9650, %v10068
        %v10152 = vadd.f32 %v9654, %v10072
        %v10153 = vadd.f32 %v9656, %v10074
        %v10154 = vadd.f32 %v9658, %v10076
        %v10155 = vadd.f32 %v9660, %v10078
        %v10156 = vadd.f32 %v9664, %v10082
        %v10157 = vadd.f32 %v9666, %v10084
        %v10158 = vadd.f32 %v9668, %v10086
        %v10159 = vadd.f32 %v9670, %v10088
        %v10160 = vadd.f32 %v9674, %v10092
        %v10161 = vadd.f32 %v9676, %v10094
        %v10162 = vadd.f32 %v9678, %v10096
        %v10163 = vadd.f32 %v9680, %v10098
        %v10164 = vld [vmem:[#allocation3] sm:$0xff]
        %v10165 = vld [vmem:[#allocation3 + $0x8] sm:$0xff]
        %v10166 = vld [vmem:[#allocation3 + $0x10] sm:$0xff]
        %v10167 = vld [vmem:[#allocation3 + $0x18] sm:$0xff]
        %v10168 = vld [vmem:[#allocation3 + $0x20] sm:$0xff]
        %v10169 = vld [vmem:[#allocation3 + $0x28] sm:$0xff]
        %v10170 = vld [vmem:[#allocation3 + $0x30] sm:$0xff]
        %v10171 = vld [vmem:[#allocation3 + $0x38] sm:$0xff]
        %v10172 = vld [vmem:[#allocation3 + $0x40] sm:$0xff]
        %v10173 = vld [vmem:[#allocation3 + $0x48] sm:$0xff]
        %v10174 = vld [vmem:[#allocation3 + $0x50] sm:$0xff]
        %v10175 = vld [vmem:[#allocation3 + $0x58] sm:$0xff]
        %v10176 = vld [vmem:[#allocation3 + $0x60] sm:$0xff]
        %v10177 = vld [vmem:[#allocation3 + $0x68] sm:$0xff]
        %v10178 = vld [vmem:[#allocation3 + $0x70] sm:$0xff]
        %v10179 = vld [vmem:[#allocation3 + $0x78] sm:$0xff]
        %v10180 = vld [vmem:[#allocation3 + $0x80] sm:$0xff]
        %v10181 = vld [vmem:[#allocation3 + $0x88] sm:$0xff]
        %v10182 = vld [vmem:[#allocation3 + $0x90] sm:$0xff]
        %v10183 = vld [vmem:[#allocation3 + $0x98] sm:$0xff]
        %v10184 = vld [vmem:[#allocation3 + $0xa0] sm:$0xff]
        %v10185 = vld [vmem:[#allocation3 + $0xa8] sm:$0xff]
        %v10186 = vld [vmem:[#allocation3 + $0xb0] sm:$0xff]
        %v10187 = vld [vmem:[#allocation3 + $0xb8] sm:$0xff]
        %v10188 = vld [vmem:[#allocation3 + $0xc0] sm:$0xff]
        %v10189 = vld [vmem:[#allocation3 + $0xc8] sm:$0xff]
        %v10190 = vld [vmem:[#allocation3 + $0xd0] sm:$0xff]
        %v10191 = vld [vmem:[#allocation3 + $0xd8] sm:$0xff]
        %v10192 = vld [vmem:[#allocation3 + $0xe0] sm:$0xff]
        %v10193 = vld [vmem:[#allocation3 + $0xe8] sm:$0xff]
        %v10194 = vld [vmem:[#allocation3 + $0xf0] sm:$0xff]
        %v10195 = vld [vmem:[#allocation3 + $0xf8] sm:$0xff]
        %v10196 = vld [vmem:[#allocation3 + $0x100] sm:$0xff]
        %v10197 = vld [vmem:[#allocation3 + $0x108] sm:$0xff]
        %v10198 = vld [vmem:[#allocation3 + $0x110] sm:$0xff]
        %v10199 = vld [vmem:[#allocation3 + $0x118] sm:$0xff]
        %v10200 = vld [vmem:[#allocation3 + $0x120] sm:$0xff]
        %v10201 = vld [vmem:[#allocation3 + $0x128] sm:$0xff]
        %v10202 = vld [vmem:[#allocation3 + $0x130] sm:$0xff]
        %v10203 = vld [vmem:[#allocation3 + $0x138] sm:$0xff]
        %v10204 = vld [vmem:[#allocation3 + $0x140] sm:$0xff]
        %v10205 = vld [vmem:[#allocation3 + $0x148] sm:$0xff]
        %v10206 = vld [vmem:[#allocation3 + $0x150] sm:$0xff]
        %v10207 = vld [vmem:[#allocation3 + $0x158] sm:$0xff]
        %v10208 = vld [vmem:[#allocation3 + $0x160] sm:$0xff]
        %v10209 = vld [vmem:[#allocation3 + $0x168] sm:$0xff]
        %v10210 = vld [vmem:[#allocation3 + $0x170] sm:$0xff]
        %v10211 = vld [vmem:[#allocation3 + $0x178] sm:$0xff]
        %v10212 = vld [vmem:[#allocation3 + $0x180] sm:$0xff]
        %v10213 = vld [vmem:[#allocation3 + $0x188] sm:$0xff]
        %v10214 = vld [vmem:[#allocation3 + $0x190] sm:$0xff]
        %v10215 = vld [vmem:[#allocation3 + $0x198] sm:$0xff]
        %v10216 = vld [vmem:[#allocation3 + $0x1a0] sm:$0xff]
        %v10217 = vld [vmem:[#allocation3 + $0x1a8] sm:$0xff]
        %v10218 = vld [vmem:[#allocation3 + $0x1b0] sm:$0xff]
        %v10219 = vld [vmem:[#allocation3 + $0x1b8] sm:$0xff]
        %v10220 = vld [vmem:[#allocation3 + $0x1c0] sm:$0xff]
        %v10221 = vld [vmem:[#allocation3 + $0x1c8] sm:$0xff]
        %v10222 = vld [vmem:[#allocation3 + $0x1d0] sm:$0xff]
        %v10223 = vld [vmem:[#allocation3 + $0x1d8] sm:$0xff]
        %v10224 = vld [vmem:[#allocation3 + $0x1e0] sm:$0xff]
        %v10225 = vld [vmem:[#allocation3 + $0x1e8] sm:$0xff]
        %v10226 = vld [vmem:[#allocation3 + $0x1f0] sm:$0xff]
        %v10227 = vld [vmem:[#allocation3 + $0x1f8] sm:$0xff]
        %v10228 = vadd.f32 %v10164, %v10100
        %v10229 = vadd.f32 %v10165, %v10101
        %v10230 = vadd.f32 %v10166, %v10102
        %v10231 = vadd.f32 %v10167, %v10103
        %v10232 = vadd.f32 %v10168, %v10104
        %v10233 = vadd.f32 %v10169, %v10105
        %v10234 = vadd.f32 %v10170, %v10106
        %v10235 = vadd.f32 %v10171, %v10107
        %v10236 = vadd.f32 %v10172, %v10108
        %v10237 = vadd.f32 %v10173, %v10109
        %v10238 = vadd.f32 %v10174, %v10110
        %v10239 = vadd.f32 %v10175, %v10111
        %v10240 = vadd.f32 %v10176, %v10112
        %v10241 = vadd.f32 %v10177, %v10113
        %v10242 = vadd.f32 %v10178, %v10114
        %v10243 = vadd.f32 %v10179, %v10115
        %v10244 = vadd.f32 %v10180, %v10116
        %v10245 = vadd.f32 %v10181, %v10117
        %v10246 = vadd.f32 %v10182, %v10118
        %v10247 = vadd.f32 %v10183, %v10119
        %v10248 = vadd.f32 %v10184, %v10120
        %v10249 = vadd.f32 %v10185, %v10121
        %v10250 = vadd.f32 %v10186, %v10122
        %v10251 = vadd.f32 %v10187, %v10123
        %v10252 = vadd.f32 %v10188, %v10124
        %v10253 = vadd.f32 %v10189, %v10125
        %v10254 = vadd.f32 %v10190, %v10126
        %v10255 = vadd.f32 %v10191, %v10127
        %v10256 = vadd.f32 %v10192, %v10128
        %v10257 = vadd.f32 %v10193, %v10129
        %v10258 = vadd.f32 %v10194, %v10130
        %v10259 = vadd.f32 %v10195, %v10131
        %v10260 = vadd.f32 %v10196, %v10132
        %v10261 = vadd.f32 %v10197, %v10133
        %v10262 = vadd.f32 %v10198, %v10134
        %v10263 = vadd.f32 %v10199, %v10135
        %v10264 = vadd.f32 %v10200, %v10136
        %v10265 = vadd.f32 %v10201, %v10137
        %v10266 = vadd.f32 %v10202, %v10138
        %v10267 = vadd.f32 %v10203, %v10139
        %v10268 = vadd.f32 %v10204, %v10140
        %v10269 = vadd.f32 %v10205, %v10141
        %v10270 = vadd.f32 %v10206, %v10142
        %v10271 = vadd.f32 %v10207, %v10143
        %v10272 = vadd.f32 %v10208, %v10144
        %v10273 = vadd.f32 %v10209, %v10145
        %v10274 = vadd.f32 %v10210, %v10146
        %v10275 = vadd.f32 %v10211, %v10147
        %v10276 = vadd.f32 %v10212, %v10148
        %v10277 = vadd.f32 %v10213, %v10149
        %v10278 = vadd.f32 %v10214, %v10150
        %v10279 = vadd.f32 %v10215, %v10151
        %v10280 = vadd.f32 %v10216, %v10152
        %v10281 = vadd.f32 %v10217, %v10153
        %v10282 = vadd.f32 %v10218, %v10154
        %v10283 = vadd.f32 %v10219, %v10155
        %v10284 = vadd.f32 %v10220, %v10156
        %v10285 = vadd.f32 %v10221, %v10157
        %v10286 = vadd.f32 %v10222, %v10158
        %v10287 = vadd.f32 %v10223, %v10159
        %v10288 = vadd.f32 %v10224, %v10160
        %v10289 = vadd.f32 %v10225, %v10161
        %v10290 = vadd.f32 %v10226, %v10162
        %v10291 = vadd.f32 %v10227, %v10163
        %10292 = vst [vmem:[#allocation3] sm:$0xff] %v10228
        %10293 = vst [vmem:[#allocation3 + $0x8] sm:$0xff] %v10229
        %10294 = vst [vmem:[#allocation3 + $0x10] sm:$0xff] %v10230
        %10295 = vst [vmem:[#allocation3 + $0x18] sm:$0xff] %v10231
        %10296 = vst [vmem:[#allocation3 + $0x20] sm:$0xff] %v10232
        %10297 = vst [vmem:[#allocation3 + $0x28] sm:$0xff] %v10233
        %10298 = vst [vmem:[#allocation3 + $0x30] sm:$0xff] %v10234
        %10299 = vst [vmem:[#allocation3 + $0x38] sm:$0xff] %v10235
        %10300 = vst [vmem:[#allocation3 + $0x40] sm:$0xff] %v10236
        %10301 = vst [vmem:[#allocation3 + $0x48] sm:$0xff] %v10237
        %10302 = vst [vmem:[#allocation3 + $0x50] sm:$0xff] %v10238
        %10303 = vst [vmem:[#allocation3 + $0x58] sm:$0xff] %v10239
        %10304 = vst [vmem:[#allocation3 + $0x60] sm:$0xff] %v10240
        %10305 = vst [vmem:[#allocation3 + $0x68] sm:$0xff] %v10241
        %10306 = vst [vmem:[#allocation3 + $0x70] sm:$0xff] %v10242
        %10307 = vst [vmem:[#allocation3 + $0x78] sm:$0xff] %v10243
        %10308 = vst [vmem:[#allocation3 + $0x80] sm:$0xff] %v10244
        %10309 = vst [vmem:[#allocation3 + $0x88] sm:$0xff] %v10245
        %10310 = vst [vmem:[#allocation3 + $0x90] sm:$0xff] %v10246
        %10311 = vst [vmem:[#allocation3 + $0x98] sm:$0xff] %v10247
        %10312 = vst [vmem:[#allocation3 + $0xa0] sm:$0xff] %v10248
        %10313 = vst [vmem:[#allocation3 + $0xa8] sm:$0xff] %v10249
        %10314 = vst [vmem:[#allocation3 + $0xb0] sm:$0xff] %v10250
        %10315 = vst [vmem:[#allocation3 + $0xb8] sm:$0xff] %v10251
        %10316 = vst [vmem:[#allocation3 + $0xc0] sm:$0xff] %v10252
        %10317 = vst [vmem:[#allocation3 + $0xc8] sm:$0xff] %v10253
        %10318 = vst [vmem:[#allocation3 + $0xd0] sm:$0xff] %v10254
        %10319 = vst [vmem:[#allocation3 + $0xd8] sm:$0xff] %v10255
        %10320 = vst [vmem:[#allocation3 + $0xe0] sm:$0xff] %v10256
        %10321 = vst [vmem:[#allocation3 + $0xe8] sm:$0xff] %v10257
        %10322 = vst [vmem:[#allocation3 + $0xf0] sm:$0xff] %v10258
        %10323 = vst [vmem:[#allocation3 + $0xf8] sm:$0xff] %v10259
        %10324 = vst [vmem:[#allocation3 + $0x100] sm:$0xff] %v10260
        %10325 = vst [vmem:[#allocation3 + $0x108] sm:$0xff] %v10261
        %10326 = vst [vmem:[#allocation3 + $0x110] sm:$0xff] %v10262
        %10327 = vst [vmem:[#allocation3 + $0x118] sm:$0xff] %v10263
        %10328 = vst [vmem:[#allocation3 + $0x120] sm:$0xff] %v10264
        %10329 = vst [vmem:[#allocation3 + $0x128] sm:$0xff] %v10265
        %10330 = vst [vmem:[#allocation3 + $0x130] sm:$0xff] %v10266
        %10331 = vst [vmem:[#allocation3 + $0x138] sm:$0xff] %v10267
        %10332 = vst [vmem:[#allocation3 + $0x140] sm:$0xff] %v10268
        %10333 = vst [vmem:[#allocation3 + $0x148] sm:$0xff] %v10269
        %10334 = vst [vmem:[#allocation3 + $0x150] sm:$0xff] %v10270
        %10335 = vst [vmem:[#allocation3 + $0x158] sm:$0xff] %v10271
        %10336 = vst [vmem:[#allocation3 + $0x160] sm:$0xff] %v10272
        %10337 = vst [vmem:[#allocation3 + $0x168] sm:$0xff] %v10273
        %10338 = vst [vmem:[#allocation3 + $0x170] sm:$0xff] %v10274
        %10339 = vst [vmem:[#allocation3 + $0x178] sm:$0xff] %v10275
        %10340 = vst [vmem:[#allocation3 + $0x180] sm:$0xff] %v10276
        %10341 = vst [vmem:[#allocation3 + $0x188] sm:$0xff] %v10277
        %10342 = vst [vmem:[#allocation3 + $0x190] sm:$0xff] %v10278
        %10343 = vst [vmem:[#allocation3 + $0x198] sm:$0xff] %v10279
        %10344 = vst [vmem:[#allocation3 + $0x1a0] sm:$0xff] %v10280
        %10345 = vst [vmem:[#allocation3 + $0x1a8] sm:$0xff] %v10281
        %10346 = vst [vmem:[#allocation3 + $0x1b0] sm:$0xff] %v10282
        %10347 = vst [vmem:[#allocation3 + $0x1b8] sm:$0xff] %v10283
        %10348 = vst [vmem:[#allocation3 + $0x1c0] sm:$0xff] %v10284
        %10349 = vst [vmem:[#allocation3 + $0x1c8] sm:$0xff] %v10285
        %10350 = vst [vmem:[#allocation3 + $0x1d0] sm:$0xff] %v10286
        %10351 = vst [vmem:[#allocation3 + $0x1d8] sm:$0xff] %v10287
        %10352 = vst [vmem:[#allocation3 + $0x1e0] sm:$0xff] %v10288
        %10353 = vst [vmem:[#allocation3 + $0x1e8] sm:$0xff] %v10289
        %10354 = vst [vmem:[#allocation3 + $0x1f0] sm:$0xff] %v10290
        %10355 = vst [vmem:[#allocation3 + $0x1f8] sm:$0xff] %v10291
        %v10356 = vld [vmem:[#allocation3] sm:$0xff]
        %v10357 = vld [vmem:[#allocation3 + $0x8] sm:$0xff]
        %v10358 = vld [vmem:[#allocation3 + $0x10] sm:$0xff]
        %v10359 = vld [vmem:[#allocation3 + $0x18] sm:$0xff]
        %v10360 = vld [vmem:[#allocation3 + $0x20] sm:$0xff]
        %v10361 = vld [vmem:[#allocation3 + $0x28] sm:$0xff]
        %v10362 = vld [vmem:[#allocation3 + $0x30] sm:$0xff]
        %v10363 = vld [vmem:[#allocation3 + $0x38] sm:$0xff]
        %v10364 = vld [vmem:[#allocation3 + $0x40] sm:$0xff]
        %v10365 = vld [vmem:[#allocation3 + $0x48] sm:$0xff]
        %v10366 = vld [vmem:[#allocation3 + $0x50] sm:$0xff]
        %v10367 = vld [vmem:[#allocation3 + $0x58] sm:$0xff]
        %v10368 = vld [vmem:[#allocation3 + $0x60] sm:$0xff]
        %v10369 = vld [vmem:[#allocation3 + $0x68] sm:$0xff]
        %v10370 = vld [vmem:[#allocation3 + $0x70] sm:$0xff]
        %v10371 = vld [vmem:[#allocation3 + $0x78] sm:$0xff]
        %v10372 = vld [vmem:[#allocation3 + $0x80] sm:$0xff]
        %v10373 = vld [vmem:[#allocation3 + $0x88] sm:$0xff]
        %v10374 = vld [vmem:[#allocation3 + $0x90] sm:$0xff]
        %v10375 = vld [vmem:[#allocation3 + $0x98] sm:$0xff]
        %v10376 = vld [vmem:[#allocation3 + $0xa0] sm:$0xff]
        %v10377 = vld [vmem:[#allocation3 + $0xa8] sm:$0xff]
        %v10378 = vld [vmem:[#allocation3 + $0xb0] sm:$0xff]
        %v10379 = vld [vmem:[#allocation3 + $0xb8] sm:$0xff]
        %v10380 = vld [vmem:[#allocation3 + $0xc0] sm:$0xff]
        %v10381 = vld [vmem:[#allocation3 + $0xc8] sm:$0xff]
        %v10382 = vld [vmem:[#allocation3 + $0xd0] sm:$0xff]
        %v10383 = vld [vmem:[#allocation3 + $0xd8] sm:$0xff]
        %v10384 = vld [vmem:[#allocation3 + $0xe0] sm:$0xff]
        %v10385 = vld [vmem:[#allocation3 + $0xe8] sm:$0xff]
        %v10386 = vld [vmem:[#allocation3 + $0xf0] sm:$0xff]
        %v10387 = vld [vmem:[#allocation3 + $0xf8] sm:$0xff]
        %v10388 = vld [vmem:[#allocation3 + $0x100] sm:$0xff]
        %v10389 = vld [vmem:[#allocation3 + $0x108] sm:$0xff]
        %v10390 = vld [vmem:[#allocation3 + $0x110] sm:$0xff]
        %v10391 = vld [vmem:[#allocation3 + $0x118] sm:$0xff]
        %v10392 = vld [vmem:[#allocation3 + $0x120] sm:$0xff]
        %v10393 = vld [vmem:[#allocation3 + $0x128] sm:$0xff]
        %v10394 = vld [vmem:[#allocation3 + $0x130] sm:$0xff]
        %v10395 = vld [vmem:[#allocation3 + $0x138] sm:$0xff]
        %v10396 = vld [vmem:[#allocation3 + $0x140] sm:$0xff]
        %v10397 = vld [vmem:[#allocation3 + $0x148] sm:$0xff]
        %v10398 = vld [vmem:[#allocation3 + $0x150] sm:$0xff]
        %v10399 = vld [vmem:[#allocation3 + $0x158] sm:$0xff]
        %v10400 = vld [vmem:[#allocation3 + $0x160] sm:$0xff]
        %v10401 = vld [vmem:[#allocation3 + $0x168] sm:$0xff]
        %v10402 = vld [vmem:[#allocation3 + $0x170] sm:$0xff]
        %v10403 = vld [vmem:[#allocation3 + $0x178] sm:$0xff]
        %v10404 = vld [vmem:[#allocation3 + $0x180] sm:$0xff]
        %v10405 = vld [vmem:[#allocation3 + $0x188] sm:$0xff]
        %v10406 = vld [vmem:[#allocation3 + $0x190] sm:$0xff]
        %v10407 = vld [vmem:[#allocation3 + $0x198] sm:$0xff]
        %v10408 = vld [vmem:[#allocation3 + $0x1a0] sm:$0xff]
        %v10409 = vld [vmem:[#allocation3 + $0x1a8] sm:$0xff]
        %v10410 = vld [vmem:[#allocation3 + $0x1b0] sm:$0xff]
        %v10411 = vld [vmem:[#allocation3 + $0x1b8] sm:$0xff]
        %v10412 = vld [vmem:[#allocation3 + $0x1c0] sm:$0xff]
        %v10413 = vld [vmem:[#allocation3 + $0x1c8] sm:$0xff]
        %v10414 = vld [vmem:[#allocation3 + $0x1d0] sm:$0xff]
        %v10415 = vld [vmem:[#allocation3 + $0x1d8] sm:$0xff]
        %v10416 = vld [vmem:[#allocation3 + $0x1e0] sm:$0xff]
        %v10417 = vld [vmem:[#allocation3 + $0x1e8] sm:$0xff]
        %v10418 = vld [vmem:[#allocation3 + $0x1f0] sm:$0xff]
        %v10419 = vld [vmem:[#allocation3 + $0x1f8] sm:$0xff]
        %v10420 = vmul.f32 %v10356, 0.1
        %v10421 = vmul.f32 %v10357, 0.1
        %v10422 = vmul.f32 %v10358, 0.1
        %v10423 = vmul.f32 %v10359, 0.1
        %v10424 = vmul.f32 %v10360, 0.1
        %v10425 = vmul.f32 %v10361, 0.1
        %v10426 = vmul.f32 %v10362, 0.1
        %v10427 = vmul.f32 %v10363, 0.1
        %v10428 = vmul.f32 %v10364, 0.1
        %v10429 = vmul.f32 %v10365, 0.1
        %v10430 = vmul.f32 %v10366, 0.1
        %v10431 = vmul.f32 %v10367, 0.1
        %v10432 = vmul.f32 %v10368, 0.1
        %v10433 = vmul.f32 %v10369, 0.1
        %v10434 = vmul.f32 %v10370, 0.1
        %v10435 = vmul.f32 %v10371, 0.1
        %v10436 = vmul.f32 %v10372, 0.1
        %v10437 = vmul.f32 %v10373, 0.1
        %v10438 = vmul.f32 %v10374, 0.1
        %v10439 = vmul.f32 %v10375, 0.1
        %v10440 = vmul.f32 %v10376, 0.1
        %v10441 = vmul.f32 %v10377, 0.1
        %v10442 = vmul.f32 %v10378, 0.1
        %v10443 = vmul.f32 %v10379, 0.1
        %v10444 = vmul.f32 %v10380, 0.1
        %v10445 = vmul.f32 %v10381, 0.1
        %v10446 = vmul.f32 %v10382, 0.1
        %v10447 = vmul.f32 %v10383, 0.1
        %v10448 = vmul.f32 %v10384, 0.1
        %v10449 = vmul.f32 %v10385, 0.1
        %v10450 = vmul.f32 %v10386, 0.1
        %v10451 = vmul.f32 %v10387, 0.1
        %v10452 = vmul.f32 %v10388, 0.1
        %v10453 = vmul.f32 %v10389, 0.1
        %v10454 = vmul.f32 %v10390, 0.1
        %v10455 = vmul.f32 %v10391, 0.1
        %v10456 = vmul.f32 %v10392, 0.1
        %v10457 = vmul.f32 %v10393, 0.1
        %v10458 = vmul.f32 %v10394, 0.1
        %v10459 = vmul.f32 %v10395, 0.1
        %v10460 = vmul.f32 %v10396, 0.1
        %v10461 = vmul.f32 %v10397, 0.1
        %v10462 = vmul.f32 %v10398, 0.1
        %v10463 = vmul.f32 %v10399, 0.1
        %v10464 = vmul.f32 %v10400, 0.1
        %v10465 = vmul.f32 %v10401, 0.1
        %v10466 = vmul.f32 %v10402, 0.1
        %v10467 = vmul.f32 %v10403, 0.1
        %v10468 = vmul.f32 %v10404, 0.1
        %v10469 = vmul.f32 %v10405, 0.1
        %v10470 = vmul.f32 %v10406, 0.1
        %v10471 = vmul.f32 %v10407, 0.1
        %v10472 = vmul.f32 %v10408, 0.1
        %v10473 = vmul.f32 %v10409, 0.1
        %v10474 = vmul.f32 %v10410, 0.1
        %v10475 = vmul.f32 %v10411, 0.1
        %v10476 = vmul.f32 %v10412, 0.1
        %v10477 = vmul.f32 %v10413, 0.1
        %v10478 = vmul.f32 %v10414, 0.1
        %v10479 = vmul.f32 %v10415, 0.1
        %v10480 = vmul.f32 %v10416, 0.1
        %v10481 = vmul.f32 %v10417, 0.1
        %v10482 = vmul.f32 %v10418, 0.1
        %v10483 = vmul.f32 %v10419, 0.1
        %v10484 = vld [vmem:[%s168] sm:$0xff]
        %v10485 = vld [vmem:[%s168 + $0x8] sm:$0xff]
        %v10486 = vld [vmem:[%s168 + $0x10] sm:$0xff]
        %v10487 = vld [vmem:[%s168 + $0x18] sm:$0xff]
        %v10488 = vld [vmem:[%s168 + $0x20] sm:$0xff]
        %v10489 = vld [vmem:[%s168 + $0x28] sm:$0xff]
        %v10490 = vld [vmem:[%s168 + $0x30] sm:$0xff]
        %v10491 = vld [vmem:[%s168 + $0x38] sm:$0xff]
        %v10492 = vld [vmem:[%s168 + $0x40] sm:$0xff]
        %v10493 = vld [vmem:[%s168 + $0x48] sm:$0xff]
        %v10494 = vld [vmem:[%s168 + $0x50] sm:$0xff]
        %v10495 = vld [vmem:[%s168 + $0x58] sm:$0xff]
        %v10496 = vld [vmem:[%s168 + $0x60] sm:$0xff]
        %v10497 = vld [vmem:[%s168 + $0x68] sm:$0xff]
        %v10498 = vld [vmem:[%s168 + $0x70] sm:$0xff]
        %v10499 = vld [vmem:[%s168 + $0x78] sm:$0xff]
        %v10500 = vld [vmem:[%s168 + $0x80] sm:$0xff]
        %v10501 = vld [vmem:[%s168 + $0x88] sm:$0xff]
        %v10502 = vld [vmem:[%s168 + $0x90] sm:$0xff]
        %v10503 = vld [vmem:[%s168 + $0x98] sm:$0xff]
        %v10504 = vld [vmem:[%s168 + $0xa0] sm:$0xff]
        %v10505 = vld [vmem:[%s168 + $0xa8] sm:$0xff]
        %v10506 = vld [vmem:[%s168 + $0xb0] sm:$0xff]
        %v10507 = vld [vmem:[%s168 + $0xb8] sm:$0xff]
        %v10508 = vld [vmem:[%s168 + $0xc0] sm:$0xff]
        %v10509 = vld [vmem:[%s168 + $0xc8] sm:$0xff]
        %v10510 = vld [vmem:[%s168 + $0xd0] sm:$0xff]
        %v10511 = vld [vmem:[%s168 + $0xd8] sm:$0xff]
        %v10512 = vld [vmem:[%s168 + $0xe0] sm:$0xff]
        %v10513 = vld [vmem:[%s168 + $0xe8] sm:$0xff]
        %v10514 = vld [vmem:[%s168 + $0xf0] sm:$0xff]
        %v10515 = vld [vmem:[%s168 + $0xf8] sm:$0xff]
        %v10516 = vld [vmem:[%s168 + $0x100] sm:$0xff]
        %v10517 = vld [vmem:[%s168 + $0x108] sm:$0xff]
        %v10518 = vld [vmem:[%s168 + $0x110] sm:$0xff]
        %v10519 = vld [vmem:[%s168 + $0x118] sm:$0xff]
        %v10520 = vld [vmem:[%s168 + $0x120] sm:$0xff]
        %v10521 = vld [vmem:[%s168 + $0x128] sm:$0xff]
        %v10522 = vld [vmem:[%s168 + $0x130] sm:$0xff]
        %v10523 = vld [vmem:[%s168 + $0x138] sm:$0xff]
        %v10524 = vld [vmem:[%s168 + $0x140] sm:$0xff]
        %v10525 = vld [vmem:[%s168 + $0x148] sm:$0xff]
        %v10526 = vld [vmem:[%s168 + $0x150] sm:$0xff]
        %v10527 = vld [vmem:[%s168 + $0x158] sm:$0xff]
        %v10528 = vld [vmem:[%s168 + $0x160] sm:$0xff]
        %v10529 = vld [vmem:[%s168 + $0x168] sm:$0xff]
        %v10530 = vld [vmem:[%s168 + $0x170] sm:$0xff]
        %v10531 = vld [vmem:[%s168 + $0x178] sm:$0xff]
        %v10532 = vld [vmem:[%s168 + $0x180] sm:$0xff]
        %v10533 = vld [vmem:[%s168 + $0x188] sm:$0xff]
        %v10534 = vld [vmem:[%s168 + $0x190] sm:$0xff]
        %v10535 = vld [vmem:[%s168 + $0x198] sm:$0xff]
        %v10536 = vld [vmem:[%s168 + $0x1a0] sm:$0xff]
        %v10537 = vld [vmem:[%s168 + $0x1a8] sm:$0xff]
        %v10538 = vld [vmem:[%s168 + $0x1b0] sm:$0xff]
        %v10539 = vld [vmem:[%s168 + $0x1b8] sm:$0xff]
        %v10540 = vld [vmem:[%s168 + $0x1c0] sm:$0xff]
        %v10541 = vld [vmem:[%s168 + $0x1c8] sm:$0xff]
        %v10542 = vld [vmem:[%s168 + $0x1d0] sm:$0xff]
        %v10543 = vld [vmem:[%s168 + $0x1d8] sm:$0xff]
        %v10544 = vld [vmem:[%s168 + $0x1e0] sm:$0xff]
        %v10545 = vld [vmem:[%s168 + $0x1e8] sm:$0xff]
        %v10546 = vld [vmem:[%s168 + $0x1f0] sm:$0xff]
        %v10547 = vld [vmem:[%s168 + $0x1f8] sm:$0xff]
        %v10548 = vadd.f32 %v10420, %v10484
        %v10549 = vadd.f32 %v10421, %v10485
        %v10550 = vadd.f32 %v10422, %v10486
        %v10551 = vadd.f32 %v10423, %v10487
        %v10552 = vadd.f32 %v10424, %v10488
        %v10553 = vadd.f32 %v10425, %v10489
        %v10554 = vadd.f32 %v10426, %v10490
        %v10555 = vadd.f32 %v10427, %v10491
        %v10556 = vadd.f32 %v10428, %v10492
        %v10557 = vadd.f32 %v10429, %v10493
        %v10558 = vadd.f32 %v10430, %v10494
        %v10559 = vadd.f32 %v10431, %v10495
        %v10560 = vadd.f32 %v10432, %v10496
        %v10561 = vadd.f32 %v10433, %v10497
        %v10562 = vadd.f32 %v10434, %v10498
        %v10563 = vadd.f32 %v10435, %v10499
        %v10564 = vadd.f32 %v10436, %v10500
        %v10565 = vadd.f32 %v10437, %v10501
        %v10566 = vadd.f32 %v10438, %v10502
        %v10567 = vadd.f32 %v10439, %v10503
        %v10568 = vadd.f32 %v10440, %v10504
        %v10569 = vadd.f32 %v10441, %v10505
        %v10570 = vadd.f32 %v10442, %v10506
        %v10571 = vadd.f32 %v10443, %v10507
        %v10572 = vadd.f32 %v10444, %v10508
        %v10573 = vadd.f32 %v10445, %v10509
        %v10574 = vadd.f32 %v10446, %v10510
        %v10575 = vadd.f32 %v10447, %v10511
        %v10576 = vadd.f32 %v10448, %v10512
        %v10577 = vadd.f32 %v10449, %v10513
        %v10578 = vadd.f32 %v10450, %v10514
        %v10579 = vadd.f32 %v10451, %v10515
        %v10580 = vadd.f32 %v10452, %v10516
        %v10581 = vadd.f32 %v10453, %v10517
        %v10582 = vadd.f32 %v10454, %v10518
        %v10583 = vadd.f32 %v10455, %v10519
        %v10584 = vadd.f32 %v10456, %v10520
        %v10585 = vadd.f32 %v10457, %v10521
        %v10586 = vadd.f32 %v10458, %v10522
        %v10587 = vadd.f32 %v10459, %v10523
        %v10588 = vadd.f32 %v10460, %v10524
        %v10589 = vadd.f32 %v10461, %v10525
        %v10590 = vadd.f32 %v10462, %v10526
        %v10591 = vadd.f32 %v10463, %v10527
        %v10592 = vadd.f32 %v10464, %v10528
        %v10593 = vadd.f32 %v10465, %v10529
        %v10594 = vadd.f32 %v10466, %v10530
        %v10595 = vadd.f32 %v10467, %v10531
        %v10596 = vadd.f32 %v10468, %v10532
        %v10597 = vadd.f32 %v10469, %v10533
        %v10598 = vadd.f32 %v10470, %v10534
        %v10599 = vadd.f32 %v10471, %v10535
        %v10600 = vadd.f32 %v10472, %v10536
        %v10601 = vadd.f32 %v10473, %v10537
        %v10602 = vadd.f32 %v10474, %v10538
        %v10603 = vadd.f32 %v10475, %v10539
        %v10604 = vadd.f32 %v10476, %v10540
        %v10605 = vadd.f32 %v10477, %v10541
        %v10606 = vadd.f32 %v10478, %v10542
        %v10607 = vadd.f32 %v10479, %v10543
        %v10608 = vadd.f32 %v10480, %v10544
        %v10609 = vadd.f32 %v10481, %v10545
        %v10610 = vadd.f32 %v10482, %v10546
        %v10611 = vadd.f32 %v10483, %v10547
        %10612 = vst [vmem:[%s163] sm:$0xff] %v10548
        %10613 = vst [vmem:[%s163 + $0x8] sm:$0xff] %v10549
        %10614 = vst [vmem:[%s163 + $0x10] sm:$0xff] %v10550
        %10615 = vst [vmem:[%s163 + $0x18] sm:$0xff] %v10551
        %10616 = vst [vmem:[%s163 + $0x20] sm:$0xff] %v10552
        %10617 = vst [vmem:[%s163 + $0x28] sm:$0xff] %v10553
        %10618 = vst [vmem:[%s163 + $0x30] sm:$0xff] %v10554
        %10619 = vst [vmem:[%s163 + $0x38] sm:$0xff] %v10555
        %10620 = vst [vmem:[%s163 + $0x40] sm:$0xff] %v10556
        %10621 = vst [vmem:[%s163 + $0x48] sm:$0xff] %v10557
        %10622 = vst [vmem:[%s163 + $0x50] sm:$0xff] %v10558
        %10623 = vst [vmem:[%s163 + $0x58] sm:$0xff] %v10559
        %10624 = vst [vmem:[%s163 + $0x60] sm:$0xff] %v10560
        %10625 = vst [vmem:[%s163 + $0x68] sm:$0xff] %v10561
        %10626 = vst [vmem:[%s163 + $0x70] sm:$0xff] %v10562
        %10627 = vst [vmem:[%s163 + $0x78] sm:$0xff] %v10563
        %10628 = vst [vmem:[%s163 + $0x80] sm:$0xff] %v10564
        %10629 = vst [vmem:[%s163 + $0x88] sm:$0xff] %v10565
        %10630 = vst [vmem:[%s163 + $0x90] sm:$0xff] %v10566
        %10631 = vst [vmem:[%s163 + $0x98] sm:$0xff] %v10567
        %10632 = vst [vmem:[%s163 + $0xa0] sm:$0xff] %v10568
        %10633 = vst [vmem:[%s163 + $0xa8] sm:$0xff] %v10569
        %10634 = vst [vmem:[%s163 + $0xb0] sm:$0xff] %v10570
        %10635 = vst [vmem:[%s163 + $0xb8] sm:$0xff] %v10571
        %10636 = vst [vmem:[%s163 + $0xc0] sm:$0xff] %v10572
        %10637 = vst [vmem:[%s163 + $0xc8] sm:$0xff] %v10573
        %10638 = vst [vmem:[%s163 + $0xd0] sm:$0xff] %v10574
        %10639 = vst [vmem:[%s163 + $0xd8] sm:$0xff] %v10575
        %10640 = vst [vmem:[%s163 + $0xe0] sm:$0xff] %v10576
        %10641 = vst [vmem:[%s163 + $0xe8] sm:$0xff] %v10577
        %10642 = vst [vmem:[%s163 + $0xf0] sm:$0xff] %v10578
        %10643 = vst [vmem:[%s163 + $0xf8] sm:$0xff] %v10579
        %10644 = vst [vmem:[%s163 + $0x100] sm:$0xff] %v10580
        %10645 = vst [vmem:[%s163 + $0x108] sm:$0xff] %v10581
        %10646 = vst [vmem:[%s163 + $0x110] sm:$0xff] %v10582
        %10647 = vst [vmem:[%s163 + $0x118] sm:$0xff] %v10583
        %10648 = vst [vmem:[%s163 + $0x120] sm:$0xff] %v10584
        %10649 = vst [vmem:[%s163 + $0x128] sm:$0xff] %v10585
        %10650 = vst [vmem:[%s163 + $0x130] sm:$0xff] %v10586
        %10651 = vst [vmem:[%s163 + $0x138] sm:$0xff] %v10587
        %10652 = vst [vmem:[%s163 + $0x140] sm:$0xff] %v10588
        %10653 = vst [vmem:[%s163 + $0x148] sm:$0xff] %v10589
        %10654 = vst [vmem:[%s163 + $0x150] sm:$0xff] %v10590
        %10655 = vst [vmem:[%s163 + $0x158] sm:$0xff] %v10591
        %10656 = vst [vmem:[%s163 + $0x160] sm:$0xff] %v10592
        %10657 = vst [vmem:[%s163 + $0x168] sm:$0xff] %v10593
        %10658 = vst [vmem:[%s163 + $0x170] sm:$0xff] %v10594
        %10659 = vst [vmem:[%s163 + $0x178] sm:$0xff] %v10595
        %10660 = vst [vmem:[%s163 + $0x180] sm:$0xff] %v10596
        %10661 = vst [vmem:[%s163 + $0x188] sm:$0xff] %v10597
        %10662 = vst [vmem:[%s163 + $0x190] sm:$0xff] %v10598
        %10663 = vst [vmem:[%s163 + $0x198] sm:$0xff] %v10599
        %10664 = vst [vmem:[%s163 + $0x1a0] sm:$0xff] %v10600
        %10665 = vst [vmem:[%s163 + $0x1a8] sm:$0xff] %v10601
        %10666 = vst [vmem:[%s163 + $0x1b0] sm:$0xff] %v10602
        %10667 = vst [vmem:[%s163 + $0x1b8] sm:$0xff] %v10603
        %10668 = vst [vmem:[%s163 + $0x1c0] sm:$0xff] %v10604
        %10669 = vst [vmem:[%s163 + $0x1c8] sm:$0xff] %v10605
        %10670 = vst [vmem:[%s163 + $0x1d0] sm:$0xff] %v10606
        %10671 = vst [vmem:[%s163 + $0x1d8] sm:$0xff] %v10607
        %10672 = vst [vmem:[%s163 + $0x1e0] sm:$0xff] %v10608
        %10673 = vst [vmem:[%s163 + $0x1e8] sm:$0xff] %v10609
        %10674 = vst [vmem:[%s163 + $0x1f0] sm:$0xff] %v10610
        %10675 = vst [vmem:[%s163 + $0x1f8] sm:$0xff] %v10611
        %s10676 = sand.u32 %s93, 1
        %s10677 = scalar_lea.sflag [#allocation5], %s10676
        %s10678 = sand.u32 %s93, 1
        %s10679 = smul.addr %s10678, 512
        %s10680 = scalar_lea.vmem [#allocation4], %s10679
        // Predicated region
        $region33: #{residual_block.1} parent=31 // pred_check
          %p10681 = pneg %p103
        $region34: #{residual_block.1} parent=31 // pred_check_branch
          %10683 = sbr.rel (%p10681) target = $region36
        $region35: #{residual_block.1} parent=31 // pred_region
          %s10685 = ssub.s32 8192, 8192
          %10686 = vsyncadd %s10677, %s10685
          %s10687 = smul.addr %s17, 64
          %s10688 = smul.addr %s10687, 128
          %s10689 = scalar_lea.hbm %s3, %s10688
          %s10690 = sshll.u32 %s10680, 4
          %s10691 = int_to_ptr.vmem [resolvable:$true] %s10690
          %10696 = dma.vmem_to_hbm [thread:$0]  %s10691, 8192, %s10689, %s10677, 256, 256, 16
        $region36: #{residual_block.1} parent=31 // pred_fallthru
          _
      $region32: #{residual_block.1} parent=5 // pred_fallthru
        _
      %p10697 = scmp.le.s32.totalorder 2, %s12
      // Predicated region
      $region37: #{residual_block.1} parent=5 // pred_check
        %p10698 = pneg %p10697
      $region38: #{residual_block.1} parent=5 // pred_check_branch
        %10700 = sbr.rel (%p10698) target = $region40
      $region39: #{residual_block.1} parent=5 // pred_region
        %s10701 = ssub.s32 %s12, 2
        // Predicated region
        $region41: #{residual_block.1} parent=39 // pred_check
          %p10702 = pneg %p109
        $region42: #{residual_block.1} parent=39 // pred_check_branch
          %10704 = sbr.rel (%p10702) target = $region44
        $region43: #{residual_block.1} parent=39 // pred_region
          %s10705 = sand.u32 %s94, 1
          %s10706 = scalar_lea.sflag [#allocation5], %s10705
          %s10707 = sand.u32 %s94, 1
          %s10708 = smul.addr %s10707, 512
          %s10709 = scalar_lea.vmem [#allocation4], %s10708
          %10710 = dma.done %s10706, 8192
        $region44: #{residual_block.1} parent=39 // pred_fallthru
          _
      $region40: #{residual_block.1} parent=5 // pred_fallthru
        _
    $region6: #{residual_block.1} parent=1 // loop_footer
      %s16 = sadd.s32 1, %s12
    $region7: #{residual_block.1} parent=1 // loop_footer_branch
      %11 = sbr.rel target = $region3
    $region8: #{residual_block.1} parent=1 // loop_exit
      _
    %10711 = vsyncpa [#allocation5], 1
    %s10712 = scalar_lea.sflag [#allocation5], 1
    %10713 = vsyncpa %s10712, 1

</llo_original>
